<compile_context>
chip_gen: v7x
topology: tpu7x:2x2x1
jax: 0.10.0
libtpu: 0.0.40
codegen_flags: <defaults>
</compile_context>

<pallas_src>
import functools

import numpy as np
import jax
import jax.numpy as jnp
from jax.experimental import pallas as pl
from jax.experimental.pallas import tpu as pltpu

SCALE = 8           # channel down-scale factor vs. real InceptionV3
IMG = 75            # input spatial size (instead of 299)

_TM_CAP = 512       # split matmuls with M > _TM_CAP into parallel M blocks (keeps 2 TCs busy on v7x)
_K_ALIGN = 32       # pad contraction dim only to a sublane-friendly multiple (not 128)


def ch(n):
    return max(4, n // SCALE)


def _round_up(n, m):
    return ((n + m - 1) // m) * m


# ---------------------------------------------------------------------------
# Pallas kernels
# ---------------------------------------------------------------------------
def _mm_kernel(a_ref, w_ref, b_ref, o_ref, *, relu):
    """o = act(a @ w + b); whole K in one block (no accumulator round-trip)."""
    acc = jnp.dot(a_ref[...], w_ref[...], preferred_element_type=jnp.float32)
    out = acc + b_ref[...]
    if relu:
        out = jnp.maximum(out, 0.0)
    o_ref[...] = out.astype(o_ref.dtype)


def _mm_plus_mm_kernel(a1_ref, w1_ref, b1_ref, a2_ref, w2_ref, b2_ref, o_ref):
    """o = relu(a1 @ w1 + b1) + relu(a2 @ w2 + b2)  (the fused 'mm_plus_mm' stem)."""
    t1 = jnp.dot(a1_ref[...], w1_ref[...], preferred_element_type=jnp.float32) + b1_ref[...]
    t2 = jnp.dot(a2_ref[...], w2_ref[...], preferred_element_type=jnp.float32) + b2_ref[...]
    o_ref[...] = (jnp.maximum(t1, 0.0) + jnp.maximum(t2, 0.0)).astype(o_ref.dtype)


def _pool_kernel(win_ref, o_ref, *, op):
    # win_ref: (k*k, M, C) stacked shifted views; reduce over the window axis.
    if op == "max":
        o_ref[...] = jnp.max(win_ref[...], axis=0)
    else:
        inv = 1.0 / win_ref.shape[0]                 # count_include_pad=True semantics
        o_ref[...] = (jnp.sum(win_ref[...].astype(jnp.float32), axis=0) * inv).astype(o_ref.dtype)


def _avgpool_conv_kernel(win_ref, w_ref, b_ref, o_ref):
    """Fused avg-pool(3x3,s1,p1) -> 1x1 conv -> bias -> relu (Inception 'pool' branch)."""
    inv = 1.0 / win_ref.shape[0]
    pooled = (jnp.sum(win_ref[...].astype(jnp.float32), axis=0) * inv).astype(w_ref.dtype)
    acc = jnp.dot(pooled, w_ref[...], preferred_element_type=jnp.float32)
    o_ref[...] = jnp.maximum(acc + b_ref[...], 0.0).astype(o_ref.dtype)


# ---------------------------------------------------------------------------
# Pallas wrappers
# ---------------------------------------------------------------------------
def _pad_kn(a, w, b):
    """Pad K to a multiple of _K_ALIGN and N to a multiple of 128 (lane-dense output)."""
    k = a.shape[1]
    n = w.shape[1]
    kp = _round_up(k, _K_ALIGN)
    np_ = _round_up(n, 128)
    a_p = jnp.pad(a.astype(jnp.bfloat16), ((0, 0), (0, kp - k)))
    w_p = jnp.pad(w.astype(jnp.bfloat16), ((0, kp - k), (0, np_ - n)))
    b_p = jnp.pad(b.astype(jnp.float32), (0, np_ - n)).reshape(1, np_)
    return a_p, w_p, b_p, kp, np_


def _m_tiling(m):
    if m <= _TM_CAP:
        tm = _round_up(m, 8)
        return tm, tm
    return _TM_CAP, _round_up(m, _TM_CAP)


def matmul_bias_act(a, w, b, relu=True, out_dtype=jnp.bfloat16):
    """act(a @ w + b) with a:(M,K), w:(K,N), b:(N,). Single K block, M split only if large."""
    m, _ = a.shape
    n = w.shape[1]
    a_p, w_p, b_p, kp, np_ = _pad_kn(a, w, b)
    tm, mp = _m_tiling(m)
    if mp != m:
        a_p = jnp.pad(a_p, ((0, mp - m), (0, 0)))
    out = pl.pallas_call(
        functools.partial(_mm_kernel, relu=relu),
        out_shape=jax.ShapeDtypeStruct((mp, np_), out_dtype),
        grid=(mp // tm,),
        in_specs=[pl.BlockSpec((tm, kp), lambda i: (i, 0)),
                  pl.BlockSpec((kp, np_), lambda i: (0, 0)),
                  pl.BlockSpec((1, np_), lambda i: (0, 0))],
        out_specs=pl.BlockSpec((tm, np_), lambda i: (i, 0)),
        compiler_params=pltpu.CompilerParams(dimension_semantics=("parallel",)),
    )(a_p, w_p, b_p)
    return out[:m, :n]


def mm_plus_mm(a1, w1, b1, a2, w2, b2, out_dtype=jnp.bfloat16):
    m, _ = a1.shape
    n = w1.shape[1]
    a1_p, w1_p, b1_p, kp, np_ = _pad_kn(a1, w1, b1)
    a2_p, w2_p, b2_p, _, _ = _pad_kn(a2, w2, b2)
    tm, mp = _m_tiling(m)
    if mp != m:
        a1_p = jnp.pad(a1_p, ((0, mp - m), (0, 0)))
        a2_p = jnp.pad(a2_p, ((0, mp - m), (0, 0)))
    out = pl.pallas_call(
        _mm_plus_mm_kernel,
        out_shape=jax.ShapeDtypeStruct((mp, np_), out_dtype),
        grid=(mp // tm,),
        in_specs=[pl.BlockSpec((tm, kp), lambda i: (i, 0)),
                  pl.BlockSpec((kp, np_), lambda i: (0, 0)),
                  pl.BlockSpec((1, np_), lambda i: (0, 0)),
                  pl.BlockSpec((tm, kp), lambda i: (i, 0)),
                  pl.BlockSpec((kp, np_), lambda i: (0, 0)),
                  pl.BlockSpec((1, np_), lambda i: (0, 0))],
        out_specs=pl.BlockSpec((tm, np_), lambda i: (i, 0)),
        compiler_params=pltpu.CompilerParams(dimension_semantics=("parallel",)),
    )(a1_p, w1_p, b1_p, a2_p, w2_p, b2_p)
    return out[:m, :n]


def _windows(x, kh, kw, stride, pad, pad_value=0.0):
    """NHWC -> stacked shifted views (kh*kw, N*Ho*Wo, C). Glue only (jit-fused, no compute)."""
    ph, pw = pad
    if ph or pw:
        x = jnp.pad(x, ((0, 0), (ph, ph), (pw, pw), (0, 0)), constant_values=pad_value)
    n, hp, wp, c = x.shape
    ho = (hp - kh) // stride + 1
    wo = (wp - kw) // stride + 1
    views = []
    for di in range(kh):
        for dj in range(kw):
            views.append(x[:, di:di + (ho - 1) * stride + 1:stride,
                             dj:dj + (wo - 1) * stride + 1:stride, :])
    stacked = jnp.stack(views, axis=0).reshape(kh * kw, n * ho * wo, c)
    return stacked, (n, ho, wo, c)


def pool2d(x, k, stride, pad, op):
    if k == 1 and stride == 1 and pad == 0:
        return x
    # -inf pad for max-pool so padded windows never win (all call sites here use pad=0 anyway).
    pad_value = -jnp.inf if op == "max" else 0.0
    wins, (n, ho, wo, c) = _windows(x, k, k, stride, (pad, pad), pad_value)
    out = pl.pallas_call(
        functools.partial(_pool_kernel, op=op),
        out_shape=jax.ShapeDtypeStruct((n * ho * wo, c), x.dtype),
    )(wins)
    return out.reshape(n, ho, wo, c)


def max_pool(x, k, stride, pad=0):
    return pool2d(x, k, stride, pad, "max")


def avg_pool(x, k, stride, pad=0):
    return pool2d(x, k, stride, pad, "avg")


def avgpool_conv(x, spec, k=3, stride=1, pad=1):
    """Fused avg_pool(k,s,p) -> 1x1 BasicConv2d (one Pallas launch, no pooled HBM intermediate)."""
    assert spec["kh"] == 1 and spec["kw"] == 1 and spec["stride"] == 1
    wins, (n, ho, wo, c) = _windows(x, k, k, stride, (pad, pad), 0.0)
    cout = spec["cout"]
    cp = _round_up(c, _K_ALIGN)
    np_ = _round_up(cout, 128)
    wins_p = jnp.pad(wins, ((0, 0), (0, 0), (0, cp - c)))
    w_p = jnp.pad(spec["w"].astype(jnp.bfloat16), ((0, cp - c), (0, np_ - cout)))
    b_p = jnp.pad(spec["b"].astype(jnp.float32), (0, np_ - cout)).reshape(1, np_)
    out = pl.pallas_call(
        _avgpool_conv_kernel,
        out_shape=jax.ShapeDtypeStruct((n * ho * wo, np_), x.dtype),
    )(wins_p, w_p, b_p)
    return out[:, :cout].reshape(n, ho, wo, cout)


# ---------------------------------------------------------------------------
# Conv (BasicConv2d = conv + folded BN + relu) via im2col + Pallas matmul
# ---------------------------------------------------------------------------
def im2col(x, kh, kw, stride, pad):
    wins, (n, ho, wo, c) = _windows(x, kh, kw, stride, pad)
    # (k, M, C) -> (M, k*C) with channel fastest, matching weight layout below.
    patches = jnp.transpose(wins, (1, 0, 2)).reshape(n * ho * wo, kh * kw * c)
    return patches, (n, ho, wo)


class KeyGen:
    def __init__(self, key):
        self.key = key
        self.i = 0

    def __call__(self):
        self.i += 1
        return jax.random.fold_in(self.key, self.i)


def conv_spec(kg, cin, cout, ksize, stride=1, pad=(0, 0)):
    kh, kw = (ksize, ksize) if isinstance(ksize, int) else ksize
    fan_in = cin * kh * kw
    w = (jax.random.normal(kg(), (kh * kw * cin, cout), jnp.float32)
         / np.sqrt(fan_in)).astype(jnp.bfloat16)
    b = 0.01 * jax.random.normal(kg(), (cout,), jnp.float32)   # folded BN beta/mean
    return dict(w=w, b=b, kh=kh, kw=kw, cin=cin, cout=cout, stride=stride, pad=pad)


def apply_conv(x, spec, relu=True):
    if spec["kh"] == 1 and spec["kw"] == 1 and spec["stride"] == 1 and spec["pad"] == (0, 0):
        n, h, w_, c = x.shape
        a, ho, wo = x.reshape(n * h * w_, c), h, w_
    else:
        a, (n, ho, wo) = im2col(x, spec["kh"], spec["kw"], spec["stride"], spec["pad"])
    y = matmul_bias_act(a, spec["w"], spec["b"], relu=relu)
    return y.reshape(n, ho, wo, spec["cout"])


def apply_fused_1x1(x, specs):
    """All branch 1x1 convs that read the same x fused into ONE lane-dense matmul."""
    for s in specs:
        assert s["kh"] == 1 and s["kw"] == 1 and s["stride"] == 1 and s["pad"] == (0, 0)
    w = jnp.concatenate([s["w"] for s in specs], axis=1)
    b = jnp.concatenate([s["b"] for s in specs], axis=0)
    couts = [s["cout"] for s in specs]                       # static Python ints
    n, h, w_, c = x.shape
    y = matmul_bias_act(x.reshape(n * h * w_, c), w, b, relu=True)
    outs, s0 = [], 0
    for co in couts:
        outs.append(y[:, s0:s0 + co].reshape(n, h, w_, co))
        s0 += co
    return outs


def conv_mm_plus_mm(x1, s1, x2, s2):
    a1, (n, ho, wo) = im2col(x1, s1["kh"], s1["kw"], s1["stride"], s1["pad"])
    a2, _ = im2col(x2, s2["kh"], s2["kw"], s2["stride"], s2["pad"])
    y = mm_plus_mm(a1, s1["w"], s1["b"], a2, s2["w"], s2["b"])
    return y.reshape(n, ho, wo, s1["cout"])


# ---------------------------------------------------------------------------
# Inception blocks (torchvision structure, scaled channels)
# ---------------------------------------------------------------------------
def init_inception_a(kg, cin, pool_ch):
    return dict(
        b1=conv_spec(kg, cin, ch(64), 1),
        b5_1=conv_spec(kg, cin, ch(48), 1),
        b5_2=conv_spec(kg, ch(48), ch(64), 5, pad=(2, 2)),
        d1=conv_spec(kg, cin, ch(64), 1),
        d2=conv_spec(kg, ch(64), ch(96), 3, pad=(1, 1)),
        d3=conv_spec(kg, ch(96), ch(96), 3, pad=(1, 1)),
        bp=conv_spec(kg, cin, pool_ch, 1))


def inception_a(x, p):
    b1, b5, d = apply_fused_1x1(x, [p["b1"], p["b5_1"], p["d1"]])
    b5 = apply_conv(b5, p["b5_2"])
    d = apply_conv(apply_conv(d, p["d2"]), p["d3"])
    bp = avgpool_conv(x, p["bp"], 3, 1, 1)
    return jnp.concatenate([b1, b5, d, bp], axis=-1)


def init_inception_b(kg, cin):
    return dict(
        b3=conv_spec(kg, cin, ch(384), 3, stride=2),
        d1=conv_spec(kg, cin, ch(64), 1),
        d2=conv_spec(kg, ch(64), ch(96), 3, pad=(1, 1)),
        d3=conv_spec(kg, ch(96), ch(96), 3, stride=2))


def inception_b(x, p):
    b3 = apply_conv(x, p["b3"])
    d = apply_conv(apply_conv(apply_conv(x, p["d1"]), p["d2"]), p["d3"])
    bp = max_pool(x, 3, 2)
    return jnp.concatenate([b3, d, bp], axis=-1)


def init_inception_c(kg, cin, c7):
    return dict(
        b1=conv_spec(kg, cin, ch(192), 1),
        s1=conv_spec(kg, cin, c7, 1),
        s2=conv_spec(kg, c7, c7, (1, 7), pad=(0, 3)),
        s3=conv_spec(kg, c7, ch(192), (7, 1), pad=(3, 0)),
        d1=conv_spec(kg, cin, c7, 1),
        d2=conv_spec(kg, c7, c7, (7, 1), pad=(3, 0)),
        d3=conv_spec(kg, c7, c7, (1, 7), pad=(0, 3)),
        d4=conv_spec(kg, c7, c7, (7, 1), pad=(3, 0)),
        d5=conv_spec(kg, c7, ch(192), (1, 7), pad=(0, 3)),
        bp=conv_spec(kg, cin, ch(192), 1))


def inception_c(x, p):
    b1, s, d = apply_fused_1x1(x, [p["b1"], p["s1"], p["d1"]])
    s = apply_conv(apply_conv(s, p["s2"]), p["s3"])
    for name in ("d2", "d3", "d4", "d5"):
        d = apply_conv(d, p[name])
    bp = avgpool_conv(x, p["bp"], 3, 1, 1)
    return jnp.concatenate([b1, s, d, bp], axis=-1)


def init_inception_d(kg, cin):
    return dict(
        b3_1=conv_spec(kg, cin, ch(192), 1),
        b3_2=conv_spec(kg, ch(192), ch(320), 3, stride=2),
        b7_1=conv_spec(kg, cin, ch(192), 1),
        b7_2=conv_spec(kg, ch(192), ch(192), (1, 7), pad=(0, 3)),
        b7_3=conv_spec(kg, ch(192), ch(192), (7, 1), pad=(3, 0)),
        b7_4=conv_spec(kg, ch(192), ch(192), 3, stride=2))


def inception_d(x, p):
    b3, b7 = apply_fused_1x1(x, [p["b3_1"], p["b7_1"]])
    b3 = apply_conv(b3, p["b3_2"])
    for name in ("b7_2", "b7_3", "b7_4"):
        b7 = apply_conv(b7, p[name])
    bp = max_pool(x, 3, 2)
    return jnp.concatenate([b3, b7, bp], axis=-1)


def init_inception_e(kg, cin):
    return dict(
        b1=conv_spec(kg, cin, ch(320), 1),
        b3_1=conv_spec(kg, cin, ch(384), 1),
        b3_2a=conv_spec(kg, ch(384), ch(384), (1, 3), pad=(0, 1)),
        b3_2b=conv_spec(kg, ch(384), ch(384), (3, 1), pad=(1, 0)),
        d1=conv_spec(kg, cin, ch(448), 1),
        d2=conv_spec(kg, ch(448), ch(384), 3, pad=(1, 1)),
        d3a=conv_spec(kg, ch(384), ch(384), (1, 3), pad=(0, 1)),
        d3b=conv_spec(kg, ch(384), ch(384), (3, 1), pad=(1, 0)),
        bp=conv_spec(kg, cin, ch(192), 1))


def inception_e(x, p):
    b1, b3, d = apply_fused_1x1(x, [p["b1"], p["b3_1"], p["d1"]])
    b3 = jnp.concatenate([apply_conv(b3, p["b3_2a"]),
                          apply_conv(b3, p["b3_2b"])], axis=-1)
    d = apply_conv(d, p["d2"])
    d = jnp.concatenate([apply_conv(d, p["d3a"]),
                         apply_conv(d, p["d3b"])], axis=-1)
    bp = avgpool_conv(x, p["bp"], 3, 1, 1)
    return jnp.concatenate([b1, b3, d, bp], axis=-1)


# ---------------------------------------------------------------------------
# Model
# ---------------------------------------------------------------------------
def init_params(key):
    kg = KeyGen(key)
    P = {}
    P["conv1a"] = conv_spec(kg, 3, ch(32), 3, stride=2)
    # TODO(synk): original Conv2d_2a_3x3/2b_3x3 expect 32-ch inputs but the buggy forward
    # feeds them raw 3-ch images; they are defined on 3 channels here (2a with stride 2 so
    # that t1 + t2 is shape-consistent).
    P["conv2a"] = conv_spec(kg, 3, ch(32), 3, stride=2)
    P["conv2b"] = conv_spec(kg, 3, ch(64), 3, pad=(1, 1))
    # TODO(synk): Conv2d_3b_1x1 input channels follow the actual t4 (32s) rather than
    # torchvision's 64, since t4 comes from t1 + t2 in this synthetic graph.
    P["conv3b"] = conv_spec(kg, ch(32), ch(80), 1)
    P["conv4a"] = conv_spec(kg, ch(80), ch(192), 3)

    c5b_in = ch(192)
    P["mixed5b"] = init_inception_a(kg, c5b_in, ch(32))
    c5b = ch(64) + ch(64) + ch(96) + ch(32)
    P["mixed5c"] = init_inception_a(kg, c5b, ch(64))
    c5c = ch(64) + ch(64) + ch(96) + ch(64)
    P["mixed5d"] = init_inception_a(kg, c5c, ch(64))
    c5d = c5c
    P["mixed6a"] = init_inception_b(kg, c5d)
    c6a = ch(384) + ch(96) + c5d
    P["mixed6b"] = init_inception_c(kg, c6a, ch(128))
    c6 = 4 * ch(192)
    P["mixed6c"] = init_inception_c(kg, c6, ch(160))
    P["mixed6d"] = init_inception_c(kg, c6, ch(160))
    P["mixed6e"] = init_inception_c(kg, c6, ch(192))
    P["mixed7a"] = init_inception_d(kg, c6)
    c7a = ch(320) + ch(192) + c6
    P["mixed7b"] = init_inception_e(kg, c7a)
    c7 = ch(320) + 2 * ch(384) + 2 * ch(384) + ch(192)   # = ch(2048)
    P["mixed7c"] = init_inception_e(kg, c7)

    # TODO(synk): original fc is Linear(2048, 10) which does not match its own flatten
    # (2048*H*W); here the final map is 1x1 so fc input = ch(2048) is consistent.
    fc_in = c7
    P["fc_w"] = jax.random.normal(kg(), (fc_in, 10), jnp.float32) / np.sqrt(fc_in)
    P["fc_b"] = 0.01 * jax.random.normal(kg(), (10,), jnp.float32)
    return P


def forward(params, input1, input2, input4):
    # layout: NCHW inputs -> NHWC internal; bf16 activations everywhere (f32 accumulate).
    x1 = jnp.transpose(input1, (0, 2, 3, 1)).astype(jnp.bfloat16)
    x2 = jnp.transpose(input2, (0, 2, 3, 1)).astype(jnp.bfloat16)
    x4 = jnp.transpose(input4, (0, 2, 3, 1)).astype(jnp.bfloat16)

    # t1 = Conv2d_1a_3x3(input1); t2 = Conv2d_2a_3x3(input2); fused (t1 + t2) in one kernel.
    t1_plus_t2 = conv_mm_plus_mm(x1, params["conv1a"], x2, params["conv2a"])
    t3 = apply_conv(x4, params["conv2b"])        # computed-then-unused, as in the original forward
    del t3
    t4 = max_pool(t1_plus_t2, 3, 2)              # maxpool1
    t5 = apply_conv(t4, params["conv3b"])
    t6 = apply_conv(t5, params["conv4a"])
    t7 = max_pool(t6, 3, 2)                      # maxpool2
    t8 = inception_a(t7, params["mixed5b"])
    t9 = inception_a(t8, params["mixed5c"])
    t10 = inception_a(t9, params["mixed5d"])
    t11 = inception_b(t10, params["mixed6a"])
    t12 = inception_c(t11, params["mixed6b"])
    t13 = inception_c(t12, params["mixed6c"])
    t14 = inception_c(t13, params["mixed6d"])
    t15 = inception_c(t14, params["mixed6e"])
    t16 = inception_d(t15, params["mixed7a"])
    t17 = inception_e(t16, params["mixed7b"])
    t18 = inception_e(t17, params["mixed7c"])

    # TODO(synk): original AvgPool2d(5,1,0) needs a >=5 final map (input 299); at this
    # reduced scale the final map is 1x1, so the kernel is clamped to the map size.
    k = min(5, t18.shape[1])
    t19 = avg_pool(t18, k, 1)
    t20 = t19                                    # dropout: eval-mode identity

    t20_nchw = jnp.transpose(t20, (0, 3, 1, 2))
    flat = t20_nchw.reshape(input1.shape[0], -1)
    assert flat.shape[1] == params["fc_w"].shape[0]
    t21 = matmul_bias_act(flat, params["fc_w"], params["fc_b"],
                          relu=False, out_dtype=jnp.float32)
    return t21


if __name__ == "__main__":
    root = jax.random.PRNGKey(0)
    params = init_params(jax.random.fold_in(root, 1000))
    k1, k2, k3 = jax.random.split(root, 3)
    input1 = jax.random.normal(k1, (1, 3, IMG, IMG), jnp.float32)
    input2 = jax.random.normal(k2, (1, 3, IMG, IMG), jnp.float32)
    input4 = jax.random.normal(k3, (1, 3, IMG, IMG), jnp.float32)

    fwd = jax.jit(functools.partial(forward, params))   # params closed over; glue fused by XLA
    out = jax.block_until_ready(fwd(input1, input2, input4))
    assert out.shape == (1, 10), out.shape
    assert bool(jnp.all(jnp.isfinite(out)))
    print("KERNEL_OK")
</pallas_src>

<mosaic_0001>
module attributes {stable_mosaic.version = 11 : i64} {
  func.func @_mm_plus_mm_kernel(%arg0: i32, %arg1: memref<512x32xbf16, #tpu.memory_space<vmem>>, %arg2: memref<32x128xbf16, #tpu.memory_space<vmem>>, %arg3: memref<1x128xf32, #tpu.memory_space<vmem>>, %arg4: memref<512x32xbf16, #tpu.memory_space<vmem>>, %arg5: memref<32x128xbf16, #tpu.memory_space<vmem>>, %arg6: memref<1x128xf32, #tpu.memory_space<vmem>>, %arg7: memref<512x128xbf16, #tpu.memory_space<vmem>>) attributes {dimension_semantics = [#tpu.dimension_semantics<parallel>], iteration_bounds = array<i64: 3>, scalar_prefetch = 0 : i64, scratch_operands = 0 : i64, tpu.core_type = #tpu.core_type<tc>, window_params = [{transform_indices = @transform_0, window_bounds = array<i64: 512, 32>}, {pipeline_mode = #tpu.pipeline_mode<synchronous>, transform_indices = @transform_1, window_bounds = array<i64: 32, 128>}, {pipeline_mode = #tpu.pipeline_mode<synchronous>, transform_indices = @transform_2, window_bounds = array<i64: 1, 128>}, {transform_indices = @transform_3, window_bounds = array<i64: 512, 32>}, {pipeline_mode = #tpu.pipeline_mode<synchronous>, transform_indices = @transform_4, window_bounds = array<i64: 32, 128>}, {pipeline_mode = #tpu.pipeline_mode<synchronous>, transform_indices = @transform_5, window_bounds = array<i64: 1, 128>}, {transform_indices = @transform_6, window_bounds = array<i64: 512, 128>}]} {
    %c0 = arith.constant 0 : index
    %c0_0 = arith.constant 0 : index
    %0 = vector.load %arg1[%c0, %c0_0] : memref<512x32xbf16, #tpu.memory_space<vmem>>, vector<512x32xbf16>
    %c0_1 = arith.constant 0 : index
    %c0_2 = arith.constant 0 : index
    %1 = vector.load %arg2[%c0_1, %c0_2] : memref<32x128xbf16, #tpu.memory_space<vmem>>, vector<32x128xbf16>
    %cst = arith.constant dense<0.000000e+00> : vector<512x128xf32>
    %2 = tpu.matmul %0, %1, %cst {dimension_numbers = #tpu.dot_dimension_numbers<[1], [0], [0], [1], [0, 0, 1, 1], [], []>} : vector<512x32xbf16>, vector<32x128xbf16>, vector<512x128xf32> -> vector<512x128xf32>
    %c0_3 = arith.constant 0 : index
    %c0_4 = arith.constant 0 : index
    %3 = vector.load %arg3[%c0_3, %c0_4] : memref<1x128xf32, #tpu.memory_space<vmem>>, vector<1x128xf32>
    %4 = vector.broadcast %3 : vector<1x128xf32> to vector<512x128xf32>
    %5 = arith.addf %2, %4 : vector<512x128xf32>
    %c0_5 = arith.constant 0 : index
    %c0_6 = arith.constant 0 : index
    %6 = vector.load %arg4[%c0_5, %c0_6] : memref<512x32xbf16, #tpu.memory_space<vmem>>, vector<512x32xbf16>
    %c0_7 = arith.constant 0 : index
    %c0_8 = arith.constant 0 : index
    %7 = vector.load %arg5[%c0_7, %c0_8] : memref<32x128xbf16, #tpu.memory_space<vmem>>, vector<32x128xbf16>
    %cst_9 = arith.constant dense<0.000000e+00> : vector<512x128xf32>
    %8 = tpu.matmul %6, %7, %cst_9 {dimension_numbers = #tpu.dot_dimension_numbers<[1], [0], [0], [1], [0, 0, 1, 1], [], []>} : vector<512x32xbf16>, vector<32x128xbf16>, vector<512x128xf32> -> vector<512x128xf32>
    %c0_10 = arith.constant 0 : index
    %c0_11 = arith.constant 0 : index
    %9 = vector.load %arg6[%c0_10, %c0_11] : memref<1x128xf32, #tpu.memory_space<vmem>>, vector<1x128xf32>
    %10 = vector.broadcast %9 : vector<1x128xf32> to vector<512x128xf32>
    %11 = arith.addf %8, %10 : vector<512x128xf32>
    %cst_12 = arith.constant 0.000000e+00 : f32
    %12 = vector.broadcast %cst_12 : f32 to vector<512x128xf32>
    %13 = arith.maximumf %5, %12 : vector<512x128xf32>
    %cst_13 = arith.constant 0.000000e+00 : f32
    %14 = vector.broadcast %cst_13 : f32 to vector<512x128xf32>
    %15 = arith.maximumf %11, %14 : vector<512x128xf32>
    %16 = arith.addf %13, %15 : vector<512x128xf32>
    %17 = arith.truncf %16 : vector<512x128xf32> to vector<512x128xbf16>
    %c0_14 = arith.constant 0 : index
    %c0_15 = arith.constant 0 : index
    %18 = vector.load %arg7[%c0_14, %c0_15] : memref<512x128xbf16, #tpu.memory_space<vmem>>, vector<512x128xbf16>
    tpu.vector_store %arg7[%c0_14, %c0_15], %17 {strides = array<i32>} : memref<512x128xbf16, #tpu.memory_space<vmem>>, vector<512x128xbf16>,
    return
  }
  func.func @transform_0(%arg0: i32) -> (i32, i32) {
    %c0_i32 = arith.constant 0 : i32
    %c0_i32_0 = arith.constant 0 : i32
    return %arg0, %c0_i32 : i32, i32
  }
  func.func @transform_1(%arg0: i32) -> (i32, i32) {
    %c0_i32 = arith.constant 0 : i32
    %c0_i32_0 = arith.constant 0 : i32
    %c0_i32_1 = arith.constant 0 : i32
    return %c0_i32, %c0_i32_0 : i32, i32
  }
  func.func @transform_2(%arg0: i32) -> (i32, i32) {
    %c0_i32 = arith.constant 0 : i32
    %c0_i32_0 = arith.constant 0 : i32
    %c0_i32_1 = arith.constant 0 : i32
    return %c0_i32, %c0_i32_0 : i32, i32
  }
  func.func @transform_3(%arg0: i32) -> (i32, i32) {
    %c0_i32 = arith.constant 0 : i32
    %c0_i32_0 = arith.constant 0 : i32
    return %arg0, %c0_i32 : i32, i32
  }
  func.func @transform_4(%arg0: i32) -> (i32, i32) {
    %c0_i32 = arith.constant 0 : i32
    %c0_i32_0 = arith.constant 0 : i32
    %c0_i32_1 = arith.constant 0 : i32
    return %c0_i32, %c0_i32_0 : i32, i32
  }
  func.func @transform_5(%arg0: i32) -> (i32, i32) {
    %c0_i32 = arith.constant 0 : i32
    %c0_i32_0 = arith.constant 0 : i32
    %c0_i32_1 = arith.constant 0 : i32
    return %c0_i32, %c0_i32_0 : i32, i32
  }
  func.func @transform_6(%arg0: i32) -> (i32, i32) {
    %c0_i32 = arith.constant 0 : i32
    %c0_i32_0 = arith.constant 0 : i32
    return %arg0, %c0_i32 : i32, i32
  }
}

module attributes {stable_mosaic.version = 11 : i64} {
  func.func @_pool_kernel(%arg0: memref<9x324x4xbf16, #tpu.memory_space<vmem>>, %arg1: memref<324x4xbf16, #tpu.memory_space<vmem>>) attributes {dimension_semantics = [], scalar_prefetch = 0 : i64, scratch_operands = 0 : i64, tpu.core_type = #tpu.core_type<tc>} {
    %c0 = arith.constant 0 : index
    %c0_0 = arith.constant 0 : index
    %c0_1 = arith.constant 0 : index
    %0 = vector.load %arg0[%c0, %c0_0, %c0_1] : memref<9x324x4xbf16, #tpu.memory_space<vmem>>, vector<9x324x4xbf16>
    %cst = arith.constant dense<0xFF80> : vector<324x4xbf16>
    %1 = vector.multi_reduction <maximumf>, %0, %cst [0] : vector<9x324x4xbf16> to vector<324x4xbf16>
    %c0_2 = arith.constant 0 : index
    %c0_3 = arith.constant 0 : index
    %2 = vector.load %arg1[%c0_2, %c0_3] : memref<324x4xbf16, #tpu.memory_space<vmem>>, vector<324x4xbf16>
    tpu.vector_store %arg1[%c0_2, %c0_3], %1 {strides = array<i32>} : memref<324x4xbf16, #tpu.memory_space<vmem>>, vector<324x4xbf16>,
    return
  }
}

module attributes {stable_mosaic.version = 11 : i64} {
  func.func @_mm_kernel(%arg0: i32, %arg1: memref<328x32xbf16, #tpu.memory_space<vmem>>, %arg2: memref<32x128xbf16, #tpu.memory_space<vmem>>, %arg3: memref<1x128xf32, #tpu.memory_space<vmem>>, %arg4: memref<328x128xbf16, #tpu.memory_space<vmem>>) attributes {dimension_semantics = [#tpu.dimension_semantics<parallel>], iteration_bounds = array<i64: 1>, scalar_prefetch = 0 : i64, scratch_operands = 0 : i64, tpu.core_type = #tpu.core_type<tc>, window_params = [{transform_indices = @transform_0, window_bounds = array<i64: 328, 32>}, {pipeline_mode = #tpu.pipeline_mode<synchronous>, transform_indices = @transform_1, window_bounds = array<i64: 32, 128>}, {pipeline_mode = #tpu.pipeline_mode<synchronous>, transform_indices = @transform_2, window_bounds = array<i64: 1, 128>}, {transform_indices = @transform_3, window_bounds = array<i64: 328, 128>}]} {
    %c0 = arith.constant 0 : index
    %c0_0 = arith.constant 0 : index
    %0 = vector.load %arg1[%c0, %c0_0] : memref<328x32xbf16, #tpu.memory_space<vmem>>, vector<328x32xbf16>
    %c0_1 = arith.constant 0 : index
    %c0_2 = arith.constant 0 : index
    %1 = vector.load %arg2[%c0_1, %c0_2] : memref<32x128xbf16, #tpu.memory_space<vmem>>, vector<32x128xbf16>
    %cst = arith.constant dense<0.000000e+00> : vector<328x128xf32>
    %2 = tpu.matmul %0, %1, %cst {dimension_numbers = #tpu.dot_dimension_numbers<[1], [0], [0], [1], [0, 0, 1, 1], [], []>} : vector<328x32xbf16>, vector<32x128xbf16>, vector<328x128xf32> -> vector<328x128xf32>
    %c0_3 = arith.constant 0 : index
    %c0_4 = arith.constant 0 : index
    %3 = vector.load %arg3[%c0_3, %c0_4] : memref<1x128xf32, #tpu.memory_space<vmem>>, vector<1x128xf32>
    %4 = vector.broadcast %3 : vector<1x128xf32> to vector<328x128xf32>
    %5 = arith.addf %2, %4 : vector<328x128xf32>
    %cst_5 = arith.constant 0.000000e+00 : f32
    %6 = vector.broadcast %cst_5 : f32 to vector<328x128xf32>
    %7 = arith.maximumf %5, %6 : vector<328x128xf32>
    %8 = arith.truncf %7 : vector<328x128xf32> to vector<328x128xbf16>
    %c0_6 = arith.constant 0 : index
    %c0_7 = arith.constant 0 : index
    %9 = vector.load %arg4[%c0_6, %c0_7] : memref<328x128xbf16, #tpu.memory_space<vmem>>, vector<328x128xbf16>
    tpu.vector_store %arg4[%c0_6, %c0_7], %8 {strides = array<i32>} : memref<328x128xbf16, #tpu.memory_space<vmem>>, vector<328x128xbf16>,
    return
  }
  func.func @transform_0(%arg0: i32) -> (i32, i32) {
    %c0_i32 = arith.constant 0 : i32
    %c0_i32_0 = arith.constant 0 : i32
    return %arg0, %c0_i32 : i32, i32
  }
  func.func @transform_1(%arg0: i32) -> (i32, i32) {
    %c0_i32 = arith.constant 0 : i32
    %c0_i32_0 = arith.constant 0 : i32
    %c0_i32_1 = arith.constant 0 : i32
    return %c0_i32, %c0_i32_0 : i32, i32
  }
  func.func @transform_2(%arg0: i32) -> (i32, i32) {
    %c0_i32 = arith.constant 0 : i32
    %c0_i32_0 = arith.constant 0 : i32
    %c0_i32_1 = arith.constant 0 : i32
    return %c0_i32, %c0_i32_0 : i32, i32
  }
  func.func @transform_3(%arg0: i32) -> (i32, i32) {
    %c0_i32 = arith.constant 0 : i32
    %c0_i32_0 = arith.constant 0 : i32
    return %arg0, %c0_i32 : i32, i32
  }
}

module attributes {stable_mosaic.version = 11 : i64} {
  func.func @_mm_kernel(%arg0: i32, %arg1: memref<256x96xbf16, #tpu.memory_space<vmem>>, %arg2: memref<96x128xbf16, #tpu.memory_space<vmem>>, %arg3: memref<1x128xf32, #tpu.memory_space<vmem>>, %arg4: memref<256x128xbf16, #tpu.memory_space<vmem>>) attributes {dimension_semantics = [#tpu.dimension_semantics<parallel>], iteration_bounds = array<i64: 1>, scalar_prefetch = 0 : i64, scratch_operands = 0 : i64, tpu.core_type = #tpu.core_type<tc>, window_params = [{transform_indices = @transform_0, window_bounds = array<i64: 256, 96>}, {pipeline_mode = #tpu.pipeline_mode<synchronous>, transform_indices = @transform_1, window_bounds = array<i64: 96, 128>}, {pipeline_mode = #tpu.pipeline_mode<synchronous>, transform_indices = @transform_2, window_bounds = array<i64: 1, 128>}, {transform_indices = @transform_3, window_bounds = array<i64: 256, 128>}]} {
    %c0 = arith.constant 0 : index
    %c0_0 = arith.constant 0 : index
    %0 = vector.load %arg1[%c0, %c0_0] : memref<256x96xbf16, #tpu.memory_space<vmem>>, vector<256x96xbf16>
    %c0_1 = arith.constant 0 : index
    %c0_2 = arith.constant 0 : index
    %1 = vector.load %arg2[%c0_1, %c0_2] : memref<96x128xbf16, #tpu.memory_space<vmem>>, vector<96x128xbf16>
    %cst = arith.constant dense<0.000000e+00> : vector<256x128xf32>
    %2 = tpu.matmul %0, %1, %cst {dimension_numbers = #tpu.dot_dimension_numbers<[1], [0], [0], [1], [0, 0, 1, 1], [], []>} : vector<256x96xbf16>, vector<96x128xbf16>, vector<256x128xf32> -> vector<256x128xf32>
    %c0_3 = arith.constant 0 : index
    %c0_4 = arith.constant 0 : index
    %3 = vector.load %arg3[%c0_3, %c0_4] : memref<1x128xf32, #tpu.memory_space<vmem>>, vector<1x128xf32>
    %4 = vector.broadcast %3 : vector<1x128xf32> to vector<256x128xf32>
    %5 = arith.addf %2, %4 : vector<256x128xf32>
    %cst_5 = arith.constant 0.000000e+00 : f32
    %6 = vector.broadcast %cst_5 : f32 to vector<256x128xf32>
    %7 = arith.maximumf %5, %6 : vector<256x128xf32>
    %8 = arith.truncf %7 : vector<256x128xf32> to vector<256x128xbf16>
    %c0_6 = arith.constant 0 : index
    %c0_7 = arith.constant 0 : index
    %9 = vector.load %arg4[%c0_6, %c0_7] : memref<256x128xbf16, #tpu.memory_space<vmem>>, vector<256x128xbf16>
    tpu.vector_store %arg4[%c0_6, %c0_7], %8 {strides = array<i32>} : memref<256x128xbf16, #tpu.memory_space<vmem>>, vector<256x128xbf16>,
    return
  }
  func.func @transform_0(%arg0: i32) -> (i32, i32) {
    %c0_i32 = arith.constant 0 : i32
    %c0_i32_0 = arith.constant 0 : i32
    return %arg0, %c0_i32 : i32, i32
  }
  func.func @transform_1(%arg0: i32) -> (i32, i32) {
    %c0_i32 = arith.constant 0 : i32
    %c0_i32_0 = arith.constant 0 : i32
    %c0_i32_1 = arith.constant 0 : i32
    return %c0_i32, %c0_i32_0 : i32, i32
  }
  func.func @transform_2(%arg0: i32) -> (i32, i32) {
    %c0_i32 = arith.constant 0 : i32
    %c0_i32_0 = arith.constant 0 : i32
    %c0_i32_1 = arith.constant 0 : i32
    return %c0_i32, %c0_i32_0 : i32, i32
  }
  func.func @transform_3(%arg0: i32) -> (i32, i32) {
    %c0_i32 = arith.constant 0 : i32
    %c0_i32_0 = arith.constant 0 : i32
    return %arg0, %c0_i32 : i32, i32
  }
}

module attributes {stable_mosaic.version = 11 : i64} {
  func.func @_mm_kernel(%arg0: i32, %arg1: memref<56x32xbf16, #tpu.memory_space<vmem>>, %arg2: memref<32x128xbf16, #tpu.memory_space<vmem>>, %arg3: memref<1x128xf32, #tpu.memory_space<vmem>>, %arg4: memref<56x128xbf16, #tpu.memory_space<vmem>>) attributes {dimension_semantics = [#tpu.dimension_semantics<parallel>], iteration_bounds = array<i64: 1>, scalar_prefetch = 0 : i64, scratch_operands = 0 : i64, tpu.core_type = #tpu.core_type<tc>, window_params = [{transform_indices = @transform_0, window_bounds = array<i64: 56, 32>}, {pipeline_mode = #tpu.pipeline_mode<synchronous>, transform_indices = @transform_1, window_bounds = array<i64: 32, 128>}, {pipeline_mode = #tpu.pipeline_mode<synchronous>, transform_indices = @transform_2, window_bounds = array<i64: 1, 128>}, {transform_indices = @transform_3, window_bounds = array<i64: 56, 128>}]} {
    %c0 = arith.constant 0 : index
    %c0_0 = arith.constant 0 : index
    %0 = vector.load %arg1[%c0, %c0_0] : memref<56x32xbf16, #tpu.memory_space<vmem>>, vector<56x32xbf16>
    %c0_1 = arith.constant 0 : index
    %c0_2 = arith.constant 0 : index
    %1 = vector.load %arg2[%c0_1, %c0_2] : memref<32x128xbf16, #tpu.memory_space<vmem>>, vector<32x128xbf16>
    %cst = arith.constant dense<0.000000e+00> : vector<56x128xf32>
    %2 = tpu.matmul %0, %1, %cst {dimension_numbers = #tpu.dot_dimension_numbers<[1], [0], [0], [1], [0, 0, 1, 1], [], []>} : vector<56x32xbf16>, vector<32x128xbf16>, vector<56x128xf32> -> vector<56x128xf32>
    %c0_3 = arith.constant 0 : index
    %c0_4 = arith.constant 0 : index
    %3 = vector.load %arg3[%c0_3, %c0_4] : memref<1x128xf32, #tpu.memory_space<vmem>>, vector<1x128xf32>
    %4 = vector.broadcast %3 : vector<1x128xf32> to vector<56x128xf32>
    %5 = arith.addf %2, %4 : vector<56x128xf32>
    %cst_5 = arith.constant 0.000000e+00 : f32
    %6 = vector.broadcast %cst_5 : f32 to vector<56x128xf32>
    %7 = arith.maximumf %5, %6 : vector<56x128xf32>
    %8 = arith.truncf %7 : vector<56x128xf32> to vector<56x128xbf16>
    %c0_6 = arith.constant 0 : index
    %c0_7 = arith.constant 0 : index
    %9 = vector.load %arg4[%c0_6, %c0_7] : memref<56x128xbf16, #tpu.memory_space<vmem>>, vector<56x128xbf16>
    tpu.vector_store %arg4[%c0_6, %c0_7], %8 {strides = array<i32>} : memref<56x128xbf16, #tpu.memory_space<vmem>>, vector<56x128xbf16>,
    return
  }
  func.func @transform_0(%arg0: i32) -> (i32, i32) {
    %c0_i32 = arith.constant 0 : i32
    %c0_i32_0 = arith.constant 0 : i32
    return %arg0, %c0_i32 : i32, i32
  }
  func.func @transform_1(%arg0: i32) -> (i32, i32) {
    %c0_i32 = arith.constant 0 : i32
    %c0_i32_0 = arith.constant 0 : i32
    %c0_i32_1 = arith.constant 0 : i32
    return %c0_i32, %c0_i32_0 : i32, i32
  }
  func.func @transform_2(%arg0: i32) -> (i32, i32) {
    %c0_i32 = arith.constant 0 : i32
    %c0_i32_0 = arith.constant 0 : i32
    %c0_i32_1 = arith.constant 0 : i32
    return %c0_i32, %c0_i32_0 : i32, i32
  }
  func.func @transform_3(%arg0: i32) -> (i32, i32) {
    %c0_i32 = arith.constant 0 : i32
    %c0_i32_0 = arith.constant 0 : i32
    return %arg0, %c0_i32 : i32, i32
  }
}

module attributes {stable_mosaic.version = 11 : i64} {
  func.func @_pool_kernel(%arg0: memref<9x49x24xbf16, #tpu.memory_space<vmem>>, %arg1: memref<49x24xbf16, #tpu.memory_space<vmem>>) attributes {dimension_semantics = [], scalar_prefetch = 0 : i64, scratch_operands = 0 : i64, tpu.core_type = #tpu.core_type<tc>} {
    %c0 = arith.constant 0 : index
    %c0_0 = arith.constant 0 : index
    %c0_1 = arith.constant 0 : index
    %0 = vector.load %arg0[%c0, %c0_0, %c0_1] : memref<9x49x24xbf16, #tpu.memory_space<vmem>>, vector<9x49x24xbf16>
    %cst = arith.constant dense<0xFF80> : vector<49x24xbf16>
    %1 = vector.multi_reduction <maximumf>, %0, %cst [0] : vector<9x49x24xbf16> to vector<49x24xbf16>
    %c0_2 = arith.constant 0 : index
    %c0_3 = arith.constant 0 : index
    %2 = vector.load %arg1[%c0_2, %c0_3] : memref<49x24xbf16, #tpu.memory_space<vmem>>, vector<49x24xbf16>
    tpu.vector_store %arg1[%c0_2, %c0_3], %1 {strides = array<i32>} : memref<49x24xbf16, #tpu.memory_space<vmem>>, vector<49x24xbf16>,
    return
  }
}

module attributes {stable_mosaic.version = 11 : i64} {
  func.func @_mm_kernel(%arg0: i32, %arg1: memref<56x160xbf16, #tpu.memory_space<vmem>>, %arg2: memref<160x128xbf16, #tpu.memory_space<vmem>>, %arg3: memref<1x128xf32, #tpu.memory_space<vmem>>, %arg4: memref<56x128xbf16, #tpu.memory_space<vmem>>) attributes {dimension_semantics = [#tpu.dimension_semantics<parallel>], iteration_bounds = array<i64: 1>, scalar_prefetch = 0 : i64, scratch_operands = 0 : i64, tpu.core_type = #tpu.core_type<tc>, window_params = [{transform_indices = @transform_0, window_bounds = array<i64: 56, 160>}, {pipeline_mode = #tpu.pipeline_mode<synchronous>, transform_indices = @transform_1, window_bounds = array<i64: 160, 128>}, {pipeline_mode = #tpu.pipeline_mode<synchronous>, transform_indices = @transform_2, window_bounds = array<i64: 1, 128>}, {transform_indices = @transform_3, window_bounds = array<i64: 56, 128>}]} {
    %c0 = arith.constant 0 : index
    %c0_0 = arith.constant 0 : index
    %0 = vector.load %arg1[%c0, %c0_0] : memref<56x160xbf16, #tpu.memory_space<vmem>>, vector<56x160xbf16>
    %c0_1 = arith.constant 0 : index
    %c0_2 = arith.constant 0 : index
    %1 = vector.load %arg2[%c0_1, %c0_2] : memref<160x128xbf16, #tpu.memory_space<vmem>>, vector<160x128xbf16>
    %cst = arith.constant dense<0.000000e+00> : vector<56x128xf32>
    %2 = tpu.matmul %0, %1, %cst {dimension_numbers = #tpu.dot_dimension_numbers<[1], [0], [0], [1], [0, 0, 1, 1], [], []>} : vector<56x160xbf16>, vector<160x128xbf16>, vector<56x128xf32> -> vector<56x128xf32>
    %c0_3 = arith.constant 0 : index
    %c0_4 = arith.constant 0 : index
    %3 = vector.load %arg3[%c0_3, %c0_4] : memref<1x128xf32, #tpu.memory_space<vmem>>, vector<1x128xf32>
    %4 = vector.broadcast %3 : vector<1x128xf32> to vector<56x128xf32>
    %5 = arith.addf %2, %4 : vector<56x128xf32>
    %cst_5 = arith.constant 0.000000e+00 : f32
    %6 = vector.broadcast %cst_5 : f32 to vector<56x128xf32>
    %7 = arith.maximumf %5, %6 : vector<56x128xf32>
    %8 = arith.truncf %7 : vector<56x128xf32> to vector<56x128xbf16>
    %c0_6 = arith.constant 0 : index
    %c0_7 = arith.constant 0 : index
    %9 = vector.load %arg4[%c0_6, %c0_7] : memref<56x128xbf16, #tpu.memory_space<vmem>>, vector<56x128xbf16>
    tpu.vector_store %arg4[%c0_6, %c0_7], %8 {strides = array<i32>} : memref<56x128xbf16, #tpu.memory_space<vmem>>, vector<56x128xbf16>,
    return
  }
  func.func @transform_0(%arg0: i32) -> (i32, i32) {
    %c0_i32 = arith.constant 0 : i32
    %c0_i32_0 = arith.constant 0 : i32
    return %arg0, %c0_i32 : i32, i32
  }
  func.func @transform_1(%arg0: i32) -> (i32, i32) {
    %c0_i32 = arith.constant 0 : i32
    %c0_i32_0 = arith.constant 0 : i32
    %c0_i32_1 = arith.constant 0 : i32
    return %c0_i32, %c0_i32_0 : i32, i32
  }
  func.func @transform_2(%arg0: i32) -> (i32, i32) {
    %c0_i32 = arith.constant 0 : i32
    %c0_i32_0 = arith.constant 0 : i32
    %c0_i32_1 = arith.constant 0 : i32
    return %c0_i32, %c0_i32_0 : i32, i32
  }
  func.func @transform_3(%arg0: i32) -> (i32, i32) {
    %c0_i32 = arith.constant 0 : i32
    %c0_i32_0 = arith.constant 0 : i32
    return %arg0, %c0_i32 : i32, i32
  }
}

module attributes {stable_mosaic.version = 11 : i64} {
  func.func @_mm_kernel(%arg0: i32, %arg1: memref<56x96xbf16, #tpu.memory_space<vmem>>, %arg2: memref<96x128xbf16, #tpu.memory_space<vmem>>, %arg3: memref<1x128xf32, #tpu.memory_space<vmem>>, %arg4: memref<56x128xbf16, #tpu.memory_space<vmem>>) attributes {dimension_semantics = [#tpu.dimension_semantics<parallel>], iteration_bounds = array<i64: 1>, scalar_prefetch = 0 : i64, scratch_operands = 0 : i64, tpu.core_type = #tpu.core_type<tc>, window_params = [{transform_indices = @transform_0, window_bounds = array<i64: 56, 96>}, {pipeline_mode = #tpu.pipeline_mode<synchronous>, transform_indices = @transform_1, window_bounds = array<i64: 96, 128>}, {pipeline_mode = #tpu.pipeline_mode<synchronous>, transform_indices = @transform_2, window_bounds = array<i64: 1, 128>}, {transform_indices = @transform_3, window_bounds = array<i64: 56, 128>}]} {
    %c0 = arith.constant 0 : index
    %c0_0 = arith.constant 0 : index
    %0 = vector.load %arg1[%c0, %c0_0] : memref<56x96xbf16, #tpu.memory_space<vmem>>, vector<56x96xbf16>
    %c0_1 = arith.constant 0 : index
    %c0_2 = arith.constant 0 : index
    %1 = vector.load %arg2[%c0_1, %c0_2] : memref<96x128xbf16, #tpu.memory_space<vmem>>, vector<96x128xbf16>
    %cst = arith.constant dense<0.000000e+00> : vector<56x128xf32>
    %2 = tpu.matmul %0, %1, %cst {dimension_numbers = #tpu.dot_dimension_numbers<[1], [0], [0], [1], [0, 0, 1, 1], [], []>} : vector<56x96xbf16>, vector<96x128xbf16>, vector<56x128xf32> -> vector<56x128xf32>
    %c0_3 = arith.constant 0 : index
    %c0_4 = arith.constant 0 : index
    %3 = vector.load %arg3[%c0_3, %c0_4] : memref<1x128xf32, #tpu.memory_space<vmem>>, vector<1x128xf32>
    %4 = vector.broadcast %3 : vector<1x128xf32> to vector<56x128xf32>
    %5 = arith.addf %2, %4 : vector<56x128xf32>
    %cst_5 = arith.constant 0.000000e+00 : f32
    %6 = vector.broadcast %cst_5 : f32 to vector<56x128xf32>
    %7 = arith.maximumf %5, %6 : vector<56x128xf32>
    %8 = arith.truncf %7 : vector<56x128xf32> to vector<56x128xbf16>
    %c0_6 = arith.constant 0 : index
    %c0_7 = arith.constant 0 : index
    %9 = vector.load %arg4[%c0_6, %c0_7] : memref<56x128xbf16, #tpu.memory_space<vmem>>, vector<56x128xbf16>
    tpu.vector_store %arg4[%c0_6, %c0_7], %8 {strides = array<i32>} : memref<56x128xbf16, #tpu.memory_space<vmem>>, vector<56x128xbf16>,
    return
  }
  func.func @transform_0(%arg0: i32) -> (i32, i32) {
    %c0_i32 = arith.constant 0 : i32
    %c0_i32_0 = arith.constant 0 : i32
    return %arg0, %c0_i32 : i32, i32
  }
  func.func @transform_1(%arg0: i32) -> (i32, i32) {
    %c0_i32 = arith.constant 0 : i32
    %c0_i32_0 = arith.constant 0 : i32
    %c0_i32_1 = arith.constant 0 : i32
    return %c0_i32, %c0_i32_0 : i32, i32
  }
  func.func @transform_2(%arg0: i32) -> (i32, i32) {
    %c0_i32 = arith.constant 0 : i32
    %c0_i32_0 = arith.constant 0 : i32
    %c0_i32_1 = arith.constant 0 : i32
    return %c0_i32, %c0_i32_0 : i32, i32
  }
  func.func @transform_3(%arg0: i32) -> (i32, i32) {
    %c0_i32 = arith.constant 0 : i32
    %c0_i32_0 = arith.constant 0 : i32
    return %arg0, %c0_i32 : i32, i32
  }
}

module attributes {stable_mosaic.version = 11 : i64} {
  func.func @_mm_kernel(%arg0: i32, %arg1: memref<56x128xbf16, #tpu.memory_space<vmem>>, %arg2: memref<128x128xbf16, #tpu.memory_space<vmem>>, %arg3: memref<1x128xf32, #tpu.memory_space<vmem>>, %arg4: memref<56x128xbf16, #tpu.memory_space<vmem>>) attributes {dimension_semantics = [#tpu.dimension_semantics<parallel>], iteration_bounds = array<i64: 1>, scalar_prefetch = 0 : i64, scratch_operands = 0 : i64, tpu.core_type = #tpu.core_type<tc>, window_params = [{transform_indices = @transform_0, window_bounds = array<i64: 56, 128>}, {pipeline_mode = #tpu.pipeline_mode<synchronous>, transform_indices = @transform_1, window_bounds = array<i64: 128, 128>}, {pipeline_mode = #tpu.pipeline_mode<synchronous>, transform_indices = @transform_2, window_bounds = array<i64: 1, 128>}, {transform_indices = @transform_3, window_bounds = array<i64: 56, 128>}]} {
    %c0 = arith.constant 0 : index
    %c0_0 = arith.constant 0 : index
    %0 = vector.load %arg1[%c0, %c0_0] : memref<56x128xbf16, #tpu.memory_space<vmem>>, vector<56x128xbf16>
    %c0_1 = arith.constant 0 : index
    %c0_2 = arith.constant 0 : index
    %1 = vector.load %arg2[%c0_1, %c0_2] : memref<128x128xbf16, #tpu.memory_space<vmem>>, vector<128x128xbf16>
    %cst = arith.constant dense<0.000000e+00> : vector<56x128xf32>
    %2 = tpu.matmul %0, %1, %cst {dimension_numbers = #tpu.dot_dimension_numbers<[1], [0], [0], [1], [0, 0, 1, 1], [], []>} : vector<56x128xbf16>, vector<128x128xbf16>, vector<56x128xf32> -> vector<56x128xf32>
    %c0_3 = arith.constant 0 : index
    %c0_4 = arith.constant 0 : index
    %3 = vector.load %arg3[%c0_3, %c0_4] : memref<1x128xf32, #tpu.memory_space<vmem>>, vector<1x128xf32>
    %4 = vector.broadcast %3 : vector<1x128xf32> to vector<56x128xf32>
    %5 = arith.addf %2, %4 : vector<56x128xf32>
    %cst_5 = arith.constant 0.000000e+00 : f32
    %6 = vector.broadcast %cst_5 : f32 to vector<56x128xf32>
    %7 = arith.maximumf %5, %6 : vector<56x128xf32>
    %8 = arith.truncf %7 : vector<56x128xf32> to vector<56x128xbf16>
    %c0_6 = arith.constant 0 : index
    %c0_7 = arith.constant 0 : index
    %9 = vector.load %arg4[%c0_6, %c0_7] : memref<56x128xbf16, #tpu.memory_space<vmem>>, vector<56x128xbf16>
    tpu.vector_store %arg4[%c0_6, %c0_7], %8 {strides = array<i32>} : memref<56x128xbf16, #tpu.memory_space<vmem>>, vector<56x128xbf16>,
    return
  }
  func.func @transform_0(%arg0: i32) -> (i32, i32) {
    %c0_i32 = arith.constant 0 : i32
    %c0_i32_0 = arith.constant 0 : i32
    return %arg0, %c0_i32 : i32, i32
  }
  func.func @transform_1(%arg0: i32) -> (i32, i32) {
    %c0_i32 = arith.constant 0 : i32
    %c0_i32_0 = arith.constant 0 : i32
    %c0_i32_1 = arith.constant 0 : i32
    return %c0_i32, %c0_i32_0 : i32, i32
  }
  func.func @transform_2(%arg0: i32) -> (i32, i32) {
    %c0_i32 = arith.constant 0 : i32
    %c0_i32_0 = arith.constant 0 : i32
    %c0_i32_1 = arith.constant 0 : i32
    return %c0_i32, %c0_i32_0 : i32, i32
  }
  func.func @transform_3(%arg0: i32) -> (i32, i32) {
    %c0_i32 = arith.constant 0 : i32
    %c0_i32_0 = arith.constant 0 : i32
    return %arg0, %c0_i32 : i32, i32
  }
}

module attributes {stable_mosaic.version = 11 : i64} {
  func.func @_avgpool_conv_kernel(%arg0: memref<9x49x32xbf16, #tpu.memory_space<vmem>>, %arg1: memref<32x128xbf16, #tpu.memory_space<vmem>>, %arg2: memref<1x128xf32, #tpu.memory_space<vmem>>, %arg3: memref<49x128xbf16, #tpu.memory_space<vmem>>) attributes {dimension_semantics = [], scalar_prefetch = 0 : i64, scratch_operands = 0 : i64, tpu.core_type = #tpu.core_type<tc>} {
    %c0 = arith.constant 0 : index
    %c0_0 = arith.constant 0 : index
    %c0_1 = arith.constant 0 : index
    %0 = vector.load %arg0[%c0, %c0_0, %c0_1] : memref<9x49x32xbf16, #tpu.memory_space<vmem>>, vector<9x49x32xbf16>
    %1 = arith.extf %0 : vector<9x49x32xbf16> to vector<9x49x32xf32>
    %cst = arith.constant dense<0.000000e+00> : vector<49x32xf32>
    %2 = vector.multi_reduction <add>, %1, %cst [0] : vector<9x49x32xf32> to vector<49x32xf32>
    %cst_2 = arith.constant 0.111111112 : f32
    %3 = vector.broadcast %cst_2 : f32 to vector<49x32xf32>
    %4 = arith.mulf %2, %3 : vector<49x32xf32>
    %5 = arith.truncf %4 : vector<49x32xf32> to vector<49x32xbf16>
    %c0_3 = arith.constant 0 : index
    %c0_4 = arith.constant 0 : index
    %6 = vector.load %arg1[%c0_3, %c0_4] : memref<32x128xbf16, #tpu.memory_space<vmem>>, vector<32x128xbf16>
    %cst_5 = arith.constant dense<0.000000e+00> : vector<49x128xf32>
    %7 = tpu.matmul %5, %6, %cst_5 {dimension_numbers = #tpu.dot_dimension_numbers<[1], [0], [0], [1], [0, 0, 1, 1], [], []>} : vector<49x32xbf16>, vector<32x128xbf16>, vector<49x128xf32> -> vector<49x128xf32>
    %c0_6 = arith.constant 0 : index
    %c0_7 = arith.constant 0 : index
    %8 = vector.load %arg2[%c0_6, %c0_7] : memref<1x128xf32, #tpu.memory_space<vmem>>, vector<1x128xf32>
    %9 = vector.broadcast %8 : vector<1x128xf32> to vector<49x128xf32>
    %10 = arith.addf %7, %9 : vector<49x128xf32>
    %cst_8 = arith.constant 0.000000e+00 : f32
    %11 = vector.broadcast %cst_8 : f32 to vector<49x128xf32>
    %12 = arith.maximumf %10, %11 : vector<49x128xf32>
    %13 = arith.truncf %12 : vector<49x128xf32> to vector<49x128xbf16>
    %c0_9 = arith.constant 0 : index
    %c0_10 = arith.constant 0 : index
    %14 = vector.load %arg3[%c0_9, %c0_10] : memref<49x128xbf16, #tpu.memory_space<vmem>>, vector<49x128xbf16>
    tpu.vector_store %arg3[%c0_9, %c0_10], %13 {strides = array<i32>} : memref<49x128xbf16, #tpu.memory_space<vmem>>, vector<49x128xbf16>,
    return
  }
}

module attributes {stable_mosaic.version = 11 : i64} {
  func.func @_mm_kernel(%arg0: i32, %arg1: memref<56x64xbf16, #tpu.memory_space<vmem>>, %arg2: memref<64x128xbf16, #tpu.memory_space<vmem>>, %arg3: memref<1x128xf32, #tpu.memory_space<vmem>>, %arg4: memref<56x128xbf16, #tpu.memory_space<vmem>>) attributes {dimension_semantics = [#tpu.dimension_semantics<parallel>], iteration_bounds = array<i64: 1>, scalar_prefetch = 0 : i64, scratch_operands = 0 : i64, tpu.core_type = #tpu.core_type<tc>, window_params = [{transform_indices = @transform_0, window_bounds = array<i64: 56, 64>}, {pipeline_mode = #tpu.pipeline_mode<synchronous>, transform_indices = @transform_1, window_bounds = array<i64: 64, 128>}, {pipeline_mode = #tpu.pipeline_mode<synchronous>, transform_indices = @transform_2, window_bounds = array<i64: 1, 128>}, {transform_indices = @transform_3, window_bounds = array<i64: 56, 128>}]} {
    %c0 = arith.constant 0 : index
    %c0_0 = arith.constant 0 : index
    %0 = vector.load %arg1[%c0, %c0_0] : memref<56x64xbf16, #tpu.memory_space<vmem>>, vector<56x64xbf16>
    %c0_1 = arith.constant 0 : index
    %c0_2 = arith.constant 0 : index
    %1 = vector.load %arg2[%c0_1, %c0_2] : memref<64x128xbf16, #tpu.memory_space<vmem>>, vector<64x128xbf16>
    %cst = arith.constant dense<0.000000e+00> : vector<56x128xf32>
    %2 = tpu.matmul %0, %1, %cst {dimension_numbers = #tpu.dot_dimension_numbers<[1], [0], [0], [1], [0, 0, 1, 1], [], []>} : vector<56x64xbf16>, vector<64x128xbf16>, vector<56x128xf32> -> vector<56x128xf32>
    %c0_3 = arith.constant 0 : index
    %c0_4 = arith.constant 0 : index
    %3 = vector.load %arg3[%c0_3, %c0_4] : memref<1x128xf32, #tpu.memory_space<vmem>>, vector<1x128xf32>
    %4 = vector.broadcast %3 : vector<1x128xf32> to vector<56x128xf32>
    %5 = arith.addf %2, %4 : vector<56x128xf32>
    %cst_5 = arith.constant 0.000000e+00 : f32
    %6 = vector.broadcast %cst_5 : f32 to vector<56x128xf32>
    %7 = arith.maximumf %5, %6 : vector<56x128xf32>
    %8 = arith.truncf %7 : vector<56x128xf32> to vector<56x128xbf16>
    %c0_6 = arith.constant 0 : index
    %c0_7 = arith.constant 0 : index
    %9 = vector.load %arg4[%c0_6, %c0_7] : memref<56x128xbf16, #tpu.memory_space<vmem>>, vector<56x128xbf16>
    tpu.vector_store %arg4[%c0_6, %c0_7], %8 {strides = array<i32>} : memref<56x128xbf16, #tpu.memory_space<vmem>>, vector<56x128xbf16>,
    return
  }
  func.func @transform_0(%arg0: i32) -> (i32, i32) {
    %c0_i32 = arith.constant 0 : i32
    %c0_i32_0 = arith.constant 0 : i32
    return %arg0, %c0_i32 : i32, i32
  }
  func.func @transform_1(%arg0: i32) -> (i32, i32) {
    %c0_i32 = arith.constant 0 : i32
    %c0_i32_0 = arith.constant 0 : i32
    %c0_i32_1 = arith.constant 0 : i32
    return %c0_i32, %c0_i32_0 : i32, i32
  }
  func.func @transform_2(%arg0: i32) -> (i32, i32) {
    %c0_i32 = arith.constant 0 : i32
    %c0_i32_0 = arith.constant 0 : i32
    %c0_i32_1 = arith.constant 0 : i32
    return %c0_i32, %c0_i32_0 : i32, i32
  }
  func.func @transform_3(%arg0: i32) -> (i32, i32) {
    %c0_i32 = arith.constant 0 : i32
    %c0_i32_0 = arith.constant 0 : i32
    return %arg0, %c0_i32 : i32, i32
  }
}

module attributes {stable_mosaic.version = 11 : i64} {
  func.func @_avgpool_conv_kernel(%arg0: memref<9x49x64xbf16, #tpu.memory_space<vmem>>, %arg1: memref<64x128xbf16, #tpu.memory_space<vmem>>, %arg2: memref<1x128xf32, #tpu.memory_space<vmem>>, %arg3: memref<49x128xbf16, #tpu.memory_space<vmem>>) attributes {dimension_semantics = [], scalar_prefetch = 0 : i64, scratch_operands = 0 : i64, tpu.core_type = #tpu.core_type<tc>} {
    %c0 = arith.constant 0 : index
    %c0_0 = arith.constant 0 : index
    %c0_1 = arith.constant 0 : index
    %0 = vector.load %arg0[%c0, %c0_0, %c0_1] : memref<9x49x64xbf16, #tpu.memory_space<vmem>>, vector<9x49x64xbf16>
    %1 = arith.extf %0 : vector<9x49x64xbf16> to vector<9x49x64xf32>
    %cst = arith.constant dense<0.000000e+00> : vector<49x64xf32>
    %2 = vector.multi_reduction <add>, %1, %cst [0] : vector<9x49x64xf32> to vector<49x64xf32>
    %cst_2 = arith.constant 0.111111112 : f32
    %3 = vector.broadcast %cst_2 : f32 to vector<49x64xf32>
    %4 = arith.mulf %2, %3 : vector<49x64xf32>
    %5 = arith.truncf %4 : vector<49x64xf32> to vector<49x64xbf16>
    %c0_3 = arith.constant 0 : index
    %c0_4 = arith.constant 0 : index
    %6 = vector.load %arg1[%c0_3, %c0_4] : memref<64x128xbf16, #tpu.memory_space<vmem>>, vector<64x128xbf16>
    %cst_5 = arith.constant dense<0.000000e+00> : vector<49x128xf32>
    %7 = tpu.matmul %5, %6, %cst_5 {dimension_numbers = #tpu.dot_dimension_numbers<[1], [0], [0], [1], [0, 0, 1, 1], [], []>} : vector<49x64xbf16>, vector<64x128xbf16>, vector<49x128xf32> -> vector<49x128xf32>
    %c0_6 = arith.constant 0 : index
    %c0_7 = arith.constant 0 : index
    %8 = vector.load %arg2[%c0_6, %c0_7] : memref<1x128xf32, #tpu.memory_space<vmem>>, vector<1x128xf32>
    %9 = vector.broadcast %8 : vector<1x128xf32> to vector<49x128xf32>
    %10 = arith.addf %7, %9 : vector<49x128xf32>
    %cst_8 = arith.constant 0.000000e+00 : f32
    %11 = vector.broadcast %cst_8 : f32 to vector<49x128xf32>
    %12 = arith.maximumf %10, %11 : vector<49x128xf32>
    %13 = arith.truncf %12 : vector<49x128xf32> to vector<49x128xbf16>
    %c0_9 = arith.constant 0 : index
    %c0_10 = arith.constant 0 : index
    %14 = vector.load %arg3[%c0_9, %c0_10] : memref<49x128xbf16, #tpu.memory_space<vmem>>, vector<49x128xbf16>
    tpu.vector_store %arg3[%c0_9, %c0_10], %13 {strides = array<i32>} : memref<49x128xbf16, #tpu.memory_space<vmem>>, vector<49x128xbf16>,
    return
  }
}

module attributes {stable_mosaic.version = 11 : i64} {
  func.func @_mm_kernel(%arg0: i32, %arg1: memref<16x128xbf16, #tpu.memory_space<vmem>>, %arg2: memref<128x128xbf16, #tpu.memory_space<vmem>>, %arg3: memref<1x128xf32, #tpu.memory_space<vmem>>, %arg4: memref<16x128xbf16, #tpu.memory_space<vmem>>) attributes {dimension_semantics = [#tpu.dimension_semantics<parallel>], iteration_bounds = array<i64: 1>, scalar_prefetch = 0 : i64, scratch_operands = 0 : i64, tpu.core_type = #tpu.core_type<tc>, window_params = [{transform_indices = @transform_0, window_bounds = array<i64: 16, 128>}, {pipeline_mode = #tpu.pipeline_mode<synchronous>, transform_indices = @transform_1, window_bounds = array<i64: 128, 128>}, {pipeline_mode = #tpu.pipeline_mode<synchronous>, transform_indices = @transform_2, window_bounds = array<i64: 1, 128>}, {transform_indices = @transform_3, window_bounds = array<i64: 16, 128>}]} {
    %c0 = arith.constant 0 : index
    %c0_0 = arith.constant 0 : index
    %0 = vector.load %arg1[%c0, %c0_0] : memref<16x128xbf16, #tpu.memory_space<vmem>>, vector<16x128xbf16>
    %c0_1 = arith.constant 0 : index
    %c0_2 = arith.constant 0 : index
    %1 = vector.load %arg2[%c0_1, %c0_2] : memref<128x128xbf16, #tpu.memory_space<vmem>>, vector<128x128xbf16>
    %cst = arith.constant dense<0.000000e+00> : vector<16x128xf32>
    %2 = tpu.matmul %0, %1, %cst {dimension_numbers = #tpu.dot_dimension_numbers<[1], [0], [0], [1], [0, 0, 1, 1], [], []>} : vector<16x128xbf16>, vector<128x128xbf16>, vector<16x128xf32> -> vector<16x128xf32>
    %c0_3 = arith.constant 0 : index
    %c0_4 = arith.constant 0 : index
    %3 = vector.load %arg3[%c0_3, %c0_4] : memref<1x128xf32, #tpu.memory_space<vmem>>, vector<1x128xf32>
    %4 = vector.broadcast %3 : vector<1x128xf32> to vector<16x128xf32>
    %5 = arith.addf %2, %4 : vector<16x128xf32>
    %cst_5 = arith.constant 0.000000e+00 : f32
    %6 = vector.broadcast %cst_5 : f32 to vector<16x128xf32>
    %7 = arith.maximumf %5, %6 : vector<16x128xf32>
    %8 = arith.truncf %7 : vector<16x128xf32> to vector<16x128xbf16>
    %c0_6 = arith.constant 0 : index
    %c0_7 = arith.constant 0 : index
    %9 = vector.load %arg4[%c0_6, %c0_7] : memref<16x128xbf16, #tpu.memory_space<vmem>>, vector<16x128xbf16>
    tpu.vector_store %arg4[%c0_6, %c0_7], %8 {strides = array<i32>} : memref<16x128xbf16, #tpu.memory_space<vmem>>, vector<16x128xbf16>,
    return
  }
  func.func @transform_0(%arg0: i32) -> (i32, i32) {
    %c0_i32 = arith.constant 0 : i32
    %c0_i32_0 = arith.constant 0 : i32
    return %arg0, %c0_i32 : i32, i32
  }
  func.func @transform_1(%arg0: i32) -> (i32, i32) {
    %c0_i32 = arith.constant 0 : i32
    %c0_i32_0 = arith.constant 0 : i32
    %c0_i32_1 = arith.constant 0 : i32
    return %c0_i32, %c0_i32_0 : i32, i32
  }
  func.func @transform_2(%arg0: i32) -> (i32, i32) {
    %c0_i32 = arith.constant 0 : i32
    %c0_i32_0 = arith.constant 0 : i32
    %c0_i32_1 = arith.constant 0 : i32
    return %c0_i32, %c0_i32_0 : i32, i32
  }
  func.func @transform_3(%arg0: i32) -> (i32, i32) {
    %c0_i32 = arith.constant 0 : i32
    %c0_i32_0 = arith.constant 0 : i32
    return %arg0, %c0_i32 : i32, i32
  }
}

module attributes {stable_mosaic.version = 11 : i64} {
  func.func @_mm_kernel(%arg0: i32, %arg1: memref<16x96xbf16, #tpu.memory_space<vmem>>, %arg2: memref<96x128xbf16, #tpu.memory_space<vmem>>, %arg3: memref<1x128xf32, #tpu.memory_space<vmem>>, %arg4: memref<16x128xbf16, #tpu.memory_space<vmem>>) attributes {dimension_semantics = [#tpu.dimension_semantics<parallel>], iteration_bounds = array<i64: 1>, scalar_prefetch = 0 : i64, scratch_operands = 0 : i64, tpu.core_type = #tpu.core_type<tc>, window_params = [{transform_indices = @transform_0, window_bounds = array<i64: 16, 96>}, {pipeline_mode = #tpu.pipeline_mode<synchronous>, transform_indices = @transform_1, window_bounds = array<i64: 96, 128>}, {pipeline_mode = #tpu.pipeline_mode<synchronous>, transform_indices = @transform_2, window_bounds = array<i64: 1, 128>}, {transform_indices = @transform_3, window_bounds = array<i64: 16, 128>}]} {
    %c0 = arith.constant 0 : index
    %c0_0 = arith.constant 0 : index
    %0 = vector.load %arg1[%c0, %c0_0] : memref<16x96xbf16, #tpu.memory_space<vmem>>, vector<16x96xbf16>
    %c0_1 = arith.constant 0 : index
    %c0_2 = arith.constant 0 : index
    %1 = vector.load %arg2[%c0_1, %c0_2] : memref<96x128xbf16, #tpu.memory_space<vmem>>, vector<96x128xbf16>
    %cst = arith.constant dense<0.000000e+00> : vector<16x128xf32>
    %2 = tpu.matmul %0, %1, %cst {dimension_numbers = #tpu.dot_dimension_numbers<[1], [0], [0], [1], [0, 0, 1, 1], [], []>} : vector<16x96xbf16>, vector<96x128xbf16>, vector<16x128xf32> -> vector<16x128xf32>
    %c0_3 = arith.constant 0 : index
    %c0_4 = arith.constant 0 : index
    %3 = vector.load %arg3[%c0_3, %c0_4] : memref<1x128xf32, #tpu.memory_space<vmem>>, vector<1x128xf32>
    %4 = vector.broadcast %3 : vector<1x128xf32> to vector<16x128xf32>
    %5 = arith.addf %2, %4 : vector<16x128xf32>
    %cst_5 = arith.constant 0.000000e+00 : f32
    %6 = vector.broadcast %cst_5 : f32 to vector<16x128xf32>
    %7 = arith.maximumf %5, %6 : vector<16x128xf32>
    %8 = arith.truncf %7 : vector<16x128xf32> to vector<16x128xbf16>
    %c0_6 = arith.constant 0 : index
    %c0_7 = arith.constant 0 : index
    %9 = vector.load %arg4[%c0_6, %c0_7] : memref<16x128xbf16, #tpu.memory_space<vmem>>, vector<16x128xbf16>
    tpu.vector_store %arg4[%c0_6, %c0_7], %8 {strides = array<i32>} : memref<16x128xbf16, #tpu.memory_space<vmem>>, vector<16x128xbf16>,
    return
  }
  func.func @transform_0(%arg0: i32) -> (i32, i32) {
    %c0_i32 = arith.constant 0 : i32
    %c0_i32_0 = arith.constant 0 : i32
    return %arg0, %c0_i32 : i32, i32
  }
  func.func @transform_1(%arg0: i32) -> (i32, i32) {
    %c0_i32 = arith.constant 0 : i32
    %c0_i32_0 = arith.constant 0 : i32
    %c0_i32_1 = arith.constant 0 : i32
    return %c0_i32, %c0_i32_0 : i32, i32
  }
  func.func @transform_2(%arg0: i32) -> (i32, i32) {
    %c0_i32 = arith.constant 0 : i32
    %c0_i32_0 = arith.constant 0 : i32
    %c0_i32_1 = arith.constant 0 : i32
    return %c0_i32, %c0_i32_0 : i32, i32
  }
  func.func @transform_3(%arg0: i32) -> (i32, i32) {
    %c0_i32 = arith.constant 0 : i32
    %c0_i32_0 = arith.constant 0 : i32
    return %arg0, %c0_i32 : i32, i32
  }
}

module attributes {stable_mosaic.version = 11 : i64} {
  func.func @_pool_kernel(%arg0: memref<9x9x36xbf16, #tpu.memory_space<vmem>>, %arg1: memref<9x36xbf16, #tpu.memory_space<vmem>>) attributes {dimension_semantics = [], scalar_prefetch = 0 : i64, scratch_operands = 0 : i64, tpu.core_type = #tpu.core_type<tc>} {
    %c0 = arith.constant 0 : index
    %c0_0 = arith.constant 0 : index
    %c0_1 = arith.constant 0 : index
    %0 = vector.load %arg0[%c0, %c0_0, %c0_1] : memref<9x9x36xbf16, #tpu.memory_space<vmem>>, vector<9x9x36xbf16>
    %cst = arith.constant dense<0xFF80> : vector<9x36xbf16>
    %1 = vector.multi_reduction <maximumf>, %0, %cst [0] : vector<9x9x36xbf16> to vector<9x36xbf16>
    %c0_2 = arith.constant 0 : index
    %c0_3 = arith.constant 0 : index
    %2 = vector.load %arg1[%c0_2, %c0_3] : memref<9x36xbf16, #tpu.memory_space<vmem>>, vector<9x36xbf16>
    tpu.vector_store %arg1[%c0_2, %c0_3], %1 {strides = array<i32>} : memref<9x36xbf16, #tpu.memory_space<vmem>>, vector<9x36xbf16>,
    return
  }
}

module attributes {stable_mosaic.version = 11 : i64} {
  func.func @_mm_kernel(%arg0: i32, %arg1: memref<16x352xbf16, #tpu.memory_space<vmem>>, %arg2: memref<352x128xbf16, #tpu.memory_space<vmem>>, %arg3: memref<1x128xf32, #tpu.memory_space<vmem>>, %arg4: memref<16x128xbf16, #tpu.memory_space<vmem>>) attributes {dimension_semantics = [#tpu.dimension_semantics<parallel>], iteration_bounds = array<i64: 1>, scalar_prefetch = 0 : i64, scratch_operands = 0 : i64, tpu.core_type = #tpu.core_type<tc>, window_params = [{transform_indices = @transform_0, window_bounds = array<i64: 16, 352>}, {pipeline_mode = #tpu.pipeline_mode<synchronous>, transform_indices = @transform_1, window_bounds = array<i64: 352, 128>}, {pipeline_mode = #tpu.pipeline_mode<synchronous>, transform_indices = @transform_2, window_bounds = array<i64: 1, 128>}, {transform_indices = @transform_3, window_bounds = array<i64: 16, 128>}]} {
    %c0 = arith.constant 0 : index
    %c0_0 = arith.constant 0 : index
    %0 = vector.load %arg1[%c0, %c0_0] : memref<16x352xbf16, #tpu.memory_space<vmem>>, vector<16x352xbf16>
    %c0_1 = arith.constant 0 : index
    %c0_2 = arith.constant 0 : index
    %1 = vector.load %arg2[%c0_1, %c0_2] : memref<352x128xbf16, #tpu.memory_space<vmem>>, vector<352x128xbf16>
    %cst = arith.constant dense<0.000000e+00> : vector<16x128xf32>
    %2 = tpu.matmul %0, %1, %cst {dimension_numbers = #tpu.dot_dimension_numbers<[1], [0], [0], [1], [0, 0, 1, 1], [], []>} : vector<16x352xbf16>, vector<352x128xbf16>, vector<16x128xf32> -> vector<16x128xf32>
    %c0_3 = arith.constant 0 : index
    %c0_4 = arith.constant 0 : index
    %3 = vector.load %arg3[%c0_3, %c0_4] : memref<1x128xf32, #tpu.memory_space<vmem>>, vector<1x128xf32>
    %4 = vector.broadcast %3 : vector<1x128xf32> to vector<16x128xf32>
    %5 = arith.addf %2, %4 : vector<16x128xf32>
    %cst_5 = arith.constant 0.000000e+00 : f32
    %6 = vector.broadcast %cst_5 : f32 to vector<16x128xf32>
    %7 = arith.maximumf %5, %6 : vector<16x128xf32>
    %8 = arith.truncf %7 : vector<16x128xf32> to vector<16x128xbf16>
    %c0_6 = arith.constant 0 : index
    %c0_7 = arith.constant 0 : index
    %9 = vector.load %arg4[%c0_6, %c0_7] : memref<16x128xbf16, #tpu.memory_space<vmem>>, vector<16x128xbf16>
    tpu.vector_store %arg4[%c0_6, %c0_7], %8 {strides = array<i32>} : memref<16x128xbf16, #tpu.memory_space<vmem>>, vector<16x128xbf16>,
    return
  }
  func.func @transform_0(%arg0: i32) -> (i32, i32) {
    %c0_i32 = arith.constant 0 : i32
    %c0_i32_0 = arith.constant 0 : i32
    return %arg0, %c0_i32 : i32, i32
  }
  func.func @transform_1(%arg0: i32) -> (i32, i32) {
    %c0_i32 = arith.constant 0 : i32
    %c0_i32_0 = arith.constant 0 : i32
    %c0_i32_1 = arith.constant 0 : i32
    return %c0_i32, %c0_i32_0 : i32, i32
  }
  func.func @transform_2(%arg0: i32) -> (i32, i32) {
    %c0_i32 = arith.constant 0 : i32
    %c0_i32_0 = arith.constant 0 : i32
    %c0_i32_1 = arith.constant 0 : i32
    return %c0_i32, %c0_i32_0 : i32, i32
  }
  func.func @transform_3(%arg0: i32) -> (i32, i32) {
    %c0_i32 = arith.constant 0 : i32
    %c0_i32_0 = arith.constant 0 : i32
    return %arg0, %c0_i32 : i32, i32
  }
}

module attributes {stable_mosaic.version = 11 : i64} {
  func.func @_avgpool_conv_kernel(%arg0: memref<9x9x96xbf16, #tpu.memory_space<vmem>>, %arg1: memref<96x128xbf16, #tpu.memory_space<vmem>>, %arg2: memref<1x128xf32, #tpu.memory_space<vmem>>, %arg3: memref<9x128xbf16, #tpu.memory_space<vmem>>) attributes {dimension_semantics = [], scalar_prefetch = 0 : i64, scratch_operands = 0 : i64, tpu.core_type = #tpu.core_type<tc>} {
    %c0 = arith.constant 0 : index
    %c0_0 = arith.constant 0 : index
    %c0_1 = arith.constant 0 : index
    %0 = vector.load %arg0[%c0, %c0_0, %c0_1] : memref<9x9x96xbf16, #tpu.memory_space<vmem>>, vector<9x9x96xbf16>
    %1 = arith.extf %0 : vector<9x9x96xbf16> to vector<9x9x96xf32>
    %cst = arith.constant dense<0.000000e+00> : vector<9x96xf32>
    %2 = vector.multi_reduction <add>, %1, %cst [0] : vector<9x9x96xf32> to vector<9x96xf32>
    %cst_2 = arith.constant 0.111111112 : f32
    %3 = vector.broadcast %cst_2 : f32 to vector<9x96xf32>
    %4 = arith.mulf %2, %3 : vector<9x96xf32>
    %5 = arith.truncf %4 : vector<9x96xf32> to vector<9x96xbf16>
    %c0_3 = arith.constant 0 : index
    %c0_4 = arith.constant 0 : index
    %6 = vector.load %arg1[%c0_3, %c0_4] : memref<96x128xbf16, #tpu.memory_space<vmem>>, vector<96x128xbf16>
    %cst_5 = arith.constant dense<0.000000e+00> : vector<9x128xf32>
    %7 = tpu.matmul %5, %6, %cst_5 {dimension_numbers = #tpu.dot_dimension_numbers<[1], [0], [0], [1], [0, 0, 1, 1], [], []>} : vector<9x96xbf16>, vector<96x128xbf16>, vector<9x128xf32> -> vector<9x128xf32>
    %c0_6 = arith.constant 0 : index
    %c0_7 = arith.constant 0 : index
    %8 = vector.load %arg2[%c0_6, %c0_7] : memref<1x128xf32, #tpu.memory_space<vmem>>, vector<1x128xf32>
    %9 = vector.broadcast %8 : vector<1x128xf32> to vector<9x128xf32>
    %10 = arith.addf %7, %9 : vector<9x128xf32>
    %cst_8 = arith.constant 0.000000e+00 : f32
    %11 = vector.broadcast %cst_8 : f32 to vector<9x128xf32>
    %12 = arith.maximumf %10, %11 : vector<9x128xf32>
    %13 = arith.truncf %12 : vector<9x128xf32> to vector<9x128xbf16>
    %c0_9 = arith.constant 0 : index
    %c0_10 = arith.constant 0 : index
    %14 = vector.load %arg3[%c0_9, %c0_10] : memref<9x128xbf16, #tpu.memory_space<vmem>>, vector<9x128xbf16>
    tpu.vector_store %arg3[%c0_9, %c0_10], %13 {strides = array<i32>} : memref<9x128xbf16, #tpu.memory_space<vmem>>, vector<9x128xbf16>,
    return
  }
}

module attributes {stable_mosaic.version = 11 : i64} {
  func.func @_mm_kernel(%arg0: i32, %arg1: memref<16x160xbf16, #tpu.memory_space<vmem>>, %arg2: memref<160x128xbf16, #tpu.memory_space<vmem>>, %arg3: memref<1x128xf32, #tpu.memory_space<vmem>>, %arg4: memref<16x128xbf16, #tpu.memory_space<vmem>>) attributes {dimension_semantics = [#tpu.dimension_semantics<parallel>], iteration_bounds = array<i64: 1>, scalar_prefetch = 0 : i64, scratch_operands = 0 : i64, tpu.core_type = #tpu.core_type<tc>, window_params = [{transform_indices = @transform_0, window_bounds = array<i64: 16, 160>}, {pipeline_mode = #tpu.pipeline_mode<synchronous>, transform_indices = @transform_1, window_bounds = array<i64: 160, 128>}, {pipeline_mode = #tpu.pipeline_mode<synchronous>, transform_indices = @transform_2, window_bounds = array<i64: 1, 128>}, {transform_indices = @transform_3, window_bounds = array<i64: 16, 128>}]} {
    %c0 = arith.constant 0 : index
    %c0_0 = arith.constant 0 : index
    %0 = vector.load %arg1[%c0, %c0_0] : memref<16x160xbf16, #tpu.memory_space<vmem>>, vector<16x160xbf16>
    %c0_1 = arith.constant 0 : index
    %c0_2 = arith.constant 0 : index
    %1 = vector.load %arg2[%c0_1, %c0_2] : memref<160x128xbf16, #tpu.memory_space<vmem>>, vector<160x128xbf16>
    %cst = arith.constant dense<0.000000e+00> : vector<16x128xf32>
    %2 = tpu.matmul %0, %1, %cst {dimension_numbers = #tpu.dot_dimension_numbers<[1], [0], [0], [1], [0, 0, 1, 1], [], []>} : vector<16x160xbf16>, vector<160x128xbf16>, vector<16x128xf32> -> vector<16x128xf32>
    %c0_3 = arith.constant 0 : index
    %c0_4 = arith.constant 0 : index
    %3 = vector.load %arg3[%c0_3, %c0_4] : memref<1x128xf32, #tpu.memory_space<vmem>>, vector<1x128xf32>
    %4 = vector.broadcast %3 : vector<1x128xf32> to vector<16x128xf32>
    %5 = arith.addf %2, %4 : vector<16x128xf32>
    %cst_5 = arith.constant 0.000000e+00 : f32
    %6 = vector.broadcast %cst_5 : f32 to vector<16x128xf32>
    %7 = arith.maximumf %5, %6 : vector<16x128xf32>
    %8 = arith.truncf %7 : vector<16x128xf32> to vector<16x128xbf16>
    %c0_6 = arith.constant 0 : index
    %c0_7 = arith.constant 0 : index
    %9 = vector.load %arg4[%c0_6, %c0_7] : memref<16x128xbf16, #tpu.memory_space<vmem>>, vector<16x128xbf16>
    tpu.vector_store %arg4[%c0_6, %c0_7], %8 {strides = array<i32>} : memref<16x128xbf16, #tpu.memory_space<vmem>>, vector<16x128xbf16>,
    return
  }
  func.func @transform_0(%arg0: i32) -> (i32, i32) {
    %c0_i32 = arith.constant 0 : i32
    %c0_i32_0 = arith.constant 0 : i32
    return %arg0, %c0_i32 : i32, i32
  }
  func.func @transform_1(%arg0: i32) -> (i32, i32) {
    %c0_i32 = arith.constant 0 : i32
    %c0_i32_0 = arith.constant 0 : i32
    %c0_i32_1 = arith.constant 0 : i32
    return %c0_i32, %c0_i32_0 : i32, i32
  }
  func.func @transform_2(%arg0: i32) -> (i32, i32) {
    %c0_i32 = arith.constant 0 : i32
    %c0_i32_0 = arith.constant 0 : i32
    %c0_i32_1 = arith.constant 0 : i32
    return %c0_i32, %c0_i32_0 : i32, i32
  }
  func.func @transform_3(%arg0: i32) -> (i32, i32) {
    %c0_i32 = arith.constant 0 : i32
    %c0_i32_0 = arith.constant 0 : i32
    return %arg0, %c0_i32 : i32, i32
  }
}

module attributes {stable_mosaic.version = 11 : i64} {
  func.func @_mm_kernel(%arg0: i32, %arg1: memref<16x192xbf16, #tpu.memory_space<vmem>>, %arg2: memref<192x128xbf16, #tpu.memory_space<vmem>>, %arg3: memref<1x128xf32, #tpu.memory_space<vmem>>, %arg4: memref<16x128xbf16, #tpu.memory_space<vmem>>) attributes {dimension_semantics = [#tpu.dimension_semantics<parallel>], iteration_bounds = array<i64: 1>, scalar_prefetch = 0 : i64, scratch_operands = 0 : i64, tpu.core_type = #tpu.core_type<tc>, window_params = [{transform_indices = @transform_0, window_bounds = array<i64: 16, 192>}, {pipeline_mode = #tpu.pipeline_mode<synchronous>, transform_indices = @transform_1, window_bounds = array<i64: 192, 128>}, {pipeline_mode = #tpu.pipeline_mode<synchronous>, transform_indices = @transform_2, window_bounds = array<i64: 1, 128>}, {transform_indices = @transform_3, window_bounds = array<i64: 16, 128>}]} {
    %c0 = arith.constant 0 : index
    %c0_0 = arith.constant 0 : index
    %0 = vector.load %arg1[%c0, %c0_0] : memref<16x192xbf16, #tpu.memory_space<vmem>>, vector<16x192xbf16>
    %c0_1 = arith.constant 0 : index
    %c0_2 = arith.constant 0 : index
    %1 = vector.load %arg2[%c0_1, %c0_2] : memref<192x128xbf16, #tpu.memory_space<vmem>>, vector<192x128xbf16>
    %cst = arith.constant dense<0.000000e+00> : vector<16x128xf32>
    %2 = tpu.matmul %0, %1, %cst {dimension_numbers = #tpu.dot_dimension_numbers<[1], [0], [0], [1], [0, 0, 1, 1], [], []>} : vector<16x192xbf16>, vector<192x128xbf16>, vector<16x128xf32> -> vector<16x128xf32>
    %c0_3 = arith.constant 0 : index
    %c0_4 = arith.constant 0 : index
    %3 = vector.load %arg3[%c0_3, %c0_4] : memref<1x128xf32, #tpu.memory_space<vmem>>, vector<1x128xf32>
    %4 = vector.broadcast %3 : vector<1x128xf32> to vector<16x128xf32>
    %5 = arith.addf %2, %4 : vector<16x128xf32>
    %cst_5 = arith.constant 0.000000e+00 : f32
    %6 = vector.broadcast %cst_5 : f32 to vector<16x128xf32>
    %7 = arith.maximumf %5, %6 : vector<16x128xf32>
    %8 = arith.truncf %7 : vector<16x128xf32> to vector<16x128xbf16>
    %c0_6 = arith.constant 0 : index
    %c0_7 = arith.constant 0 : index
    %9 = vector.load %arg4[%c0_6, %c0_7] : memref<16x128xbf16, #tpu.memory_space<vmem>>, vector<16x128xbf16>
    tpu.vector_store %arg4[%c0_6, %c0_7], %8 {strides = array<i32>} : memref<16x128xbf16, #tpu.memory_space<vmem>>, vector<16x128xbf16>,
    return
  }
  func.func @transform_0(%arg0: i32) -> (i32, i32) {
    %c0_i32 = arith.constant 0 : i32
    %c0_i32_0 = arith.constant 0 : i32
    return %arg0, %c0_i32 : i32, i32
  }
  func.func @transform_1(%arg0: i32) -> (i32, i32) {
    %c0_i32 = arith.constant 0 : i32
    %c0_i32_0 = arith.constant 0 : i32
    %c0_i32_1 = arith.constant 0 : i32
    return %c0_i32, %c0_i32_0 : i32, i32
  }
  func.func @transform_2(%arg0: i32) -> (i32, i32) {
    %c0_i32 = arith.constant 0 : i32
    %c0_i32_0 = arith.constant 0 : i32
    %c0_i32_1 = arith.constant 0 : i32
    return %c0_i32, %c0_i32_0 : i32, i32
  }
  func.func @transform_3(%arg0: i32) -> (i32, i32) {
    %c0_i32 = arith.constant 0 : i32
    %c0_i32_0 = arith.constant 0 : i32
    return %arg0, %c0_i32 : i32, i32
  }
}

module attributes {stable_mosaic.version = 11 : i64} {
  func.func @_mm_kernel(%arg0: i32, %arg1: memref<8x224xbf16, #tpu.memory_space<vmem>>, %arg2: memref<224x128xbf16, #tpu.memory_space<vmem>>, %arg3: memref<1x128xf32, #tpu.memory_space<vmem>>, %arg4: memref<8x128xbf16, #tpu.memory_space<vmem>>) attributes {dimension_semantics = [#tpu.dimension_semantics<parallel>], iteration_bounds = array<i64: 1>, scalar_prefetch = 0 : i64, scratch_operands = 0 : i64, tpu.core_type = #tpu.core_type<tc>, window_params = [{transform_indices = @transform_0, window_bounds = array<i64: 8, 224>}, {pipeline_mode = #tpu.pipeline_mode<synchronous>, transform_indices = @transform_1, window_bounds = array<i64: 224, 128>}, {pipeline_mode = #tpu.pipeline_mode<synchronous>, transform_indices = @transform_2, window_bounds = array<i64: 1, 128>}, {transform_indices = @transform_3, window_bounds = array<i64: 8, 128>}]} {
    %c0 = arith.constant 0 : index
    %c0_0 = arith.constant 0 : index
    %0 = vector.load %arg1[%c0, %c0_0] : memref<8x224xbf16, #tpu.memory_space<vmem>>, vector<8x224xbf16>
    %c0_1 = arith.constant 0 : index
    %c0_2 = arith.constant 0 : index
    %1 = vector.load %arg2[%c0_1, %c0_2] : memref<224x128xbf16, #tpu.memory_space<vmem>>, vector<224x128xbf16>
    %cst = arith.constant dense<0.000000e+00> : vector<8x128xf32>
    %2 = tpu.matmul %0, %1, %cst {dimension_numbers = #tpu.dot_dimension_numbers<[1], [0], [0], [1], [0, 0, 1, 1], [], []>} : vector<8x224xbf16>, vector<224x128xbf16>, vector<8x128xf32> -> vector<8x128xf32>
    %c0_3 = arith.constant 0 : index
    %c0_4 = arith.constant 0 : index
    %3 = vector.load %arg3[%c0_3, %c0_4] : memref<1x128xf32, #tpu.memory_space<vmem>>, vector<1x128xf32>
    %4 = vector.broadcast %3 : vector<1x128xf32> to vector<8x128xf32>
    %5 = arith.addf %2, %4 : vector<8x128xf32>
    %cst_5 = arith.constant 0.000000e+00 : f32
    %6 = vector.broadcast %cst_5 : f32 to vector<8x128xf32>
    %7 = arith.maximumf %5, %6 : vector<8x128xf32>
    %8 = arith.truncf %7 : vector<8x128xf32> to vector<8x128xbf16>
    %c0_6 = arith.constant 0 : index
    %c0_7 = arith.constant 0 : index
    %9 = vector.load %arg4[%c0_6, %c0_7] : memref<8x128xbf16, #tpu.memory_space<vmem>>, vector<8x128xbf16>
    tpu.vector_store %arg4[%c0_6, %c0_7], %8 {strides = array<i32>} : memref<8x128xbf16, #tpu.memory_space<vmem>>, vector<8x128xbf16>,
    return
  }
  func.func @transform_0(%arg0: i32) -> (i32, i32) {
    %c0_i32 = arith.constant 0 : i32
    %c0_i32_0 = arith.constant 0 : i32
    return %arg0, %c0_i32 : i32, i32
  }
  func.func @transform_1(%arg0: i32) -> (i32, i32) {
    %c0_i32 = arith.constant 0 : i32
    %c0_i32_0 = arith.constant 0 : i32
    %c0_i32_1 = arith.constant 0 : i32
    return %c0_i32, %c0_i32_0 : i32, i32
  }
  func.func @transform_2(%arg0: i32) -> (i32, i32) {
    %c0_i32 = arith.constant 0 : i32
    %c0_i32_0 = arith.constant 0 : i32
    %c0_i32_1 = arith.constant 0 : i32
    return %c0_i32, %c0_i32_0 : i32, i32
  }
  func.func @transform_3(%arg0: i32) -> (i32, i32) {
    %c0_i32 = arith.constant 0 : i32
    %c0_i32_0 = arith.constant 0 : i32
    return %arg0, %c0_i32 : i32, i32
  }
}

module attributes {stable_mosaic.version = 11 : i64} {
  func.func @_pool_kernel(%arg0: memref<9x1x96xbf16, #tpu.memory_space<vmem>>, %arg1: memref<1x96xbf16, #tpu.memory_space<vmem>>) attributes {dimension_semantics = [], scalar_prefetch = 0 : i64, scratch_operands = 0 : i64, tpu.core_type = #tpu.core_type<tc>} {
    %c0 = arith.constant 0 : index
    %c0_0 = arith.constant 0 : index
    %c0_1 = arith.constant 0 : index
    %0 = vector.load %arg0[%c0, %c0_0, %c0_1] : memref<9x1x96xbf16, #tpu.memory_space<vmem>>, vector<9x1x96xbf16>
    %cst = arith.constant dense<0xFF80> : vector<1x96xbf16>
    %1 = vector.multi_reduction <maximumf>, %0, %cst [0] : vector<9x1x96xbf16> to vector<1x96xbf16>
    %c0_2 = arith.constant 0 : index
    %c0_3 = arith.constant 0 : index
    %2 = vector.load %arg1[%c0_2, %c0_3] : memref<1x96xbf16, #tpu.memory_space<vmem>>, vector<1x96xbf16>
    tpu.vector_store %arg1[%c0_2, %c0_3], %1 {strides = array<i32>} : memref<1x96xbf16, #tpu.memory_space<vmem>>, vector<1x96xbf16>,
    return
  }
}

module attributes {stable_mosaic.version = 11 : i64} {
  func.func @_avgpool_conv_kernel(%arg0: memref<9x1x160xbf16, #tpu.memory_space<vmem>>, %arg1: memref<160x128xbf16, #tpu.memory_space<vmem>>, %arg2: memref<1x128xf32, #tpu.memory_space<vmem>>, %arg3: memref<1x128xbf16, #tpu.memory_space<vmem>>) attributes {dimension_semantics = [], scalar_prefetch = 0 : i64, scratch_operands = 0 : i64, tpu.core_type = #tpu.core_type<tc>} {
    %c0 = arith.constant 0 : index
    %c0_0 = arith.constant 0 : index
    %c0_1 = arith.constant 0 : index
    %0 = vector.load %arg0[%c0, %c0_0, %c0_1] : memref<9x1x160xbf16, #tpu.memory_space<vmem>>, vector<9x1x160xbf16>
    %1 = arith.extf %0 : vector<9x1x160xbf16> to vector<9x1x160xf32>
    %cst = arith.constant dense<0.000000e+00> : vector<1x160xf32>
    %2 = vector.multi_reduction <add>, %1, %cst [0] : vector<9x1x160xf32> to vector<1x160xf32>
    %cst_2 = arith.constant 0.111111112 : f32
    %3 = vector.broadcast %cst_2 : f32 to vector<1x160xf32>
    %4 = arith.mulf %2, %3 : vector<1x160xf32>
    %5 = arith.truncf %4 : vector<1x160xf32> to vector<1x160xbf16>
    %c0_3 = arith.constant 0 : index
    %c0_4 = arith.constant 0 : index
    %6 = vector.load %arg1[%c0_3, %c0_4] : memref<160x128xbf16, #tpu.memory_space<vmem>>, vector<160x128xbf16>
    %cst_5 = arith.constant dense<0.000000e+00> : vector<1x128xf32>
    %7 = tpu.matmul %5, %6, %cst_5 {dimension_numbers = #tpu.dot_dimension_numbers<[1], [0], [0], [1], [0, 0, 1, 1], [], []>} : vector<1x160xbf16>, vector<160x128xbf16>, vector<1x128xf32> -> vector<1x128xf32>
    %c0_6 = arith.constant 0 : index
    %c0_7 = arith.constant 0 : index
    %8 = vector.load %arg2[%c0_6, %c0_7] : memref<1x128xf32, #tpu.memory_space<vmem>>, vector<1x128xf32>
    %9 = arith.addf %7, %8 : vector<1x128xf32>
    %cst_8 = arith.constant 0.000000e+00 : f32
    %10 = vector.broadcast %cst_8 : f32 to vector<1x128xf32>
    %11 = arith.maximumf %9, %10 : vector<1x128xf32>
    %12 = arith.truncf %11 : vector<1x128xf32> to vector<1x128xbf16>
    %c0_9 = arith.constant 0 : index
    %c0_10 = arith.constant 0 : index
    %13 = vector.load %arg3[%c0_9, %c0_10] : memref<1x128xbf16, #tpu.memory_space<vmem>>, vector<1x128xbf16>
    tpu.vector_store %arg3[%c0_9, %c0_10], %12 {strides = array<i32>} : memref<1x128xbf16, #tpu.memory_space<vmem>>, vector<1x128xbf16>,
    return
  }
}

module attributes {stable_mosaic.version = 11 : i64} {
  func.func @_mm_kernel(%arg0: i32, %arg1: memref<8x160xbf16, #tpu.memory_space<vmem>>, %arg2: memref<160x256xbf16, #tpu.memory_space<vmem>>, %arg3: memref<1x256xf32, #tpu.memory_space<vmem>>, %arg4: memref<8x256xbf16, #tpu.memory_space<vmem>>) attributes {dimension_semantics = [#tpu.dimension_semantics<parallel>], iteration_bounds = array<i64: 1>, scalar_prefetch = 0 : i64, scratch_operands = 0 : i64, tpu.core_type = #tpu.core_type<tc>, window_params = [{transform_indices = @transform_0, window_bounds = array<i64: 8, 160>}, {pipeline_mode = #tpu.pipeline_mode<synchronous>, transform_indices = @transform_1, window_bounds = array<i64: 160, 256>}, {pipeline_mode = #tpu.pipeline_mode<synchronous>, transform_indices = @transform_2, window_bounds = array<i64: 1, 256>}, {transform_indices = @transform_3, window_bounds = array<i64: 8, 256>}]} {
    %c0 = arith.constant 0 : index
    %c0_0 = arith.constant 0 : index
    %0 = vector.load %arg1[%c0, %c0_0] : memref<8x160xbf16, #tpu.memory_space<vmem>>, vector<8x160xbf16>
    %c0_1 = arith.constant 0 : index
    %c0_2 = arith.constant 0 : index
    %1 = vector.load %arg2[%c0_1, %c0_2] : memref<160x256xbf16, #tpu.memory_space<vmem>>, vector<160x256xbf16>
    %cst = arith.constant dense<0.000000e+00> : vector<8x256xf32>
    %2 = tpu.matmul %0, %1, %cst {dimension_numbers = #tpu.dot_dimension_numbers<[1], [0], [0], [1], [0, 0, 1, 1], [], []>} : vector<8x160xbf16>, vector<160x256xbf16>, vector<8x256xf32> -> vector<8x256xf32>
    %c0_3 = arith.constant 0 : index
    %c0_4 = arith.constant 0 : index
    %3 = vector.load %arg3[%c0_3, %c0_4] : memref<1x256xf32, #tpu.memory_space<vmem>>, vector<1x256xf32>
    %4 = vector.broadcast %3 : vector<1x256xf32> to vector<8x256xf32>
    %5 = arith.addf %2, %4 : vector<8x256xf32>
    %cst_5 = arith.constant 0.000000e+00 : f32
    %6 = vector.broadcast %cst_5 : f32 to vector<8x256xf32>
    %7 = arith.maximumf %5, %6 : vector<8x256xf32>
    %8 = arith.truncf %7 : vector<8x256xf32> to vector<8x256xbf16>
    %c0_6 = arith.constant 0 : index
    %c0_7 = arith.constant 0 : index
    %9 = vector.load %arg4[%c0_6, %c0_7] : memref<8x256xbf16, #tpu.memory_space<vmem>>, vector<8x256xbf16>
    tpu.vector_store %arg4[%c0_6, %c0_7], %8 {strides = array<i32>} : memref<8x256xbf16, #tpu.memory_space<vmem>>, vector<8x256xbf16>,
    return
  }
  func.func @transform_0(%arg0: i32) -> (i32, i32) {
    %c0_i32 = arith.constant 0 : i32
    %c0_i32_0 = arith.constant 0 : i32
    return %arg0, %c0_i32 : i32, i32
  }
  func.func @transform_1(%arg0: i32) -> (i32, i32) {
    %c0_i32 = arith.constant 0 : i32
    %c0_i32_0 = arith.constant 0 : i32
    %c0_i32_1 = arith.constant 0 : i32
    return %c0_i32, %c0_i32_0 : i32, i32
  }
  func.func @transform_2(%arg0: i32) -> (i32, i32) {
    %c0_i32 = arith.constant 0 : i32
    %c0_i32_0 = arith.constant 0 : i32
    %c0_i32_1 = arith.constant 0 : i32
    return %c0_i32, %c0_i32_0 : i32, i32
  }
  func.func @transform_3(%arg0: i32) -> (i32, i32) {
    %c0_i32 = arith.constant 0 : i32
    %c0_i32_0 = arith.constant 0 : i32
    return %arg0, %c0_i32 : i32, i32
  }
}

module attributes {stable_mosaic.version = 11 : i64} {
  func.func @_mm_kernel(%arg0: i32, %arg1: memref<8x512xbf16, #tpu.memory_space<vmem>>, %arg2: memref<512x128xbf16, #tpu.memory_space<vmem>>, %arg3: memref<1x128xf32, #tpu.memory_space<vmem>>, %arg4: memref<8x128xbf16, #tpu.memory_space<vmem>>) attributes {dimension_semantics = [#tpu.dimension_semantics<parallel>], iteration_bounds = array<i64: 1>, scalar_prefetch = 0 : i64, scratch_operands = 0 : i64, tpu.core_type = #tpu.core_type<tc>, window_params = [{transform_indices = @transform_0, window_bounds = array<i64: 8, 512>}, {pipeline_mode = #tpu.pipeline_mode<synchronous>, transform_indices = @transform_1, window_bounds = array<i64: 512, 128>}, {pipeline_mode = #tpu.pipeline_mode<synchronous>, transform_indices = @transform_2, window_bounds = array<i64: 1, 128>}, {transform_indices = @transform_3, window_bounds = array<i64: 8, 128>}]} {
    %c0 = arith.constant 0 : index
    %c0_0 = arith.constant 0 : index
    %0 = vector.load %arg1[%c0, %c0_0] : memref<8x512xbf16, #tpu.memory_space<vmem>>, vector<8x512xbf16>
    %c0_1 = arith.constant 0 : index
    %c0_2 = arith.constant 0 : index
    %1 = vector.load %arg2[%c0_1, %c0_2] : memref<512x128xbf16, #tpu.memory_space<vmem>>, vector<512x128xbf16>
    %cst = arith.constant dense<0.000000e+00> : vector<8x128xf32>
    %2 = tpu.matmul %0, %1, %cst {dimension_numbers = #tpu.dot_dimension_numbers<[1], [0], [0], [1], [0, 0, 1, 1], [], []>} : vector<8x512xbf16>, vector<512x128xbf16>, vector<8x128xf32> -> vector<8x128xf32>
    %c0_3 = arith.constant 0 : index
    %c0_4 = arith.constant 0 : index
    %3 = vector.load %arg3[%c0_3, %c0_4] : memref<1x128xf32, #tpu.memory_space<vmem>>, vector<1x128xf32>
    %4 = vector.broadcast %3 : vector<1x128xf32> to vector<8x128xf32>
    %5 = arith.addf %2, %4 : vector<8x128xf32>
    %cst_5 = arith.constant 0.000000e+00 : f32
    %6 = vector.broadcast %cst_5 : f32 to vector<8x128xf32>
    %7 = arith.maximumf %5, %6 : vector<8x128xf32>
    %8 = arith.truncf %7 : vector<8x128xf32> to vector<8x128xbf16>
    %c0_6 = arith.constant 0 : index
    %c0_7 = arith.constant 0 : index
    %9 = vector.load %arg4[%c0_6, %c0_7] : memref<8x128xbf16, #tpu.memory_space<vmem>>, vector<8x128xbf16>
    tpu.vector_store %arg4[%c0_6, %c0_7], %8 {strides = array<i32>} : memref<8x128xbf16, #tpu.memory_space<vmem>>, vector<8x128xbf16>,
    return
  }
  func.func @transform_0(%arg0: i32) -> (i32, i32) {
    %c0_i32 = arith.constant 0 : i32
    %c0_i32_0 = arith.constant 0 : i32
    return %arg0, %c0_i32 : i32, i32
  }
  func.func @transform_1(%arg0: i32) -> (i32, i32) {
    %c0_i32 = arith.constant 0 : i32
    %c0_i32_0 = arith.constant 0 : i32
    %c0_i32_1 = arith.constant 0 : i32
    return %c0_i32, %c0_i32_0 : i32, i32
  }
  func.func @transform_2(%arg0: i32) -> (i32, i32) {
    %c0_i32 = arith.constant 0 : i32
    %c0_i32_0 = arith.constant 0 : i32
    %c0_i32_1 = arith.constant 0 : i32
    return %c0_i32, %c0_i32_0 : i32, i32
  }
  func.func @transform_3(%arg0: i32) -> (i32, i32) {
    %c0_i32 = arith.constant 0 : i32
    %c0_i32_0 = arith.constant 0 : i32
    return %arg0, %c0_i32 : i32, i32
  }
}

module attributes {stable_mosaic.version = 11 : i64} {
  func.func @_mm_kernel(%arg0: i32, %arg1: memref<8x160xbf16, #tpu.memory_space<vmem>>, %arg2: memref<160x128xbf16, #tpu.memory_space<vmem>>, %arg3: memref<1x128xf32, #tpu.memory_space<vmem>>, %arg4: memref<8x128xbf16, #tpu.memory_space<vmem>>) attributes {dimension_semantics = [#tpu.dimension_semantics<parallel>], iteration_bounds = array<i64: 1>, scalar_prefetch = 0 : i64, scratch_operands = 0 : i64, tpu.core_type = #tpu.core_type<tc>, window_params = [{transform_indices = @transform_0, window_bounds = array<i64: 8, 160>}, {pipeline_mode = #tpu.pipeline_mode<synchronous>, transform_indices = @transform_1, window_bounds = array<i64: 160, 128>}, {pipeline_mode = #tpu.pipeline_mode<synchronous>, transform_indices = @transform_2, window_bounds = array<i64: 1, 128>}, {transform_indices = @transform_3, window_bounds = array<i64: 8, 128>}]} {
    %c0 = arith.constant 0 : index
    %c0_0 = arith.constant 0 : index
    %0 = vector.load %arg1[%c0, %c0_0] : memref<8x160xbf16, #tpu.memory_space<vmem>>, vector<8x160xbf16>
    %c0_1 = arith.constant 0 : index
    %c0_2 = arith.constant 0 : index
    %1 = vector.load %arg2[%c0_1, %c0_2] : memref<160x128xbf16, #tpu.memory_space<vmem>>, vector<160x128xbf16>
    %cst = arith.constant dense<0.000000e+00> : vector<8x128xf32>
    %2 = tpu.matmul %0, %1, %cst {dimension_numbers = #tpu.dot_dimension_numbers<[1], [0], [0], [1], [0, 0, 1, 1], [], []>} : vector<8x160xbf16>, vector<160x128xbf16>, vector<8x128xf32> -> vector<8x128xf32>
    %c0_3 = arith.constant 0 : index
    %c0_4 = arith.constant 0 : index
    %3 = vector.load %arg3[%c0_3, %c0_4] : memref<1x128xf32, #tpu.memory_space<vmem>>, vector<1x128xf32>
    %4 = vector.broadcast %3 : vector<1x128xf32> to vector<8x128xf32>
    %5 = arith.addf %2, %4 : vector<8x128xf32>
    %cst_5 = arith.constant 0.000000e+00 : f32
    %6 = vector.broadcast %cst_5 : f32 to vector<8x128xf32>
    %7 = arith.maximumf %5, %6 : vector<8x128xf32>
    %8 = arith.truncf %7 : vector<8x128xf32> to vector<8x128xbf16>
    %c0_6 = arith.constant 0 : index
    %c0_7 = arith.constant 0 : index
    %9 = vector.load %arg4[%c0_6, %c0_7] : memref<8x128xbf16, #tpu.memory_space<vmem>>, vector<8x128xbf16>
    tpu.vector_store %arg4[%c0_6, %c0_7], %8 {strides = array<i32>} : memref<8x128xbf16, #tpu.memory_space<vmem>>, vector<8x128xbf16>,
    return
  }
  func.func @transform_0(%arg0: i32) -> (i32, i32) {
    %c0_i32 = arith.constant 0 : i32
    %c0_i32_0 = arith.constant 0 : i32
    return %arg0, %c0_i32 : i32, i32
  }
  func.func @transform_1(%arg0: i32) -> (i32, i32) {
    %c0_i32 = arith.constant 0 : i32
    %c0_i32_0 = arith.constant 0 : i32
    %c0_i32_1 = arith.constant 0 : i32
    return %c0_i32, %c0_i32_0 : i32, i32
  }
  func.func @transform_2(%arg0: i32) -> (i32, i32) {
    %c0_i32 = arith.constant 0 : i32
    %c0_i32_0 = arith.constant 0 : i32
    %c0_i32_1 = arith.constant 0 : i32
    return %c0_i32, %c0_i32_0 : i32, i32
  }
  func.func @transform_3(%arg0: i32) -> (i32, i32) {
    %c0_i32 = arith.constant 0 : i32
    %c0_i32_0 = arith.constant 0 : i32
    return %arg0, %c0_i32 : i32, i32
  }
}

module attributes {stable_mosaic.version = 11 : i64} {
  func.func @_mm_kernel(%arg0: i32, %arg1: memref<8x256xbf16, #tpu.memory_space<vmem>>, %arg2: memref<256x256xbf16, #tpu.memory_space<vmem>>, %arg3: memref<1x256xf32, #tpu.memory_space<vmem>>, %arg4: memref<8x256xbf16, #tpu.memory_space<vmem>>) attributes {dimension_semantics = [#tpu.dimension_semantics<parallel>], iteration_bounds = array<i64: 1>, scalar_prefetch = 0 : i64, scratch_operands = 0 : i64, tpu.core_type = #tpu.core_type<tc>, window_params = [{transform_indices = @transform_0, window_bounds = array<i64: 8, 256>}, {pipeline_mode = #tpu.pipeline_mode<synchronous>, transform_indices = @transform_1, window_bounds = array<i64: 256, 256>}, {pipeline_mode = #tpu.pipeline_mode<synchronous>, transform_indices = @transform_2, window_bounds = array<i64: 1, 256>}, {transform_indices = @transform_3, window_bounds = array<i64: 8, 256>}]} {
    %c0 = arith.constant 0 : index
    %c0_0 = arith.constant 0 : index
    %0 = vector.load %arg1[%c0, %c0_0] : memref<8x256xbf16, #tpu.memory_space<vmem>>, vector<8x256xbf16>
    %c0_1 = arith.constant 0 : index
    %c0_2 = arith.constant 0 : index
    %1 = vector.load %arg2[%c0_1, %c0_2] : memref<256x256xbf16, #tpu.memory_space<vmem>>, vector<256x256xbf16>
    %cst = arith.constant dense<0.000000e+00> : vector<8x256xf32>
    %2 = tpu.matmul %0, %1, %cst {dimension_numbers = #tpu.dot_dimension_numbers<[1], [0], [0], [1], [0, 0, 1, 1], [], []>} : vector<8x256xbf16>, vector<256x256xbf16>, vector<8x256xf32> -> vector<8x256xf32>
    %c0_3 = arith.constant 0 : index
    %c0_4 = arith.constant 0 : index
    %3 = vector.load %arg3[%c0_3, %c0_4] : memref<1x256xf32, #tpu.memory_space<vmem>>, vector<1x256xf32>
    %4 = vector.broadcast %3 : vector<1x256xf32> to vector<8x256xf32>
    %5 = arith.addf %2, %4 : vector<8x256xf32>
    %cst_5 = arith.constant 0.000000e+00 : f32
    %6 = vector.broadcast %cst_5 : f32 to vector<8x256xf32>
    %7 = arith.maximumf %5, %6 : vector<8x256xf32>
    %8 = arith.truncf %7 : vector<8x256xf32> to vector<8x256xbf16>
    %c0_6 = arith.constant 0 : index
    %c0_7 = arith.constant 0 : index
    %9 = vector.load %arg4[%c0_6, %c0_7] : memref<8x256xbf16, #tpu.memory_space<vmem>>, vector<8x256xbf16>
    tpu.vector_store %arg4[%c0_6, %c0_7], %8 {strides = array<i32>} : memref<8x256xbf16, #tpu.memory_space<vmem>>, vector<8x256xbf16>,
    return
  }
  func.func @transform_0(%arg0: i32) -> (i32, i32) {
    %c0_i32 = arith.constant 0 : i32
    %c0_i32_0 = arith.constant 0 : i32
    return %arg0, %c0_i32 : i32, i32
  }
  func.func @transform_1(%arg0: i32) -> (i32, i32) {
    %c0_i32 = arith.constant 0 : i32
    %c0_i32_0 = arith.constant 0 : i32
    %c0_i32_1 = arith.constant 0 : i32
    return %c0_i32, %c0_i32_0 : i32, i32
  }
  func.func @transform_2(%arg0: i32) -> (i32, i32) {
    %c0_i32 = arith.constant 0 : i32
    %c0_i32_0 = arith.constant 0 : i32
    %c0_i32_1 = arith.constant 0 : i32
    return %c0_i32, %c0_i32_0 : i32, i32
  }
  func.func @transform_3(%arg0: i32) -> (i32, i32) {
    %c0_i32 = arith.constant 0 : i32
    %c0_i32_0 = arith.constant 0 : i32
    return %arg0, %c0_i32 : i32, i32
  }
}

module attributes {stable_mosaic.version = 11 : i64} {
  func.func @_avgpool_conv_kernel(%arg0: memref<9x1x256xbf16, #tpu.memory_space<vmem>>, %arg1: memref<256x128xbf16, #tpu.memory_space<vmem>>, %arg2: memref<1x128xf32, #tpu.memory_space<vmem>>, %arg3: memref<1x128xbf16, #tpu.memory_space<vmem>>) attributes {dimension_semantics = [], scalar_prefetch = 0 : i64, scratch_operands = 0 : i64, tpu.core_type = #tpu.core_type<tc>} {
    %c0 = arith.constant 0 : index
    %c0_0 = arith.constant 0 : index
    %c0_1 = arith.constant 0 : index
    %0 = vector.load %arg0[%c0, %c0_0, %c0_1] : memref<9x1x256xbf16, #tpu.memory_space<vmem>>, vector<9x1x256xbf16>
    %1 = arith.extf %0 : vector<9x1x256xbf16> to vector<9x1x256xf32>
    %cst = arith.constant dense<0.000000e+00> : vector<1x256xf32>
    %2 = vector.multi_reduction <add>, %1, %cst [0] : vector<9x1x256xf32> to vector<1x256xf32>
    %cst_2 = arith.constant 0.111111112 : f32
    %3 = vector.broadcast %cst_2 : f32 to vector<1x256xf32>
    %4 = arith.mulf %2, %3 : vector<1x256xf32>
    %5 = arith.truncf %4 : vector<1x256xf32> to vector<1x256xbf16>
    %c0_3 = arith.constant 0 : index
    %c0_4 = arith.constant 0 : index
    %6 = vector.load %arg1[%c0_3, %c0_4] : memref<256x128xbf16, #tpu.memory_space<vmem>>, vector<256x128xbf16>
    %cst_5 = arith.constant dense<0.000000e+00> : vector<1x128xf32>
    %7 = tpu.matmul %5, %6, %cst_5 {dimension_numbers = #tpu.dot_dimension_numbers<[1], [0], [0], [1], [0, 0, 1, 1], [], []>} : vector<1x256xbf16>, vector<256x128xbf16>, vector<1x128xf32> -> vector<1x128xf32>
    %c0_6 = arith.constant 0 : index
    %c0_7 = arith.constant 0 : index
    %8 = vector.load %arg2[%c0_6, %c0_7] : memref<1x128xf32, #tpu.memory_space<vmem>>, vector<1x128xf32>
    %9 = arith.addf %7, %8 : vector<1x128xf32>
    %cst_8 = arith.constant 0.000000e+00 : f32
    %10 = vector.broadcast %cst_8 : f32 to vector<1x128xf32>
    %11 = arith.maximumf %9, %10 : vector<1x128xf32>
    %12 = arith.truncf %11 : vector<1x128xf32> to vector<1x128xbf16>
    %c0_9 = arith.constant 0 : index
    %c0_10 = arith.constant 0 : index
    %13 = vector.load %arg3[%c0_9, %c0_10] : memref<1x128xbf16, #tpu.memory_space<vmem>>, vector<1x128xbf16>
    tpu.vector_store %arg3[%c0_9, %c0_10], %12 {strides = array<i32>} : memref<1x128xbf16, #tpu.memory_space<vmem>>, vector<1x128xbf16>,
    return
  }
}

module attributes {stable_mosaic.version = 11 : i64} {
  func.func @_mm_kernel(%arg0: i32, %arg1: memref<8x256xbf16, #tpu.memory_space<vmem>>, %arg2: memref<256x128xbf16, #tpu.memory_space<vmem>>, %arg3: memref<1x128xf32, #tpu.memory_space<vmem>>, %arg4: memref<8x128xf32, #tpu.memory_space<vmem>>) attributes {dimension_semantics = [#tpu.dimension_semantics<parallel>], iteration_bounds = array<i64: 1>, scalar_prefetch = 0 : i64, scratch_operands = 0 : i64, tpu.core_type = #tpu.core_type<tc>, window_params = [{transform_indices = @transform_0, window_bounds = array<i64: 8, 256>}, {pipeline_mode = #tpu.pipeline_mode<synchronous>, transform_indices = @transform_1, window_bounds = array<i64: 256, 128>}, {pipeline_mode = #tpu.pipeline_mode<synchronous>, transform_indices = @transform_2, window_bounds = array<i64: 1, 128>}, {transform_indices = @transform_3, window_bounds = array<i64: 8, 128>}]} {
    %c0 = arith.constant 0 : index
    %c0_0 = arith.constant 0 : index
    %0 = vector.load %arg1[%c0, %c0_0] : memref<8x256xbf16, #tpu.memory_space<vmem>>, vector<8x256xbf16>
    %c0_1 = arith.constant 0 : index
    %c0_2 = arith.constant 0 : index
    %1 = vector.load %arg2[%c0_1, %c0_2] : memref<256x128xbf16, #tpu.memory_space<vmem>>, vector<256x128xbf16>
    %cst = arith.constant dense<0.000000e+00> : vector<8x128xf32>
    %2 = tpu.matmul %0, %1, %cst {dimension_numbers = #tpu.dot_dimension_numbers<[1], [0], [0], [1], [0, 0, 1, 1], [], []>} : vector<8x256xbf16>, vector<256x128xbf16>, vector<8x128xf32> -> vector<8x128xf32>
    %c0_3 = arith.constant 0 : index
    %c0_4 = arith.constant 0 : index
    %3 = vector.load %arg3[%c0_3, %c0_4] : memref<1x128xf32, #tpu.memory_space<vmem>>, vector<1x128xf32>
    %4 = vector.broadcast %3 : vector<1x128xf32> to vector<8x128xf32>
    %5 = arith.addf %2, %4 : vector<8x128xf32>
    %c0_5 = arith.constant 0 : index
    %c0_6 = arith.constant 0 : index
    %6 = vector.load %arg4[%c0_5, %c0_6] : memref<8x128xf32, #tpu.memory_space<vmem>>, vector<8x128xf32>
    tpu.vector_store %arg4[%c0_5, %c0_6], %5 {strides = array<i32>} : memref<8x128xf32, #tpu.memory_space<vmem>>, vector<8x128xf32>,
    return
  }
  func.func @transform_0(%arg0: i32) -> (i32, i32) {
    %c0_i32 = arith.constant 0 : i32
    %c0_i32_0 = arith.constant 0 : i32
    return %arg0, %c0_i32 : i32, i32
  }
  func.func @transform_1(%arg0: i32) -> (i32, i32) {
    %c0_i32 = arith.constant 0 : i32
    %c0_i32_0 = arith.constant 0 : i32
    %c0_i32_1 = arith.constant 0 : i32
    return %c0_i32, %c0_i32_0 : i32, i32
  }
  func.func @transform_2(%arg0: i32) -> (i32, i32) {
    %c0_i32 = arith.constant 0 : i32
    %c0_i32_0 = arith.constant 0 : i32
    %c0_i32_1 = arith.constant 0 : i32
    return %c0_i32, %c0_i32_0 : i32, i32
  }
  func.func @transform_3(%arg0: i32) -> (i32, i32) {
    %c0_i32 = arith.constant 0 : i32
    %c0_i32_0 = arith.constant 0 : i32
    return %arg0, %c0_i32 : i32, i32
  }
}

</mosaic_0001>

<llo_original>
// kernel: forward.78
$region0: #{forward.78}
  #allocation0 [shape = 'u32[]', space=smem, size = 0x4, offset = 0x4, fixed_abs, tag = 'smem constant byte address 0x4 - core index']
  #allocation1 [shape = 'u32[144,128]{1,0:T(1,128)}', space=vmem, size = 0x12000, scoped, tag = 'internal scratch']
  %s0 = inlined_call_operand.vmem [shape: bf16[1536,32], index: 0, kind: input, shape index: {}]
  %s1 = inlined_call_operand.vmem [shape: bf16[32,128], index: 1, kind: input, shape index: {}]
  %s2 = inlined_call_operand.vmem [shape: f32[1,128], index: 2, kind: input, shape index: {}]
  %s3 = inlined_call_operand.vmem [shape: bf16[1536,32], index: 3, kind: input, shape index: {}]
  %s4 = inlined_call_operand.vmem [shape: bf16[32,128], index: 4, kind: input, shape index: {}]
  %s5 = inlined_call_operand.vmem [shape: f32[1,128], index: 5, kind: input, shape index: {}]
  %s6 = inlined_call_operand.vmem [shape: bf16[1536,128], index: 6, kind: output, shape index: {}]
  %s7 = sld [smem:[#allocation0]]
  $region57: #{forward.78} parent=0
    _
  %s9 = ssub.s32 1, %s7
  %s10 = scalar_select 0, %s9, %s7
  loop: start=0, step=1, limit=5
  $region2: #{forward.78} parent=0 // loop_pre_header
    _
  $region3: #{forward.78} parent=0 // loop_header
    %s12 = sphi 0, %s16
    %p13 = scmp.ge.s32.totalorder %s12, 5
    %s22 = sphi 0, %s24
    %s25 = sphi 0, %s22
    %s26 = sphi 0, %s25
    %s42 = sphi 0, %s26
    %s46 = sphi 0, %s46
    %s48 = sphi 0, %s46
    %s49 = sphi 0, %s48
    %s63 = sphi 0, %s49
    %s67 = sphi 0, %s67
    %s69 = sphi 0, %s67
    %s70 = sphi 0, %s69
    %s84 = sphi 0, %s70
    %s90 = sphi 0, %s92
    %s93 = sphi 0, %s90
    %s94 = sphi 0, %s93
    %s110 = sphi 0, %s94
    %s114 = sphi 0, %s114
    %s116 = sphi 0, %s114
    %s117 = sphi 0, %s116
    %s131 = sphi 0, %s117
    %s135 = sphi 0, %s135
    %s137 = sphi 0, %s135
    %s138 = sphi 0, %s137
    %s152 = sphi 0, %s138
    %s158 = sphi 0, %s160
    %s161 = sphi 0, %s158
    %s162 = sphi 0, %s161
    %s178 = sphi 0, %s162
  $region4: #{forward.78} parent=0 // loop_header_branch
    %15 = sbr.rel (%p13) target = $region8
  $region5: #{forward.78} parent=0 // loop_body
    %s17 = ssub.s32 %s12, 1
    %s18 = ssub.s32 %s12, 2
    %s19 = sadd.s32 %s12, 1
    %s20 = ssub.s32 %s12, %s19
    %p21 = scmp.eq.s32.totalorder %s20, 0
    %s23 = sadd.s32 %s22, 1
    %s24 = scalar_select %p21, %s22, %s23
    %p27 = pneg %p21
    %p28 = scmp.eq.s32.totalorder %s12, 2
    %p29 = por %p27, %p28
    %p30 = scmp.ne.s32.totalorder %s22, %s25
    %p31 = scmp.eq.s32.totalorder %s12, 0
    %p32 = por %p30, %p31
    %p33 = scmp.ne.s32.totalorder %s22, %s25
    %p34 = scmp.eq.s32.totalorder %s17, 2
    %p35 = por %p33, %p34
    %p36 = scmp.ne.s32.totalorder %s25, %s26
    %p37 = scmp.eq.s32.totalorder %s17, 0
    %p38 = por %p36, %p37
    %p39 = scmp.ne.s32.totalorder %s25, %s26
    %p40 = scmp.eq.s32.totalorder %s18, 2
    %p41 = por %p39, %p40
    %p43 = scmp.ne.s32.totalorder %s26, %s42
    %p44 = scmp.eq.s32.totalorder %s18, 0
    %p45 = por %p43, %p44
    %s47 = sadd.s32 %s46, 1
    %p50 = scmp.eq.s32.totalorder %s12, 2
    %p51 = scmp.ne.s32.totalorder %s46, %s48
    %p52 = scmp.eq.s32.totalorder %s12, 0
    %p53 = por %p51, %p52
    %p54 = scmp.ne.s32.totalorder %s46, %s48
    %p55 = scmp.eq.s32.totalorder %s17, 2
    %p56 = por %p54, %p55
    %p57 = scmp.ne.s32.totalorder %s48, %s49
    %p58 = scmp.eq.s32.totalorder %s17, 0
    %p59 = por %p57, %p58
    %p60 = scmp.ne.s32.totalorder %s48, %s49
    %p61 = scmp.eq.s32.totalorder %s18, 2
    %p62 = por %p60, %p61
    %p64 = scmp.ne.s32.totalorder %s49, %s63
    %p65 = scmp.eq.s32.totalorder %s18, 0
    %p66 = por %p64, %p65
    %s68 = sadd.s32 %s67, 1
    %p71 = scmp.eq.s32.totalorder %s12, 2
    %p72 = scmp.ne.s32.totalorder %s67, %s69
    %p73 = scmp.eq.s32.totalorder %s12, 0
    %p74 = por %p72, %p73
    %p75 = scmp.ne.s32.totalorder %s67, %s69
    %p76 = scmp.eq.s32.totalorder %s17, 2
    %p77 = por %p75, %p76
    %p78 = scmp.ne.s32.totalorder %s69, %s70
    %p79 = scmp.eq.s32.totalorder %s17, 0
    %p80 = por %p78, %p79
    %p81 = scmp.ne.s32.totalorder %s69, %s70
    %p82 = scmp.eq.s32.totalorder %s18, 2
    %p83 = por %p81, %p82
    %p85 = scmp.ne.s32.totalorder %s70, %s84
    %p86 = scmp.eq.s32.totalorder %s18, 0
    %p87 = por %p85, %p86
    %s88 = ssub.s32 %s12, %s19
    %p89 = scmp.eq.s32.totalorder %s88, 0
    %s91 = sadd.s32 %s90, 1
    %s92 = scalar_select %p89, %s90, %s91
    %p95 = pneg %p89
    %p96 = scmp.eq.s32.totalorder %s12, 2
    %p97 = por %p95, %p96
    %p98 = scmp.ne.s32.totalorder %s90, %s93
    %p99 = scmp.eq.s32.totalorder %s12, 0
    %p100 = por %p98, %p99
    %p101 = scmp.ne.s32.totalorder %s90, %s93
    %p102 = scmp.eq.s32.totalorder %s17, 2
    %p103 = por %p101, %p102
    %p104 = scmp.ne.s32.totalorder %s93, %s94
    %p105 = scmp.eq.s32.totalorder %s17, 0
    %p106 = por %p104, %p105
    %p107 = scmp.ne.s32.totalorder %s93, %s94
    %p108 = scmp.eq.s32.totalorder %s18, 2
    %p109 = por %p107, %p108
    %p111 = scmp.ne.s32.totalorder %s94, %s110
    %p112 = scmp.eq.s32.totalorder %s18, 0
    %p113 = por %p111, %p112
    %s115 = sadd.s32 %s114, 1
    %p118 = scmp.eq.s32.totalorder %s12, 2
    %p119 = scmp.ne.s32.totalorder %s114, %s116
    %p120 = scmp.eq.s32.totalorder %s12, 0
    %p121 = por %p119, %p120
    %p122 = scmp.ne.s32.totalorder %s114, %s116
    %p123 = scmp.eq.s32.totalorder %s17, 2
    %p124 = por %p122, %p123
    %p125 = scmp.ne.s32.totalorder %s116, %s117
    %p126 = scmp.eq.s32.totalorder %s17, 0
    %p127 = por %p125, %p126
    %p128 = scmp.ne.s32.totalorder %s116, %s117
    %p129 = scmp.eq.s32.totalorder %s18, 2
    %p130 = por %p128, %p129
    %p132 = scmp.ne.s32.totalorder %s117, %s131
    %p133 = scmp.eq.s32.totalorder %s18, 0
    %p134 = por %p132, %p133
    %s136 = sadd.s32 %s135, 1
    %p139 = scmp.eq.s32.totalorder %s12, 2
    %p140 = scmp.ne.s32.totalorder %s135, %s137
    %p141 = scmp.eq.s32.totalorder %s12, 0
    %p142 = por %p140, %p141
    %p143 = scmp.ne.s32.totalorder %s135, %s137
    %p144 = scmp.eq.s32.totalorder %s17, 2
    %p145 = por %p143, %p144
    %p146 = scmp.ne.s32.totalorder %s137, %s138
    %p147 = scmp.eq.s32.totalorder %s17, 0
    %p148 = por %p146, %p147
    %p149 = scmp.ne.s32.totalorder %s137, %s138
    %p150 = scmp.eq.s32.totalorder %s18, 2
    %p151 = por %p149, %p150
    %p153 = scmp.ne.s32.totalorder %s138, %s152
    %p154 = scmp.eq.s32.totalorder %s18, 0
    %p155 = por %p153, %p154
    %s156 = ssub.s32 %s12, %s19
    %p157 = scmp.eq.s32.totalorder %s156, 0
    %s159 = sadd.s32 %s158, 1
    %s160 = scalar_select %p157, %s158, %s159
    %p163 = pneg %p157
    %p164 = scmp.eq.s32.totalorder %s12, 2
    %p165 = por %p163, %p164
    %p166 = scmp.ne.s32.totalorder %s158, %s161
    %p167 = scmp.eq.s32.totalorder %s12, 0
    %p168 = por %p166, %p167
    %p169 = scmp.ne.s32.totalorder %s158, %s161
    %p170 = scmp.eq.s32.totalorder %s17, 2
    %p171 = por %p169, %p170
    %p172 = scmp.ne.s32.totalorder %s161, %s162
    %p173 = scmp.eq.s32.totalorder %s17, 0
    %p174 = por %p172, %p173
    %p175 = scmp.ne.s32.totalorder %s161, %s162
    %p176 = scmp.eq.s32.totalorder %s18, 2
    %p177 = por %p175, %p176
    %p179 = scmp.ne.s32.totalorder %s162, %s178
    %p180 = scmp.eq.s32.totalorder %s18, 0
    %p181 = por %p179, %p180
    %p182 = scmp.le.s32.totalorder 1, %s12
    %p183 = scmp.lt.s32.totalorder %s12, 4
    %p184 = pnand %p182, %p183
    %p185 = pneg %p184
    // Predicated region
    $region9: #{forward.78} parent=5 // pred_check
      _
    $region10: #{forward.78} parent=5 // pred_check_branch
      %187 = sbr.rel (%p184) target = $region12
    $region11: #{forward.78} parent=5 // pred_region
      %s188 = ssub.s32 %s12, 1
      // Predicated region
      $region13: #{forward.78} parent=11 // pred_check
        %p189 = pneg %p59
      $region14: #{forward.78} parent=11 // pred_check_branch
        %191 = sbr.rel (%p189) target = $region16
      $region15: #{forward.78} parent=11 // pred_region
        _
      $region16: #{forward.78} parent=11 // pred_fallthru
        _
      // Predicated region
      $region17: #{forward.78} parent=11 // pred_check
        %p192 = pneg %p80
      $region18: #{forward.78} parent=11 // pred_check_branch
        %194 = sbr.rel (%p192) target = $region20
      $region19: #{forward.78} parent=11 // pred_region
        _
      $region20: #{forward.78} parent=11 // pred_fallthru
        _
      // Predicated region
      $region21: #{forward.78} parent=11 // pred_check
        %p195 = pneg %p127
      $region22: #{forward.78} parent=11 // pred_check_branch
        %197 = sbr.rel (%p195) target = $region24
      $region23: #{forward.78} parent=11 // pred_region
        _
      $region24: #{forward.78} parent=11 // pred_fallthru
        _
      // Predicated region
      $region25: #{forward.78} parent=11 // pred_check
        %p198 = pneg %p148
      $region26: #{forward.78} parent=11 // pred_check_branch
        %200 = sbr.rel (%p198) target = $region28
      $region27: #{forward.78} parent=11 // pred_region
        _
      $region28: #{forward.78} parent=11 // pred_fallthru
        _
    $region12: #{forward.78} parent=5 // pred_fallthru
      _
    %p201 = scmp.lt.s32.totalorder %s12, 3
    // Predicated region
    $region29: #{forward.78} parent=5 // pred_check
      %p202 = pneg %p201
    $region30: #{forward.78} parent=5 // pred_check_branch
      %204 = sbr.rel (%p202) target = $region32
    $region31: #{forward.78} parent=5 // pred_region
      // Predicated region
      $region33: #{forward.78} parent=31 // pred_check
        %p205 = pneg %p32
      $region34: #{forward.78} parent=31 // pred_check_branch
        %207 = sbr.rel (%p205) target = $region36
      $region35: #{forward.78} parent=31 // pred_region
        %s208 = smul.u32 64, %s12
        %p209 = scmp.lt.s32.totalorder %s208, 191
        %s210 = scalar_select %p209, %s208, 191
        %s211 = smul.addr %s210, 4
        %s212 = scalar_lea.vmem %s0, %s211
        %s213 = smul.u32 64, %s12
      $region36: #{forward.78} parent=31 // pred_fallthru
        _
      // Predicated region
      $region37: #{forward.78} parent=31 // pred_check
        %p214 = pneg %p100
      $region38: #{forward.78} parent=31 // pred_check_branch
        %216 = sbr.rel (%p214) target = $region40
      $region39: #{forward.78} parent=31 // pred_region
        %s217 = smul.u32 64, %s12
        %p218 = scmp.lt.s32.totalorder %s217, 191
        %s219 = scalar_select %p218, %s217, 191
        %s220 = smul.addr %s219, 4
        %s221 = scalar_lea.vmem %s3, %s220
        %s222 = smul.u32 64, %s12
      $region40: #{forward.78} parent=31 // pred_fallthru
        _
    $region32: #{forward.78} parent=5 // pred_fallthru
      _
    %p223 = scmp.le.s32.totalorder 1, %s12
    %p224 = scmp.lt.s32.totalorder %s12, 4
    %p225 = pnand %p223, %p224
    %p226 = pneg %p225
    // Predicated region
    $region41: #{forward.78} parent=5 // pred_check
      _
    $region42: #{forward.78} parent=5 // pred_check_branch
      %228 = sbr.rel (%p225) target = $region44
    $region43: #{forward.78} parent=5 // pred_region
      %s229 = ssub.s32 %s12, 1
      %s230 = smul.u32 64, %s17
      %p231 = scmp.lt.s32.totalorder %s230, 191
      %s232 = scalar_select %p231, %s230, 191
      %s233 = smul.addr %s232, 4
      %s234 = scalar_lea.vmem %s0, %s233
      %p235 = pneg %p38
      %p236 = pneg %p35
      %p237 = pneg %p59
      %p238 = pneg %p56
      %p239 = pneg %p80
      %p240 = pneg %p77
      %s241 = smul.u32 64, %s17
      %p242 = scmp.lt.s32.totalorder %s241, 191
      %s243 = scalar_select %p242, %s241, 191
      %s244 = smul.addr %s243, 4
      %s245 = scalar_lea.vmem %s3, %s244
      %p246 = pneg %p106
      %p247 = pneg %p103
      %p248 = pneg %p127
      %p249 = pneg %p124
      %p250 = pneg %p148
      %p251 = pneg %p145
      %p252 = pneg %p174
      %p253 = pneg %p171
      %s254 = smul.u32 64, %s17
      %p255 = scmp.lt.s32.totalorder %s254, 191
      %s256 = scalar_select %p255, %s254, 191
      %s257 = smul.addr %s256, 4
      %s258 = scalar_lea.vmem %s6, %s257
      %s259 = smul.u32 64, %s17
      %p260 = scmp.lt.s32.totalorder %s259, 191
      %s261 = scalar_select %p260, %s259, 191
      %s262 = smul.addr %s261, 4
      %s263 = scalar_lea.vmem %s0, %s262
      %s264 = smul.u32 64, %s17
      %s265 = smul.u32 64, %s17
      %p266 = scmp.lt.s32.totalorder %s265, 191
      %s267 = scalar_select %p266, %s265, 191
      %s268 = smul.addr %s267, 4
      %s269 = scalar_lea.vmem %s3, %s268
      %s270 = smul.u32 64, %s17
      %s271 = smul.u32 64, %s17
      %p272 = scmp.lt.s32.totalorder %s271, 191
      %s273 = scalar_select %p272, %s271, 191
      %s274 = smul.addr %s273, 4
      %s275 = scalar_lea.vmem %s6, %s274
      %s276 = smul.u32 64, %s17
      %v278 = vld [vmem:[%s263] sm:$0xf]
      %v279 = vld [vmem:[%s263 + $0x4] sm:$0xf]
      %v280 = vld [vmem:[%s263 + $0x8] sm:$0xf]
      %v281 = vld [vmem:[%s263 + $0xc] sm:$0xf]
      %v282 = vld [vmem:[%s263 + $0x10] sm:$0xf]
      %v283 = vld [vmem:[%s263 + $0x14] sm:$0xf]
      %v284 = vld [vmem:[%s263 + $0x18] sm:$0xf]
      %v285 = vld [vmem:[%s263 + $0x1c] sm:$0xf]
      %v286 = vld [vmem:[%s263 + $0x20] sm:$0xf]
      %v287 = vld [vmem:[%s263 + $0x24] sm:$0xf]
      %v288 = vld [vmem:[%s263 + $0x28] sm:$0xf]
      %v289 = vld [vmem:[%s263 + $0x2c] sm:$0xf]
      %v290 = vld [vmem:[%s263 + $0x30] sm:$0xf]
      %v291 = vld [vmem:[%s263 + $0x34] sm:$0xf]
      %v292 = vld [vmem:[%s263 + $0x38] sm:$0xf]
      %v293 = vld [vmem:[%s263 + $0x3c] sm:$0xf]
      %v294 = vld [vmem:[%s263 + $0x40] sm:$0xf]
      %v295 = vld [vmem:[%s263 + $0x44] sm:$0xf]
      %v296 = vld [vmem:[%s263 + $0x48] sm:$0xf]
      %v297 = vld [vmem:[%s263 + $0x4c] sm:$0xf]
      %v298 = vld [vmem:[%s263 + $0x50] sm:$0xf]
      %v299 = vld [vmem:[%s263 + $0x54] sm:$0xf]
      %v300 = vld [vmem:[%s263 + $0x58] sm:$0xf]
      %v301 = vld [vmem:[%s263 + $0x5c] sm:$0xf]
      %v302 = vld [vmem:[%s263 + $0x60] sm:$0xf]
      %v303 = vld [vmem:[%s263 + $0x64] sm:$0xf]
      %v304 = vld [vmem:[%s263 + $0x68] sm:$0xf]
      %v305 = vld [vmem:[%s263 + $0x6c] sm:$0xf]
      %v306 = vld [vmem:[%s263 + $0x70] sm:$0xf]
      %v307 = vld [vmem:[%s263 + $0x74] sm:$0xf]
      %v308 = vld [vmem:[%s263 + $0x78] sm:$0xf]
      %v309 = vld [vmem:[%s263 + $0x7c] sm:$0xf]
      %v310 = vld [vmem:[%s263 + $0x80] sm:$0xf]
      %v311 = vld [vmem:[%s263 + $0x84] sm:$0xf]
      %v312 = vld [vmem:[%s263 + $0x88] sm:$0xf]
      %v313 = vld [vmem:[%s263 + $0x8c] sm:$0xf]
      %v314 = vld [vmem:[%s263 + $0x90] sm:$0xf]
      %v315 = vld [vmem:[%s263 + $0x94] sm:$0xf]
      %v316 = vld [vmem:[%s263 + $0x98] sm:$0xf]
      %v317 = vld [vmem:[%s263 + $0x9c] sm:$0xf]
      %v318 = vld [vmem:[%s263 + $0xa0] sm:$0xf]
      %v319 = vld [vmem:[%s263 + $0xa4] sm:$0xf]
      %v320 = vld [vmem:[%s263 + $0xa8] sm:$0xf]
      %v321 = vld [vmem:[%s263 + $0xac] sm:$0xf]
      %v322 = vld [vmem:[%s263 + $0xb0] sm:$0xf]
      %v323 = vld [vmem:[%s263 + $0xb4] sm:$0xf]
      %v324 = vld [vmem:[%s263 + $0xb8] sm:$0xf]
      %v325 = vld [vmem:[%s263 + $0xbc] sm:$0xf]
      %v326 = vld [vmem:[%s263 + $0xc0] sm:$0xf]
      %v327 = vld [vmem:[%s263 + $0xc4] sm:$0xf]
      %v328 = vld [vmem:[%s263 + $0xc8] sm:$0xf]
      %v329 = vld [vmem:[%s263 + $0xcc] sm:$0xf]
      %v330 = vld [vmem:[%s263 + $0xd0] sm:$0xf]
      %v331 = vld [vmem:[%s263 + $0xd4] sm:$0xf]
      %v332 = vld [vmem:[%s263 + $0xd8] sm:$0xf]
      %v333 = vld [vmem:[%s263 + $0xdc] sm:$0xf]
      %v334 = vld [vmem:[%s263 + $0xe0] sm:$0xf]
      %v335 = vld [vmem:[%s263 + $0xe4] sm:$0xf]
      %v336 = vld [vmem:[%s263 + $0xe8] sm:$0xf]
      %v337 = vld [vmem:[%s263 + $0xec] sm:$0xf]
      %v338 = vld [vmem:[%s263 + $0xf0] sm:$0xf]
      %v339 = vld [vmem:[%s263 + $0xf4] sm:$0xf]
      %v340 = vld [vmem:[%s263 + $0xf8] sm:$0xf]
      %v341 = vld [vmem:[%s263 + $0xfc] sm:$0xf]
      %v342 = vld [vmem:[%s1] sm:$0xf]
      %v343 = vld [vmem:[%s1 + $0x4] sm:$0xf]
      %v344 = vld [vmem:[%s1 + $0x8] sm:$0xf]
      %v345 = vld [vmem:[%s1 + $0xc] sm:$0xf]
      %v346 = vld [vmem:[%s2] sm:$0x1]
      %v348 = vlaneseq
      %v349 = vshrl.u32 %v348, 7
      %v350 = vsub.s32 0, %v349
      %v351 = vrot.slane %v346, %v350
      %v417 = vunpack.c.l.b16 %v278
      %v418 = vunpack.c.l.b16 %v279
      %v419 = vunpack.c.l.b16 %v280
      %v420 = vunpack.c.l.b16 %v281
      %v421 = vunpack.c.l.b16 %v282
      %v422 = vunpack.c.l.b16 %v283
      %v423 = vunpack.c.l.b16 %v284
      %v424 = vunpack.c.l.b16 %v285
      %v425 = vunpack.c.l.b16 %v286
      %v426 = vunpack.c.l.b16 %v287
      %v427 = vunpack.c.l.b16 %v288
      %v428 = vunpack.c.l.b16 %v289
      %v429 = vunpack.c.l.b16 %v290
      %v430 = vunpack.c.l.b16 %v291
      %v431 = vunpack.c.l.b16 %v292
      %v432 = vunpack.c.l.b16 %v293
      %v433 = vunpack.c.l.b16 %v294
      %v434 = vunpack.c.l.b16 %v295
      %v435 = vunpack.c.l.b16 %v296
      %v436 = vunpack.c.l.b16 %v297
      %v437 = vunpack.c.l.b16 %v298
      %v438 = vunpack.c.l.b16 %v299
      %v439 = vunpack.c.l.b16 %v300
      %v440 = vunpack.c.l.b16 %v301
      %v441 = vunpack.c.l.b16 %v302
      %v442 = vunpack.c.l.b16 %v303
      %v443 = vunpack.c.l.b16 %v304
      %v444 = vunpack.c.l.b16 %v305
      %v445 = vunpack.c.l.b16 %v306
      %v446 = vunpack.c.l.b16 %v307
      %v447 = vunpack.c.l.b16 %v308
      %v448 = vunpack.c.l.b16 %v309
      %v449 = vunpack.c.l.b16 %v310
      %v450 = vunpack.c.l.b16 %v311
      %v451 = vunpack.c.l.b16 %v312
      %v452 = vunpack.c.l.b16 %v313
      %v453 = vunpack.c.l.b16 %v314
      %v454 = vunpack.c.l.b16 %v315
      %v455 = vunpack.c.l.b16 %v316
      %v456 = vunpack.c.l.b16 %v317
      %v457 = vunpack.c.l.b16 %v318
      %v458 = vunpack.c.l.b16 %v319
      %v459 = vunpack.c.l.b16 %v320
      %v460 = vunpack.c.l.b16 %v321
      %v461 = vunpack.c.l.b16 %v322
      %v462 = vunpack.c.l.b16 %v323
      %v463 = vunpack.c.l.b16 %v324
      %v464 = vunpack.c.l.b16 %v325
      %v465 = vunpack.c.l.b16 %v326
      %v466 = vunpack.c.l.b16 %v327
      %v467 = vunpack.c.l.b16 %v328
      %v468 = vunpack.c.l.b16 %v329
      %v469 = vunpack.c.l.b16 %v330
      %v470 = vunpack.c.l.b16 %v331
      %v471 = vunpack.c.l.b16 %v332
      %v472 = vunpack.c.l.b16 %v333
      %v473 = vunpack.c.l.b16 %v334
      %v474 = vunpack.c.l.b16 %v335
      %v475 = vunpack.c.l.b16 %v336
      %v476 = vunpack.c.l.b16 %v337
      %v477 = vunpack.c.l.b16 %v338
      %v478 = vunpack.c.l.b16 %v339
      %v479 = vunpack.c.l.b16 %v340
      %v480 = vunpack.c.l.b16 %v341
      %v481 = vpack.c.b16 %v418, %v417
      %v482 = vpack.c.b16 %v420, %v419
      %v483 = vpack.c.b16 %v422, %v421
      %v484 = vpack.c.b16 %v424, %v423
      %v485 = vpack.c.b16 %v426, %v425
      %v486 = vpack.c.b16 %v428, %v427
      %v487 = vpack.c.b16 %v430, %v429
      %v488 = vpack.c.b16 %v432, %v431
      %v489 = vpack.c.b16 %v434, %v433
      %v490 = vpack.c.b16 %v436, %v435
      %v491 = vpack.c.b16 %v438, %v437
      %v492 = vpack.c.b16 %v440, %v439
      %v493 = vpack.c.b16 %v442, %v441
      %v494 = vpack.c.b16 %v444, %v443
      %v495 = vpack.c.b16 %v446, %v445
      %v496 = vpack.c.b16 %v448, %v447
      %v497 = vpack.c.b16 %v450, %v449
      %v498 = vpack.c.b16 %v452, %v451
      %v499 = vpack.c.b16 %v454, %v453
      %v500 = vpack.c.b16 %v456, %v455
      %v501 = vpack.c.b16 %v458, %v457
      %v502 = vpack.c.b16 %v460, %v459
      %v503 = vpack.c.b16 %v462, %v461
      %v504 = vpack.c.b16 %v464, %v463
      %v505 = vpack.c.b16 %v466, %v465
      %v506 = vpack.c.b16 %v468, %v467
      %v507 = vpack.c.b16 %v470, %v469
      %v508 = vpack.c.b16 %v472, %v471
      %v509 = vpack.c.b16 %v474, %v473
      %v510 = vpack.c.b16 %v476, %v475
      %v511 = vpack.c.b16 %v478, %v477
      %v512 = vpack.c.b16 %v480, %v479
      %v517 = vunpack.c.l.b16 %v342
      %v518 = vunpack.c.l.b16 %v343
      %v519 = vunpack.c.l.b16 %v344
      %v520 = vunpack.c.l.b16 %v345
      %v521 = vpack.c.b16 %v518, %v517
      %v522 = vpack.c.b16 %v520, %v519
      %vm525 = vcmask 261120
      %v527 = vsel %vm525, %v481, 0
      %v530 = vsel %vm525, %v482, 0
      %v533 = vsel %vm525, %v483, 0
      %v536 = vsel %vm525, %v484, 0
      %v539 = vsel %vm525, %v485, 0
      %v542 = vsel %vm525, %v486, 0
      %v545 = vsel %vm525, %v487, 0
      %v548 = vsel %vm525, %v488, 0
      %v551 = vsel %vm525, %v489, 0
      %v554 = vsel %vm525, %v490, 0
      %v557 = vsel %vm525, %v491, 0
      %v560 = vsel %vm525, %v492, 0
      %v563 = vsel %vm525, %v493, 0
      %v566 = vsel %vm525, %v494, 0
      %v569 = vsel %vm525, %v495, 0
      %v572 = vsel %vm525, %v496, 0
      %v575 = vsel %vm525, %v497, 0
      %v578 = vsel %vm525, %v498, 0
      %v581 = vsel %vm525, %v499, 0
      %v584 = vsel %vm525, %v500, 0
      %v587 = vsel %vm525, %v501, 0
      %v590 = vsel %vm525, %v502, 0
      %v593 = vsel %vm525, %v503, 0
      %v596 = vsel %vm525, %v504, 0
      %v599 = vsel %vm525, %v505, 0
      %v602 = vsel %vm525, %v506, 0
      %v605 = vsel %vm525, %v507, 0
      %v608 = vsel %vm525, %v508, 0
      %v611 = vsel %vm525, %v509, 0
      %v614 = vsel %vm525, %v510, 0
      %v617 = vsel %vm525, %v511, 0
      %v620 = vsel %vm525, %v512, 0
      %622 = vmatprep.subr.bf16.mxu0 0
      %623 = vmatpush1.bf16.msra.mxu0 %v521
      %624 = vmatprep.subr.bf16.mxu0 0
      %625 = vmatpush1.bf16.msra.mxu0 %v522
      %626 = vmatprep.subr.bf16.mxu0 0
      %627 = vmatpush1.bf16.msra.mxu0 0
      %628 = vmatprep.subr.bf16.mxu0 0
      %629 = vmatpush1.bf16.msra.mxu0 0
      %630 = vmatprep.subr.bf16.mxu0 0
      %631 = vmatpush1.bf16.msra.mxu0 0
      %632 = vmatprep.subr.bf16.mxu0 0
      %633 = vmatpush1.bf16.msra.mxu0 0
      %634 = vmatprep.subr.bf16.mxu0 0
      %635 = vmatpush1.bf16.msra.mxu0 0
      %636 = vmatprep.subr.bf16.mxu0 0
      %637 = vmatpush1.bf16.msra.mxu0 0
      %638 = vmatprep.subr.bf16.mxu0 0
      %639 = vmatpush1.bf16.msra.mxu0 0
      %640 = vmatprep.subr.bf16.mxu0 0
      %641 = vmatpush1.bf16.msra.mxu0 0
      %642 = vmatprep.subr.bf16.mxu0 0
      %643 = vmatpush1.bf16.msra.mxu0 0
      %644 = vmatprep.subr.bf16.mxu0 0
      %645 = vmatpush1.bf16.msra.mxu0 0
      %646 = vmatprep.subr.bf16.mxu0 0
      %647 = vmatpush1.bf16.msra.mxu0 0
      %648 = vmatprep.subr.bf16.mxu0 0
      %649 = vmatpush1.bf16.msra.mxu0 0
      %650 = vmatprep.subr.bf16.mxu0 0
      %651 = vmatpush1.bf16.msra.mxu0 0
      %652 = vmatprep.subr.bf16.mxu0 0
      %653 = vmatpush1.bf16.msra.mxu0 0
      %654 = vmatprep.mubr.bf16.mxu0 0
      %655 = vmatmul.mubr.bf16.gmra.mrb[0].mxu0 %v527
      %v656 = vpop.f32.mrb[0].mxu0
      %v657 = vadd.f32 %v351, %v656
      %v658 = vpop.f32.mrb[0].mxu0
      %v659 = vpop.f32.mrb[0].mxu0
      %v660 = vadd.f32 %v351, %v659
      %v661 = vpop.f32.mrb[0].mxu0
      %662 = vmatprep.mubr.bf16.mxu0 0
      %663 = vmatmul.mubr.bf16.gmra.mrb[0].mxu0 %v530
      %v664 = vpop.f32.mrb[0].mxu0
      %v665 = vadd.f32 %v351, %v664
      %v666 = vpop.f32.mrb[0].mxu0
      %v667 = vpop.f32.mrb[0].mxu0
      %v668 = vadd.f32 %v351, %v667
      %v669 = vpop.f32.mrb[0].mxu0
      %670 = vmatprep.mubr.bf16.mxu0 0
      %671 = vmatmul.mubr.bf16.gmra.mrb[0].mxu0 %v533
      %v672 = vpop.f32.mrb[0].mxu0
      %v673 = vadd.f32 %v351, %v672
      %v674 = vpop.f32.mrb[0].mxu0
      %v675 = vpop.f32.mrb[0].mxu0
      %v676 = vadd.f32 %v351, %v675
      %v677 = vpop.f32.mrb[0].mxu0
      %678 = vmatprep.mubr.bf16.mxu0 0
      %679 = vmatmul.mubr.bf16.gmra.mrb[0].mxu0 %v536
      %v680 = vpop.f32.mrb[0].mxu0
      %v681 = vadd.f32 %v351, %v680
      %v682 = vpop.f32.mrb[0].mxu0
      %v683 = vpop.f32.mrb[0].mxu0
      %v684 = vadd.f32 %v351, %v683
      %v685 = vpop.f32.mrb[0].mxu0
      %686 = vmatprep.mubr.bf16.mxu0 0
      %687 = vmatmul.mubr.bf16.gmra.mrb[0].mxu0 %v539
      %v688 = vpop.f32.mrb[0].mxu0
      %v689 = vadd.f32 %v351, %v688
      %v690 = vpop.f32.mrb[0].mxu0
      %v691 = vpop.f32.mrb[0].mxu0
      %v692 = vadd.f32 %v351, %v691
      %v693 = vpop.f32.mrb[0].mxu0
      %694 = vmatprep.mubr.bf16.mxu0 0
      %695 = vmatmul.mubr.bf16.gmra.mrb[0].mxu0 %v542
      %v696 = vpop.f32.mrb[0].mxu0
      %v697 = vadd.f32 %v351, %v696
      %v698 = vpop.f32.mrb[0].mxu0
      %v699 = vpop.f32.mrb[0].mxu0
      %v700 = vadd.f32 %v351, %v699
      %v701 = vpop.f32.mrb[0].mxu0
      %702 = vmatprep.mubr.bf16.mxu0 0
      %703 = vmatmul.mubr.bf16.gmra.mrb[0].mxu0 %v545
      %v704 = vpop.f32.mrb[0].mxu0
      %v705 = vadd.f32 %v351, %v704
      %v706 = vpop.f32.mrb[0].mxu0
      %v707 = vpop.f32.mrb[0].mxu0
      %v708 = vadd.f32 %v351, %v707
      %v709 = vpop.f32.mrb[0].mxu0
      %710 = vmatprep.mubr.bf16.mxu0 0
      %711 = vmatmul.mubr.bf16.gmra.mrb[0].mxu0 %v548
      %v712 = vpop.f32.mrb[0].mxu0
      %v713 = vadd.f32 %v351, %v712
      %v714 = vpop.f32.mrb[0].mxu0
      %v715 = vpop.f32.mrb[0].mxu0
      %v716 = vadd.f32 %v351, %v715
      %v717 = vpop.f32.mrb[0].mxu0
      %718 = vmatprep.mubr.bf16.mxu0 0
      %719 = vmatmul.mubr.bf16.gmra.mrb[0].mxu0 %v551
      %v720 = vpop.f32.mrb[0].mxu0
      %v721 = vadd.f32 %v351, %v720
      %v722 = vpop.f32.mrb[0].mxu0
      %v723 = vpop.f32.mrb[0].mxu0
      %v724 = vadd.f32 %v351, %v723
      %v725 = vpop.f32.mrb[0].mxu0
      %726 = vmatprep.mubr.bf16.mxu0 0
      %727 = vmatmul.mubr.bf16.gmra.mrb[0].mxu0 %v554
      %v728 = vpop.f32.mrb[0].mxu0
      %v729 = vadd.f32 %v351, %v728
      %v730 = vpop.f32.mrb[0].mxu0
      %v731 = vpop.f32.mrb[0].mxu0
      %v732 = vadd.f32 %v351, %v731
      %v733 = vpop.f32.mrb[0].mxu0
      %734 = vmatprep.mubr.bf16.mxu0 0
      %735 = vmatmul.mubr.bf16.gmra.mrb[0].mxu0 %v557
      %v736 = vpop.f32.mrb[0].mxu0
      %v737 = vadd.f32 %v351, %v736
      %v738 = vpop.f32.mrb[0].mxu0
      %v739 = vpop.f32.mrb[0].mxu0
      %v740 = vadd.f32 %v351, %v739
      %v741 = vpop.f32.mrb[0].mxu0
      %742 = vmatprep.mubr.bf16.mxu0 0
      %743 = vmatmul.mubr.bf16.gmra.mrb[0].mxu0 %v560
      %v744 = vpop.f32.mrb[0].mxu0
      %v745 = vadd.f32 %v351, %v744
      %v746 = vpop.f32.mrb[0].mxu0
      %v747 = vpop.f32.mrb[0].mxu0
      %v748 = vadd.f32 %v351, %v747
      %v749 = vpop.f32.mrb[0].mxu0
      %750 = vmatprep.mubr.bf16.mxu0 0
      %751 = vmatmul.mubr.bf16.gmra.mrb[0].mxu0 %v563
      %v752 = vpop.f32.mrb[0].mxu0
      %v753 = vadd.f32 %v351, %v752
      %v754 = vpop.f32.mrb[0].mxu0
      %v755 = vpop.f32.mrb[0].mxu0
      %v756 = vadd.f32 %v351, %v755
      %v757 = vpop.f32.mrb[0].mxu0
      %758 = vmatprep.mubr.bf16.mxu0 0
      %759 = vmatmul.mubr.bf16.gmra.mrb[0].mxu0 %v566
      %v760 = vpop.f32.mrb[0].mxu0
      %v761 = vadd.f32 %v351, %v760
      %v762 = vpop.f32.mrb[0].mxu0
      %v763 = vpop.f32.mrb[0].mxu0
      %v764 = vadd.f32 %v351, %v763
      %v765 = vpop.f32.mrb[0].mxu0
      %766 = vmatprep.mubr.bf16.mxu0 0
      %767 = vmatmul.mubr.bf16.gmra.mrb[0].mxu0 %v569
      %v768 = vpop.f32.mrb[0].mxu0
      %v769 = vadd.f32 %v351, %v768
      %v770 = vpop.f32.mrb[0].mxu0
      %v771 = vpop.f32.mrb[0].mxu0
      %v772 = vadd.f32 %v351, %v771
      %v773 = vpop.f32.mrb[0].mxu0
      %774 = vmatprep.mubr.bf16.mxu0 0
      %775 = vmatmul.mubr.bf16.gmra.mrb[0].mxu0 %v572
      %v776 = vpop.f32.mrb[0].mxu0
      %v777 = vadd.f32 %v351, %v776
      %v778 = vpop.f32.mrb[0].mxu0
      %v779 = vpop.f32.mrb[0].mxu0
      %v780 = vadd.f32 %v351, %v779
      %v781 = vpop.f32.mrb[0].mxu0
      %782 = vmatprep.mubr.bf16.mxu0 0
      %783 = vmatmul.mubr.bf16.gmra.mrb[0].mxu0 %v575
      %v784 = vpop.f32.mrb[0].mxu0
      %v785 = vadd.f32 %v351, %v784
      %v786 = vpop.f32.mrb[0].mxu0
      %v787 = vpop.f32.mrb[0].mxu0
      %v788 = vadd.f32 %v351, %v787
      %v789 = vpop.f32.mrb[0].mxu0
      %790 = vmatprep.mubr.bf16.mxu0 0
      %791 = vmatmul.mubr.bf16.gmra.mrb[0].mxu0 %v578
      %v792 = vpop.f32.mrb[0].mxu0
      %v793 = vadd.f32 %v351, %v792
      %v794 = vpop.f32.mrb[0].mxu0
      %v795 = vpop.f32.mrb[0].mxu0
      %v796 = vadd.f32 %v351, %v795
      %v797 = vpop.f32.mrb[0].mxu0
      %798 = vmatprep.mubr.bf16.mxu0 0
      %799 = vmatmul.mubr.bf16.gmra.mrb[0].mxu0 %v581
      %v800 = vpop.f32.mrb[0].mxu0
      %v801 = vadd.f32 %v351, %v800
      %v802 = vpop.f32.mrb[0].mxu0
      %v803 = vpop.f32.mrb[0].mxu0
      %v804 = vadd.f32 %v351, %v803
      %v805 = vpop.f32.mrb[0].mxu0
      %806 = vmatprep.mubr.bf16.mxu0 0
      %807 = vmatmul.mubr.bf16.gmra.mrb[0].mxu0 %v584
      %v808 = vpop.f32.mrb[0].mxu0
      %v809 = vadd.f32 %v351, %v808
      %v810 = vpop.f32.mrb[0].mxu0
      %v811 = vpop.f32.mrb[0].mxu0
      %v812 = vadd.f32 %v351, %v811
      %v813 = vpop.f32.mrb[0].mxu0
      %814 = vmatprep.mubr.bf16.mxu0 0
      %815 = vmatmul.mubr.bf16.gmra.mrb[0].mxu0 %v587
      %v816 = vpop.f32.mrb[0].mxu0
      %v817 = vadd.f32 %v351, %v816
      %v818 = vpop.f32.mrb[0].mxu0
      %v819 = vpop.f32.mrb[0].mxu0
      %v820 = vadd.f32 %v351, %v819
      %v821 = vpop.f32.mrb[0].mxu0
      %822 = vmatprep.mubr.bf16.mxu0 0
      %823 = vmatmul.mubr.bf16.gmra.mrb[0].mxu0 %v590
      %v824 = vpop.f32.mrb[0].mxu0
      %v825 = vadd.f32 %v351, %v824
      %v826 = vpop.f32.mrb[0].mxu0
      %v827 = vpop.f32.mrb[0].mxu0
      %v828 = vadd.f32 %v351, %v827
      %v829 = vpop.f32.mrb[0].mxu0
      %830 = vmatprep.mubr.bf16.mxu0 0
      %831 = vmatmul.mubr.bf16.gmra.mrb[0].mxu0 %v593
      %v832 = vpop.f32.mrb[0].mxu0
      %v833 = vadd.f32 %v351, %v832
      %v834 = vpop.f32.mrb[0].mxu0
      %v835 = vpop.f32.mrb[0].mxu0
      %v836 = vadd.f32 %v351, %v835
      %v837 = vpop.f32.mrb[0].mxu0
      %838 = vmatprep.mubr.bf16.mxu0 0
      %839 = vmatmul.mubr.bf16.gmra.mrb[0].mxu0 %v596
      %v840 = vpop.f32.mrb[0].mxu0
      %v841 = vadd.f32 %v351, %v840
      %v842 = vpop.f32.mrb[0].mxu0
      %v843 = vpop.f32.mrb[0].mxu0
      %v844 = vadd.f32 %v351, %v843
      %v845 = vpop.f32.mrb[0].mxu0
      %846 = vmatprep.mubr.bf16.mxu0 0
      %847 = vmatmul.mubr.bf16.gmra.mrb[0].mxu0 %v599
      %v848 = vpop.f32.mrb[0].mxu0
      %v849 = vadd.f32 %v351, %v848
      %v850 = vpop.f32.mrb[0].mxu0
      %v851 = vpop.f32.mrb[0].mxu0
      %v852 = vadd.f32 %v351, %v851
      %v853 = vpop.f32.mrb[0].mxu0
      %854 = vmatprep.mubr.bf16.mxu0 0
      %855 = vmatmul.mubr.bf16.gmra.mrb[0].mxu0 %v602
      %v856 = vpop.f32.mrb[0].mxu0
      %v857 = vadd.f32 %v351, %v856
      %v858 = vpop.f32.mrb[0].mxu0
      %v859 = vpop.f32.mrb[0].mxu0
      %v860 = vadd.f32 %v351, %v859
      %v861 = vpop.f32.mrb[0].mxu0
      %862 = vmatprep.mubr.bf16.mxu0 0
      %863 = vmatmul.mubr.bf16.gmra.mrb[0].mxu0 %v605
      %v864 = vpop.f32.mrb[0].mxu0
      %v865 = vadd.f32 %v351, %v864
      %v866 = vpop.f32.mrb[0].mxu0
      %v867 = vpop.f32.mrb[0].mxu0
      %v868 = vadd.f32 %v351, %v867
      %v869 = vpop.f32.mrb[0].mxu0
      %870 = vmatprep.mubr.bf16.mxu0 0
      %871 = vmatmul.mubr.bf16.gmra.mrb[0].mxu0 %v608
      %v872 = vpop.f32.mrb[0].mxu0
      %v873 = vadd.f32 %v351, %v872
      %v874 = vpop.f32.mrb[0].mxu0
      %v875 = vpop.f32.mrb[0].mxu0
      %v876 = vadd.f32 %v351, %v875
      %v877 = vpop.f32.mrb[0].mxu0
      %878 = vmatprep.mubr.bf16.mxu0 0
      %879 = vmatmul.mubr.bf16.gmra.mrb[0].mxu0 %v611
      %v880 = vpop.f32.mrb[0].mxu0
      %v881 = vadd.f32 %v351, %v880
      %v882 = vpop.f32.mrb[0].mxu0
      %v883 = vpop.f32.mrb[0].mxu0
      %v884 = vadd.f32 %v351, %v883
      %v885 = vpop.f32.mrb[0].mxu0
      %886 = vmatprep.mubr.bf16.mxu0 0
      %887 = vmatmul.mubr.bf16.gmra.mrb[0].mxu0 %v614
      %v888 = vpop.f32.mrb[0].mxu0
      %v889 = vadd.f32 %v351, %v888
      %v890 = vpop.f32.mrb[0].mxu0
      %v891 = vpop.f32.mrb[0].mxu0
      %v892 = vadd.f32 %v351, %v891
      %v893 = vpop.f32.mrb[0].mxu0
      %894 = vmatprep.mubr.bf16.mxu0 0
      %895 = vmatmul.mubr.bf16.gmra.mrb[0].mxu0 %v617
      %v896 = vpop.f32.mrb[0].mxu0
      %v897 = vadd.f32 %v351, %v896
      %v898 = vpop.f32.mrb[0].mxu0
      %v899 = vpop.f32.mrb[0].mxu0
      %v900 = vadd.f32 %v351, %v899
      %v901 = vpop.f32.mrb[0].mxu0
      %902 = vmatprep.mubr.bf16.mxu0 0
      %903 = vmatmul.mubr.bf16.gmra.mrb[0].mxu0 %v620
      %v904 = vpop.f32.mrb[0].mxu0
      %v905 = vadd.f32 %v351, %v904
      %v906 = vpop.f32.mrb[0].mxu0
      %v907 = vpop.f32.mrb[0].mxu0
      %v908 = vadd.f32 %v351, %v907
      %v909 = vpop.f32.mrb[0].mxu0
      %910 = vdwg.mxu0
      %v911 = vld [vmem:[%s269] sm:$0xf]
      %v912 = vld [vmem:[%s269 + $0x4] sm:$0xf]
      %v913 = vld [vmem:[%s269 + $0x8] sm:$0xf]
      %v914 = vld [vmem:[%s269 + $0xc] sm:$0xf]
      %v915 = vld [vmem:[%s269 + $0x10] sm:$0xf]
      %v916 = vld [vmem:[%s269 + $0x14] sm:$0xf]
      %v917 = vld [vmem:[%s269 + $0x18] sm:$0xf]
      %v918 = vld [vmem:[%s269 + $0x1c] sm:$0xf]
      %v919 = vld [vmem:[%s269 + $0x20] sm:$0xf]
      %v920 = vld [vmem:[%s269 + $0x24] sm:$0xf]
      %v921 = vld [vmem:[%s269 + $0x28] sm:$0xf]
      %v922 = vld [vmem:[%s269 + $0x2c] sm:$0xf]
      %v923 = vld [vmem:[%s269 + $0x30] sm:$0xf]
      %v924 = vld [vmem:[%s269 + $0x34] sm:$0xf]
      %v925 = vld [vmem:[%s269 + $0x38] sm:$0xf]
      %v926 = vld [vmem:[%s269 + $0x3c] sm:$0xf]
      %v927 = vld [vmem:[%s269 + $0x40] sm:$0xf]
      %v928 = vld [vmem:[%s269 + $0x44] sm:$0xf]
      %v929 = vld [vmem:[%s269 + $0x48] sm:$0xf]
      %v930 = vld [vmem:[%s269 + $0x4c] sm:$0xf]
      %v931 = vld [vmem:[%s269 + $0x50] sm:$0xf]
      %v932 = vld [vmem:[%s269 + $0x54] sm:$0xf]
      %v933 = vld [vmem:[%s269 + $0x58] sm:$0xf]
      %v934 = vld [vmem:[%s269 + $0x5c] sm:$0xf]
      %v935 = vld [vmem:[%s269 + $0x60] sm:$0xf]
      %v936 = vld [vmem:[%s269 + $0x64] sm:$0xf]
      %v937 = vld [vmem:[%s269 + $0x68] sm:$0xf]
      %v938 = vld [vmem:[%s269 + $0x6c] sm:$0xf]
      %v939 = vld [vmem:[%s269 + $0x70] sm:$0xf]
      %v940 = vld [vmem:[%s269 + $0x74] sm:$0xf]
      %v941 = vld [vmem:[%s269 + $0x78] sm:$0xf]
      %v942 = vld [vmem:[%s269 + $0x7c] sm:$0xf]
      %v943 = vld [vmem:[%s269 + $0x80] sm:$0xf]
      %v944 = vld [vmem:[%s269 + $0x84] sm:$0xf]
      %v945 = vld [vmem:[%s269 + $0x88] sm:$0xf]
      %v946 = vld [vmem:[%s269 + $0x8c] sm:$0xf]
      %v947 = vld [vmem:[%s269 + $0x90] sm:$0xf]
      %v948 = vld [vmem:[%s269 + $0x94] sm:$0xf]
      %v949 = vld [vmem:[%s269 + $0x98] sm:$0xf]
      %v950 = vld [vmem:[%s269 + $0x9c] sm:$0xf]
      %v951 = vld [vmem:[%s269 + $0xa0] sm:$0xf]
      %v952 = vld [vmem:[%s269 + $0xa4] sm:$0xf]
      %v953 = vld [vmem:[%s269 + $0xa8] sm:$0xf]
      %v954 = vld [vmem:[%s269 + $0xac] sm:$0xf]
      %v955 = vld [vmem:[%s269 + $0xb0] sm:$0xf]
      %v956 = vld [vmem:[%s269 + $0xb4] sm:$0xf]
      %v957 = vld [vmem:[%s269 + $0xb8] sm:$0xf]
      %v958 = vld [vmem:[%s269 + $0xbc] sm:$0xf]
      %v959 = vld [vmem:[%s269 + $0xc0] sm:$0xf]
      %v960 = vld [vmem:[%s269 + $0xc4] sm:$0xf]
      %v961 = vld [vmem:[%s269 + $0xc8] sm:$0xf]
      %v962 = vld [vmem:[%s269 + $0xcc] sm:$0xf]
      %v963 = vld [vmem:[%s269 + $0xd0] sm:$0xf]
      %v964 = vld [vmem:[%s269 + $0xd4] sm:$0xf]
      %v965 = vld [vmem:[%s269 + $0xd8] sm:$0xf]
      %v966 = vld [vmem:[%s269 + $0xdc] sm:$0xf]
      %v967 = vld [vmem:[%s269 + $0xe0] sm:$0xf]
      %v968 = vld [vmem:[%s269 + $0xe4] sm:$0xf]
      %v969 = vld [vmem:[%s269 + $0xe8] sm:$0xf]
      %v970 = vld [vmem:[%s269 + $0xec] sm:$0xf]
      %v971 = vld [vmem:[%s269 + $0xf0] sm:$0xf]
      %v972 = vld [vmem:[%s269 + $0xf4] sm:$0xf]
      %v973 = vld [vmem:[%s269 + $0xf8] sm:$0xf]
      %v974 = vld [vmem:[%s269 + $0xfc] sm:$0xf]
      %v975 = vld [vmem:[%s4] sm:$0xf]
      %v976 = vld [vmem:[%s4 + $0x4] sm:$0xf]
      %v977 = vld [vmem:[%s4 + $0x8] sm:$0xf]
      %v978 = vld [vmem:[%s4 + $0xc] sm:$0xf]
      %v979 = vld [vmem:[%s5] sm:$0x1]
      %v981 = vlaneseq
      %v982 = vshrl.u32 %v981, 7
      %v983 = vsub.s32 0, %v982
      %v984 = vrot.slane %v979, %v983
      %v1050 = vunpack.c.l.b16 %v911
      %v1051 = vunpack.c.l.b16 %v912
      %v1052 = vunpack.c.l.b16 %v913
      %v1053 = vunpack.c.l.b16 %v914
      %v1054 = vunpack.c.l.b16 %v915
      %v1055 = vunpack.c.l.b16 %v916
      %v1056 = vunpack.c.l.b16 %v917
      %v1057 = vunpack.c.l.b16 %v918
      %v1058 = vunpack.c.l.b16 %v919
      %v1059 = vunpack.c.l.b16 %v920
      %v1060 = vunpack.c.l.b16 %v921
      %v1061 = vunpack.c.l.b16 %v922
      %v1062 = vunpack.c.l.b16 %v923
      %v1063 = vunpack.c.l.b16 %v924
      %v1064 = vunpack.c.l.b16 %v925
      %v1065 = vunpack.c.l.b16 %v926
      %v1066 = vunpack.c.l.b16 %v927
      %v1067 = vunpack.c.l.b16 %v928
      %v1068 = vunpack.c.l.b16 %v929
      %v1069 = vunpack.c.l.b16 %v930
      %v1070 = vunpack.c.l.b16 %v931
      %v1071 = vunpack.c.l.b16 %v932
      %v1072 = vunpack.c.l.b16 %v933
      %v1073 = vunpack.c.l.b16 %v934
      %v1074 = vunpack.c.l.b16 %v935
      %v1075 = vunpack.c.l.b16 %v936
      %v1076 = vunpack.c.l.b16 %v937
      %v1077 = vunpack.c.l.b16 %v938
      %v1078 = vunpack.c.l.b16 %v939
      %v1079 = vunpack.c.l.b16 %v940
      %v1080 = vunpack.c.l.b16 %v941
      %v1081 = vunpack.c.l.b16 %v942
      %v1082 = vunpack.c.l.b16 %v943
      %v1083 = vunpack.c.l.b16 %v944
      %v1084 = vunpack.c.l.b16 %v945
      %v1085 = vunpack.c.l.b16 %v946
      %v1086 = vunpack.c.l.b16 %v947
      %v1087 = vunpack.c.l.b16 %v948
      %v1088 = vunpack.c.l.b16 %v949
      %v1089 = vunpack.c.l.b16 %v950
      %v1090 = vunpack.c.l.b16 %v951
      %v1091 = vunpack.c.l.b16 %v952
      %v1092 = vunpack.c.l.b16 %v953
      %v1093 = vunpack.c.l.b16 %v954
      %v1094 = vunpack.c.l.b16 %v955
      %v1095 = vunpack.c.l.b16 %v956
      %v1096 = vunpack.c.l.b16 %v957
      %v1097 = vunpack.c.l.b16 %v958
      %v1098 = vunpack.c.l.b16 %v959
      %v1099 = vunpack.c.l.b16 %v960
      %v1100 = vunpack.c.l.b16 %v961
      %v1101 = vunpack.c.l.b16 %v962
      %v1102 = vunpack.c.l.b16 %v963
      %v1103 = vunpack.c.l.b16 %v964
      %v1104 = vunpack.c.l.b16 %v965
      %v1105 = vunpack.c.l.b16 %v966
      %v1106 = vunpack.c.l.b16 %v967
      %v1107 = vunpack.c.l.b16 %v968
      %v1108 = vunpack.c.l.b16 %v969
      %v1109 = vunpack.c.l.b16 %v970
      %v1110 = vunpack.c.l.b16 %v971
      %v1111 = vunpack.c.l.b16 %v972
      %v1112 = vunpack.c.l.b16 %v973
      %v1113 = vunpack.c.l.b16 %v974
      %v1114 = vpack.c.b16 %v1051, %v1050
      %v1115 = vpack.c.b16 %v1053, %v1052
      %v1116 = vpack.c.b16 %v1055, %v1054
      %v1117 = vpack.c.b16 %v1057, %v1056
      %v1118 = vpack.c.b16 %v1059, %v1058
      %v1119 = vpack.c.b16 %v1061, %v1060
      %v1120 = vpack.c.b16 %v1063, %v1062
      %v1121 = vpack.c.b16 %v1065, %v1064
      %v1122 = vpack.c.b16 %v1067, %v1066
      %v1123 = vpack.c.b16 %v1069, %v1068
      %v1124 = vpack.c.b16 %v1071, %v1070
      %v1125 = vpack.c.b16 %v1073, %v1072
      %v1126 = vpack.c.b16 %v1075, %v1074
      %v1127 = vpack.c.b16 %v1077, %v1076
      %v1128 = vpack.c.b16 %v1079, %v1078
      %v1129 = vpack.c.b16 %v1081, %v1080
      %v1130 = vpack.c.b16 %v1083, %v1082
      %v1131 = vpack.c.b16 %v1085, %v1084
      %v1132 = vpack.c.b16 %v1087, %v1086
      %v1133 = vpack.c.b16 %v1089, %v1088
      %v1134 = vpack.c.b16 %v1091, %v1090
      %v1135 = vpack.c.b16 %v1093, %v1092
      %v1136 = vpack.c.b16 %v1095, %v1094
      %v1137 = vpack.c.b16 %v1097, %v1096
      %v1138 = vpack.c.b16 %v1099, %v1098
      %v1139 = vpack.c.b16 %v1101, %v1100
      %v1140 = vpack.c.b16 %v1103, %v1102
      %v1141 = vpack.c.b16 %v1105, %v1104
      %v1142 = vpack.c.b16 %v1107, %v1106
      %v1143 = vpack.c.b16 %v1109, %v1108
      %v1144 = vpack.c.b16 %v1111, %v1110
      %v1145 = vpack.c.b16 %v1113, %v1112
      %v1150 = vunpack.c.l.b16 %v975
      %v1151 = vunpack.c.l.b16 %v976
      %v1152 = vunpack.c.l.b16 %v977
      %v1153 = vunpack.c.l.b16 %v978
      %v1154 = vpack.c.b16 %v1151, %v1150
      %v1155 = vpack.c.b16 %v1153, %v1152
      %v1159 = vsel %vm525, %v1114, 0
      %v1162 = vsel %vm525, %v1115, 0
      %v1165 = vsel %vm525, %v1116, 0
      %v1168 = vsel %vm525, %v1117, 0
      %v1171 = vsel %vm525, %v1118, 0
      %v1174 = vsel %vm525, %v1119, 0
      %v1177 = vsel %vm525, %v1120, 0
      %v1180 = vsel %vm525, %v1121, 0
      %v1183 = vsel %vm525, %v1122, 0
      %v1186 = vsel %vm525, %v1123, 0
      %v1189 = vsel %vm525, %v1124, 0
      %v1192 = vsel %vm525, %v1125, 0
      %v1195 = vsel %vm525, %v1126, 0
      %v1198 = vsel %vm525, %v1127, 0
      %v1201 = vsel %vm525, %v1128, 0
      %v1204 = vsel %vm525, %v1129, 0
      %v1207 = vsel %vm525, %v1130, 0
      %v1210 = vsel %vm525, %v1131, 0
      %v1213 = vsel %vm525, %v1132, 0
      %v1216 = vsel %vm525, %v1133, 0
      %v1219 = vsel %vm525, %v1134, 0
      %v1222 = vsel %vm525, %v1135, 0
      %v1225 = vsel %vm525, %v1136, 0
      %v1228 = vsel %vm525, %v1137, 0
      %v1231 = vsel %vm525, %v1138, 0
      %v1234 = vsel %vm525, %v1139, 0
      %v1237 = vsel %vm525, %v1140, 0
      %v1240 = vsel %vm525, %v1141, 0
      %v1243 = vsel %vm525, %v1142, 0
      %v1246 = vsel %vm525, %v1143, 0
      %v1249 = vsel %vm525, %v1144, 0
      %v1252 = vsel %vm525, %v1145, 0
      %1254 = vmatprep.subr.bf16.mxu0 0
      %1255 = vmatpush1.bf16.msra.mxu0 %v1154
      %1256 = vmatprep.subr.bf16.mxu0 0
      %1257 = vmatpush1.bf16.msra.mxu0 %v1155
      %1258 = vmatprep.subr.bf16.mxu0 0
      %1259 = vmatpush1.bf16.msra.mxu0 0
      %1260 = vmatprep.subr.bf16.mxu0 0
      %1261 = vmatpush1.bf16.msra.mxu0 0
      %1262 = vmatprep.subr.bf16.mxu0 0
      %1263 = vmatpush1.bf16.msra.mxu0 0
      %1264 = vmatprep.subr.bf16.mxu0 0
      %1265 = vmatpush1.bf16.msra.mxu0 0
      %1266 = vmatprep.subr.bf16.mxu0 0
      %1267 = vmatpush1.bf16.msra.mxu0 0
      %1268 = vmatprep.subr.bf16.mxu0 0
      %1269 = vmatpush1.bf16.msra.mxu0 0
      %1270 = vmatprep.subr.bf16.mxu0 0
      %1271 = vmatpush1.bf16.msra.mxu0 0
      %1272 = vmatprep.subr.bf16.mxu0 0
      %1273 = vmatpush1.bf16.msra.mxu0 0
      %1274 = vmatprep.subr.bf16.mxu0 0
      %1275 = vmatpush1.bf16.msra.mxu0 0
      %1276 = vmatprep.subr.bf16.mxu0 0
      %1277 = vmatpush1.bf16.msra.mxu0 0
      %1278 = vmatprep.subr.bf16.mxu0 0
      %1279 = vmatpush1.bf16.msra.mxu0 0
      %1280 = vmatprep.subr.bf16.mxu0 0
      %1281 = vmatpush1.bf16.msra.mxu0 0
      %1282 = vmatprep.subr.bf16.mxu0 0
      %1283 = vmatpush1.bf16.msra.mxu0 0
      %1284 = vmatprep.subr.bf16.mxu0 0
      %1285 = vmatpush1.bf16.msra.mxu0 0
      %1286 = vmatprep.mubr.bf16.mxu0 0
      %1287 = vmatmul.mubr.bf16.gmra.mrb[0].mxu0 %v1159
      %v1288 = vpop.f32.mrb[0].mxu0
      %v1289 = vadd.f32 %v984, %v1288
      %v1290 = vpop.f32.mrb[0].mxu0
      %v1291 = vpop.f32.mrb[0].mxu0
      %v1292 = vadd.f32 %v984, %v1291
      %v1293 = vpop.f32.mrb[0].mxu0
      %1294 = vmatprep.mubr.bf16.mxu0 0
      %1295 = vmatmul.mubr.bf16.gmra.mrb[0].mxu0 %v1162
      %v1296 = vpop.f32.mrb[0].mxu0
      %v1297 = vadd.f32 %v984, %v1296
      %v1298 = vpop.f32.mrb[0].mxu0
      %v1299 = vpop.f32.mrb[0].mxu0
      %v1300 = vadd.f32 %v984, %v1299
      %v1301 = vpop.f32.mrb[0].mxu0
      %1302 = vmatprep.mubr.bf16.mxu0 0
      %1303 = vmatmul.mubr.bf16.gmra.mrb[0].mxu0 %v1165
      %v1304 = vpop.f32.mrb[0].mxu0
      %v1305 = vadd.f32 %v984, %v1304
      %v1306 = vpop.f32.mrb[0].mxu0
      %v1307 = vpop.f32.mrb[0].mxu0
      %v1308 = vadd.f32 %v984, %v1307
      %v1309 = vpop.f32.mrb[0].mxu0
      %1310 = vmatprep.mubr.bf16.mxu0 0
      %1311 = vmatmul.mubr.bf16.gmra.mrb[0].mxu0 %v1168
      %v1312 = vpop.f32.mrb[0].mxu0
      %v1313 = vadd.f32 %v984, %v1312
      %v1314 = vpop.f32.mrb[0].mxu0
      %v1315 = vpop.f32.mrb[0].mxu0
      %v1316 = vadd.f32 %v984, %v1315
      %v1317 = vpop.f32.mrb[0].mxu0
      %1318 = vmatprep.mubr.bf16.mxu0 0
      %1319 = vmatmul.mubr.bf16.gmra.mrb[0].mxu0 %v1171
      %v1320 = vpop.f32.mrb[0].mxu0
      %v1321 = vadd.f32 %v984, %v1320
      %v1322 = vpop.f32.mrb[0].mxu0
      %v1323 = vpop.f32.mrb[0].mxu0
      %v1324 = vadd.f32 %v984, %v1323
      %v1325 = vpop.f32.mrb[0].mxu0
      %1326 = vmatprep.mubr.bf16.mxu0 0
      %1327 = vmatmul.mubr.bf16.gmra.mrb[0].mxu0 %v1174
      %v1328 = vpop.f32.mrb[0].mxu0
      %v1329 = vadd.f32 %v984, %v1328
      %v1330 = vpop.f32.mrb[0].mxu0
      %v1331 = vpop.f32.mrb[0].mxu0
      %v1332 = vadd.f32 %v984, %v1331
      %v1333 = vpop.f32.mrb[0].mxu0
      %1334 = vmatprep.mubr.bf16.mxu0 0
      %1335 = vmatmul.mubr.bf16.gmra.mrb[0].mxu0 %v1177
      %v1336 = vpop.f32.mrb[0].mxu0
      %v1337 = vadd.f32 %v984, %v1336
      %v1338 = vpop.f32.mrb[0].mxu0
      %v1339 = vpop.f32.mrb[0].mxu0
      %v1340 = vadd.f32 %v984, %v1339
      %v1341 = vpop.f32.mrb[0].mxu0
      %1342 = vmatprep.mubr.bf16.mxu0 0
      %1343 = vmatmul.mubr.bf16.gmra.mrb[0].mxu0 %v1180
      %v1344 = vpop.f32.mrb[0].mxu0
      %v1345 = vadd.f32 %v984, %v1344
      %v1346 = vpop.f32.mrb[0].mxu0
      %v1347 = vpop.f32.mrb[0].mxu0
      %v1348 = vadd.f32 %v984, %v1347
      %v1349 = vpop.f32.mrb[0].mxu0
      %1350 = vmatprep.mubr.bf16.mxu0 0
      %1351 = vmatmul.mubr.bf16.gmra.mrb[0].mxu0 %v1183
      %v1352 = vpop.f32.mrb[0].mxu0
      %v1353 = vadd.f32 %v984, %v1352
      %v1354 = vpop.f32.mrb[0].mxu0
      %v1355 = vpop.f32.mrb[0].mxu0
      %v1356 = vadd.f32 %v984, %v1355
      %v1357 = vpop.f32.mrb[0].mxu0
      %1358 = vmatprep.mubr.bf16.mxu0 0
      %1359 = vmatmul.mubr.bf16.gmra.mrb[0].mxu0 %v1186
      %v1360 = vpop.f32.mrb[0].mxu0
      %v1361 = vadd.f32 %v984, %v1360
      %v1362 = vpop.f32.mrb[0].mxu0
      %v1363 = vpop.f32.mrb[0].mxu0
      %v1364 = vadd.f32 %v984, %v1363
      %v1365 = vpop.f32.mrb[0].mxu0
      %1366 = vmatprep.mubr.bf16.mxu0 0
      %1367 = vmatmul.mubr.bf16.gmra.mrb[0].mxu0 %v1189
      %v1368 = vpop.f32.mrb[0].mxu0
      %v1369 = vadd.f32 %v984, %v1368
      %v1370 = vpop.f32.mrb[0].mxu0
      %v1371 = vpop.f32.mrb[0].mxu0
      %v1372 = vadd.f32 %v984, %v1371
      %v1373 = vpop.f32.mrb[0].mxu0
      %1374 = vmatprep.mubr.bf16.mxu0 0
      %1375 = vmatmul.mubr.bf16.gmra.mrb[0].mxu0 %v1192
      %v1376 = vpop.f32.mrb[0].mxu0
      %v1377 = vadd.f32 %v984, %v1376
      %v1378 = vpop.f32.mrb[0].mxu0
      %v1379 = vpop.f32.mrb[0].mxu0
      %v1380 = vadd.f32 %v984, %v1379
      %v1381 = vpop.f32.mrb[0].mxu0
      %1382 = vmatprep.mubr.bf16.mxu0 0
      %1383 = vmatmul.mubr.bf16.gmra.mrb[0].mxu0 %v1195
      %v1384 = vpop.f32.mrb[0].mxu0
      %v1385 = vadd.f32 %v984, %v1384
      %v1386 = vpop.f32.mrb[0].mxu0
      %v1387 = vpop.f32.mrb[0].mxu0
      %v1388 = vadd.f32 %v984, %v1387
      %v1389 = vpop.f32.mrb[0].mxu0
      %1390 = vmatprep.mubr.bf16.mxu0 0
      %1391 = vmatmul.mubr.bf16.gmra.mrb[0].mxu0 %v1198
      %v1392 = vpop.f32.mrb[0].mxu0
      %v1393 = vadd.f32 %v984, %v1392
      %v1394 = vpop.f32.mrb[0].mxu0
      %v1395 = vpop.f32.mrb[0].mxu0
      %v1396 = vadd.f32 %v984, %v1395
      %v1397 = vpop.f32.mrb[0].mxu0
      %1398 = vmatprep.mubr.bf16.mxu0 0
      %1399 = vmatmul.mubr.bf16.gmra.mrb[0].mxu0 %v1201
      %v1400 = vpop.f32.mrb[0].mxu0
      %v1401 = vadd.f32 %v984, %v1400
      %v1402 = vpop.f32.mrb[0].mxu0
      %v1403 = vpop.f32.mrb[0].mxu0
      %v1404 = vadd.f32 %v984, %v1403
      %v1405 = vpop.f32.mrb[0].mxu0
      %1406 = vmatprep.mubr.bf16.mxu0 0
      %1407 = vmatmul.mubr.bf16.gmra.mrb[0].mxu0 %v1204
      %v1408 = vpop.f32.mrb[0].mxu0
      %v1409 = vadd.f32 %v984, %v1408
      %v1410 = vpop.f32.mrb[0].mxu0
      %v1411 = vpop.f32.mrb[0].mxu0
      %v1412 = vadd.f32 %v984, %v1411
      %v1413 = vpop.f32.mrb[0].mxu0
      %1414 = vmatprep.mubr.bf16.mxu0 0
      %1415 = vmatmul.mubr.bf16.gmra.mrb[0].mxu0 %v1207
      %v1416 = vpop.f32.mrb[0].mxu0
      %v1417 = vadd.f32 %v984, %v1416
      %v1418 = vpop.f32.mrb[0].mxu0
      %v1419 = vpop.f32.mrb[0].mxu0
      %v1420 = vadd.f32 %v984, %v1419
      %v1421 = vpop.f32.mrb[0].mxu0
      %1422 = vmatprep.mubr.bf16.mxu0 0
      %1423 = vmatmul.mubr.bf16.gmra.mrb[0].mxu0 %v1210
      %v1424 = vpop.f32.mrb[0].mxu0
      %v1425 = vadd.f32 %v984, %v1424
      %v1426 = vpop.f32.mrb[0].mxu0
      %v1427 = vpop.f32.mrb[0].mxu0
      %v1428 = vadd.f32 %v984, %v1427
      %v1429 = vpop.f32.mrb[0].mxu0
      %1430 = vmatprep.mubr.bf16.mxu0 0
      %1431 = vmatmul.mubr.bf16.gmra.mrb[0].mxu0 %v1213
      %v1432 = vpop.f32.mrb[0].mxu0
      %v1433 = vadd.f32 %v984, %v1432
      %v1434 = vpop.f32.mrb[0].mxu0
      %v1435 = vpop.f32.mrb[0].mxu0
      %v1436 = vadd.f32 %v984, %v1435
      %v1437 = vpop.f32.mrb[0].mxu0
      %1438 = vmatprep.mubr.bf16.mxu0 0
      %1439 = vmatmul.mubr.bf16.gmra.mrb[0].mxu0 %v1216
      %v1440 = vpop.f32.mrb[0].mxu0
      %v1441 = vadd.f32 %v984, %v1440
      %v1442 = vpop.f32.mrb[0].mxu0
      %v1443 = vpop.f32.mrb[0].mxu0
      %v1444 = vadd.f32 %v984, %v1443
      %v1445 = vpop.f32.mrb[0].mxu0
      %1446 = vmatprep.mubr.bf16.mxu0 0
      %1447 = vmatmul.mubr.bf16.gmra.mrb[0].mxu0 %v1219
      %v1448 = vpop.f32.mrb[0].mxu0
      %v1449 = vadd.f32 %v984, %v1448
      %v1450 = vpop.f32.mrb[0].mxu0
      %v1451 = vpop.f32.mrb[0].mxu0
      %v1452 = vadd.f32 %v984, %v1451
      %v1453 = vpop.f32.mrb[0].mxu0
      %1454 = vmatprep.mubr.bf16.mxu0 0
      %1455 = vmatmul.mubr.bf16.gmra.mrb[0].mxu0 %v1222
      %v1456 = vpop.f32.mrb[0].mxu0
      %v1457 = vadd.f32 %v984, %v1456
      %v1458 = vpop.f32.mrb[0].mxu0
      %v1459 = vpop.f32.mrb[0].mxu0
      %v1460 = vadd.f32 %v984, %v1459
      %v1461 = vpop.f32.mrb[0].mxu0
      %1462 = vmatprep.mubr.bf16.mxu0 0
      %1463 = vmatmul.mubr.bf16.gmra.mrb[0].mxu0 %v1225
      %v1464 = vpop.f32.mrb[0].mxu0
      %v1465 = vadd.f32 %v984, %v1464
      %v1466 = vpop.f32.mrb[0].mxu0
      %v1467 = vpop.f32.mrb[0].mxu0
      %v1468 = vadd.f32 %v984, %v1467
      %v1469 = vpop.f32.mrb[0].mxu0
      %1470 = vmatprep.mubr.bf16.mxu0 0
      %1471 = vmatmul.mubr.bf16.gmra.mrb[0].mxu0 %v1228
      %v1472 = vpop.f32.mrb[0].mxu0
      %v1473 = vadd.f32 %v984, %v1472
      %v1474 = vpop.f32.mrb[0].mxu0
      %v1475 = vpop.f32.mrb[0].mxu0
      %v1476 = vadd.f32 %v984, %v1475
      %v1477 = vpop.f32.mrb[0].mxu0
      %1478 = vmatprep.mubr.bf16.mxu0 0
      %1479 = vmatmul.mubr.bf16.gmra.mrb[0].mxu0 %v1231
      %v1480 = vpop.f32.mrb[0].mxu0
      %v1481 = vadd.f32 %v984, %v1480
      %v1482 = vpop.f32.mrb[0].mxu0
      %v1483 = vpop.f32.mrb[0].mxu0
      %v1484 = vadd.f32 %v984, %v1483
      %v1485 = vpop.f32.mrb[0].mxu0
      %1486 = vmatprep.mubr.bf16.mxu0 0
      %1487 = vmatmul.mubr.bf16.gmra.mrb[0].mxu0 %v1234
      %v1488 = vpop.f32.mrb[0].mxu0
      %v1489 = vadd.f32 %v984, %v1488
      %v1490 = vpop.f32.mrb[0].mxu0
      %v1491 = vpop.f32.mrb[0].mxu0
      %v1492 = vadd.f32 %v984, %v1491
      %v1493 = vpop.f32.mrb[0].mxu0
      %1494 = vmatprep.mubr.bf16.mxu0 0
      %1495 = vmatmul.mubr.bf16.gmra.mrb[0].mxu0 %v1237
      %v1496 = vpop.f32.mrb[0].mxu0
      %v1497 = vadd.f32 %v984, %v1496
      %v1498 = vpop.f32.mrb[0].mxu0
      %v1499 = vpop.f32.mrb[0].mxu0
      %v1500 = vadd.f32 %v984, %v1499
      %v1501 = vpop.f32.mrb[0].mxu0
      %1502 = vmatprep.mubr.bf16.mxu0 0
      %1503 = vmatmul.mubr.bf16.gmra.mrb[0].mxu0 %v1240
      %v1504 = vpop.f32.mrb[0].mxu0
      %v1505 = vadd.f32 %v984, %v1504
      %v1506 = vpop.f32.mrb[0].mxu0
      %v1507 = vpop.f32.mrb[0].mxu0
      %v1508 = vadd.f32 %v984, %v1507
      %v1509 = vpop.f32.mrb[0].mxu0
      %1510 = vmatprep.mubr.bf16.mxu0 0
      %1511 = vmatmul.mubr.bf16.gmra.mrb[0].mxu0 %v1243
      %v1512 = vpop.f32.mrb[0].mxu0
      %v1513 = vadd.f32 %v984, %v1512
      %v1514 = vpop.f32.mrb[0].mxu0
      %v1515 = vpop.f32.mrb[0].mxu0
      %v1516 = vadd.f32 %v984, %v1515
      %v1517 = vpop.f32.mrb[0].mxu0
      %1518 = vmatprep.mubr.bf16.mxu0 0
      %1519 = vmatmul.mubr.bf16.gmra.mrb[0].mxu0 %v1246
      %v1520 = vpop.f32.mrb[0].mxu0
      %v1521 = vadd.f32 %v984, %v1520
      %v1522 = vpop.f32.mrb[0].mxu0
      %v1523 = vpop.f32.mrb[0].mxu0
      %v1524 = vadd.f32 %v984, %v1523
      %v1525 = vpop.f32.mrb[0].mxu0
      %1526 = vmatprep.mubr.bf16.mxu0 0
      %1527 = vmatmul.mubr.bf16.gmra.mrb[0].mxu0 %v1249
      %v1528 = vpop.f32.mrb[0].mxu0
      %v1529 = vadd.f32 %v984, %v1528
      %v1530 = vpop.f32.mrb[0].mxu0
      %v1531 = vpop.f32.mrb[0].mxu0
      %v1532 = vadd.f32 %v984, %v1531
      %v1533 = vpop.f32.mrb[0].mxu0
      %1534 = vmatprep.mubr.bf16.mxu0 0
      %1535 = vmatmul.mubr.bf16.gmra.mrb[0].mxu0 %v1252
      %v1536 = vpop.f32.mrb[0].mxu0
      %v1537 = vadd.f32 %v984, %v1536
      %v1538 = vpop.f32.mrb[0].mxu0
      %v1539 = vpop.f32.mrb[0].mxu0
      %v1540 = vadd.f32 %v984, %v1539
      %v1541 = vpop.f32.mrb[0].mxu0
      %1542 = vdwg.mxu0
      %v1543 = vmax.f32 %v657, 0.0
      %v1544 = vmax.f32 %v660, 0.0
      %v1545 = vmax.f32 %v665, 0.0
      %v1546 = vmax.f32 %v668, 0.0
      %v1547 = vmax.f32 %v673, 0.0
      %v1548 = vmax.f32 %v676, 0.0
      %v1549 = vmax.f32 %v681, 0.0
      %v1550 = vmax.f32 %v684, 0.0
      %v1551 = vmax.f32 %v689, 0.0
      %v1552 = vmax.f32 %v692, 0.0
      %v1553 = vmax.f32 %v697, 0.0
      %v1554 = vmax.f32 %v700, 0.0
      %v1555 = vmax.f32 %v705, 0.0
      %v1556 = vmax.f32 %v708, 0.0
      %v1557 = vmax.f32 %v713, 0.0
      %v1558 = vmax.f32 %v716, 0.0
      %v1559 = vmax.f32 %v721, 0.0
      %v1560 = vmax.f32 %v724, 0.0
      %v1561 = vmax.f32 %v729, 0.0
      %v1562 = vmax.f32 %v732, 0.0
      %v1563 = vmax.f32 %v737, 0.0
      %v1564 = vmax.f32 %v740, 0.0
      %v1565 = vmax.f32 %v745, 0.0
      %v1566 = vmax.f32 %v748, 0.0
      %v1567 = vmax.f32 %v753, 0.0
      %v1568 = vmax.f32 %v756, 0.0
      %v1569 = vmax.f32 %v761, 0.0
      %v1570 = vmax.f32 %v764, 0.0
      %v1571 = vmax.f32 %v769, 0.0
      %v1572 = vmax.f32 %v772, 0.0
      %v1573 = vmax.f32 %v777, 0.0
      %v1574 = vmax.f32 %v780, 0.0
      %v1575 = vmax.f32 %v785, 0.0
      %v1576 = vmax.f32 %v788, 0.0
      %v1577 = vmax.f32 %v793, 0.0
      %v1578 = vmax.f32 %v796, 0.0
      %v1579 = vmax.f32 %v801, 0.0
      %v1580 = vmax.f32 %v804, 0.0
      %v1581 = vmax.f32 %v809, 0.0
      %v1582 = vmax.f32 %v812, 0.0
      %v1583 = vmax.f32 %v817, 0.0
      %v1584 = vmax.f32 %v820, 0.0
      %v1585 = vmax.f32 %v825, 0.0
      %v1586 = vmax.f32 %v828, 0.0
      %v1587 = vmax.f32 %v833, 0.0
      %v1588 = vmax.f32 %v836, 0.0
      %v1589 = vmax.f32 %v841, 0.0
      %v1590 = vmax.f32 %v844, 0.0
      %v1591 = vmax.f32 %v849, 0.0
      %v1592 = vmax.f32 %v852, 0.0
      %v1593 = vmax.f32 %v857, 0.0
      %v1594 = vmax.f32 %v860, 0.0
      %v1595 = vmax.f32 %v865, 0.0
      %v1596 = vmax.f32 %v868, 0.0
      %v1597 = vmax.f32 %v873, 0.0
      %v1598 = vmax.f32 %v876, 0.0
      %v1599 = vmax.f32 %v881, 0.0
      %v1600 = vmax.f32 %v884, 0.0
      %v1601 = vmax.f32 %v889, 0.0
      %v1602 = vmax.f32 %v892, 0.0
      %v1603 = vmax.f32 %v897, 0.0
      %v1604 = vmax.f32 %v900, 0.0
      %v1605 = vmax.f32 %v905, 0.0
      %v1606 = vmax.f32 %v908, 0.0
      %v1607 = vmax.f32 %v1289, 0.0
      %v1608 = vmax.f32 %v1292, 0.0
      %v1609 = vmax.f32 %v1297, 0.0
      %v1610 = vmax.f32 %v1300, 0.0
      %v1611 = vmax.f32 %v1305, 0.0
      %v1612 = vmax.f32 %v1308, 0.0
      %v1613 = vmax.f32 %v1313, 0.0
      %v1614 = vmax.f32 %v1316, 0.0
      %v1615 = vmax.f32 %v1321, 0.0
      %v1616 = vmax.f32 %v1324, 0.0
      %v1617 = vmax.f32 %v1329, 0.0
      %v1618 = vmax.f32 %v1332, 0.0
      %v1619 = vmax.f32 %v1337, 0.0
      %v1620 = vmax.f32 %v1340, 0.0
      %v1621 = vmax.f32 %v1345, 0.0
      %v1622 = vmax.f32 %v1348, 0.0
      %v1623 = vmax.f32 %v1353, 0.0
      %v1624 = vmax.f32 %v1356, 0.0
      %v1625 = vmax.f32 %v1361, 0.0
      %v1626 = vmax.f32 %v1364, 0.0
      %v1627 = vmax.f32 %v1369, 0.0
      %v1628 = vmax.f32 %v1372, 0.0
      %v1629 = vmax.f32 %v1377, 0.0
      %v1630 = vmax.f32 %v1380, 0.0
      %v1631 = vmax.f32 %v1385, 0.0
      %v1632 = vmax.f32 %v1388, 0.0
      %v1633 = vmax.f32 %v1393, 0.0
      %v1634 = vmax.f32 %v1396, 0.0
      %v1635 = vmax.f32 %v1401, 0.0
      %v1636 = vmax.f32 %v1404, 0.0
      %v1637 = vmax.f32 %v1409, 0.0
      %v1638 = vmax.f32 %v1412, 0.0
      %v1639 = vmax.f32 %v1417, 0.0
      %v1640 = vmax.f32 %v1420, 0.0
      %v1641 = vmax.f32 %v1425, 0.0
      %v1642 = vmax.f32 %v1428, 0.0
      %v1643 = vmax.f32 %v1433, 0.0
      %v1644 = vmax.f32 %v1436, 0.0
      %v1645 = vmax.f32 %v1441, 0.0
      %v1646 = vmax.f32 %v1444, 0.0
      %v1647 = vmax.f32 %v1449, 0.0
      %v1648 = vmax.f32 %v1452, 0.0
      %v1649 = vmax.f32 %v1457, 0.0
      %v1650 = vmax.f32 %v1460, 0.0
      %v1651 = vmax.f32 %v1465, 0.0
      %v1652 = vmax.f32 %v1468, 0.0
      %v1653 = vmax.f32 %v1473, 0.0
      %v1654 = vmax.f32 %v1476, 0.0
      %v1655 = vmax.f32 %v1481, 0.0
      %v1656 = vmax.f32 %v1484, 0.0
      %v1657 = vmax.f32 %v1489, 0.0
      %v1658 = vmax.f32 %v1492, 0.0
      %v1659 = vmax.f32 %v1497, 0.0
      %v1660 = vmax.f32 %v1500, 0.0
      %v1661 = vmax.f32 %v1505, 0.0
      %v1662 = vmax.f32 %v1508, 0.0
      %v1663 = vmax.f32 %v1513, 0.0
      %v1664 = vmax.f32 %v1516, 0.0
      %v1665 = vmax.f32 %v1521, 0.0
      %v1666 = vmax.f32 %v1524, 0.0
      %v1667 = vmax.f32 %v1529, 0.0
      %v1668 = vmax.f32 %v1532, 0.0
      %v1669 = vmax.f32 %v1537, 0.0
      %v1670 = vmax.f32 %v1540, 0.0
      %v1671 = vadd.f32 %v1543, %v1607
      %v1672 = vadd.f32 %v1544, %v1608
      %v1673 = vadd.f32 %v1545, %v1609
      %v1674 = vadd.f32 %v1546, %v1610
      %v1675 = vadd.f32 %v1547, %v1611
      %v1676 = vadd.f32 %v1548, %v1612
      %v1677 = vadd.f32 %v1549, %v1613
      %v1678 = vadd.f32 %v1550, %v1614
      %v1679 = vadd.f32 %v1551, %v1615
      %v1680 = vadd.f32 %v1552, %v1616
      %v1681 = vadd.f32 %v1553, %v1617
      %v1682 = vadd.f32 %v1554, %v1618
      %v1683 = vadd.f32 %v1555, %v1619
      %v1684 = vadd.f32 %v1556, %v1620
      %v1685 = vadd.f32 %v1557, %v1621
      %v1686 = vadd.f32 %v1558, %v1622
      %v1687 = vadd.f32 %v1559, %v1623
      %v1688 = vadd.f32 %v1560, %v1624
      %v1689 = vadd.f32 %v1561, %v1625
      %v1690 = vadd.f32 %v1562, %v1626
      %v1691 = vadd.f32 %v1563, %v1627
      %v1692 = vadd.f32 %v1564, %v1628
      %v1693 = vadd.f32 %v1565, %v1629
      %v1694 = vadd.f32 %v1566, %v1630
      %v1695 = vadd.f32 %v1567, %v1631
      %v1696 = vadd.f32 %v1568, %v1632
      %v1697 = vadd.f32 %v1569, %v1633
      %v1698 = vadd.f32 %v1570, %v1634
      %v1699 = vadd.f32 %v1571, %v1635
      %v1700 = vadd.f32 %v1572, %v1636
      %v1701 = vadd.f32 %v1573, %v1637
      %v1702 = vadd.f32 %v1574, %v1638
      %v1703 = vadd.f32 %v1575, %v1639
      %v1704 = vadd.f32 %v1576, %v1640
      %v1705 = vadd.f32 %v1577, %v1641
      %v1706 = vadd.f32 %v1578, %v1642
      %v1707 = vadd.f32 %v1579, %v1643
      %v1708 = vadd.f32 %v1580, %v1644
      %v1709 = vadd.f32 %v1581, %v1645
      %v1710 = vadd.f32 %v1582, %v1646
      %v1711 = vadd.f32 %v1583, %v1647
      %v1712 = vadd.f32 %v1584, %v1648
      %v1713 = vadd.f32 %v1585, %v1649
      %v1714 = vadd.f32 %v1586, %v1650
      %v1715 = vadd.f32 %v1587, %v1651
      %v1716 = vadd.f32 %v1588, %v1652
      %v1717 = vadd.f32 %v1589, %v1653
      %v1718 = vadd.f32 %v1590, %v1654
      %v1719 = vadd.f32 %v1591, %v1655
      %v1720 = vadd.f32 %v1592, %v1656
      %v1721 = vadd.f32 %v1593, %v1657
      %v1722 = vadd.f32 %v1594, %v1658
      %v1723 = vadd.f32 %v1595, %v1659
      %v1724 = vadd.f32 %v1596, %v1660
      %v1725 = vadd.f32 %v1597, %v1661
      %v1726 = vadd.f32 %v1598, %v1662
      %v1727 = vadd.f32 %v1599, %v1663
      %v1728 = vadd.f32 %v1600, %v1664
      %v1729 = vadd.f32 %v1601, %v1665
      %v1730 = vadd.f32 %v1602, %v1666
      %v1731 = vadd.f32 %v1603, %v1667
      %v1732 = vadd.f32 %v1604, %v1668
      %v1733 = vadd.f32 %v1605, %v1669
      %v1734 = vadd.f32 %v1606, %v1670
      %v1735 = vpack.c.bf16 %v1672, %v1671
      %v1736 = vpack.c.bf16 %v1674, %v1673
      %v1737 = vpack.c.bf16 %v1676, %v1675
      %v1738 = vpack.c.bf16 %v1678, %v1677
      %v1739 = vpack.c.bf16 %v1680, %v1679
      %v1740 = vpack.c.bf16 %v1682, %v1681
      %v1741 = vpack.c.bf16 %v1684, %v1683
      %v1742 = vpack.c.bf16 %v1686, %v1685
      %v1743 = vpack.c.bf16 %v1688, %v1687
      %v1744 = vpack.c.bf16 %v1690, %v1689
      %v1745 = vpack.c.bf16 %v1692, %v1691
      %v1746 = vpack.c.bf16 %v1694, %v1693
      %v1747 = vpack.c.bf16 %v1696, %v1695
      %v1748 = vpack.c.bf16 %v1698, %v1697
      %v1749 = vpack.c.bf16 %v1700, %v1699
      %v1750 = vpack.c.bf16 %v1702, %v1701
      %v1751 = vpack.c.bf16 %v1704, %v1703
      %v1752 = vpack.c.bf16 %v1706, %v1705
      %v1753 = vpack.c.bf16 %v1708, %v1707
      %v1754 = vpack.c.bf16 %v1710, %v1709
      %v1755 = vpack.c.bf16 %v1712, %v1711
      %v1756 = vpack.c.bf16 %v1714, %v1713
      %v1757 = vpack.c.bf16 %v1716, %v1715
      %v1758 = vpack.c.bf16 %v1718, %v1717
      %v1759 = vpack.c.bf16 %v1720, %v1719
      %v1760 = vpack.c.bf16 %v1722, %v1721
      %v1761 = vpack.c.bf16 %v1724, %v1723
      %v1762 = vpack.c.bf16 %v1726, %v1725
      %v1763 = vpack.c.bf16 %v1728, %v1727
      %v1764 = vpack.c.bf16 %v1730, %v1729
      %v1765 = vpack.c.bf16 %v1732, %v1731
      %v1766 = vpack.c.bf16 %v1734, %v1733
      %v1799 = vunpack.c.l.b16 %v1735
      %v1800 = vunpack.c.h.b16 %v1735
      %v1801 = vunpack.c.l.b16 %v1736
      %v1802 = vunpack.c.h.b16 %v1736
      %v1803 = vunpack.c.l.b16 %v1737
      %v1804 = vunpack.c.h.b16 %v1737
      %v1805 = vunpack.c.l.b16 %v1738
      %v1806 = vunpack.c.h.b16 %v1738
      %v1807 = vunpack.c.l.b16 %v1739
      %v1808 = vunpack.c.h.b16 %v1739
      %v1809 = vunpack.c.l.b16 %v1740
      %v1810 = vunpack.c.h.b16 %v1740
      %v1811 = vunpack.c.l.b16 %v1741
      %v1812 = vunpack.c.h.b16 %v1741
      %v1813 = vunpack.c.l.b16 %v1742
      %v1814 = vunpack.c.h.b16 %v1742
      %v1815 = vunpack.c.l.b16 %v1743
      %v1816 = vunpack.c.h.b16 %v1743
      %v1817 = vunpack.c.l.b16 %v1744
      %v1818 = vunpack.c.h.b16 %v1744
      %v1819 = vunpack.c.l.b16 %v1745
      %v1820 = vunpack.c.h.b16 %v1745
      %v1821 = vunpack.c.l.b16 %v1746
      %v1822 = vunpack.c.h.b16 %v1746
      %v1823 = vunpack.c.l.b16 %v1747
      %v1824 = vunpack.c.h.b16 %v1747
      %v1825 = vunpack.c.l.b16 %v1748
      %v1826 = vunpack.c.h.b16 %v1748
      %v1827 = vunpack.c.l.b16 %v1749
      %v1828 = vunpack.c.h.b16 %v1749
      %v1829 = vunpack.c.l.b16 %v1750
      %v1830 = vunpack.c.h.b16 %v1750
      %v1831 = vunpack.c.l.b16 %v1751
      %v1832 = vunpack.c.h.b16 %v1751
      %v1833 = vunpack.c.l.b16 %v1752
      %v1834 = vunpack.c.h.b16 %v1752
      %v1835 = vunpack.c.l.b16 %v1753
      %v1836 = vunpack.c.h.b16 %v1753
      %v1837 = vunpack.c.l.b16 %v1754
      %v1838 = vunpack.c.h.b16 %v1754
      %v1839 = vunpack.c.l.b16 %v1755
      %v1840 = vunpack.c.h.b16 %v1755
      %v1841 = vunpack.c.l.b16 %v1756
      %v1842 = vunpack.c.h.b16 %v1756
      %v1843 = vunpack.c.l.b16 %v1757
      %v1844 = vunpack.c.h.b16 %v1757
      %v1845 = vunpack.c.l.b16 %v1758
      %v1846 = vunpack.c.h.b16 %v1758
      %v1847 = vunpack.c.l.b16 %v1759
      %v1848 = vunpack.c.h.b16 %v1759
      %v1849 = vunpack.c.l.b16 %v1760
      %v1850 = vunpack.c.h.b16 %v1760
      %v1851 = vunpack.c.l.b16 %v1761
      %v1852 = vunpack.c.h.b16 %v1761
      %v1853 = vunpack.c.l.b16 %v1762
      %v1854 = vunpack.c.h.b16 %v1762
      %v1855 = vunpack.c.l.b16 %v1763
      %v1856 = vunpack.c.h.b16 %v1763
      %v1857 = vunpack.c.l.b16 %v1764
      %v1858 = vunpack.c.h.b16 %v1764
      %v1859 = vunpack.c.l.b16 %v1765
      %v1860 = vunpack.c.h.b16 %v1765
      %v1861 = vunpack.c.l.b16 %v1766
      %v1862 = vunpack.c.h.b16 %v1766
      %v1863 = vpack.c.b16 %v1799, %v1799
      %v1864 = vpack.c.b16 %v1800, %v1800
      %v1865 = vpack.c.b16 %v1801, %v1801
      %v1866 = vpack.c.b16 %v1802, %v1802
      %v1867 = vpack.c.b16 %v1803, %v1803
      %v1868 = vpack.c.b16 %v1804, %v1804
      %v1869 = vpack.c.b16 %v1805, %v1805
      %v1870 = vpack.c.b16 %v1806, %v1806
      %v1871 = vpack.c.b16 %v1807, %v1807
      %v1872 = vpack.c.b16 %v1808, %v1808
      %v1873 = vpack.c.b16 %v1809, %v1809
      %v1874 = vpack.c.b16 %v1810, %v1810
      %v1875 = vpack.c.b16 %v1811, %v1811
      %v1876 = vpack.c.b16 %v1812, %v1812
      %v1877 = vpack.c.b16 %v1813, %v1813
      %v1878 = vpack.c.b16 %v1814, %v1814
      %v1879 = vpack.c.b16 %v1815, %v1815
      %v1880 = vpack.c.b16 %v1816, %v1816
      %v1881 = vpack.c.b16 %v1817, %v1817
      %v1882 = vpack.c.b16 %v1818, %v1818
      %v1883 = vpack.c.b16 %v1819, %v1819
      %v1884 = vpack.c.b16 %v1820, %v1820
      %v1885 = vpack.c.b16 %v1821, %v1821
      %v1886 = vpack.c.b16 %v1822, %v1822
      %v1887 = vpack.c.b16 %v1823, %v1823
      %v1888 = vpack.c.b16 %v1824, %v1824
      %v1889 = vpack.c.b16 %v1825, %v1825
      %v1890 = vpack.c.b16 %v1826, %v1826
      %v1891 = vpack.c.b16 %v1827, %v1827
      %v1892 = vpack.c.b16 %v1828, %v1828
      %v1893 = vpack.c.b16 %v1829, %v1829
      %v1894 = vpack.c.b16 %v1830, %v1830
      %v1895 = vpack.c.b16 %v1831, %v1831
      %v1896 = vpack.c.b16 %v1832, %v1832
      %v1897 = vpack.c.b16 %v1833, %v1833
      %v1898 = vpack.c.b16 %v1834, %v1834
      %v1899 = vpack.c.b16 %v1835, %v1835
      %v1900 = vpack.c.b16 %v1836, %v1836
      %v1901 = vpack.c.b16 %v1837, %v1837
      %v1902 = vpack.c.b16 %v1838, %v1838
      %v1903 = vpack.c.b16 %v1839, %v1839
      %v1904 = vpack.c.b16 %v1840, %v1840
      %v1905 = vpack.c.b16 %v1841, %v1841
      %v1906 = vpack.c.b16 %v1842, %v1842
      %v1907 = vpack.c.b16 %v1843, %v1843
      %v1908 = vpack.c.b16 %v1844, %v1844
      %v1909 = vpack.c.b16 %v1845, %v1845
      %v1910 = vpack.c.b16 %v1846, %v1846
      %v1911 = vpack.c.b16 %v1847, %v1847
      %v1912 = vpack.c.b16 %v1848, %v1848
      %v1913 = vpack.c.b16 %v1849, %v1849
      %v1914 = vpack.c.b16 %v1850, %v1850
      %v1915 = vpack.c.b16 %v1851, %v1851
      %v1916 = vpack.c.b16 %v1852, %v1852
      %v1917 = vpack.c.b16 %v1853, %v1853
      %v1918 = vpack.c.b16 %v1854, %v1854
      %v1919 = vpack.c.b16 %v1855, %v1855
      %v1920 = vpack.c.b16 %v1856, %v1856
      %v1921 = vpack.c.b16 %v1857, %v1857
      %v1922 = vpack.c.b16 %v1858, %v1858
      %v1923 = vpack.c.b16 %v1859, %v1859
      %v1924 = vpack.c.b16 %v1860, %v1860
      %v1925 = vpack.c.b16 %v1861, %v1861
      %v1926 = vpack.c.b16 %v1862, %v1862
      %1991 = vst [vmem:[%s275] sm:$0xf] %v1863
      %1992 = vst [vmem:[%s275 + $0x4] sm:$0xf] %v1864
      %1993 = vst [vmem:[%s275 + $0x8] sm:$0xf] %v1865
      %1994 = vst [vmem:[%s275 + $0xc] sm:$0xf] %v1866
      %1995 = vst [vmem:[%s275 + $0x10] sm:$0xf] %v1867
      %1996 = vst [vmem:[%s275 + $0x14] sm:$0xf] %v1868
      %1997 = vst [vmem:[%s275 + $0x18] sm:$0xf] %v1869
      %1998 = vst [vmem:[%s275 + $0x1c] sm:$0xf] %v1870
      %1999 = vst [vmem:[%s275 + $0x20] sm:$0xf] %v1871
      %2000 = vst [vmem:[%s275 + $0x24] sm:$0xf] %v1872
      %2001 = vst [vmem:[%s275 + $0x28] sm:$0xf] %v1873
      %2002 = vst [vmem:[%s275 + $0x2c] sm:$0xf] %v1874
      %2003 = vst [vmem:[%s275 + $0x30] sm:$0xf] %v1875
      %2004 = vst [vmem:[%s275 + $0x34] sm:$0xf] %v1876
      %2005 = vst [vmem:[%s275 + $0x38] sm:$0xf] %v1877
      %2006 = vst [vmem:[%s275 + $0x3c] sm:$0xf] %v1878
      %2007 = vst [vmem:[%s275 + $0x40] sm:$0xf] %v1879
      %2008 = vst [vmem:[%s275 + $0x44] sm:$0xf] %v1880
      %2009 = vst [vmem:[%s275 + $0x48] sm:$0xf] %v1881
      %2010 = vst [vmem:[%s275 + $0x4c] sm:$0xf] %v1882
      %2011 = vst [vmem:[%s275 + $0x50] sm:$0xf] %v1883
      %2012 = vst [vmem:[%s275 + $0x54] sm:$0xf] %v1884
      %2013 = vst [vmem:[%s275 + $0x58] sm:$0xf] %v1885
      %2014 = vst [vmem:[%s275 + $0x5c] sm:$0xf] %v1886
      %2015 = vst [vmem:[%s275 + $0x60] sm:$0xf] %v1887
      %2016 = vst [vmem:[%s275 + $0x64] sm:$0xf] %v1888
      %2017 = vst [vmem:[%s275 + $0x68] sm:$0xf] %v1889
      %2018 = vst [vmem:[%s275 + $0x6c] sm:$0xf] %v1890
      %2019 = vst [vmem:[%s275 + $0x70] sm:$0xf] %v1891
      %2020 = vst [vmem:[%s275 + $0x74] sm:$0xf] %v1892
      %2021 = vst [vmem:[%s275 + $0x78] sm:$0xf] %v1893
      %2022 = vst [vmem:[%s275 + $0x7c] sm:$0xf] %v1894
      %2023 = vst [vmem:[%s275 + $0x80] sm:$0xf] %v1895
      %2024 = vst [vmem:[%s275 + $0x84] sm:$0xf] %v1896
      %2025 = vst [vmem:[%s275 + $0x88] sm:$0xf] %v1897
      %2026 = vst [vmem:[%s275 + $0x8c] sm:$0xf] %v1898
      %2027 = vst [vmem:[%s275 + $0x90] sm:$0xf] %v1899
      %2028 = vst [vmem:[%s275 + $0x94] sm:$0xf] %v1900
      %2029 = vst [vmem:[%s275 + $0x98] sm:$0xf] %v1901
      %2030 = vst [vmem:[%s275 + $0x9c] sm:$0xf] %v1902
      %2031 = vst [vmem:[%s275 + $0xa0] sm:$0xf] %v1903
      %2032 = vst [vmem:[%s275 + $0xa4] sm:$0xf] %v1904
      %2033 = vst [vmem:[%s275 + $0xa8] sm:$0xf] %v1905
      %2034 = vst [vmem:[%s275 + $0xac] sm:$0xf] %v1906
      %2035 = vst [vmem:[%s275 + $0xb0] sm:$0xf] %v1907
      %2036 = vst [vmem:[%s275 + $0xb4] sm:$0xf] %v1908
      %2037 = vst [vmem:[%s275 + $0xb8] sm:$0xf] %v1909
      %2038 = vst [vmem:[%s275 + $0xbc] sm:$0xf] %v1910
      %2039 = vst [vmem:[%s275 + $0xc0] sm:$0xf] %v1911
      %2040 = vst [vmem:[%s275 + $0xc4] sm:$0xf] %v1912
      %2041 = vst [vmem:[%s275 + $0xc8] sm:$0xf] %v1913
      %2042 = vst [vmem:[%s275 + $0xcc] sm:$0xf] %v1914
      %2043 = vst [vmem:[%s275 + $0xd0] sm:$0xf] %v1915
      %2044 = vst [vmem:[%s275 + $0xd4] sm:$0xf] %v1916
      %2045 = vst [vmem:[%s275 + $0xd8] sm:$0xf] %v1917
      %2046 = vst [vmem:[%s275 + $0xdc] sm:$0xf] %v1918
      %2047 = vst [vmem:[%s275 + $0xe0] sm:$0xf] %v1919
      %2048 = vst [vmem:[%s275 + $0xe4] sm:$0xf] %v1920
      %2049 = vst [vmem:[%s275 + $0xe8] sm:$0xf] %v1921
      %2050 = vst [vmem:[%s275 + $0xec] sm:$0xf] %v1922
      %2051 = vst [vmem:[%s275 + $0xf0] sm:$0xf] %v1923
      %2052 = vst [vmem:[%s275 + $0xf4] sm:$0xf] %v1924
      %2053 = vst [vmem:[%s275 + $0xf8] sm:$0xf] %v1925
      %2054 = vst [vmem:[%s275 + $0xfc] sm:$0xf] %v1926
      %s2055 = smul.u32 64, %s17
      %p2056 = scmp.lt.s32.totalorder %s2055, 191
      %s2057 = scalar_select %p2056, %s2055, 191
      %s2058 = smul.addr %s2057, 4
      %s2059 = scalar_lea.vmem %s6, %s2058
      // Predicated region
      $region45: #{forward.78} parent=43 // pred_check
        %p2060 = pneg %p171
      $region46: #{forward.78} parent=43 // pred_check_branch
        %2062 = sbr.rel (%p2060) target = $region48
      $region47: #{forward.78} parent=43 // pred_region
        %s2063 = smul.u32 64, %s17
      $region48: #{forward.78} parent=43 // pred_fallthru
        _
    $region44: #{forward.78} parent=5 // pred_fallthru
      _
    %p2064 = scmp.le.s32.totalorder 2, %s12
    // Predicated region
    $region49: #{forward.78} parent=5 // pred_check
      %p2065 = pneg %p2064
    $region50: #{forward.78} parent=5 // pred_check_branch
      %2067 = sbr.rel (%p2065) target = $region52
    $region51: #{forward.78} parent=5 // pred_region
      %s2068 = ssub.s32 %s12, 2
      // Predicated region
      $region53: #{forward.78} parent=51 // pred_check
        %p2069 = pneg %p177
      $region54: #{forward.78} parent=51 // pred_check_branch
        %2071 = sbr.rel (%p2069) target = $region56
      $region55: #{forward.78} parent=51 // pred_region
        %s2072 = smul.u32 64, %s18
        %p2073 = scmp.lt.s32.totalorder %s2072, 191
        %s2074 = scalar_select %p2073, %s2072, 191
        %s2075 = smul.addr %s2074, 4
        %s2076 = scalar_lea.vmem %s6, %s2075
      $region56: #{forward.78} parent=51 // pred_fallthru
        _
    $region52: #{forward.78} parent=5 // pred_fallthru
      _
  $region6: #{forward.78} parent=0 // loop_footer
    %s16 = sadd.s32 1, %s12
  $region7: #{forward.78} parent=0 // loop_footer_branch
    %11 = sbr.rel target = $region3
  $region8: #{forward.78} parent=0 // loop_exit
    _

// kernel: forward.80
$region0: #{forward.80}
  #allocation0 [shape = 'u32[]', space=smem, size = 0x4, offset = 0x4, fixed_abs, tag = 'smem constant byte address 0x4 - core index']
  #allocation1 [shape = 'u32[144,128]{1,0:T(1,128)}', space=vmem, size = 0x12000, scoped, tag = 'internal scratch']
  %s0 = inlined_call_operand.vmem [shape: bf16[328,32], index: 0, kind: input, shape index: {}]
  %s1 = inlined_call_operand.vmem [shape: bf16[32,128], index: 1, kind: input, shape index: {}]
  %s2 = inlined_call_operand.vmem [shape: f32[1,128], index: 2, kind: input, shape index: {}]
  %s3 = inlined_call_operand.vmem [shape: bf16[328,128], index: 3, kind: output, shape index: {}]
  %s4 = sld [smem:[#allocation0]]
  $region22: #{forward.80} parent=0
    _
  %s6 = ssub.s32 1, %s4
  %s7 = scalar_select 0, %s6, %s4
  // Predicated region
  $region2: #{forward.80} parent=0 // pred_check
    _
  $region3: #{forward.80} parent=0 // pred_check_branch
    %9 = sbr.rel (0) target = $region5
  $region4: #{forward.80} parent=0 // pred_region
    _
  $region5: #{forward.80} parent=0 // pred_fallthru
    _
  // Predicated region
  $region6: #{forward.80} parent=0 // pred_check
    _
  $region7: #{forward.80} parent=0 // pred_check_branch
    %11 = sbr.rel (0) target = $region9
  $region8: #{forward.80} parent=0 // pred_region
    _
  $region9: #{forward.80} parent=0 // pred_fallthru
    _
  // Predicated region
  $region10: #{forward.80} parent=0 // pred_check
    _
  $region11: #{forward.80} parent=0 // pred_check_branch
    %13 = sbr.rel (0) target = $region13
  $region12: #{forward.80} parent=0 // pred_region
    _
  $region13: #{forward.80} parent=0 // pred_fallthru
    _
  %v15 = vld [vmem:[%s0] sm:$0xf]
  %v16 = vld [vmem:[%s0 + $0x4] sm:$0xf]
  %v17 = vld [vmem:[%s0 + $0x8] sm:$0xf]
  %v18 = vld [vmem:[%s0 + $0xc] sm:$0xf]
  %v19 = vld [vmem:[%s0 + $0x10] sm:$0xf]
  %v20 = vld [vmem:[%s0 + $0x14] sm:$0xf]
  %v21 = vld [vmem:[%s0 + $0x18] sm:$0xf]
  %v22 = vld [vmem:[%s0 + $0x1c] sm:$0xf]
  %v23 = vld [vmem:[%s0 + $0x20] sm:$0xf]
  %v24 = vld [vmem:[%s0 + $0x24] sm:$0xf]
  %v25 = vld [vmem:[%s0 + $0x28] sm:$0xf]
  %v26 = vld [vmem:[%s0 + $0x2c] sm:$0xf]
  %v27 = vld [vmem:[%s0 + $0x30] sm:$0xf]
  %v28 = vld [vmem:[%s0 + $0x34] sm:$0xf]
  %v29 = vld [vmem:[%s0 + $0x38] sm:$0xf]
  %v30 = vld [vmem:[%s0 + $0x3c] sm:$0xf]
  %v31 = vld [vmem:[%s0 + $0x40] sm:$0xf]
  %v32 = vld [vmem:[%s0 + $0x44] sm:$0xf]
  %v33 = vld [vmem:[%s0 + $0x48] sm:$0xf]
  %v34 = vld [vmem:[%s0 + $0x4c] sm:$0xf]
  %v35 = vld [vmem:[%s0 + $0x50] sm:$0xf]
  %v36 = vld [vmem:[%s0 + $0x54] sm:$0xf]
  %v37 = vld [vmem:[%s0 + $0x58] sm:$0xf]
  %v38 = vld [vmem:[%s0 + $0x5c] sm:$0xf]
  %v39 = vld [vmem:[%s0 + $0x60] sm:$0xf]
  %v40 = vld [vmem:[%s0 + $0x64] sm:$0xf]
  %v41 = vld [vmem:[%s0 + $0x68] sm:$0xf]
  %v42 = vld [vmem:[%s0 + $0x6c] sm:$0xf]
  %v43 = vld [vmem:[%s0 + $0x70] sm:$0xf]
  %v44 = vld [vmem:[%s0 + $0x74] sm:$0xf]
  %v45 = vld [vmem:[%s0 + $0x78] sm:$0xf]
  %v46 = vld [vmem:[%s0 + $0x7c] sm:$0xf]
  %v47 = vld [vmem:[%s0 + $0x80] sm:$0xf]
  %v48 = vld [vmem:[%s0 + $0x84] sm:$0xf]
  %v49 = vld [vmem:[%s0 + $0x88] sm:$0xf]
  %v50 = vld [vmem:[%s0 + $0x8c] sm:$0xf]
  %v51 = vld [vmem:[%s0 + $0x90] sm:$0xf]
  %v52 = vld [vmem:[%s0 + $0x94] sm:$0xf]
  %v53 = vld [vmem:[%s0 + $0x98] sm:$0xf]
  %v54 = vld [vmem:[%s0 + $0x9c] sm:$0xf]
  %v55 = vld [vmem:[%s0 + $0xa0] sm:$0xf]
  %v56 = vld [vmem:[%s1] sm:$0xf]
  %v57 = vld [vmem:[%s1 + $0x4] sm:$0xf]
  %v58 = vld [vmem:[%s1 + $0x8] sm:$0xf]
  %v59 = vld [vmem:[%s1 + $0xc] sm:$0xf]
  %v60 = vld [vmem:[%s2] sm:$0x1]
  %v62 = vlaneseq
  %v63 = vshrl.u32 %v62, 7
  %v64 = vsub.s32 0, %v63
  %v65 = vrot.slane %v60, %v64
  %v108 = vunpack.c.l.b16 %v15
  %v109 = vunpack.c.l.b16 %v16
  %v110 = vunpack.c.l.b16 %v17
  %v111 = vunpack.c.l.b16 %v18
  %v112 = vunpack.c.l.b16 %v19
  %v113 = vunpack.c.l.b16 %v20
  %v114 = vunpack.c.l.b16 %v21
  %v115 = vunpack.c.l.b16 %v22
  %v116 = vunpack.c.l.b16 %v23
  %v117 = vunpack.c.l.b16 %v24
  %v118 = vunpack.c.l.b16 %v25
  %v119 = vunpack.c.l.b16 %v26
  %v120 = vunpack.c.l.b16 %v27
  %v121 = vunpack.c.l.b16 %v28
  %v122 = vunpack.c.l.b16 %v29
  %v123 = vunpack.c.l.b16 %v30
  %v124 = vunpack.c.l.b16 %v31
  %v125 = vunpack.c.l.b16 %v32
  %v126 = vunpack.c.l.b16 %v33
  %v127 = vunpack.c.l.b16 %v34
  %v128 = vunpack.c.l.b16 %v35
  %v129 = vunpack.c.l.b16 %v36
  %v130 = vunpack.c.l.b16 %v37
  %v131 = vunpack.c.l.b16 %v38
  %v132 = vunpack.c.l.b16 %v39
  %v133 = vunpack.c.l.b16 %v40
  %v134 = vunpack.c.l.b16 %v41
  %v135 = vunpack.c.l.b16 %v42
  %v136 = vunpack.c.l.b16 %v43
  %v137 = vunpack.c.l.b16 %v44
  %v138 = vunpack.c.l.b16 %v45
  %v139 = vunpack.c.l.b16 %v46
  %v140 = vunpack.c.l.b16 %v47
  %v141 = vunpack.c.l.b16 %v48
  %v142 = vunpack.c.l.b16 %v49
  %v143 = vunpack.c.l.b16 %v50
  %v144 = vunpack.c.l.b16 %v51
  %v145 = vunpack.c.l.b16 %v52
  %v146 = vunpack.c.l.b16 %v53
  %v147 = vunpack.c.l.b16 %v54
  %v148 = vunpack.c.l.b16 %v55
  %v149 = vpack.c.b16 %v109, %v108
  %v150 = vpack.c.b16 %v111, %v110
  %v151 = vpack.c.b16 %v113, %v112
  %v152 = vpack.c.b16 %v115, %v114
  %v153 = vpack.c.b16 %v117, %v116
  %v154 = vpack.c.b16 %v119, %v118
  %v155 = vpack.c.b16 %v121, %v120
  %v156 = vpack.c.b16 %v123, %v122
  %v157 = vpack.c.b16 %v125, %v124
  %v158 = vpack.c.b16 %v127, %v126
  %v159 = vpack.c.b16 %v129, %v128
  %v160 = vpack.c.b16 %v131, %v130
  %v161 = vpack.c.b16 %v133, %v132
  %v162 = vpack.c.b16 %v135, %v134
  %v163 = vpack.c.b16 %v137, %v136
  %v164 = vpack.c.b16 %v139, %v138
  %v165 = vpack.c.b16 %v141, %v140
  %v166 = vpack.c.b16 %v143, %v142
  %v167 = vpack.c.b16 %v145, %v144
  %v168 = vpack.c.b16 %v147, %v146
  %v169 = vpack.c.b16 %v148, %v148
  %v174 = vunpack.c.l.b16 %v56
  %v175 = vunpack.c.l.b16 %v57
  %v176 = vunpack.c.l.b16 %v58
  %v177 = vunpack.c.l.b16 %v59
  %v178 = vpack.c.b16 %v175, %v174
  %v179 = vpack.c.b16 %v177, %v176
  %vm182 = vcmask 261120
  %v184 = vsel %vm182, %v149, 0
  %v187 = vsel %vm182, %v150, 0
  %v190 = vsel %vm182, %v151, 0
  %v193 = vsel %vm182, %v152, 0
  %v196 = vsel %vm182, %v153, 0
  %v199 = vsel %vm182, %v154, 0
  %v202 = vsel %vm182, %v155, 0
  %v205 = vsel %vm182, %v156, 0
  %v208 = vsel %vm182, %v157, 0
  %v211 = vsel %vm182, %v158, 0
  %v214 = vsel %vm182, %v159, 0
  %v217 = vsel %vm182, %v160, 0
  %v220 = vsel %vm182, %v161, 0
  %v223 = vsel %vm182, %v162, 0
  %v226 = vsel %vm182, %v163, 0
  %v229 = vsel %vm182, %v164, 0
  %v232 = vsel %vm182, %v165, 0
  %v235 = vsel %vm182, %v166, 0
  %v238 = vsel %vm182, %v167, 0
  %v241 = vsel %vm182, %v168, 0
  %v244 = vsel %vm182, %v169, 0
  %246 = vmatprep.subr.bf16.mxu0 0
  %247 = vmatpush1.bf16.msra.mxu0 %v178
  %248 = vmatprep.subr.bf16.mxu0 0
  %249 = vmatpush1.bf16.msra.mxu0 %v179
  %250 = vmatprep.subr.bf16.mxu0 0
  %251 = vmatpush1.bf16.msra.mxu0 0
  %252 = vmatprep.subr.bf16.mxu0 0
  %253 = vmatpush1.bf16.msra.mxu0 0
  %254 = vmatprep.subr.bf16.mxu0 0
  %255 = vmatpush1.bf16.msra.mxu0 0
  %256 = vmatprep.subr.bf16.mxu0 0
  %257 = vmatpush1.bf16.msra.mxu0 0
  %258 = vmatprep.subr.bf16.mxu0 0
  %259 = vmatpush1.bf16.msra.mxu0 0
  %260 = vmatprep.subr.bf16.mxu0 0
  %261 = vmatpush1.bf16.msra.mxu0 0
  %262 = vmatprep.subr.bf16.mxu0 0
  %263 = vmatpush1.bf16.msra.mxu0 0
  %264 = vmatprep.subr.bf16.mxu0 0
  %265 = vmatpush1.bf16.msra.mxu0 0
  %266 = vmatprep.subr.bf16.mxu0 0
  %267 = vmatpush1.bf16.msra.mxu0 0
  %268 = vmatprep.subr.bf16.mxu0 0
  %269 = vmatpush1.bf16.msra.mxu0 0
  %270 = vmatprep.subr.bf16.mxu0 0
  %271 = vmatpush1.bf16.msra.mxu0 0
  %272 = vmatprep.subr.bf16.mxu0 0
  %273 = vmatpush1.bf16.msra.mxu0 0
  %274 = vmatprep.subr.bf16.mxu0 0
  %275 = vmatpush1.bf16.msra.mxu0 0
  %276 = vmatprep.subr.bf16.mxu0 0
  %277 = vmatpush1.bf16.msra.mxu0 0
  %278 = vmatprep.mubr.bf16.mxu0 0
  %279 = vmatmul.mubr.bf16.gmra.mrb[0].mxu0 %v184
  %v280 = vpop.f32.mrb[0].mxu0
  %v281 = vadd.f32 %v65, %v280
  %v282 = vpop.f32.mrb[0].mxu0
  %v283 = vpop.f32.mrb[0].mxu0
  %v284 = vadd.f32 %v65, %v283
  %v285 = vpop.f32.mrb[0].mxu0
  %286 = vmatprep.mubr.bf16.mxu0 0
  %287 = vmatmul.mubr.bf16.gmra.mrb[0].mxu0 %v187
  %v288 = vpop.f32.mrb[0].mxu0
  %v289 = vadd.f32 %v65, %v288
  %v290 = vpop.f32.mrb[0].mxu0
  %v291 = vpop.f32.mrb[0].mxu0
  %v292 = vadd.f32 %v65, %v291
  %v293 = vpop.f32.mrb[0].mxu0
  %294 = vmatprep.mubr.bf16.mxu0 0
  %295 = vmatmul.mubr.bf16.gmra.mrb[0].mxu0 %v190
  %v296 = vpop.f32.mrb[0].mxu0
  %v297 = vadd.f32 %v65, %v296
  %v298 = vpop.f32.mrb[0].mxu0
  %v299 = vpop.f32.mrb[0].mxu0
  %v300 = vadd.f32 %v65, %v299
  %v301 = vpop.f32.mrb[0].mxu0
  %302 = vmatprep.mubr.bf16.mxu0 0
  %303 = vmatmul.mubr.bf16.gmra.mrb[0].mxu0 %v193
  %v304 = vpop.f32.mrb[0].mxu0
  %v305 = vadd.f32 %v65, %v304
  %v306 = vpop.f32.mrb[0].mxu0
  %v307 = vpop.f32.mrb[0].mxu0
  %v308 = vadd.f32 %v65, %v307
  %v309 = vpop.f32.mrb[0].mxu0
  %310 = vmatprep.mubr.bf16.mxu0 0
  %311 = vmatmul.mubr.bf16.gmra.mrb[0].mxu0 %v196
  %v312 = vpop.f32.mrb[0].mxu0
  %v313 = vadd.f32 %v65, %v312
  %v314 = vpop.f32.mrb[0].mxu0
  %v315 = vpop.f32.mrb[0].mxu0
  %v316 = vadd.f32 %v65, %v315
  %v317 = vpop.f32.mrb[0].mxu0
  %318 = vmatprep.mubr.bf16.mxu0 0
  %319 = vmatmul.mubr.bf16.gmra.mrb[0].mxu0 %v199
  %v320 = vpop.f32.mrb[0].mxu0
  %v321 = vadd.f32 %v65, %v320
  %v322 = vpop.f32.mrb[0].mxu0
  %v323 = vpop.f32.mrb[0].mxu0
  %v324 = vadd.f32 %v65, %v323
  %v325 = vpop.f32.mrb[0].mxu0
  %326 = vmatprep.mubr.bf16.mxu0 0
  %327 = vmatmul.mubr.bf16.gmra.mrb[0].mxu0 %v202
  %v328 = vpop.f32.mrb[0].mxu0
  %v329 = vadd.f32 %v65, %v328
  %v330 = vpop.f32.mrb[0].mxu0
  %v331 = vpop.f32.mrb[0].mxu0
  %v332 = vadd.f32 %v65, %v331
  %v333 = vpop.f32.mrb[0].mxu0
  %334 = vmatprep.mubr.bf16.mxu0 0
  %335 = vmatmul.mubr.bf16.gmra.mrb[0].mxu0 %v205
  %v336 = vpop.f32.mrb[0].mxu0
  %v337 = vadd.f32 %v65, %v336
  %v338 = vpop.f32.mrb[0].mxu0
  %v339 = vpop.f32.mrb[0].mxu0
  %v340 = vadd.f32 %v65, %v339
  %v341 = vpop.f32.mrb[0].mxu0
  %342 = vmatprep.mubr.bf16.mxu0 0
  %343 = vmatmul.mubr.bf16.gmra.mrb[0].mxu0 %v208
  %v344 = vpop.f32.mrb[0].mxu0
  %v345 = vadd.f32 %v65, %v344
  %v346 = vpop.f32.mrb[0].mxu0
  %v347 = vpop.f32.mrb[0].mxu0
  %v348 = vadd.f32 %v65, %v347
  %v349 = vpop.f32.mrb[0].mxu0
  %350 = vmatprep.mubr.bf16.mxu0 0
  %351 = vmatmul.mubr.bf16.gmra.mrb[0].mxu0 %v211
  %v352 = vpop.f32.mrb[0].mxu0
  %v353 = vadd.f32 %v65, %v352
  %v354 = vpop.f32.mrb[0].mxu0
  %v355 = vpop.f32.mrb[0].mxu0
  %v356 = vadd.f32 %v65, %v355
  %v357 = vpop.f32.mrb[0].mxu0
  %358 = vmatprep.mubr.bf16.mxu0 0
  %359 = vmatmul.mubr.bf16.gmra.mrb[0].mxu0 %v214
  %v360 = vpop.f32.mrb[0].mxu0
  %v361 = vadd.f32 %v65, %v360
  %v362 = vpop.f32.mrb[0].mxu0
  %v363 = vpop.f32.mrb[0].mxu0
  %v364 = vadd.f32 %v65, %v363
  %v365 = vpop.f32.mrb[0].mxu0
  %366 = vmatprep.mubr.bf16.mxu0 0
  %367 = vmatmul.mubr.bf16.gmra.mrb[0].mxu0 %v217
  %v368 = vpop.f32.mrb[0].mxu0
  %v369 = vadd.f32 %v65, %v368
  %v370 = vpop.f32.mrb[0].mxu0
  %v371 = vpop.f32.mrb[0].mxu0
  %v372 = vadd.f32 %v65, %v371
  %v373 = vpop.f32.mrb[0].mxu0
  %374 = vmatprep.mubr.bf16.mxu0 0
  %375 = vmatmul.mubr.bf16.gmra.mrb[0].mxu0 %v220
  %v376 = vpop.f32.mrb[0].mxu0
  %v377 = vadd.f32 %v65, %v376
  %v378 = vpop.f32.mrb[0].mxu0
  %v379 = vpop.f32.mrb[0].mxu0
  %v380 = vadd.f32 %v65, %v379
  %v381 = vpop.f32.mrb[0].mxu0
  %382 = vmatprep.mubr.bf16.mxu0 0
  %383 = vmatmul.mubr.bf16.gmra.mrb[0].mxu0 %v223
  %v384 = vpop.f32.mrb[0].mxu0
  %v385 = vadd.f32 %v65, %v384
  %v386 = vpop.f32.mrb[0].mxu0
  %v387 = vpop.f32.mrb[0].mxu0
  %v388 = vadd.f32 %v65, %v387
  %v389 = vpop.f32.mrb[0].mxu0
  %390 = vmatprep.mubr.bf16.mxu0 0
  %391 = vmatmul.mubr.bf16.gmra.mrb[0].mxu0 %v226
  %v392 = vpop.f32.mrb[0].mxu0
  %v393 = vadd.f32 %v65, %v392
  %v394 = vpop.f32.mrb[0].mxu0
  %v395 = vpop.f32.mrb[0].mxu0
  %v396 = vadd.f32 %v65, %v395
  %v397 = vpop.f32.mrb[0].mxu0
  %398 = vmatprep.mubr.bf16.mxu0 0
  %399 = vmatmul.mubr.bf16.gmra.mrb[0].mxu0 %v229
  %v400 = vpop.f32.mrb[0].mxu0
  %v401 = vadd.f32 %v65, %v400
  %v402 = vpop.f32.mrb[0].mxu0
  %v403 = vpop.f32.mrb[0].mxu0
  %v404 = vadd.f32 %v65, %v403
  %v405 = vpop.f32.mrb[0].mxu0
  %406 = vmatprep.mubr.bf16.mxu0 0
  %407 = vmatmul.mubr.bf16.gmra.mrb[0].mxu0 %v232
  %v408 = vpop.f32.mrb[0].mxu0
  %v409 = vadd.f32 %v65, %v408
  %v410 = vpop.f32.mrb[0].mxu0
  %v411 = vpop.f32.mrb[0].mxu0
  %v412 = vadd.f32 %v65, %v411
  %v413 = vpop.f32.mrb[0].mxu0
  %414 = vmatprep.mubr.bf16.mxu0 0
  %415 = vmatmul.mubr.bf16.gmra.mrb[0].mxu0 %v235
  %v416 = vpop.f32.mrb[0].mxu0
  %v417 = vadd.f32 %v65, %v416
  %v418 = vpop.f32.mrb[0].mxu0
  %v419 = vpop.f32.mrb[0].mxu0
  %v420 = vadd.f32 %v65, %v419
  %v421 = vpop.f32.mrb[0].mxu0
  %422 = vmatprep.mubr.bf16.mxu0 0
  %423 = vmatmul.mubr.bf16.gmra.mrb[0].mxu0 %v238
  %v424 = vpop.f32.mrb[0].mxu0
  %v425 = vadd.f32 %v65, %v424
  %v426 = vpop.f32.mrb[0].mxu0
  %v427 = vpop.f32.mrb[0].mxu0
  %v428 = vadd.f32 %v65, %v427
  %v429 = vpop.f32.mrb[0].mxu0
  %430 = vmatprep.mubr.bf16.mxu0 0
  %431 = vmatmul.mubr.bf16.gmra.mrb[0].mxu0 %v241
  %v432 = vpop.f32.mrb[0].mxu0
  %v433 = vadd.f32 %v65, %v432
  %v434 = vpop.f32.mrb[0].mxu0
  %v435 = vpop.f32.mrb[0].mxu0
  %v436 = vadd.f32 %v65, %v435
  %v437 = vpop.f32.mrb[0].mxu0
  %438 = vmatprep.mubr.bf16.mxu0 0
  %439 = vmatmul.mubr.bf16.gmra.mrb[0].mxu0 %v244
  %v440 = vpop.f32.mrb[0].mxu0
  %v441 = vadd.f32 %v65, %v440
  %v442 = vpop.f32.mrb[0].mxu0
  %v443 = vpop.f32.mrb[0].mxu0
  %v444 = vpop.f32.mrb[0].mxu0
  %445 = vdwg.mxu0
  %v446 = vmax.f32 %v281, 0.0
  %v447 = vmax.f32 %v284, 0.0
  %v448 = vmax.f32 %v289, 0.0
  %v449 = vmax.f32 %v292, 0.0
  %v450 = vmax.f32 %v297, 0.0
  %v451 = vmax.f32 %v300, 0.0
  %v452 = vmax.f32 %v305, 0.0
  %v453 = vmax.f32 %v308, 0.0
  %v454 = vmax.f32 %v313, 0.0
  %v455 = vmax.f32 %v316, 0.0
  %v456 = vmax.f32 %v321, 0.0
  %v457 = vmax.f32 %v324, 0.0
  %v458 = vmax.f32 %v329, 0.0
  %v459 = vmax.f32 %v332, 0.0
  %v460 = vmax.f32 %v337, 0.0
  %v461 = vmax.f32 %v340, 0.0
  %v462 = vmax.f32 %v345, 0.0
  %v463 = vmax.f32 %v348, 0.0
  %v464 = vmax.f32 %v353, 0.0
  %v465 = vmax.f32 %v356, 0.0
  %v466 = vmax.f32 %v361, 0.0
  %v467 = vmax.f32 %v364, 0.0
  %v468 = vmax.f32 %v369, 0.0
  %v469 = vmax.f32 %v372, 0.0
  %v470 = vmax.f32 %v377, 0.0
  %v471 = vmax.f32 %v380, 0.0
  %v472 = vmax.f32 %v385, 0.0
  %v473 = vmax.f32 %v388, 0.0
  %v474 = vmax.f32 %v393, 0.0
  %v475 = vmax.f32 %v396, 0.0
  %v476 = vmax.f32 %v401, 0.0
  %v477 = vmax.f32 %v404, 0.0
  %v478 = vmax.f32 %v409, 0.0
  %v479 = vmax.f32 %v412, 0.0
  %v480 = vmax.f32 %v417, 0.0
  %v481 = vmax.f32 %v420, 0.0
  %v482 = vmax.f32 %v425, 0.0
  %v483 = vmax.f32 %v428, 0.0
  %v484 = vmax.f32 %v433, 0.0
  %v485 = vmax.f32 %v436, 0.0
  %v486 = vmax.f32 %v441, 0.0
  %v487 = vpack.c.bf16 %v447, %v446
  %v488 = vpack.c.bf16 %v449, %v448
  %v489 = vpack.c.bf16 %v451, %v450
  %v490 = vpack.c.bf16 %v453, %v452
  %v491 = vpack.c.bf16 %v455, %v454
  %v492 = vpack.c.bf16 %v457, %v456
  %v493 = vpack.c.bf16 %v459, %v458
  %v494 = vpack.c.bf16 %v461, %v460
  %v495 = vpack.c.bf16 %v463, %v462
  %v496 = vpack.c.bf16 %v465, %v464
  %v497 = vpack.c.bf16 %v467, %v466
  %v498 = vpack.c.bf16 %v469, %v468
  %v499 = vpack.c.bf16 %v471, %v470
  %v500 = vpack.c.bf16 %v473, %v472
  %v501 = vpack.c.bf16 %v475, %v474
  %v502 = vpack.c.bf16 %v477, %v476
  %v503 = vpack.c.bf16 %v479, %v478
  %v504 = vpack.c.bf16 %v481, %v480
  %v505 = vpack.c.bf16 %v483, %v482
  %v506 = vpack.c.bf16 %v485, %v484
  %v507 = vpack.c.bf16 %v486, %v486
  %v529 = vunpack.c.l.b16 %v487
  %v530 = vunpack.c.h.b16 %v487
  %v531 = vunpack.c.l.b16 %v488
  %v532 = vunpack.c.h.b16 %v488
  %v533 = vunpack.c.l.b16 %v489
  %v534 = vunpack.c.h.b16 %v489
  %v535 = vunpack.c.l.b16 %v490
  %v536 = vunpack.c.h.b16 %v490
  %v537 = vunpack.c.l.b16 %v491
  %v538 = vunpack.c.h.b16 %v491
  %v539 = vunpack.c.l.b16 %v492
  %v540 = vunpack.c.h.b16 %v492
  %v541 = vunpack.c.l.b16 %v493
  %v542 = vunpack.c.h.b16 %v493
  %v543 = vunpack.c.l.b16 %v494
  %v544 = vunpack.c.h.b16 %v494
  %v545 = vunpack.c.l.b16 %v495
  %v546 = vunpack.c.h.b16 %v495
  %v547 = vunpack.c.l.b16 %v496
  %v548 = vunpack.c.h.b16 %v496
  %v549 = vunpack.c.l.b16 %v497
  %v550 = vunpack.c.h.b16 %v497
  %v551 = vunpack.c.l.b16 %v498
  %v552 = vunpack.c.h.b16 %v498
  %v553 = vunpack.c.l.b16 %v499
  %v554 = vunpack.c.h.b16 %v499
  %v555 = vunpack.c.l.b16 %v500
  %v556 = vunpack.c.h.b16 %v500
  %v557 = vunpack.c.l.b16 %v501
  %v558 = vunpack.c.h.b16 %v501
  %v559 = vunpack.c.l.b16 %v502
  %v560 = vunpack.c.h.b16 %v502
  %v561 = vunpack.c.l.b16 %v503
  %v562 = vunpack.c.h.b16 %v503
  %v563 = vunpack.c.l.b16 %v504
  %v564 = vunpack.c.h.b16 %v504
  %v565 = vunpack.c.l.b16 %v505
  %v566 = vunpack.c.h.b16 %v505
  %v567 = vunpack.c.l.b16 %v506
  %v568 = vunpack.c.h.b16 %v506
  %v569 = vunpack.c.l.b16 %v507
  %v570 = vpack.c.b16 %v529, %v529
  %v571 = vpack.c.b16 %v530, %v530
  %v572 = vpack.c.b16 %v531, %v531
  %v573 = vpack.c.b16 %v532, %v532
  %v574 = vpack.c.b16 %v533, %v533
  %v575 = vpack.c.b16 %v534, %v534
  %v576 = vpack.c.b16 %v535, %v535
  %v577 = vpack.c.b16 %v536, %v536
  %v578 = vpack.c.b16 %v537, %v537
  %v579 = vpack.c.b16 %v538, %v538
  %v580 = vpack.c.b16 %v539, %v539
  %v581 = vpack.c.b16 %v540, %v540
  %v582 = vpack.c.b16 %v541, %v541
  %v583 = vpack.c.b16 %v542, %v542
  %v584 = vpack.c.b16 %v543, %v543
  %v585 = vpack.c.b16 %v544, %v544
  %v586 = vpack.c.b16 %v545, %v545
  %v587 = vpack.c.b16 %v546, %v546
  %v588 = vpack.c.b16 %v547, %v547
  %v589 = vpack.c.b16 %v548, %v548
  %v590 = vpack.c.b16 %v549, %v549
  %v591 = vpack.c.b16 %v550, %v550
  %v592 = vpack.c.b16 %v551, %v551
  %v593 = vpack.c.b16 %v552, %v552
  %v594 = vpack.c.b16 %v553, %v553
  %v595 = vpack.c.b16 %v554, %v554
  %v596 = vpack.c.b16 %v555, %v555
  %v597 = vpack.c.b16 %v556, %v556
  %v598 = vpack.c.b16 %v557, %v557
  %v599 = vpack.c.b16 %v558, %v558
  %v600 = vpack.c.b16 %v559, %v559
  %v601 = vpack.c.b16 %v560, %v560
  %v602 = vpack.c.b16 %v561, %v561
  %v603 = vpack.c.b16 %v562, %v562
  %v604 = vpack.c.b16 %v563, %v563
  %v605 = vpack.c.b16 %v564, %v564
  %v606 = vpack.c.b16 %v565, %v565
  %v607 = vpack.c.b16 %v566, %v566
  %v608 = vpack.c.b16 %v567, %v567
  %v609 = vpack.c.b16 %v568, %v568
  %v610 = vpack.c.b16 %v569, %v569
  %652 = vst [vmem:[%s3] sm:$0xf] %v570
  %653 = vst [vmem:[%s3 + $0x4] sm:$0xf] %v571
  %654 = vst [vmem:[%s3 + $0x8] sm:$0xf] %v572
  %655 = vst [vmem:[%s3 + $0xc] sm:$0xf] %v573
  %656 = vst [vmem:[%s3 + $0x10] sm:$0xf] %v574
  %657 = vst [vmem:[%s3 + $0x14] sm:$0xf] %v575
  %658 = vst [vmem:[%s3 + $0x18] sm:$0xf] %v576
  %659 = vst [vmem:[%s3 + $0x1c] sm:$0xf] %v577
  %660 = vst [vmem:[%s3 + $0x20] sm:$0xf] %v578
  %661 = vst [vmem:[%s3 + $0x24] sm:$0xf] %v579
  %662 = vst [vmem:[%s3 + $0x28] sm:$0xf] %v580
  %663 = vst [vmem:[%s3 + $0x2c] sm:$0xf] %v581
  %664 = vst [vmem:[%s3 + $0x30] sm:$0xf] %v582
  %665 = vst [vmem:[%s3 + $0x34] sm:$0xf] %v583
  %666 = vst [vmem:[%s3 + $0x38] sm:$0xf] %v584
  %667 = vst [vmem:[%s3 + $0x3c] sm:$0xf] %v585
  %668 = vst [vmem:[%s3 + $0x40] sm:$0xf] %v586
  %669 = vst [vmem:[%s3 + $0x44] sm:$0xf] %v587
  %670 = vst [vmem:[%s3 + $0x48] sm:$0xf] %v588
  %671 = vst [vmem:[%s3 + $0x4c] sm:$0xf] %v589
  %672 = vst [vmem:[%s3 + $0x50] sm:$0xf] %v590
  %673 = vst [vmem:[%s3 + $0x54] sm:$0xf] %v591
  %674 = vst [vmem:[%s3 + $0x58] sm:$0xf] %v592
  %675 = vst [vmem:[%s3 + $0x5c] sm:$0xf] %v593
  %676 = vst [vmem:[%s3 + $0x60] sm:$0xf] %v594
  %677 = vst [vmem:[%s3 + $0x64] sm:$0xf] %v595
  %678 = vst [vmem:[%s3 + $0x68] sm:$0xf] %v596
  %679 = vst [vmem:[%s3 + $0x6c] sm:$0xf] %v597
  %680 = vst [vmem:[%s3 + $0x70] sm:$0xf] %v598
  %681 = vst [vmem:[%s3 + $0x74] sm:$0xf] %v599
  %682 = vst [vmem:[%s3 + $0x78] sm:$0xf] %v600
  %683 = vst [vmem:[%s3 + $0x7c] sm:$0xf] %v601
  %684 = vst [vmem:[%s3 + $0x80] sm:$0xf] %v602
  %685 = vst [vmem:[%s3 + $0x84] sm:$0xf] %v603
  %686 = vst [vmem:[%s3 + $0x88] sm:$0xf] %v604
  %687 = vst [vmem:[%s3 + $0x8c] sm:$0xf] %v605
  %688 = vst [vmem:[%s3 + $0x90] sm:$0xf] %v606
  %689 = vst [vmem:[%s3 + $0x94] sm:$0xf] %v607
  %690 = vst [vmem:[%s3 + $0x98] sm:$0xf] %v608
  %691 = vst [vmem:[%s3 + $0x9c] sm:$0xf] %v609
  %692 = vst [vmem:[%s3 + $0xa0] sm:$0xf] %v610
  // Predicated region
  $region14: #{forward.80} parent=0 // pred_check
    _
  $region15: #{forward.80} parent=0 // pred_check_branch
    %694 = sbr.rel (0) target = $region17
  $region16: #{forward.80} parent=0 // pred_region
    _
  $region17: #{forward.80} parent=0 // pred_fallthru
    _
  // Predicated region
  $region18: #{forward.80} parent=0 // pred_check
    _
  $region19: #{forward.80} parent=0 // pred_check_branch
    %696 = sbr.rel (0) target = $region21
  $region20: #{forward.80} parent=0 // pred_region
    _
  $region21: #{forward.80} parent=0 // pred_fallthru
    _

// kernel: forward.79
$region0: #{forward.79}
  #allocation0 [shape = 'u32[]', space=smem, size = 0x4, offset = 0x4, fixed_abs, tag = 'smem constant byte address 0x4 - core index']
  #allocation1 [shape = 'u32[144,128]{1,0:T(1,128)}', space=vmem, size = 0x12000, scoped, tag = 'internal scratch']
  %s0 = inlined_call_operand.vmem [shape: bf16[9,324,4], index: 0, kind: input, shape index: {}]
  %s1 = inlined_call_operand.vmem [shape: bf16[324,4], index: 1, kind: output, shape index: {}]
  %s2 = sld [smem:[#allocation0]]
  $region14: #{forward.79} parent=0
    _
  %s4 = ssub.s32 1, %s2
  %s5 = scalar_select 0, %s4, %s2
  // Predicated region
  $region2: #{forward.79} parent=0 // pred_check
    _
  $region3: #{forward.79} parent=0 // pred_check_branch
    %7 = sbr.rel (0) target = $region5
  $region4: #{forward.79} parent=0 // pred_region
    _
  $region5: #{forward.79} parent=0 // pred_fallthru
    _
  %v9 = vld [vmem:[%s0] sm:$0xf]
  %v10 = vld [vmem:[%s0 + $0x4] sm:$0xf]
  %v11 = vld [vmem:[%s0 + $0x8] sm:$0xf]
  %v12 = vld [vmem:[%s0 + $0xc] sm:$0xf]
  %v13 = vld [vmem:[%s0 + $0x10] sm:$0xf]
  %v14 = vld [vmem:[%s0 + $0x14] sm:$0xf]
  %v15 = vld [vmem:[%s0 + $0x18] sm:$0xf]
  %v16 = vld [vmem:[%s0 + $0x1c] sm:$0xf]
  %v17 = vld [vmem:[%s0 + $0x20] sm:$0xf]
  %v18 = vld [vmem:[%s0 + $0x24] sm:$0xf]
  %v19 = vld [vmem:[%s0 + $0x28] sm:$0xf]
  %v20 = vld [vmem:[%s0 + $0x2c] sm:$0xf]
  %v21 = vld [vmem:[%s0 + $0x30] sm:$0xf]
  %v22 = vld [vmem:[%s0 + $0x34] sm:$0xf]
  %v23 = vld [vmem:[%s0 + $0x38] sm:$0xf]
  %v24 = vld [vmem:[%s0 + $0x3c] sm:$0xf]
  %v25 = vld [vmem:[%s0 + $0x40] sm:$0xf]
  %v26 = vld [vmem:[%s0 + $0x44] sm:$0xf]
  %v27 = vld [vmem:[%s0 + $0x48] sm:$0xf]
  %v28 = vld [vmem:[%s0 + $0x4c] sm:$0xf]
  %v29 = vld [vmem:[%s0 + $0x50] sm:$0xf]
  %v30 = vld [vmem:[%s0 + $0x54] sm:$0xf]
  %v31 = vld [vmem:[%s0 + $0x58] sm:$0xf]
  %v32 = vld [vmem:[%s0 + $0x5c] sm:$0xf]
  %v33 = vld [vmem:[%s0 + $0x60] sm:$0xf]
  %v34 = vld [vmem:[%s0 + $0x64] sm:$0xf]
  %v35 = vld [vmem:[%s0 + $0x68] sm:$0xf]
  %v36 = vld [vmem:[%s0 + $0x6c] sm:$0xf]
  %v37 = vld [vmem:[%s0 + $0x70] sm:$0xf]
  %v38 = vld [vmem:[%s0 + $0x74] sm:$0xf]
  %v39 = vld [vmem:[%s0 + $0x78] sm:$0xf]
  %v40 = vld [vmem:[%s0 + $0x7c] sm:$0xf]
  %v41 = vld [vmem:[%s0 + $0x80] sm:$0xf]
  %v42 = vld [vmem:[%s0 + $0x84] sm:$0xf]
  %v43 = vld [vmem:[%s0 + $0x88] sm:$0xf]
  %v44 = vld [vmem:[%s0 + $0x8c] sm:$0xf]
  %v45 = vld [vmem:[%s0 + $0x90] sm:$0xf]
  %v46 = vld [vmem:[%s0 + $0x94] sm:$0xf]
  %v47 = vld [vmem:[%s0 + $0x98] sm:$0xf]
  %v48 = vld [vmem:[%s0 + $0x9c] sm:$0xf]
  %v49 = vld [vmem:[%s0 + $0xa0] sm:$0x3]
  %v50 = vld [vmem:[%s0 + $0xa4] sm:$0xf]
  %v51 = vld [vmem:[%s0 + $0xa8] sm:$0xf]
  %v52 = vld [vmem:[%s0 + $0xac] sm:$0xf]
  %v53 = vld [vmem:[%s0 + $0xb0] sm:$0xf]
  %v54 = vld [vmem:[%s0 + $0xb4] sm:$0xf]
  %v55 = vld [vmem:[%s0 + $0xb8] sm:$0xf]
  %v56 = vld [vmem:[%s0 + $0xbc] sm:$0xf]
  %v57 = vld [vmem:[%s0 + $0xc0] sm:$0xf]
  %v58 = vld [vmem:[%s0 + $0xc4] sm:$0xf]
  %v59 = vld [vmem:[%s0 + $0xc8] sm:$0xf]
  %v60 = vld [vmem:[%s0 + $0xcc] sm:$0xf]
  %v61 = vld [vmem:[%s0 + $0xd0] sm:$0xf]
  %v62 = vld [vmem:[%s0 + $0xd4] sm:$0xf]
  %v63 = vld [vmem:[%s0 + $0xd8] sm:$0xf]
  %v64 = vld [vmem:[%s0 + $0xdc] sm:$0xf]
  %v65 = vld [vmem:[%s0 + $0xe0] sm:$0xf]
  %v66 = vld [vmem:[%s0 + $0xe4] sm:$0xf]
  %v67 = vld [vmem:[%s0 + $0xe8] sm:$0xf]
  %v68 = vld [vmem:[%s0 + $0xec] sm:$0xf]
  %v69 = vld [vmem:[%s0 + $0xf0] sm:$0xf]
  %v70 = vld [vmem:[%s0 + $0xf4] sm:$0xf]
  %v71 = vld [vmem:[%s0 + $0xf8] sm:$0xf]
  %v72 = vld [vmem:[%s0 + $0xfc] sm:$0xf]
  %v73 = vld [vmem:[%s0 + $0x100] sm:$0xf]
  %v74 = vld [vmem:[%s0 + $0x104] sm:$0xf]
  %v75 = vld [vmem:[%s0 + $0x108] sm:$0xf]
  %v76 = vld [vmem:[%s0 + $0x10c] sm:$0xf]
  %v77 = vld [vmem:[%s0 + $0x110] sm:$0xf]
  %v78 = vld [vmem:[%s0 + $0x114] sm:$0xf]
  %v79 = vld [vmem:[%s0 + $0x118] sm:$0xf]
  %v80 = vld [vmem:[%s0 + $0x11c] sm:$0xf]
  %v81 = vld [vmem:[%s0 + $0x120] sm:$0xf]
  %v82 = vld [vmem:[%s0 + $0x124] sm:$0xf]
  %v83 = vld [vmem:[%s0 + $0x128] sm:$0xf]
  %v84 = vld [vmem:[%s0 + $0x12c] sm:$0xf]
  %v85 = vld [vmem:[%s0 + $0x130] sm:$0xf]
  %v86 = vld [vmem:[%s0 + $0x134] sm:$0xf]
  %v87 = vld [vmem:[%s0 + $0x138] sm:$0xf]
  %v88 = vld [vmem:[%s0 + $0x13c] sm:$0xf]
  %v89 = vld [vmem:[%s0 + $0x140] sm:$0xf]
  %v90 = vld [vmem:[%s0 + $0x144] sm:$0x3]
  %v91 = vld [vmem:[%s0 + $0x148] sm:$0xf]
  %v92 = vld [vmem:[%s0 + $0x14c] sm:$0xf]
  %v93 = vld [vmem:[%s0 + $0x150] sm:$0xf]
  %v94 = vld [vmem:[%s0 + $0x154] sm:$0xf]
  %v95 = vld [vmem:[%s0 + $0x158] sm:$0xf]
  %v96 = vld [vmem:[%s0 + $0x15c] sm:$0xf]
  %v97 = vld [vmem:[%s0 + $0x160] sm:$0xf]
  %v98 = vld [vmem:[%s0 + $0x164] sm:$0xf]
  %v99 = vld [vmem:[%s0 + $0x168] sm:$0xf]
  %v100 = vld [vmem:[%s0 + $0x16c] sm:$0xf]
  %v101 = vld [vmem:[%s0 + $0x170] sm:$0xf]
  %v102 = vld [vmem:[%s0 + $0x174] sm:$0xf]
  %v103 = vld [vmem:[%s0 + $0x178] sm:$0xf]
  %v104 = vld [vmem:[%s0 + $0x17c] sm:$0xf]
  %v105 = vld [vmem:[%s0 + $0x180] sm:$0xf]
  %v106 = vld [vmem:[%s0 + $0x184] sm:$0xf]
  %v107 = vld [vmem:[%s0 + $0x188] sm:$0xf]
  %v108 = vld [vmem:[%s0 + $0x18c] sm:$0xf]
  %v109 = vld [vmem:[%s0 + $0x190] sm:$0xf]
  %v110 = vld [vmem:[%s0 + $0x194] sm:$0xf]
  %v111 = vld [vmem:[%s0 + $0x198] sm:$0xf]
  %v112 = vld [vmem:[%s0 + $0x19c] sm:$0xf]
  %v113 = vld [vmem:[%s0 + $0x1a0] sm:$0xf]
  %v114 = vld [vmem:[%s0 + $0x1a4] sm:$0xf]
  %v115 = vld [vmem:[%s0 + $0x1a8] sm:$0xf]
  %v116 = vld [vmem:[%s0 + $0x1ac] sm:$0xf]
  %v117 = vld [vmem:[%s0 + $0x1b0] sm:$0xf]
  %v118 = vld [vmem:[%s0 + $0x1b4] sm:$0xf]
  %v119 = vld [vmem:[%s0 + $0x1b8] sm:$0xf]
  %v120 = vld [vmem:[%s0 + $0x1bc] sm:$0xf]
  %v121 = vld [vmem:[%s0 + $0x1c0] sm:$0xf]
  %v122 = vld [vmem:[%s0 + $0x1c4] sm:$0xf]
  %v123 = vld [vmem:[%s0 + $0x1c8] sm:$0xf]
  %v124 = vld [vmem:[%s0 + $0x1cc] sm:$0xf]
  %v125 = vld [vmem:[%s0 + $0x1d0] sm:$0xf]
  %v126 = vld [vmem:[%s0 + $0x1d4] sm:$0xf]
  %v127 = vld [vmem:[%s0 + $0x1d8] sm:$0xf]
  %v128 = vld [vmem:[%s0 + $0x1dc] sm:$0xf]
  %v129 = vld [vmem:[%s0 + $0x1e0] sm:$0xf]
  %v130 = vld [vmem:[%s0 + $0x1e4] sm:$0xf]
  %v131 = vld [vmem:[%s0 + $0x1e8] sm:$0x3]
  %v132 = vld [vmem:[%s0 + $0x1ec] sm:$0xf]
  %v133 = vld [vmem:[%s0 + $0x1f0] sm:$0xf]
  %v134 = vld [vmem:[%s0 + $0x1f4] sm:$0xf]
  %v135 = vld [vmem:[%s0 + $0x1f8] sm:$0xf]
  %v136 = vld [vmem:[%s0 + $0x1fc] sm:$0xf]
  %v137 = vld [vmem:[%s0 + $0x200] sm:$0xf]
  %v138 = vld [vmem:[%s0 + $0x204] sm:$0xf]
  %v139 = vld [vmem:[%s0 + $0x208] sm:$0xf]
  %v140 = vld [vmem:[%s0 + $0x20c] sm:$0xf]
  %v141 = vld [vmem:[%s0 + $0x210] sm:$0xf]
  %v142 = vld [vmem:[%s0 + $0x214] sm:$0xf]
  %v143 = vld [vmem:[%s0 + $0x218] sm:$0xf]
  %v144 = vld [vmem:[%s0 + $0x21c] sm:$0xf]
  %v145 = vld [vmem:[%s0 + $0x220] sm:$0xf]
  %v146 = vld [vmem:[%s0 + $0x224] sm:$0xf]
  %v147 = vld [vmem:[%s0 + $0x228] sm:$0xf]
  %v148 = vld [vmem:[%s0 + $0x22c] sm:$0xf]
  %v149 = vld [vmem:[%s0 + $0x230] sm:$0xf]
  %v150 = vld [vmem:[%s0 + $0x234] sm:$0xf]
  %v151 = vld [vmem:[%s0 + $0x238] sm:$0xf]
  %v152 = vld [vmem:[%s0 + $0x23c] sm:$0xf]
  %v153 = vld [vmem:[%s0 + $0x240] sm:$0xf]
  %v154 = vld [vmem:[%s0 + $0x244] sm:$0xf]
  %v155 = vld [vmem:[%s0 + $0x248] sm:$0xf]
  %v156 = vld [vmem:[%s0 + $0x24c] sm:$0xf]
  %v157 = vld [vmem:[%s0 + $0x250] sm:$0xf]
  %v158 = vld [vmem:[%s0 + $0x254] sm:$0xf]
  %v159 = vld [vmem:[%s0 + $0x258] sm:$0xf]
  %v160 = vld [vmem:[%s0 + $0x25c] sm:$0xf]
  %v161 = vld [vmem:[%s0 + $0x260] sm:$0xf]
  %v162 = vld [vmem:[%s0 + $0x264] sm:$0xf]
  %v163 = vld [vmem:[%s0 + $0x268] sm:$0xf]
  %v164 = vld [vmem:[%s0 + $0x26c] sm:$0xf]
  %v165 = vld [vmem:[%s0 + $0x270] sm:$0xf]
  %v166 = vld [vmem:[%s0 + $0x274] sm:$0xf]
  %v167 = vld [vmem:[%s0 + $0x278] sm:$0xf]
  %v168 = vld [vmem:[%s0 + $0x27c] sm:$0xf]
  %v169 = vld [vmem:[%s0 + $0x280] sm:$0xf]
  %v170 = vld [vmem:[%s0 + $0x284] sm:$0xf]
  %v171 = vld [vmem:[%s0 + $0x288] sm:$0xf]
  %v172 = vld [vmem:[%s0 + $0x28c] sm:$0x3]
  %v173 = vld [vmem:[%s0 + $0x290] sm:$0xf]
  %v174 = vld [vmem:[%s0 + $0x294] sm:$0xf]
  %v175 = vld [vmem:[%s0 + $0x298] sm:$0xf]
  %v176 = vld [vmem:[%s0 + $0x29c] sm:$0xf]
  %v177 = vld [vmem:[%s0 + $0x2a0] sm:$0xf]
  %v178 = vld [vmem:[%s0 + $0x2a4] sm:$0xf]
  %v179 = vld [vmem:[%s0 + $0x2a8] sm:$0xf]
  %v180 = vld [vmem:[%s0 + $0x2ac] sm:$0xf]
  %v181 = vld [vmem:[%s0 + $0x2b0] sm:$0xf]
  %v182 = vld [vmem:[%s0 + $0x2b4] sm:$0xf]
  %v183 = vld [vmem:[%s0 + $0x2b8] sm:$0xf]
  %v184 = vld [vmem:[%s0 + $0x2bc] sm:$0xf]
  %v185 = vld [vmem:[%s0 + $0x2c0] sm:$0xf]
  %v186 = vld [vmem:[%s0 + $0x2c4] sm:$0xf]
  %v187 = vld [vmem:[%s0 + $0x2c8] sm:$0xf]
  %v188 = vld [vmem:[%s0 + $0x2cc] sm:$0xf]
  %v189 = vld [vmem:[%s0 + $0x2d0] sm:$0xf]
  %v190 = vld [vmem:[%s0 + $0x2d4] sm:$0xf]
  %v191 = vld [vmem:[%s0 + $0x2d8] sm:$0xf]
  %v192 = vld [vmem:[%s0 + $0x2dc] sm:$0xf]
  %v193 = vld [vmem:[%s0 + $0x2e0] sm:$0xf]
  %v194 = vld [vmem:[%s0 + $0x2e4] sm:$0xf]
  %v195 = vld [vmem:[%s0 + $0x2e8] sm:$0xf]
  %v196 = vld [vmem:[%s0 + $0x2ec] sm:$0xf]
  %v197 = vld [vmem:[%s0 + $0x2f0] sm:$0xf]
  %v198 = vld [vmem:[%s0 + $0x2f4] sm:$0xf]
  %v199 = vld [vmem:[%s0 + $0x2f8] sm:$0xf]
  %v200 = vld [vmem:[%s0 + $0x2fc] sm:$0xf]
  %v201 = vld [vmem:[%s0 + $0x300] sm:$0xf]
  %v202 = vld [vmem:[%s0 + $0x304] sm:$0xf]
  %v203 = vld [vmem:[%s0 + $0x308] sm:$0xf]
  %v204 = vld [vmem:[%s0 + $0x30c] sm:$0xf]
  %v205 = vld [vmem:[%s0 + $0x310] sm:$0xf]
  %v206 = vld [vmem:[%s0 + $0x314] sm:$0xf]
  %v207 = vld [vmem:[%s0 + $0x318] sm:$0xf]
  %v208 = vld [vmem:[%s0 + $0x31c] sm:$0xf]
  %v209 = vld [vmem:[%s0 + $0x320] sm:$0xf]
  %v210 = vld [vmem:[%s0 + $0x324] sm:$0xf]
  %v211 = vld [vmem:[%s0 + $0x328] sm:$0xf]
  %v212 = vld [vmem:[%s0 + $0x32c] sm:$0xf]
  %v213 = vld [vmem:[%s0 + $0x330] sm:$0x3]
  %v214 = vld [vmem:[%s0 + $0x334] sm:$0xf]
  %v215 = vld [vmem:[%s0 + $0x338] sm:$0xf]
  %v216 = vld [vmem:[%s0 + $0x33c] sm:$0xf]
  %v217 = vld [vmem:[%s0 + $0x340] sm:$0xf]
  %v218 = vld [vmem:[%s0 + $0x344] sm:$0xf]
  %v219 = vld [vmem:[%s0 + $0x348] sm:$0xf]
  %v220 = vld [vmem:[%s0 + $0x34c] sm:$0xf]
  %v221 = vld [vmem:[%s0 + $0x350] sm:$0xf]
  %v222 = vld [vmem:[%s0 + $0x354] sm:$0xf]
  %v223 = vld [vmem:[%s0 + $0x358] sm:$0xf]
  %v224 = vld [vmem:[%s0 + $0x35c] sm:$0xf]
  %v225 = vld [vmem:[%s0 + $0x360] sm:$0xf]
  %v226 = vld [vmem:[%s0 + $0x364] sm:$0xf]
  %v227 = vld [vmem:[%s0 + $0x368] sm:$0xf]
  %v228 = vld [vmem:[%s0 + $0x36c] sm:$0xf]
  %v229 = vld [vmem:[%s0 + $0x370] sm:$0xf]
  %v230 = vld [vmem:[%s0 + $0x374] sm:$0xf]
  %v231 = vld [vmem:[%s0 + $0x378] sm:$0xf]
  %v232 = vld [vmem:[%s0 + $0x37c] sm:$0xf]
  %v233 = vld [vmem:[%s0 + $0x380] sm:$0xf]
  %v234 = vld [vmem:[%s0 + $0x384] sm:$0xf]
  %v235 = vld [vmem:[%s0 + $0x388] sm:$0xf]
  %v236 = vld [vmem:[%s0 + $0x38c] sm:$0xf]
  %v237 = vld [vmem:[%s0 + $0x390] sm:$0xf]
  %v238 = vld [vmem:[%s0 + $0x394] sm:$0xf]
  %v239 = vld [vmem:[%s0 + $0x398] sm:$0xf]
  %v240 = vld [vmem:[%s0 + $0x39c] sm:$0xf]
  %v241 = vld [vmem:[%s0 + $0x3a0] sm:$0xf]
  %v242 = vld [vmem:[%s0 + $0x3a4] sm:$0xf]
  %v243 = vld [vmem:[%s0 + $0x3a8] sm:$0xf]
  %v244 = vld [vmem:[%s0 + $0x3ac] sm:$0xf]
  %v245 = vld [vmem:[%s0 + $0x3b0] sm:$0xf]
  %v246 = vld [vmem:[%s0 + $0x3b4] sm:$0xf]
  %v247 = vld [vmem:[%s0 + $0x3b8] sm:$0xf]
  %v248 = vld [vmem:[%s0 + $0x3bc] sm:$0xf]
  %v249 = vld [vmem:[%s0 + $0x3c0] sm:$0xf]
  %v250 = vld [vmem:[%s0 + $0x3c4] sm:$0xf]
  %v251 = vld [vmem:[%s0 + $0x3c8] sm:$0xf]
  %v252 = vld [vmem:[%s0 + $0x3cc] sm:$0xf]
  %v253 = vld [vmem:[%s0 + $0x3d0] sm:$0xf]
  %v254 = vld [vmem:[%s0 + $0x3d4] sm:$0x3]
  %v255 = vld [vmem:[%s0 + $0x3d8] sm:$0xf]
  %v256 = vld [vmem:[%s0 + $0x3dc] sm:$0xf]
  %v257 = vld [vmem:[%s0 + $0x3e0] sm:$0xf]
  %v258 = vld [vmem:[%s0 + $0x3e4] sm:$0xf]
  %v259 = vld [vmem:[%s0 + $0x3e8] sm:$0xf]
  %v260 = vld [vmem:[%s0 + $0x3ec] sm:$0xf]
  %v261 = vld [vmem:[%s0 + $0x3f0] sm:$0xf]
  %v262 = vld [vmem:[%s0 + $0x3f4] sm:$0xf]
  %v263 = vld [vmem:[%s0 + $0x3f8] sm:$0xf]
  %v264 = vld [vmem:[%s0 + $0x3fc] sm:$0xf]
  %v265 = vld [vmem:[%s0 + $0x400] sm:$0xf]
  %v266 = vld [vmem:[%s0 + $0x404] sm:$0xf]
  %v267 = vld [vmem:[%s0 + $0x408] sm:$0xf]
  %v268 = vld [vmem:[%s0 + $0x40c] sm:$0xf]
  %v269 = vld [vmem:[%s0 + $0x410] sm:$0xf]
  %v270 = vld [vmem:[%s0 + $0x414] sm:$0xf]
  %v271 = vld [vmem:[%s0 + $0x418] sm:$0xf]
  %v272 = vld [vmem:[%s0 + $0x41c] sm:$0xf]
  %v273 = vld [vmem:[%s0 + $0x420] sm:$0xf]
  %v274 = vld [vmem:[%s0 + $0x424] sm:$0xf]
  %v275 = vld [vmem:[%s0 + $0x428] sm:$0xf]
  %v276 = vld [vmem:[%s0 + $0x42c] sm:$0xf]
  %v277 = vld [vmem:[%s0 + $0x430] sm:$0xf]
  %v278 = vld [vmem:[%s0 + $0x434] sm:$0xf]
  %v279 = vld [vmem:[%s0 + $0x438] sm:$0xf]
  %v280 = vld [vmem:[%s0 + $0x43c] sm:$0xf]
  %v281 = vld [vmem:[%s0 + $0x440] sm:$0xf]
  %v282 = vld [vmem:[%s0 + $0x444] sm:$0xf]
  %v283 = vld [vmem:[%s0 + $0x448] sm:$0xf]
  %v284 = vld [vmem:[%s0 + $0x44c] sm:$0xf]
  %v285 = vld [vmem:[%s0 + $0x450] sm:$0xf]
  %v286 = vld [vmem:[%s0 + $0x454] sm:$0xf]
  %v287 = vld [vmem:[%s0 + $0x458] sm:$0xf]
  %v288 = vld [vmem:[%s0 + $0x45c] sm:$0xf]
  %v289 = vld [vmem:[%s0 + $0x460] sm:$0xf]
  %v290 = vld [vmem:[%s0 + $0x464] sm:$0xf]
  %v291 = vld [vmem:[%s0 + $0x468] sm:$0xf]
  %v292 = vld [vmem:[%s0 + $0x46c] sm:$0xf]
  %v293 = vld [vmem:[%s0 + $0x470] sm:$0xf]
  %v294 = vld [vmem:[%s0 + $0x474] sm:$0xf]
  %v295 = vld [vmem:[%s0 + $0x478] sm:$0x3]
  %v296 = vld [vmem:[%s0 + $0x47c] sm:$0xf]
  %v297 = vld [vmem:[%s0 + $0x480] sm:$0xf]
  %v298 = vld [vmem:[%s0 + $0x484] sm:$0xf]
  %v299 = vld [vmem:[%s0 + $0x488] sm:$0xf]
  %v300 = vld [vmem:[%s0 + $0x48c] sm:$0xf]
  %v301 = vld [vmem:[%s0 + $0x490] sm:$0xf]
  %v302 = vld [vmem:[%s0 + $0x494] sm:$0xf]
  %v303 = vld [vmem:[%s0 + $0x498] sm:$0xf]
  %v304 = vld [vmem:[%s0 + $0x49c] sm:$0xf]
  %v305 = vld [vmem:[%s0 + $0x4a0] sm:$0xf]
  %v306 = vld [vmem:[%s0 + $0x4a4] sm:$0xf]
  %v307 = vld [vmem:[%s0 + $0x4a8] sm:$0xf]
  %v308 = vld [vmem:[%s0 + $0x4ac] sm:$0xf]
  %v309 = vld [vmem:[%s0 + $0x4b0] sm:$0xf]
  %v310 = vld [vmem:[%s0 + $0x4b4] sm:$0xf]
  %v311 = vld [vmem:[%s0 + $0x4b8] sm:$0xf]
  %v312 = vld [vmem:[%s0 + $0x4bc] sm:$0xf]
  %v313 = vld [vmem:[%s0 + $0x4c0] sm:$0xf]
  %v314 = vld [vmem:[%s0 + $0x4c4] sm:$0xf]
  %v315 = vld [vmem:[%s0 + $0x4c8] sm:$0xf]
  %v316 = vld [vmem:[%s0 + $0x4cc] sm:$0xf]
  %v317 = vld [vmem:[%s0 + $0x4d0] sm:$0xf]
  %v318 = vld [vmem:[%s0 + $0x4d4] sm:$0xf]
  %v319 = vld [vmem:[%s0 + $0x4d8] sm:$0xf]
  %v320 = vld [vmem:[%s0 + $0x4dc] sm:$0xf]
  %v321 = vld [vmem:[%s0 + $0x4e0] sm:$0xf]
  %v322 = vld [vmem:[%s0 + $0x4e4] sm:$0xf]
  %v323 = vld [vmem:[%s0 + $0x4e8] sm:$0xf]
  %v324 = vld [vmem:[%s0 + $0x4ec] sm:$0xf]
  %v325 = vld [vmem:[%s0 + $0x4f0] sm:$0xf]
  %v326 = vld [vmem:[%s0 + $0x4f4] sm:$0xf]
  %v327 = vld [vmem:[%s0 + $0x4f8] sm:$0xf]
  %v328 = vld [vmem:[%s0 + $0x4fc] sm:$0xf]
  %v329 = vld [vmem:[%s0 + $0x500] sm:$0xf]
  %v330 = vld [vmem:[%s0 + $0x504] sm:$0xf]
  %v331 = vld [vmem:[%s0 + $0x508] sm:$0xf]
  %v332 = vld [vmem:[%s0 + $0x50c] sm:$0xf]
  %v333 = vld [vmem:[%s0 + $0x510] sm:$0xf]
  %v334 = vld [vmem:[%s0 + $0x514] sm:$0xf]
  %v335 = vld [vmem:[%s0 + $0x518] sm:$0xf]
  %v336 = vld [vmem:[%s0 + $0x51c] sm:$0x3]
  %v337 = vld [vmem:[%s0 + $0x520] sm:$0xf]
  %v338 = vld [vmem:[%s0 + $0x524] sm:$0xf]
  %v339 = vld [vmem:[%s0 + $0x528] sm:$0xf]
  %v340 = vld [vmem:[%s0 + $0x52c] sm:$0xf]
  %v341 = vld [vmem:[%s0 + $0x530] sm:$0xf]
  %v342 = vld [vmem:[%s0 + $0x534] sm:$0xf]
  %v343 = vld [vmem:[%s0 + $0x538] sm:$0xf]
  %v344 = vld [vmem:[%s0 + $0x53c] sm:$0xf]
  %v345 = vld [vmem:[%s0 + $0x540] sm:$0xf]
  %v346 = vld [vmem:[%s0 + $0x544] sm:$0xf]
  %v347 = vld [vmem:[%s0 + $0x548] sm:$0xf]
  %v348 = vld [vmem:[%s0 + $0x54c] sm:$0xf]
  %v349 = vld [vmem:[%s0 + $0x550] sm:$0xf]
  %v350 = vld [vmem:[%s0 + $0x554] sm:$0xf]
  %v351 = vld [vmem:[%s0 + $0x558] sm:$0xf]
  %v352 = vld [vmem:[%s0 + $0x55c] sm:$0xf]
  %v353 = vld [vmem:[%s0 + $0x560] sm:$0xf]
  %v354 = vld [vmem:[%s0 + $0x564] sm:$0xf]
  %v355 = vld [vmem:[%s0 + $0x568] sm:$0xf]
  %v356 = vld [vmem:[%s0 + $0x56c] sm:$0xf]
  %v357 = vld [vmem:[%s0 + $0x570] sm:$0xf]
  %v358 = vld [vmem:[%s0 + $0x574] sm:$0xf]
  %v359 = vld [vmem:[%s0 + $0x578] sm:$0xf]
  %v360 = vld [vmem:[%s0 + $0x57c] sm:$0xf]
  %v361 = vld [vmem:[%s0 + $0x580] sm:$0xf]
  %v362 = vld [vmem:[%s0 + $0x584] sm:$0xf]
  %v363 = vld [vmem:[%s0 + $0x588] sm:$0xf]
  %v364 = vld [vmem:[%s0 + $0x58c] sm:$0xf]
  %v365 = vld [vmem:[%s0 + $0x590] sm:$0xf]
  %v366 = vld [vmem:[%s0 + $0x594] sm:$0xf]
  %v367 = vld [vmem:[%s0 + $0x598] sm:$0xf]
  %v368 = vld [vmem:[%s0 + $0x59c] sm:$0xf]
  %v369 = vld [vmem:[%s0 + $0x5a0] sm:$0xf]
  %v370 = vld [vmem:[%s0 + $0x5a4] sm:$0xf]
  %v371 = vld [vmem:[%s0 + $0x5a8] sm:$0xf]
  %v372 = vld [vmem:[%s0 + $0x5ac] sm:$0xf]
  %v373 = vld [vmem:[%s0 + $0x5b0] sm:$0xf]
  %v374 = vld [vmem:[%s0 + $0x5b4] sm:$0xf]
  %v375 = vld [vmem:[%s0 + $0x5b8] sm:$0xf]
  %v376 = vld [vmem:[%s0 + $0x5bc] sm:$0xf]
  %v377 = vld [vmem:[%s0 + $0x5c0] sm:$0x3]
  %vm378 = vcmask 27648
  %v381 = vsel %vm378, %v9, 4286644096
  %v384 = vsel %vm378, %v50, 4286644096
  %v386 = vmax.bf16 %v381, %v384
  %v388 = vsel %vm378, %v91, 4286644096
  %v390 = vmax.bf16 %v386, %v388
  %v392 = vsel %vm378, %v132, 4286644096
  %v394 = vmax.bf16 %v390, %v392
  %v396 = vsel %vm378, %v173, 4286644096
  %v398 = vmax.bf16 %v394, %v396
  %v400 = vsel %vm378, %v214, 4286644096
  %v402 = vmax.bf16 %v398, %v400
  %v404 = vsel %vm378, %v255, 4286644096
  %v406 = vmax.bf16 %v402, %v404
  %v408 = vsel %vm378, %v296, 4286644096
  %v410 = vmax.bf16 %v406, %v408
  %v412 = vsel %vm378, %v337, 4286644096
  %v414 = vmax.bf16 %v410, %v412
  %v416 = vsel %vm378, %v10, 4286644096
  %v419 = vsel %vm378, %v51, 4286644096
  %v421 = vmax.bf16 %v416, %v419
  %v423 = vsel %vm378, %v92, 4286644096
  %v425 = vmax.bf16 %v421, %v423
  %v427 = vsel %vm378, %v133, 4286644096
  %v429 = vmax.bf16 %v425, %v427
  %v431 = vsel %vm378, %v174, 4286644096
  %v433 = vmax.bf16 %v429, %v431
  %v435 = vsel %vm378, %v215, 4286644096
  %v437 = vmax.bf16 %v433, %v435
  %v439 = vsel %vm378, %v256, 4286644096
  %v441 = vmax.bf16 %v437, %v439
  %v443 = vsel %vm378, %v297, 4286644096
  %v445 = vmax.bf16 %v441, %v443
  %v447 = vsel %vm378, %v338, 4286644096
  %v449 = vmax.bf16 %v445, %v447
  %v451 = vsel %vm378, %v11, 4286644096
  %v454 = vsel %vm378, %v52, 4286644096
  %v456 = vmax.bf16 %v451, %v454
  %v458 = vsel %vm378, %v93, 4286644096
  %v460 = vmax.bf16 %v456, %v458
  %v462 = vsel %vm378, %v134, 4286644096
  %v464 = vmax.bf16 %v460, %v462
  %v466 = vsel %vm378, %v175, 4286644096
  %v468 = vmax.bf16 %v464, %v466
  %v470 = vsel %vm378, %v216, 4286644096
  %v472 = vmax.bf16 %v468, %v470
  %v474 = vsel %vm378, %v257, 4286644096
  %v476 = vmax.bf16 %v472, %v474
  %v478 = vsel %vm378, %v298, 4286644096
  %v480 = vmax.bf16 %v476, %v478
  %v482 = vsel %vm378, %v339, 4286644096
  %v484 = vmax.bf16 %v480, %v482
  %v486 = vsel %vm378, %v12, 4286644096
  %v489 = vsel %vm378, %v53, 4286644096
  %v491 = vmax.bf16 %v486, %v489
  %v493 = vsel %vm378, %v94, 4286644096
  %v495 = vmax.bf16 %v491, %v493
  %v497 = vsel %vm378, %v135, 4286644096
  %v499 = vmax.bf16 %v495, %v497
  %v501 = vsel %vm378, %v176, 4286644096
  %v503 = vmax.bf16 %v499, %v501
  %v505 = vsel %vm378, %v217, 4286644096
  %v507 = vmax.bf16 %v503, %v505
  %v509 = vsel %vm378, %v258, 4286644096
  %v511 = vmax.bf16 %v507, %v509
  %v513 = vsel %vm378, %v299, 4286644096
  %v515 = vmax.bf16 %v511, %v513
  %v517 = vsel %vm378, %v340, 4286644096
  %v519 = vmax.bf16 %v515, %v517
  %v521 = vsel %vm378, %v13, 4286644096
  %v524 = vsel %vm378, %v54, 4286644096
  %v526 = vmax.bf16 %v521, %v524
  %v528 = vsel %vm378, %v95, 4286644096
  %v530 = vmax.bf16 %v526, %v528
  %v532 = vsel %vm378, %v136, 4286644096
  %v534 = vmax.bf16 %v530, %v532
  %v536 = vsel %vm378, %v177, 4286644096
  %v538 = vmax.bf16 %v534, %v536
  %v540 = vsel %vm378, %v218, 4286644096
  %v542 = vmax.bf16 %v538, %v540
  %v544 = vsel %vm378, %v259, 4286644096
  %v546 = vmax.bf16 %v542, %v544
  %v548 = vsel %vm378, %v300, 4286644096
  %v550 = vmax.bf16 %v546, %v548
  %v552 = vsel %vm378, %v341, 4286644096
  %v554 = vmax.bf16 %v550, %v552
  %v556 = vsel %vm378, %v14, 4286644096
  %v559 = vsel %vm378, %v55, 4286644096
  %v561 = vmax.bf16 %v556, %v559
  %v563 = vsel %vm378, %v96, 4286644096
  %v565 = vmax.bf16 %v561, %v563
  %v567 = vsel %vm378, %v137, 4286644096
  %v569 = vmax.bf16 %v565, %v567
  %v571 = vsel %vm378, %v178, 4286644096
  %v573 = vmax.bf16 %v569, %v571
  %v575 = vsel %vm378, %v219, 4286644096
  %v577 = vmax.bf16 %v573, %v575
  %v579 = vsel %vm378, %v260, 4286644096
  %v581 = vmax.bf16 %v577, %v579
  %v583 = vsel %vm378, %v301, 4286644096
  %v585 = vmax.bf16 %v581, %v583
  %v587 = vsel %vm378, %v342, 4286644096
  %v589 = vmax.bf16 %v585, %v587
  %v591 = vsel %vm378, %v15, 4286644096
  %v594 = vsel %vm378, %v56, 4286644096
  %v596 = vmax.bf16 %v591, %v594
  %v598 = vsel %vm378, %v97, 4286644096
  %v600 = vmax.bf16 %v596, %v598
  %v602 = vsel %vm378, %v138, 4286644096
  %v604 = vmax.bf16 %v600, %v602
  %v606 = vsel %vm378, %v179, 4286644096
  %v608 = vmax.bf16 %v604, %v606
  %v610 = vsel %vm378, %v220, 4286644096
  %v612 = vmax.bf16 %v608, %v610
  %v614 = vsel %vm378, %v261, 4286644096
  %v616 = vmax.bf16 %v612, %v614
  %v618 = vsel %vm378, %v302, 4286644096
  %v620 = vmax.bf16 %v616, %v618
  %v622 = vsel %vm378, %v343, 4286644096
  %v624 = vmax.bf16 %v620, %v622
  %v626 = vsel %vm378, %v16, 4286644096
  %v629 = vsel %vm378, %v57, 4286644096
  %v631 = vmax.bf16 %v626, %v629
  %v633 = vsel %vm378, %v98, 4286644096
  %v635 = vmax.bf16 %v631, %v633
  %v637 = vsel %vm378, %v139, 4286644096
  %v639 = vmax.bf16 %v635, %v637
  %v641 = vsel %vm378, %v180, 4286644096
  %v643 = vmax.bf16 %v639, %v641
  %v645 = vsel %vm378, %v221, 4286644096
  %v647 = vmax.bf16 %v643, %v645
  %v649 = vsel %vm378, %v262, 4286644096
  %v651 = vmax.bf16 %v647, %v649
  %v653 = vsel %vm378, %v303, 4286644096
  %v655 = vmax.bf16 %v651, %v653
  %v657 = vsel %vm378, %v344, 4286644096
  %v659 = vmax.bf16 %v655, %v657
  %v661 = vsel %vm378, %v17, 4286644096
  %v664 = vsel %vm378, %v58, 4286644096
  %v666 = vmax.bf16 %v661, %v664
  %v668 = vsel %vm378, %v99, 4286644096
  %v670 = vmax.bf16 %v666, %v668
  %v672 = vsel %vm378, %v140, 4286644096
  %v674 = vmax.bf16 %v670, %v672
  %v676 = vsel %vm378, %v181, 4286644096
  %v678 = vmax.bf16 %v674, %v676
  %v680 = vsel %vm378, %v222, 4286644096
  %v682 = vmax.bf16 %v678, %v680
  %v684 = vsel %vm378, %v263, 4286644096
  %v686 = vmax.bf16 %v682, %v684
  %v688 = vsel %vm378, %v304, 4286644096
  %v690 = vmax.bf16 %v686, %v688
  %v692 = vsel %vm378, %v345, 4286644096
  %v694 = vmax.bf16 %v690, %v692
  %v696 = vsel %vm378, %v18, 4286644096
  %v699 = vsel %vm378, %v59, 4286644096
  %v701 = vmax.bf16 %v696, %v699
  %v703 = vsel %vm378, %v100, 4286644096
  %v705 = vmax.bf16 %v701, %v703
  %v707 = vsel %vm378, %v141, 4286644096
  %v709 = vmax.bf16 %v705, %v707
  %v711 = vsel %vm378, %v182, 4286644096
  %v713 = vmax.bf16 %v709, %v711
  %v715 = vsel %vm378, %v223, 4286644096
  %v717 = vmax.bf16 %v713, %v715
  %v719 = vsel %vm378, %v264, 4286644096
  %v721 = vmax.bf16 %v717, %v719
  %v723 = vsel %vm378, %v305, 4286644096
  %v725 = vmax.bf16 %v721, %v723
  %v727 = vsel %vm378, %v346, 4286644096
  %v729 = vmax.bf16 %v725, %v727
  %v731 = vsel %vm378, %v19, 4286644096
  %v734 = vsel %vm378, %v60, 4286644096
  %v736 = vmax.bf16 %v731, %v734
  %v738 = vsel %vm378, %v101, 4286644096
  %v740 = vmax.bf16 %v736, %v738
  %v742 = vsel %vm378, %v142, 4286644096
  %v744 = vmax.bf16 %v740, %v742
  %v746 = vsel %vm378, %v183, 4286644096
  %v748 = vmax.bf16 %v744, %v746
  %v750 = vsel %vm378, %v224, 4286644096
  %v752 = vmax.bf16 %v748, %v750
  %v754 = vsel %vm378, %v265, 4286644096
  %v756 = vmax.bf16 %v752, %v754
  %v758 = vsel %vm378, %v306, 4286644096
  %v760 = vmax.bf16 %v756, %v758
  %v762 = vsel %vm378, %v347, 4286644096
  %v764 = vmax.bf16 %v760, %v762
  %v766 = vsel %vm378, %v20, 4286644096
  %v769 = vsel %vm378, %v61, 4286644096
  %v771 = vmax.bf16 %v766, %v769
  %v773 = vsel %vm378, %v102, 4286644096
  %v775 = vmax.bf16 %v771, %v773
  %v777 = vsel %vm378, %v143, 4286644096
  %v779 = vmax.bf16 %v775, %v777
  %v781 = vsel %vm378, %v184, 4286644096
  %v783 = vmax.bf16 %v779, %v781
  %v785 = vsel %vm378, %v225, 4286644096
  %v787 = vmax.bf16 %v783, %v785
  %v789 = vsel %vm378, %v266, 4286644096
  %v791 = vmax.bf16 %v787, %v789
  %v793 = vsel %vm378, %v307, 4286644096
  %v795 = vmax.bf16 %v791, %v793
  %v797 = vsel %vm378, %v348, 4286644096
  %v799 = vmax.bf16 %v795, %v797
  %v801 = vsel %vm378, %v21, 4286644096
  %v804 = vsel %vm378, %v62, 4286644096
  %v806 = vmax.bf16 %v801, %v804
  %v808 = vsel %vm378, %v103, 4286644096
  %v810 = vmax.bf16 %v806, %v808
  %v812 = vsel %vm378, %v144, 4286644096
  %v814 = vmax.bf16 %v810, %v812
  %v816 = vsel %vm378, %v185, 4286644096
  %v818 = vmax.bf16 %v814, %v816
  %v820 = vsel %vm378, %v226, 4286644096
  %v822 = vmax.bf16 %v818, %v820
  %v824 = vsel %vm378, %v267, 4286644096
  %v826 = vmax.bf16 %v822, %v824
  %v828 = vsel %vm378, %v308, 4286644096
  %v830 = vmax.bf16 %v826, %v828
  %v832 = vsel %vm378, %v349, 4286644096
  %v834 = vmax.bf16 %v830, %v832
  %v836 = vsel %vm378, %v22, 4286644096
  %v839 = vsel %vm378, %v63, 4286644096
  %v841 = vmax.bf16 %v836, %v839
  %v843 = vsel %vm378, %v104, 4286644096
  %v845 = vmax.bf16 %v841, %v843
  %v847 = vsel %vm378, %v145, 4286644096
  %v849 = vmax.bf16 %v845, %v847
  %v851 = vsel %vm378, %v186, 4286644096
  %v853 = vmax.bf16 %v849, %v851
  %v855 = vsel %vm378, %v227, 4286644096
  %v857 = vmax.bf16 %v853, %v855
  %v859 = vsel %vm378, %v268, 4286644096
  %v861 = vmax.bf16 %v857, %v859
  %v863 = vsel %vm378, %v309, 4286644096
  %v865 = vmax.bf16 %v861, %v863
  %v867 = vsel %vm378, %v350, 4286644096
  %v869 = vmax.bf16 %v865, %v867
  %v871 = vsel %vm378, %v23, 4286644096
  %v874 = vsel %vm378, %v64, 4286644096
  %v876 = vmax.bf16 %v871, %v874
  %v878 = vsel %vm378, %v105, 4286644096
  %v880 = vmax.bf16 %v876, %v878
  %v882 = vsel %vm378, %v146, 4286644096
  %v884 = vmax.bf16 %v880, %v882
  %v886 = vsel %vm378, %v187, 4286644096
  %v888 = vmax.bf16 %v884, %v886
  %v890 = vsel %vm378, %v228, 4286644096
  %v892 = vmax.bf16 %v888, %v890
  %v894 = vsel %vm378, %v269, 4286644096
  %v896 = vmax.bf16 %v892, %v894
  %v898 = vsel %vm378, %v310, 4286644096
  %v900 = vmax.bf16 %v896, %v898
  %v902 = vsel %vm378, %v351, 4286644096
  %v904 = vmax.bf16 %v900, %v902
  %v906 = vsel %vm378, %v24, 4286644096
  %v909 = vsel %vm378, %v65, 4286644096
  %v911 = vmax.bf16 %v906, %v909
  %v913 = vsel %vm378, %v106, 4286644096
  %v915 = vmax.bf16 %v911, %v913
  %v917 = vsel %vm378, %v147, 4286644096
  %v919 = vmax.bf16 %v915, %v917
  %v921 = vsel %vm378, %v188, 4286644096
  %v923 = vmax.bf16 %v919, %v921
  %v925 = vsel %vm378, %v229, 4286644096
  %v927 = vmax.bf16 %v923, %v925
  %v929 = vsel %vm378, %v270, 4286644096
  %v931 = vmax.bf16 %v927, %v929
  %v933 = vsel %vm378, %v311, 4286644096
  %v935 = vmax.bf16 %v931, %v933
  %v937 = vsel %vm378, %v352, 4286644096
  %v939 = vmax.bf16 %v935, %v937
  %v941 = vsel %vm378, %v25, 4286644096
  %v944 = vsel %vm378, %v66, 4286644096
  %v946 = vmax.bf16 %v941, %v944
  %v948 = vsel %vm378, %v107, 4286644096
  %v950 = vmax.bf16 %v946, %v948
  %v952 = vsel %vm378, %v148, 4286644096
  %v954 = vmax.bf16 %v950, %v952
  %v956 = vsel %vm378, %v189, 4286644096
  %v958 = vmax.bf16 %v954, %v956
  %v960 = vsel %vm378, %v230, 4286644096
  %v962 = vmax.bf16 %v958, %v960
  %v964 = vsel %vm378, %v271, 4286644096
  %v966 = vmax.bf16 %v962, %v964
  %v968 = vsel %vm378, %v312, 4286644096
  %v970 = vmax.bf16 %v966, %v968
  %v972 = vsel %vm378, %v353, 4286644096
  %v974 = vmax.bf16 %v970, %v972
  %v976 = vsel %vm378, %v26, 4286644096
  %v979 = vsel %vm378, %v67, 4286644096
  %v981 = vmax.bf16 %v976, %v979
  %v983 = vsel %vm378, %v108, 4286644096
  %v985 = vmax.bf16 %v981, %v983
  %v987 = vsel %vm378, %v149, 4286644096
  %v989 = vmax.bf16 %v985, %v987
  %v991 = vsel %vm378, %v190, 4286644096
  %v993 = vmax.bf16 %v989, %v991
  %v995 = vsel %vm378, %v231, 4286644096
  %v997 = vmax.bf16 %v993, %v995
  %v999 = vsel %vm378, %v272, 4286644096
  %v1001 = vmax.bf16 %v997, %v999
  %v1003 = vsel %vm378, %v313, 4286644096
  %v1005 = vmax.bf16 %v1001, %v1003
  %v1007 = vsel %vm378, %v354, 4286644096
  %v1009 = vmax.bf16 %v1005, %v1007
  %v1011 = vsel %vm378, %v27, 4286644096
  %v1014 = vsel %vm378, %v68, 4286644096
  %v1016 = vmax.bf16 %v1011, %v1014
  %v1018 = vsel %vm378, %v109, 4286644096
  %v1020 = vmax.bf16 %v1016, %v1018
  %v1022 = vsel %vm378, %v150, 4286644096
  %v1024 = vmax.bf16 %v1020, %v1022
  %v1026 = vsel %vm378, %v191, 4286644096
  %v1028 = vmax.bf16 %v1024, %v1026
  %v1030 = vsel %vm378, %v232, 4286644096
  %v1032 = vmax.bf16 %v1028, %v1030
  %v1034 = vsel %vm378, %v273, 4286644096
  %v1036 = vmax.bf16 %v1032, %v1034
  %v1038 = vsel %vm378, %v314, 4286644096
  %v1040 = vmax.bf16 %v1036, %v1038
  %v1042 = vsel %vm378, %v355, 4286644096
  %v1044 = vmax.bf16 %v1040, %v1042
  %v1046 = vsel %vm378, %v28, 4286644096
  %v1049 = vsel %vm378, %v69, 4286644096
  %v1051 = vmax.bf16 %v1046, %v1049
  %v1053 = vsel %vm378, %v110, 4286644096
  %v1055 = vmax.bf16 %v1051, %v1053
  %v1057 = vsel %vm378, %v151, 4286644096
  %v1059 = vmax.bf16 %v1055, %v1057
  %v1061 = vsel %vm378, %v192, 4286644096
  %v1063 = vmax.bf16 %v1059, %v1061
  %v1065 = vsel %vm378, %v233, 4286644096
  %v1067 = vmax.bf16 %v1063, %v1065
  %v1069 = vsel %vm378, %v274, 4286644096
  %v1071 = vmax.bf16 %v1067, %v1069
  %v1073 = vsel %vm378, %v315, 4286644096
  %v1075 = vmax.bf16 %v1071, %v1073
  %v1077 = vsel %vm378, %v356, 4286644096
  %v1079 = vmax.bf16 %v1075, %v1077
  %v1081 = vsel %vm378, %v29, 4286644096
  %v1084 = vsel %vm378, %v70, 4286644096
  %v1086 = vmax.bf16 %v1081, %v1084
  %v1088 = vsel %vm378, %v111, 4286644096
  %v1090 = vmax.bf16 %v1086, %v1088
  %v1092 = vsel %vm378, %v152, 4286644096
  %v1094 = vmax.bf16 %v1090, %v1092
  %v1096 = vsel %vm378, %v193, 4286644096
  %v1098 = vmax.bf16 %v1094, %v1096
  %v1100 = vsel %vm378, %v234, 4286644096
  %v1102 = vmax.bf16 %v1098, %v1100
  %v1104 = vsel %vm378, %v275, 4286644096
  %v1106 = vmax.bf16 %v1102, %v1104
  %v1108 = vsel %vm378, %v316, 4286644096
  %v1110 = vmax.bf16 %v1106, %v1108
  %v1112 = vsel %vm378, %v357, 4286644096
  %v1114 = vmax.bf16 %v1110, %v1112
  %v1116 = vsel %vm378, %v30, 4286644096
  %v1119 = vsel %vm378, %v71, 4286644096
  %v1121 = vmax.bf16 %v1116, %v1119
  %v1123 = vsel %vm378, %v112, 4286644096
  %v1125 = vmax.bf16 %v1121, %v1123
  %v1127 = vsel %vm378, %v153, 4286644096
  %v1129 = vmax.bf16 %v1125, %v1127
  %v1131 = vsel %vm378, %v194, 4286644096
  %v1133 = vmax.bf16 %v1129, %v1131
  %v1135 = vsel %vm378, %v235, 4286644096
  %v1137 = vmax.bf16 %v1133, %v1135
  %v1139 = vsel %vm378, %v276, 4286644096
  %v1141 = vmax.bf16 %v1137, %v1139
  %v1143 = vsel %vm378, %v317, 4286644096
  %v1145 = vmax.bf16 %v1141, %v1143
  %v1147 = vsel %vm378, %v358, 4286644096
  %v1149 = vmax.bf16 %v1145, %v1147
  %v1151 = vsel %vm378, %v31, 4286644096
  %v1154 = vsel %vm378, %v72, 4286644096
  %v1156 = vmax.bf16 %v1151, %v1154
  %v1158 = vsel %vm378, %v113, 4286644096
  %v1160 = vmax.bf16 %v1156, %v1158
  %v1162 = vsel %vm378, %v154, 4286644096
  %v1164 = vmax.bf16 %v1160, %v1162
  %v1166 = vsel %vm378, %v195, 4286644096
  %v1168 = vmax.bf16 %v1164, %v1166
  %v1170 = vsel %vm378, %v236, 4286644096
  %v1172 = vmax.bf16 %v1168, %v1170
  %v1174 = vsel %vm378, %v277, 4286644096
  %v1176 = vmax.bf16 %v1172, %v1174
  %v1178 = vsel %vm378, %v318, 4286644096
  %v1180 = vmax.bf16 %v1176, %v1178
  %v1182 = vsel %vm378, %v359, 4286644096
  %v1184 = vmax.bf16 %v1180, %v1182
  %v1186 = vsel %vm378, %v32, 4286644096
  %v1189 = vsel %vm378, %v73, 4286644096
  %v1191 = vmax.bf16 %v1186, %v1189
  %v1193 = vsel %vm378, %v114, 4286644096
  %v1195 = vmax.bf16 %v1191, %v1193
  %v1197 = vsel %vm378, %v155, 4286644096
  %v1199 = vmax.bf16 %v1195, %v1197
  %v1201 = vsel %vm378, %v196, 4286644096
  %v1203 = vmax.bf16 %v1199, %v1201
  %v1205 = vsel %vm378, %v237, 4286644096
  %v1207 = vmax.bf16 %v1203, %v1205
  %v1209 = vsel %vm378, %v278, 4286644096
  %v1211 = vmax.bf16 %v1207, %v1209
  %v1213 = vsel %vm378, %v319, 4286644096
  %v1215 = vmax.bf16 %v1211, %v1213
  %v1217 = vsel %vm378, %v360, 4286644096
  %v1219 = vmax.bf16 %v1215, %v1217
  %v1221 = vsel %vm378, %v33, 4286644096
  %v1224 = vsel %vm378, %v74, 4286644096
  %v1226 = vmax.bf16 %v1221, %v1224
  %v1228 = vsel %vm378, %v115, 4286644096
  %v1230 = vmax.bf16 %v1226, %v1228
  %v1232 = vsel %vm378, %v156, 4286644096
  %v1234 = vmax.bf16 %v1230, %v1232
  %v1236 = vsel %vm378, %v197, 4286644096
  %v1238 = vmax.bf16 %v1234, %v1236
  %v1240 = vsel %vm378, %v238, 4286644096
  %v1242 = vmax.bf16 %v1238, %v1240
  %v1244 = vsel %vm378, %v279, 4286644096
  %v1246 = vmax.bf16 %v1242, %v1244
  %v1248 = vsel %vm378, %v320, 4286644096
  %v1250 = vmax.bf16 %v1246, %v1248
  %v1252 = vsel %vm378, %v361, 4286644096
  %v1254 = vmax.bf16 %v1250, %v1252
  %v1256 = vsel %vm378, %v34, 4286644096
  %v1259 = vsel %vm378, %v75, 4286644096
  %v1261 = vmax.bf16 %v1256, %v1259
  %v1263 = vsel %vm378, %v116, 4286644096
  %v1265 = vmax.bf16 %v1261, %v1263
  %v1267 = vsel %vm378, %v157, 4286644096
  %v1269 = vmax.bf16 %v1265, %v1267
  %v1271 = vsel %vm378, %v198, 4286644096
  %v1273 = vmax.bf16 %v1269, %v1271
  %v1275 = vsel %vm378, %v239, 4286644096
  %v1277 = vmax.bf16 %v1273, %v1275
  %v1279 = vsel %vm378, %v280, 4286644096
  %v1281 = vmax.bf16 %v1277, %v1279
  %v1283 = vsel %vm378, %v321, 4286644096
  %v1285 = vmax.bf16 %v1281, %v1283
  %v1287 = vsel %vm378, %v362, 4286644096
  %v1289 = vmax.bf16 %v1285, %v1287
  %v1291 = vsel %vm378, %v35, 4286644096
  %v1294 = vsel %vm378, %v76, 4286644096
  %v1296 = vmax.bf16 %v1291, %v1294
  %v1298 = vsel %vm378, %v117, 4286644096
  %v1300 = vmax.bf16 %v1296, %v1298
  %v1302 = vsel %vm378, %v158, 4286644096
  %v1304 = vmax.bf16 %v1300, %v1302
  %v1306 = vsel %vm378, %v199, 4286644096
  %v1308 = vmax.bf16 %v1304, %v1306
  %v1310 = vsel %vm378, %v240, 4286644096
  %v1312 = vmax.bf16 %v1308, %v1310
  %v1314 = vsel %vm378, %v281, 4286644096
  %v1316 = vmax.bf16 %v1312, %v1314
  %v1318 = vsel %vm378, %v322, 4286644096
  %v1320 = vmax.bf16 %v1316, %v1318
  %v1322 = vsel %vm378, %v363, 4286644096
  %v1324 = vmax.bf16 %v1320, %v1322
  %v1326 = vsel %vm378, %v36, 4286644096
  %v1329 = vsel %vm378, %v77, 4286644096
  %v1331 = vmax.bf16 %v1326, %v1329
  %v1333 = vsel %vm378, %v118, 4286644096
  %v1335 = vmax.bf16 %v1331, %v1333
  %v1337 = vsel %vm378, %v159, 4286644096
  %v1339 = vmax.bf16 %v1335, %v1337
  %v1341 = vsel %vm378, %v200, 4286644096
  %v1343 = vmax.bf16 %v1339, %v1341
  %v1345 = vsel %vm378, %v241, 4286644096
  %v1347 = vmax.bf16 %v1343, %v1345
  %v1349 = vsel %vm378, %v282, 4286644096
  %v1351 = vmax.bf16 %v1347, %v1349
  %v1353 = vsel %vm378, %v323, 4286644096
  %v1355 = vmax.bf16 %v1351, %v1353
  %v1357 = vsel %vm378, %v364, 4286644096
  %v1359 = vmax.bf16 %v1355, %v1357
  %v1361 = vsel %vm378, %v37, 4286644096
  %v1364 = vsel %vm378, %v78, 4286644096
  %v1366 = vmax.bf16 %v1361, %v1364
  %v1368 = vsel %vm378, %v119, 4286644096
  %v1370 = vmax.bf16 %v1366, %v1368
  %v1372 = vsel %vm378, %v160, 4286644096
  %v1374 = vmax.bf16 %v1370, %v1372
  %v1376 = vsel %vm378, %v201, 4286644096
  %v1378 = vmax.bf16 %v1374, %v1376
  %v1380 = vsel %vm378, %v242, 4286644096
  %v1382 = vmax.bf16 %v1378, %v1380
  %v1384 = vsel %vm378, %v283, 4286644096
  %v1386 = vmax.bf16 %v1382, %v1384
  %v1388 = vsel %vm378, %v324, 4286644096
  %v1390 = vmax.bf16 %v1386, %v1388
  %v1392 = vsel %vm378, %v365, 4286644096
  %v1394 = vmax.bf16 %v1390, %v1392
  %v1396 = vsel %vm378, %v38, 4286644096
  %v1399 = vsel %vm378, %v79, 4286644096
  %v1401 = vmax.bf16 %v1396, %v1399
  %v1403 = vsel %vm378, %v120, 4286644096
  %v1405 = vmax.bf16 %v1401, %v1403
  %v1407 = vsel %vm378, %v161, 4286644096
  %v1409 = vmax.bf16 %v1405, %v1407
  %v1411 = vsel %vm378, %v202, 4286644096
  %v1413 = vmax.bf16 %v1409, %v1411
  %v1415 = vsel %vm378, %v243, 4286644096
  %v1417 = vmax.bf16 %v1413, %v1415
  %v1419 = vsel %vm378, %v284, 4286644096
  %v1421 = vmax.bf16 %v1417, %v1419
  %v1423 = vsel %vm378, %v325, 4286644096
  %v1425 = vmax.bf16 %v1421, %v1423
  %v1427 = vsel %vm378, %v366, 4286644096
  %v1429 = vmax.bf16 %v1425, %v1427
  %v1431 = vsel %vm378, %v39, 4286644096
  %v1434 = vsel %vm378, %v80, 4286644096
  %v1436 = vmax.bf16 %v1431, %v1434
  %v1438 = vsel %vm378, %v121, 4286644096
  %v1440 = vmax.bf16 %v1436, %v1438
  %v1442 = vsel %vm378, %v162, 4286644096
  %v1444 = vmax.bf16 %v1440, %v1442
  %v1446 = vsel %vm378, %v203, 4286644096
  %v1448 = vmax.bf16 %v1444, %v1446
  %v1450 = vsel %vm378, %v244, 4286644096
  %v1452 = vmax.bf16 %v1448, %v1450
  %v1454 = vsel %vm378, %v285, 4286644096
  %v1456 = vmax.bf16 %v1452, %v1454
  %v1458 = vsel %vm378, %v326, 4286644096
  %v1460 = vmax.bf16 %v1456, %v1458
  %v1462 = vsel %vm378, %v367, 4286644096
  %v1464 = vmax.bf16 %v1460, %v1462
  %v1466 = vsel %vm378, %v40, 4286644096
  %v1469 = vsel %vm378, %v81, 4286644096
  %v1471 = vmax.bf16 %v1466, %v1469
  %v1473 = vsel %vm378, %v122, 4286644096
  %v1475 = vmax.bf16 %v1471, %v1473
  %v1477 = vsel %vm378, %v163, 4286644096
  %v1479 = vmax.bf16 %v1475, %v1477
  %v1481 = vsel %vm378, %v204, 4286644096
  %v1483 = vmax.bf16 %v1479, %v1481
  %v1485 = vsel %vm378, %v245, 4286644096
  %v1487 = vmax.bf16 %v1483, %v1485
  %v1489 = vsel %vm378, %v286, 4286644096
  %v1491 = vmax.bf16 %v1487, %v1489
  %v1493 = vsel %vm378, %v327, 4286644096
  %v1495 = vmax.bf16 %v1491, %v1493
  %v1497 = vsel %vm378, %v368, 4286644096
  %v1499 = vmax.bf16 %v1495, %v1497
  %v1501 = vsel %vm378, %v41, 4286644096
  %v1504 = vsel %vm378, %v82, 4286644096
  %v1506 = vmax.bf16 %v1501, %v1504
  %v1508 = vsel %vm378, %v123, 4286644096
  %v1510 = vmax.bf16 %v1506, %v1508
  %v1512 = vsel %vm378, %v164, 4286644096
  %v1514 = vmax.bf16 %v1510, %v1512
  %v1516 = vsel %vm378, %v205, 4286644096
  %v1518 = vmax.bf16 %v1514, %v1516
  %v1520 = vsel %vm378, %v246, 4286644096
  %v1522 = vmax.bf16 %v1518, %v1520
  %v1524 = vsel %vm378, %v287, 4286644096
  %v1526 = vmax.bf16 %v1522, %v1524
  %v1528 = vsel %vm378, %v328, 4286644096
  %v1530 = vmax.bf16 %v1526, %v1528
  %v1532 = vsel %vm378, %v369, 4286644096
  %v1534 = vmax.bf16 %v1530, %v1532
  %v1536 = vsel %vm378, %v42, 4286644096
  %v1539 = vsel %vm378, %v83, 4286644096
  %v1541 = vmax.bf16 %v1536, %v1539
  %v1543 = vsel %vm378, %v124, 4286644096
  %v1545 = vmax.bf16 %v1541, %v1543
  %v1547 = vsel %vm378, %v165, 4286644096
  %v1549 = vmax.bf16 %v1545, %v1547
  %v1551 = vsel %vm378, %v206, 4286644096
  %v1553 = vmax.bf16 %v1549, %v1551
  %v1555 = vsel %vm378, %v247, 4286644096
  %v1557 = vmax.bf16 %v1553, %v1555
  %v1559 = vsel %vm378, %v288, 4286644096
  %v1561 = vmax.bf16 %v1557, %v1559
  %v1563 = vsel %vm378, %v329, 4286644096
  %v1565 = vmax.bf16 %v1561, %v1563
  %v1567 = vsel %vm378, %v370, 4286644096
  %v1569 = vmax.bf16 %v1565, %v1567
  %v1571 = vsel %vm378, %v43, 4286644096
  %v1574 = vsel %vm378, %v84, 4286644096
  %v1576 = vmax.bf16 %v1571, %v1574
  %v1578 = vsel %vm378, %v125, 4286644096
  %v1580 = vmax.bf16 %v1576, %v1578
  %v1582 = vsel %vm378, %v166, 4286644096
  %v1584 = vmax.bf16 %v1580, %v1582
  %v1586 = vsel %vm378, %v207, 4286644096
  %v1588 = vmax.bf16 %v1584, %v1586
  %v1590 = vsel %vm378, %v248, 4286644096
  %v1592 = vmax.bf16 %v1588, %v1590
  %v1594 = vsel %vm378, %v289, 4286644096
  %v1596 = vmax.bf16 %v1592, %v1594
  %v1598 = vsel %vm378, %v330, 4286644096
  %v1600 = vmax.bf16 %v1596, %v1598
  %v1602 = vsel %vm378, %v371, 4286644096
  %v1604 = vmax.bf16 %v1600, %v1602
  %v1606 = vsel %vm378, %v44, 4286644096
  %v1609 = vsel %vm378, %v85, 4286644096
  %v1611 = vmax.bf16 %v1606, %v1609
  %v1613 = vsel %vm378, %v126, 4286644096
  %v1615 = vmax.bf16 %v1611, %v1613
  %v1617 = vsel %vm378, %v167, 4286644096
  %v1619 = vmax.bf16 %v1615, %v1617
  %v1621 = vsel %vm378, %v208, 4286644096
  %v1623 = vmax.bf16 %v1619, %v1621
  %v1625 = vsel %vm378, %v249, 4286644096
  %v1627 = vmax.bf16 %v1623, %v1625
  %v1629 = vsel %vm378, %v290, 4286644096
  %v1631 = vmax.bf16 %v1627, %v1629
  %v1633 = vsel %vm378, %v331, 4286644096
  %v1635 = vmax.bf16 %v1631, %v1633
  %v1637 = vsel %vm378, %v372, 4286644096
  %v1639 = vmax.bf16 %v1635, %v1637
  %v1641 = vsel %vm378, %v45, 4286644096
  %v1644 = vsel %vm378, %v86, 4286644096
  %v1646 = vmax.bf16 %v1641, %v1644
  %v1648 = vsel %vm378, %v127, 4286644096
  %v1650 = vmax.bf16 %v1646, %v1648
  %v1652 = vsel %vm378, %v168, 4286644096
  %v1654 = vmax.bf16 %v1650, %v1652
  %v1656 = vsel %vm378, %v209, 4286644096
  %v1658 = vmax.bf16 %v1654, %v1656
  %v1660 = vsel %vm378, %v250, 4286644096
  %v1662 = vmax.bf16 %v1658, %v1660
  %v1664 = vsel %vm378, %v291, 4286644096
  %v1666 = vmax.bf16 %v1662, %v1664
  %v1668 = vsel %vm378, %v332, 4286644096
  %v1670 = vmax.bf16 %v1666, %v1668
  %v1672 = vsel %vm378, %v373, 4286644096
  %v1674 = vmax.bf16 %v1670, %v1672
  %v1676 = vsel %vm378, %v46, 4286644096
  %v1679 = vsel %vm378, %v87, 4286644096
  %v1681 = vmax.bf16 %v1676, %v1679
  %v1683 = vsel %vm378, %v128, 4286644096
  %v1685 = vmax.bf16 %v1681, %v1683
  %v1687 = vsel %vm378, %v169, 4286644096
  %v1689 = vmax.bf16 %v1685, %v1687
  %v1691 = vsel %vm378, %v210, 4286644096
  %v1693 = vmax.bf16 %v1689, %v1691
  %v1695 = vsel %vm378, %v251, 4286644096
  %v1697 = vmax.bf16 %v1693, %v1695
  %v1699 = vsel %vm378, %v292, 4286644096
  %v1701 = vmax.bf16 %v1697, %v1699
  %v1703 = vsel %vm378, %v333, 4286644096
  %v1705 = vmax.bf16 %v1701, %v1703
  %v1707 = vsel %vm378, %v374, 4286644096
  %v1709 = vmax.bf16 %v1705, %v1707
  %v1711 = vsel %vm378, %v47, 4286644096
  %v1714 = vsel %vm378, %v88, 4286644096
  %v1716 = vmax.bf16 %v1711, %v1714
  %v1718 = vsel %vm378, %v129, 4286644096
  %v1720 = vmax.bf16 %v1716, %v1718
  %v1722 = vsel %vm378, %v170, 4286644096
  %v1724 = vmax.bf16 %v1720, %v1722
  %v1726 = vsel %vm378, %v211, 4286644096
  %v1728 = vmax.bf16 %v1724, %v1726
  %v1730 = vsel %vm378, %v252, 4286644096
  %v1732 = vmax.bf16 %v1728, %v1730
  %v1734 = vsel %vm378, %v293, 4286644096
  %v1736 = vmax.bf16 %v1732, %v1734
  %v1738 = vsel %vm378, %v334, 4286644096
  %v1740 = vmax.bf16 %v1736, %v1738
  %v1742 = vsel %vm378, %v375, 4286644096
  %v1744 = vmax.bf16 %v1740, %v1742
  %v1746 = vsel %vm378, %v48, 4286644096
  %v1749 = vsel %vm378, %v89, 4286644096
  %v1751 = vmax.bf16 %v1746, %v1749
  %v1753 = vsel %vm378, %v130, 4286644096
  %v1755 = vmax.bf16 %v1751, %v1753
  %v1757 = vsel %vm378, %v171, 4286644096
  %v1759 = vmax.bf16 %v1755, %v1757
  %v1761 = vsel %vm378, %v212, 4286644096
  %v1763 = vmax.bf16 %v1759, %v1761
  %v1765 = vsel %vm378, %v253, 4286644096
  %v1767 = vmax.bf16 %v1763, %v1765
  %v1769 = vsel %vm378, %v294, 4286644096
  %v1771 = vmax.bf16 %v1767, %v1769
  %v1773 = vsel %vm378, %v335, 4286644096
  %v1775 = vmax.bf16 %v1771, %v1773
  %v1777 = vsel %vm378, %v376, 4286644096
  %v1779 = vmax.bf16 %v1775, %v1777
  %vm1780 = vcmask 25600
  %v1782 = vsel %vm1780, %v49, 4286644096
  %v1785 = vsel %vm1780, %v90, 4286644096
  %v1787 = vmax.bf16 %v1782, %v1785
  %v1789 = vsel %vm1780, %v131, 4286644096
  %v1791 = vmax.bf16 %v1787, %v1789
  %v1793 = vsel %vm1780, %v172, 4286644096
  %v1795 = vmax.bf16 %v1791, %v1793
  %v1797 = vsel %vm1780, %v213, 4286644096
  %v1799 = vmax.bf16 %v1795, %v1797
  %v1801 = vsel %vm1780, %v254, 4286644096
  %v1803 = vmax.bf16 %v1799, %v1801
  %v1805 = vsel %vm1780, %v295, 4286644096
  %v1807 = vmax.bf16 %v1803, %v1805
  %v1809 = vsel %vm1780, %v336, 4286644096
  %v1811 = vmax.bf16 %v1807, %v1809
  %v1813 = vsel %vm1780, %v377, 4286644096
  %v1815 = vmax.bf16 %v1811, %v1813
  %1816 = vst.msk [vmem:[%s1] sm:$0xf] %vm378, %v414
  %1817 = vst.msk [vmem:[%s1 + $0x4] sm:$0xf] %vm378, %v449
  %1818 = vst.msk [vmem:[%s1 + $0x8] sm:$0xf] %vm378, %v484
  %1819 = vst.msk [vmem:[%s1 + $0xc] sm:$0xf] %vm378, %v519
  %1820 = vst.msk [vmem:[%s1 + $0x10] sm:$0xf] %vm378, %v554
  %1821 = vst.msk [vmem:[%s1 + $0x14] sm:$0xf] %vm378, %v589
  %1822 = vst.msk [vmem:[%s1 + $0x18] sm:$0xf] %vm378, %v624
  %1823 = vst.msk [vmem:[%s1 + $0x1c] sm:$0xf] %vm378, %v659
  %1824 = vst.msk [vmem:[%s1 + $0x20] sm:$0xf] %vm378, %v694
  %1825 = vst.msk [vmem:[%s1 + $0x24] sm:$0xf] %vm378, %v729
  %1826 = vst.msk [vmem:[%s1 + $0x28] sm:$0xf] %vm378, %v764
  %1827 = vst.msk [vmem:[%s1 + $0x2c] sm:$0xf] %vm378, %v799
  %1828 = vst.msk [vmem:[%s1 + $0x30] sm:$0xf] %vm378, %v834
  %1829 = vst.msk [vmem:[%s1 + $0x34] sm:$0xf] %vm378, %v869
  %1830 = vst.msk [vmem:[%s1 + $0x38] sm:$0xf] %vm378, %v904
  %1831 = vst.msk [vmem:[%s1 + $0x3c] sm:$0xf] %vm378, %v939
  %1832 = vst.msk [vmem:[%s1 + $0x40] sm:$0xf] %vm378, %v974
  %1833 = vst.msk [vmem:[%s1 + $0x44] sm:$0xf] %vm378, %v1009
  %1834 = vst.msk [vmem:[%s1 + $0x48] sm:$0xf] %vm378, %v1044
  %1835 = vst.msk [vmem:[%s1 + $0x4c] sm:$0xf] %vm378, %v1079
  %1836 = vst.msk [vmem:[%s1 + $0x50] sm:$0xf] %vm378, %v1114
  %1837 = vst.msk [vmem:[%s1 + $0x54] sm:$0xf] %vm378, %v1149
  %1838 = vst.msk [vmem:[%s1 + $0x58] sm:$0xf] %vm378, %v1184
  %1839 = vst.msk [vmem:[%s1 + $0x5c] sm:$0xf] %vm378, %v1219
  %1840 = vst.msk [vmem:[%s1 + $0x60] sm:$0xf] %vm378, %v1254
  %1841 = vst.msk [vmem:[%s1 + $0x64] sm:$0xf] %vm378, %v1289
  %1842 = vst.msk [vmem:[%s1 + $0x68] sm:$0xf] %vm378, %v1324
  %1843 = vst.msk [vmem:[%s1 + $0x6c] sm:$0xf] %vm378, %v1359
  %1844 = vst.msk [vmem:[%s1 + $0x70] sm:$0xf] %vm378, %v1394
  %1845 = vst.msk [vmem:[%s1 + $0x74] sm:$0xf] %vm378, %v1429
  %1846 = vst.msk [vmem:[%s1 + $0x78] sm:$0xf] %vm378, %v1464
  %1847 = vst.msk [vmem:[%s1 + $0x7c] sm:$0xf] %vm378, %v1499
  %1848 = vst.msk [vmem:[%s1 + $0x80] sm:$0xf] %vm378, %v1534
  %1849 = vst.msk [vmem:[%s1 + $0x84] sm:$0xf] %vm378, %v1569
  %1850 = vst.msk [vmem:[%s1 + $0x88] sm:$0xf] %vm378, %v1604
  %1851 = vst.msk [vmem:[%s1 + $0x8c] sm:$0xf] %vm378, %v1639
  %1852 = vst.msk [vmem:[%s1 + $0x90] sm:$0xf] %vm378, %v1674
  %1853 = vst.msk [vmem:[%s1 + $0x94] sm:$0xf] %vm378, %v1709
  %1854 = vst.msk [vmem:[%s1 + $0x98] sm:$0xf] %vm378, %v1744
  %1855 = vst.msk [vmem:[%s1 + $0x9c] sm:$0xf] %vm378, %v1779
  %1856 = vst.msk [vmem:[%s1 + $0xa0] sm:$0x3] %vm1780, %v1815
  // Predicated region
  $region6: #{forward.79} parent=0 // pred_check
    _
  $region7: #{forward.79} parent=0 // pred_check_branch
    %1858 = sbr.rel (0) target = $region9
  $region8: #{forward.79} parent=0 // pred_region
    _
  $region9: #{forward.79} parent=0 // pred_fallthru
    _
  // Predicated region
  $region10: #{forward.79} parent=0 // pred_check
    _
  $region11: #{forward.79} parent=0 // pred_check_branch
    %1860 = sbr.rel (0) target = $region13
  $region12: #{forward.79} parent=0 // pred_region
    _
  $region13: #{forward.79} parent=0 // pred_fallthru
    _

// kernel: forward.81
$region0: #{forward.81}
  #allocation0 [shape = 'u32[]', space=smem, size = 0x4, offset = 0x4, fixed_abs, tag = 'smem constant byte address 0x4 - core index']
  #allocation1 [shape = 'u32[144,128]{1,0:T(1,128)}', space=vmem, size = 0x12000, scoped, tag = 'internal scratch']
  %s0 = inlined_call_operand.vmem [shape: bf16[256,96], index: 0, kind: input, shape index: {}]
  %s1 = inlined_call_operand.vmem [shape: bf16[96,128], index: 1, kind: input, shape index: {}]
  %s2 = inlined_call_operand.vmem [shape: f32[1,128], index: 2, kind: input, shape index: {}]
  %s3 = inlined_call_operand.vmem [shape: bf16[256,128], index: 3, kind: output, shape index: {}]
  %s4 = sld [smem:[#allocation0]]
  $region22: #{forward.81} parent=0
    _
  %s6 = ssub.s32 1, %s4
  %s7 = scalar_select 0, %s6, %s4
  // Predicated region
  $region2: #{forward.81} parent=0 // pred_check
    _
  $region3: #{forward.81} parent=0 // pred_check_branch
    %9 = sbr.rel (0) target = $region5
  $region4: #{forward.81} parent=0 // pred_region
    _
  $region5: #{forward.81} parent=0 // pred_fallthru
    _
  // Predicated region
  $region6: #{forward.81} parent=0 // pred_check
    _
  $region7: #{forward.81} parent=0 // pred_check_branch
    %11 = sbr.rel (0) target = $region9
  $region8: #{forward.81} parent=0 // pred_region
    _
  $region9: #{forward.81} parent=0 // pred_fallthru
    _
  // Predicated region
  $region10: #{forward.81} parent=0 // pred_check
    _
  $region11: #{forward.81} parent=0 // pred_check_branch
    %13 = sbr.rel (0) target = $region13
  $region12: #{forward.81} parent=0 // pred_region
    _
  $region13: #{forward.81} parent=0 // pred_fallthru
    _
  %v15 = vld [vmem:[%s0] sm:$0xf]
  %v16 = vld [vmem:[%s0 + $0x4] sm:$0xf]
  %v17 = vld [vmem:[%s0 + $0x8] sm:$0xf]
  %v18 = vld [vmem:[%s0 + $0xc] sm:$0xf]
  %v19 = vld [vmem:[%s0 + $0x10] sm:$0xf]
  %v20 = vld [vmem:[%s0 + $0x14] sm:$0xf]
  %v21 = vld [vmem:[%s0 + $0x18] sm:$0xf]
  %v22 = vld [vmem:[%s0 + $0x1c] sm:$0xf]
  %v23 = vld [vmem:[%s0 + $0x20] sm:$0xf]
  %v24 = vld [vmem:[%s0 + $0x24] sm:$0xf]
  %v25 = vld [vmem:[%s0 + $0x28] sm:$0xf]
  %v26 = vld [vmem:[%s0 + $0x2c] sm:$0xf]
  %v27 = vld [vmem:[%s0 + $0x30] sm:$0xf]
  %v28 = vld [vmem:[%s0 + $0x34] sm:$0xf]
  %v29 = vld [vmem:[%s0 + $0x38] sm:$0xf]
  %v30 = vld [vmem:[%s0 + $0x3c] sm:$0xf]
  %v31 = vld [vmem:[%s0 + $0x40] sm:$0xf]
  %v32 = vld [vmem:[%s0 + $0x44] sm:$0xf]
  %v33 = vld [vmem:[%s0 + $0x48] sm:$0xf]
  %v34 = vld [vmem:[%s0 + $0x4c] sm:$0xf]
  %v35 = vld [vmem:[%s0 + $0x50] sm:$0xf]
  %v36 = vld [vmem:[%s0 + $0x54] sm:$0xf]
  %v37 = vld [vmem:[%s0 + $0x58] sm:$0xf]
  %v38 = vld [vmem:[%s0 + $0x5c] sm:$0xf]
  %v39 = vld [vmem:[%s0 + $0x60] sm:$0xf]
  %v40 = vld [vmem:[%s0 + $0x64] sm:$0xf]
  %v41 = vld [vmem:[%s0 + $0x68] sm:$0xf]
  %v42 = vld [vmem:[%s0 + $0x6c] sm:$0xf]
  %v43 = vld [vmem:[%s0 + $0x70] sm:$0xf]
  %v44 = vld [vmem:[%s0 + $0x74] sm:$0xf]
  %v45 = vld [vmem:[%s0 + $0x78] sm:$0xf]
  %v46 = vld [vmem:[%s0 + $0x7c] sm:$0xf]
  %v47 = vld [vmem:[%s1] sm:$0xf]
  %v48 = vld [vmem:[%s1 + $0x4] sm:$0xf]
  %v49 = vld [vmem:[%s1 + $0x8] sm:$0xf]
  %v50 = vld [vmem:[%s1 + $0xc] sm:$0xf]
  %v51 = vld [vmem:[%s1 + $0x10] sm:$0xf]
  %v52 = vld [vmem:[%s1 + $0x14] sm:$0xf]
  %v53 = vld [vmem:[%s1 + $0x18] sm:$0xf]
  %v54 = vld [vmem:[%s1 + $0x1c] sm:$0xf]
  %v55 = vld [vmem:[%s1 + $0x20] sm:$0xf]
  %v56 = vld [vmem:[%s1 + $0x24] sm:$0xf]
  %v57 = vld [vmem:[%s1 + $0x28] sm:$0xf]
  %v58 = vld [vmem:[%s1 + $0x2c] sm:$0xf]
  %v59 = vld [vmem:[%s2] sm:$0x1]
  %v61 = vlaneseq
  %v62 = vshrl.u32 %v61, 7
  %v63 = vsub.s32 0, %v62
  %v64 = vrot.slane %v59, %v63
  %v98 = vunpack.c.l.b16 %v15
  %v99 = vunpack.c.l.b16 %v16
  %v100 = vunpack.c.l.b16 %v17
  %v101 = vunpack.c.l.b16 %v18
  %v102 = vunpack.c.l.b16 %v19
  %v103 = vunpack.c.l.b16 %v20
  %v104 = vunpack.c.l.b16 %v21
  %v105 = vunpack.c.l.b16 %v22
  %v106 = vunpack.c.l.b16 %v23
  %v107 = vunpack.c.l.b16 %v24
  %v108 = vunpack.c.l.b16 %v25
  %v109 = vunpack.c.l.b16 %v26
  %v110 = vunpack.c.l.b16 %v27
  %v111 = vunpack.c.l.b16 %v28
  %v112 = vunpack.c.l.b16 %v29
  %v113 = vunpack.c.l.b16 %v30
  %v114 = vunpack.c.l.b16 %v31
  %v115 = vunpack.c.l.b16 %v32
  %v116 = vunpack.c.l.b16 %v33
  %v117 = vunpack.c.l.b16 %v34
  %v118 = vunpack.c.l.b16 %v35
  %v119 = vunpack.c.l.b16 %v36
  %v120 = vunpack.c.l.b16 %v37
  %v121 = vunpack.c.l.b16 %v38
  %v122 = vunpack.c.l.b16 %v39
  %v123 = vunpack.c.l.b16 %v40
  %v124 = vunpack.c.l.b16 %v41
  %v125 = vunpack.c.l.b16 %v42
  %v126 = vunpack.c.l.b16 %v43
  %v127 = vunpack.c.l.b16 %v44
  %v128 = vunpack.c.l.b16 %v45
  %v129 = vunpack.c.l.b16 %v46
  %v130 = vpack.c.b16 %v99, %v98
  %v131 = vpack.c.b16 %v101, %v100
  %v132 = vpack.c.b16 %v103, %v102
  %v133 = vpack.c.b16 %v105, %v104
  %v134 = vpack.c.b16 %v107, %v106
  %v135 = vpack.c.b16 %v109, %v108
  %v136 = vpack.c.b16 %v111, %v110
  %v137 = vpack.c.b16 %v113, %v112
  %v138 = vpack.c.b16 %v115, %v114
  %v139 = vpack.c.b16 %v117, %v116
  %v140 = vpack.c.b16 %v119, %v118
  %v141 = vpack.c.b16 %v121, %v120
  %v142 = vpack.c.b16 %v123, %v122
  %v143 = vpack.c.b16 %v125, %v124
  %v144 = vpack.c.b16 %v127, %v126
  %v145 = vpack.c.b16 %v129, %v128
  %v158 = vunpack.c.l.b16 %v47
  %v159 = vunpack.c.l.b16 %v48
  %v160 = vunpack.c.l.b16 %v49
  %v161 = vunpack.c.l.b16 %v50
  %v162 = vunpack.c.l.b16 %v51
  %v163 = vunpack.c.l.b16 %v52
  %v164 = vunpack.c.l.b16 %v53
  %v165 = vunpack.c.l.b16 %v54
  %v166 = vunpack.c.l.b16 %v55
  %v167 = vunpack.c.l.b16 %v56
  %v168 = vunpack.c.l.b16 %v57
  %v169 = vunpack.c.l.b16 %v58
  %v170 = vpack.c.b16 %v159, %v158
  %v171 = vpack.c.b16 %v161, %v160
  %v172 = vpack.c.b16 %v163, %v162
  %v173 = vpack.c.b16 %v165, %v164
  %v174 = vpack.c.b16 %v167, %v166
  %v175 = vpack.c.b16 %v169, %v168
  %vm182 = vcmask 785408
  %v184 = vsel %vm182, %v130, 0
  %v187 = vsel %vm182, %v131, 0
  %v190 = vsel %vm182, %v132, 0
  %v193 = vsel %vm182, %v133, 0
  %v196 = vsel %vm182, %v134, 0
  %v199 = vsel %vm182, %v135, 0
  %v202 = vsel %vm182, %v136, 0
  %v205 = vsel %vm182, %v137, 0
  %v208 = vsel %vm182, %v138, 0
  %v211 = vsel %vm182, %v139, 0
  %v214 = vsel %vm182, %v140, 0
  %v217 = vsel %vm182, %v141, 0
  %v220 = vsel %vm182, %v142, 0
  %v223 = vsel %vm182, %v143, 0
  %v226 = vsel %vm182, %v144, 0
  %v229 = vsel %vm182, %v145, 0
  %231 = vmatprep.subr.bf16.mxu0 0
  %232 = vmatpush1.bf16.msra.mxu0 %v170
  %233 = vmatprep.subr.bf16.mxu0 0
  %234 = vmatpush1.bf16.msra.mxu0 %v171
  %235 = vmatprep.subr.bf16.mxu0 0
  %236 = vmatpush1.bf16.msra.mxu0 %v172
  %237 = vmatprep.subr.bf16.mxu0 0
  %238 = vmatpush1.bf16.msra.mxu0 %v173
  %239 = vmatprep.subr.bf16.mxu0 0
  %240 = vmatpush1.bf16.msra.mxu0 %v174
  %241 = vmatprep.subr.bf16.mxu0 0
  %242 = vmatpush1.bf16.msra.mxu0 %v175
  %243 = vmatprep.subr.bf16.mxu0 0
  %244 = vmatpush1.bf16.msra.mxu0 0
  %245 = vmatprep.subr.bf16.mxu0 0
  %246 = vmatpush1.bf16.msra.mxu0 0
  %247 = vmatprep.subr.bf16.mxu0 0
  %248 = vmatpush1.bf16.msra.mxu0 0
  %249 = vmatprep.subr.bf16.mxu0 0
  %250 = vmatpush1.bf16.msra.mxu0 0
  %251 = vmatprep.subr.bf16.mxu0 0
  %252 = vmatpush1.bf16.msra.mxu0 0
  %253 = vmatprep.subr.bf16.mxu0 0
  %254 = vmatpush1.bf16.msra.mxu0 0
  %255 = vmatprep.subr.bf16.mxu0 0
  %256 = vmatpush1.bf16.msra.mxu0 0
  %257 = vmatprep.subr.bf16.mxu0 0
  %258 = vmatpush1.bf16.msra.mxu0 0
  %259 = vmatprep.subr.bf16.mxu0 0
  %260 = vmatpush1.bf16.msra.mxu0 0
  %261 = vmatprep.subr.bf16.mxu0 0
  %262 = vmatpush1.bf16.msra.mxu0 0
  %263 = vmatprep.mubr.bf16.mxu0 0
  %264 = vmatmul.mubr.bf16.gmra.mrb[0].mxu0 %v184
  %v265 = vpop.f32.mrb[0].mxu0
  %v266 = vadd.f32 %v64, %v265
  %v267 = vpop.f32.mrb[0].mxu0
  %v268 = vpop.f32.mrb[0].mxu0
  %v269 = vadd.f32 %v64, %v268
  %v270 = vpop.f32.mrb[0].mxu0
  %271 = vmatprep.mubr.bf16.mxu0 0
  %272 = vmatmul.mubr.bf16.gmra.mrb[0].mxu0 %v187
  %v273 = vpop.f32.mrb[0].mxu0
  %v274 = vadd.f32 %v64, %v273
  %v275 = vpop.f32.mrb[0].mxu0
  %v276 = vpop.f32.mrb[0].mxu0
  %v277 = vadd.f32 %v64, %v276
  %v278 = vpop.f32.mrb[0].mxu0
  %279 = vmatprep.mubr.bf16.mxu0 0
  %280 = vmatmul.mubr.bf16.gmra.mrb[0].mxu0 %v190
  %v281 = vpop.f32.mrb[0].mxu0
  %v282 = vadd.f32 %v64, %v281
  %v283 = vpop.f32.mrb[0].mxu0
  %v284 = vpop.f32.mrb[0].mxu0
  %v285 = vadd.f32 %v64, %v284
  %v286 = vpop.f32.mrb[0].mxu0
  %287 = vmatprep.mubr.bf16.mxu0 0
  %288 = vmatmul.mubr.bf16.gmra.mrb[0].mxu0 %v193
  %v289 = vpop.f32.mrb[0].mxu0
  %v290 = vadd.f32 %v64, %v289
  %v291 = vpop.f32.mrb[0].mxu0
  %v292 = vpop.f32.mrb[0].mxu0
  %v293 = vadd.f32 %v64, %v292
  %v294 = vpop.f32.mrb[0].mxu0
  %295 = vmatprep.mubr.bf16.mxu0 0
  %296 = vmatmul.mubr.bf16.gmra.mrb[0].mxu0 %v196
  %v297 = vpop.f32.mrb[0].mxu0
  %v298 = vadd.f32 %v64, %v297
  %v299 = vpop.f32.mrb[0].mxu0
  %v300 = vpop.f32.mrb[0].mxu0
  %v301 = vadd.f32 %v64, %v300
  %v302 = vpop.f32.mrb[0].mxu0
  %303 = vmatprep.mubr.bf16.mxu0 0
  %304 = vmatmul.mubr.bf16.gmra.mrb[0].mxu0 %v199
  %v305 = vpop.f32.mrb[0].mxu0
  %v306 = vadd.f32 %v64, %v305
  %v307 = vpop.f32.mrb[0].mxu0
  %v308 = vpop.f32.mrb[0].mxu0
  %v309 = vadd.f32 %v64, %v308
  %v310 = vpop.f32.mrb[0].mxu0
  %311 = vmatprep.mubr.bf16.mxu0 0
  %312 = vmatmul.mubr.bf16.gmra.mrb[0].mxu0 %v202
  %v313 = vpop.f32.mrb[0].mxu0
  %v314 = vadd.f32 %v64, %v313
  %v315 = vpop.f32.mrb[0].mxu0
  %v316 = vpop.f32.mrb[0].mxu0
  %v317 = vadd.f32 %v64, %v316
  %v318 = vpop.f32.mrb[0].mxu0
  %319 = vmatprep.mubr.bf16.mxu0 0
  %320 = vmatmul.mubr.bf16.gmra.mrb[0].mxu0 %v205
  %v321 = vpop.f32.mrb[0].mxu0
  %v322 = vadd.f32 %v64, %v321
  %v323 = vpop.f32.mrb[0].mxu0
  %v324 = vpop.f32.mrb[0].mxu0
  %v325 = vadd.f32 %v64, %v324
  %v326 = vpop.f32.mrb[0].mxu0
  %327 = vmatprep.mubr.bf16.mxu0 0
  %328 = vmatmul.mubr.bf16.gmra.mrb[0].mxu0 %v208
  %v329 = vpop.f32.mrb[0].mxu0
  %v330 = vadd.f32 %v64, %v329
  %v331 = vpop.f32.mrb[0].mxu0
  %v332 = vpop.f32.mrb[0].mxu0
  %v333 = vadd.f32 %v64, %v332
  %v334 = vpop.f32.mrb[0].mxu0
  %335 = vmatprep.mubr.bf16.mxu0 0
  %336 = vmatmul.mubr.bf16.gmra.mrb[0].mxu0 %v211
  %v337 = vpop.f32.mrb[0].mxu0
  %v338 = vadd.f32 %v64, %v337
  %v339 = vpop.f32.mrb[0].mxu0
  %v340 = vpop.f32.mrb[0].mxu0
  %v341 = vadd.f32 %v64, %v340
  %v342 = vpop.f32.mrb[0].mxu0
  %343 = vmatprep.mubr.bf16.mxu0 0
  %344 = vmatmul.mubr.bf16.gmra.mrb[0].mxu0 %v214
  %v345 = vpop.f32.mrb[0].mxu0
  %v346 = vadd.f32 %v64, %v345
  %v347 = vpop.f32.mrb[0].mxu0
  %v348 = vpop.f32.mrb[0].mxu0
  %v349 = vadd.f32 %v64, %v348
  %v350 = vpop.f32.mrb[0].mxu0
  %351 = vmatprep.mubr.bf16.mxu0 0
  %352 = vmatmul.mubr.bf16.gmra.mrb[0].mxu0 %v217
  %v353 = vpop.f32.mrb[0].mxu0
  %v354 = vadd.f32 %v64, %v353
  %v355 = vpop.f32.mrb[0].mxu0
  %v356 = vpop.f32.mrb[0].mxu0
  %v357 = vadd.f32 %v64, %v356
  %v358 = vpop.f32.mrb[0].mxu0
  %359 = vmatprep.mubr.bf16.mxu0 0
  %360 = vmatmul.mubr.bf16.gmra.mrb[0].mxu0 %v220
  %v361 = vpop.f32.mrb[0].mxu0
  %v362 = vadd.f32 %v64, %v361
  %v363 = vpop.f32.mrb[0].mxu0
  %v364 = vpop.f32.mrb[0].mxu0
  %v365 = vadd.f32 %v64, %v364
  %v366 = vpop.f32.mrb[0].mxu0
  %367 = vmatprep.mubr.bf16.mxu0 0
  %368 = vmatmul.mubr.bf16.gmra.mrb[0].mxu0 %v223
  %v369 = vpop.f32.mrb[0].mxu0
  %v370 = vadd.f32 %v64, %v369
  %v371 = vpop.f32.mrb[0].mxu0
  %v372 = vpop.f32.mrb[0].mxu0
  %v373 = vadd.f32 %v64, %v372
  %v374 = vpop.f32.mrb[0].mxu0
  %375 = vmatprep.mubr.bf16.mxu0 0
  %376 = vmatmul.mubr.bf16.gmra.mrb[0].mxu0 %v226
  %v377 = vpop.f32.mrb[0].mxu0
  %v378 = vadd.f32 %v64, %v377
  %v379 = vpop.f32.mrb[0].mxu0
  %v380 = vpop.f32.mrb[0].mxu0
  %v381 = vadd.f32 %v64, %v380
  %v382 = vpop.f32.mrb[0].mxu0
  %383 = vmatprep.mubr.bf16.mxu0 0
  %384 = vmatmul.mubr.bf16.gmra.mrb[0].mxu0 %v229
  %v385 = vpop.f32.mrb[0].mxu0
  %v386 = vadd.f32 %v64, %v385
  %v387 = vpop.f32.mrb[0].mxu0
  %v388 = vpop.f32.mrb[0].mxu0
  %v389 = vadd.f32 %v64, %v388
  %v390 = vpop.f32.mrb[0].mxu0
  %391 = vdwg.mxu0
  %v392 = vmax.f32 %v266, 0.0
  %v393 = vmax.f32 %v269, 0.0
  %v394 = vmax.f32 %v274, 0.0
  %v395 = vmax.f32 %v277, 0.0
  %v396 = vmax.f32 %v282, 0.0
  %v397 = vmax.f32 %v285, 0.0
  %v398 = vmax.f32 %v290, 0.0
  %v399 = vmax.f32 %v293, 0.0
  %v400 = vmax.f32 %v298, 0.0
  %v401 = vmax.f32 %v301, 0.0
  %v402 = vmax.f32 %v306, 0.0
  %v403 = vmax.f32 %v309, 0.0
  %v404 = vmax.f32 %v314, 0.0
  %v405 = vmax.f32 %v317, 0.0
  %v406 = vmax.f32 %v322, 0.0
  %v407 = vmax.f32 %v325, 0.0
  %v408 = vmax.f32 %v330, 0.0
  %v409 = vmax.f32 %v333, 0.0
  %v410 = vmax.f32 %v338, 0.0
  %v411 = vmax.f32 %v341, 0.0
  %v412 = vmax.f32 %v346, 0.0
  %v413 = vmax.f32 %v349, 0.0
  %v414 = vmax.f32 %v354, 0.0
  %v415 = vmax.f32 %v357, 0.0
  %v416 = vmax.f32 %v362, 0.0
  %v417 = vmax.f32 %v365, 0.0
  %v418 = vmax.f32 %v370, 0.0
  %v419 = vmax.f32 %v373, 0.0
  %v420 = vmax.f32 %v378, 0.0
  %v421 = vmax.f32 %v381, 0.0
  %v422 = vmax.f32 %v386, 0.0
  %v423 = vmax.f32 %v389, 0.0
  %v424 = vpack.c.bf16 %v393, %v392
  %v425 = vpack.c.bf16 %v395, %v394
  %v426 = vpack.c.bf16 %v397, %v396
  %v427 = vpack.c.bf16 %v399, %v398
  %v428 = vpack.c.bf16 %v401, %v400
  %v429 = vpack.c.bf16 %v403, %v402
  %v430 = vpack.c.bf16 %v405, %v404
  %v431 = vpack.c.bf16 %v407, %v406
  %v432 = vpack.c.bf16 %v409, %v408
  %v433 = vpack.c.bf16 %v411, %v410
  %v434 = vpack.c.bf16 %v413, %v412
  %v435 = vpack.c.bf16 %v415, %v414
  %v436 = vpack.c.bf16 %v417, %v416
  %v437 = vpack.c.bf16 %v419, %v418
  %v438 = vpack.c.bf16 %v421, %v420
  %v439 = vpack.c.bf16 %v423, %v422
  %v456 = vunpack.c.l.b16 %v424
  %v457 = vunpack.c.h.b16 %v424
  %v458 = vunpack.c.l.b16 %v425
  %v459 = vunpack.c.h.b16 %v425
  %v460 = vunpack.c.l.b16 %v426
  %v461 = vunpack.c.h.b16 %v426
  %v462 = vunpack.c.l.b16 %v427
  %v463 = vunpack.c.h.b16 %v427
  %v464 = vunpack.c.l.b16 %v428
  %v465 = vunpack.c.h.b16 %v428
  %v466 = vunpack.c.l.b16 %v429
  %v467 = vunpack.c.h.b16 %v429
  %v468 = vunpack.c.l.b16 %v430
  %v469 = vunpack.c.h.b16 %v430
  %v470 = vunpack.c.l.b16 %v431
  %v471 = vunpack.c.h.b16 %v431
  %v472 = vunpack.c.l.b16 %v432
  %v473 = vunpack.c.h.b16 %v432
  %v474 = vunpack.c.l.b16 %v433
  %v475 = vunpack.c.h.b16 %v433
  %v476 = vunpack.c.l.b16 %v434
  %v477 = vunpack.c.h.b16 %v434
  %v478 = vunpack.c.l.b16 %v435
  %v479 = vunpack.c.h.b16 %v435
  %v480 = vunpack.c.l.b16 %v436
  %v481 = vunpack.c.h.b16 %v436
  %v482 = vunpack.c.l.b16 %v437
  %v483 = vunpack.c.h.b16 %v437
  %v484 = vunpack.c.l.b16 %v438
  %v485 = vunpack.c.h.b16 %v438
  %v486 = vunpack.c.l.b16 %v439
  %v487 = vunpack.c.h.b16 %v439
  %v488 = vpack.c.b16 %v456, %v456
  %v489 = vpack.c.b16 %v457, %v457
  %v490 = vpack.c.b16 %v458, %v458
  %v491 = vpack.c.b16 %v459, %v459
  %v492 = vpack.c.b16 %v460, %v460
  %v493 = vpack.c.b16 %v461, %v461
  %v494 = vpack.c.b16 %v462, %v462
  %v495 = vpack.c.b16 %v463, %v463
  %v496 = vpack.c.b16 %v464, %v464
  %v497 = vpack.c.b16 %v465, %v465
  %v498 = vpack.c.b16 %v466, %v466
  %v499 = vpack.c.b16 %v467, %v467
  %v500 = vpack.c.b16 %v468, %v468
  %v501 = vpack.c.b16 %v469, %v469
  %v502 = vpack.c.b16 %v470, %v470
  %v503 = vpack.c.b16 %v471, %v471
  %v504 = vpack.c.b16 %v472, %v472
  %v505 = vpack.c.b16 %v473, %v473
  %v506 = vpack.c.b16 %v474, %v474
  %v507 = vpack.c.b16 %v475, %v475
  %v508 = vpack.c.b16 %v476, %v476
  %v509 = vpack.c.b16 %v477, %v477
  %v510 = vpack.c.b16 %v478, %v478
  %v511 = vpack.c.b16 %v479, %v479
  %v512 = vpack.c.b16 %v480, %v480
  %v513 = vpack.c.b16 %v481, %v481
  %v514 = vpack.c.b16 %v482, %v482
  %v515 = vpack.c.b16 %v483, %v483
  %v516 = vpack.c.b16 %v484, %v484
  %v517 = vpack.c.b16 %v485, %v485
  %v518 = vpack.c.b16 %v486, %v486
  %v519 = vpack.c.b16 %v487, %v487
  %552 = vst [vmem:[%s3] sm:$0xf] %v488
  %553 = vst [vmem:[%s3 + $0x4] sm:$0xf] %v489
  %554 = vst [vmem:[%s3 + $0x8] sm:$0xf] %v490
  %555 = vst [vmem:[%s3 + $0xc] sm:$0xf] %v491
  %556 = vst [vmem:[%s3 + $0x10] sm:$0xf] %v492
  %557 = vst [vmem:[%s3 + $0x14] sm:$0xf] %v493
  %558 = vst [vmem:[%s3 + $0x18] sm:$0xf] %v494
  %559 = vst [vmem:[%s3 + $0x1c] sm:$0xf] %v495
  %560 = vst [vmem:[%s3 + $0x20] sm:$0xf] %v496
  %561 = vst [vmem:[%s3 + $0x24] sm:$0xf] %v497
  %562 = vst [vmem:[%s3 + $0x28] sm:$0xf] %v498
  %563 = vst [vmem:[%s3 + $0x2c] sm:$0xf] %v499
  %564 = vst [vmem:[%s3 + $0x30] sm:$0xf] %v500
  %565 = vst [vmem:[%s3 + $0x34] sm:$0xf] %v501
  %566 = vst [vmem:[%s3 + $0x38] sm:$0xf] %v502
  %567 = vst [vmem:[%s3 + $0x3c] sm:$0xf] %v503
  %568 = vst [vmem:[%s3 + $0x40] sm:$0xf] %v504
  %569 = vst [vmem:[%s3 + $0x44] sm:$0xf] %v505
  %570 = vst [vmem:[%s3 + $0x48] sm:$0xf] %v506
  %571 = vst [vmem:[%s3 + $0x4c] sm:$0xf] %v507
  %572 = vst [vmem:[%s3 + $0x50] sm:$0xf] %v508
  %573 = vst [vmem:[%s3 + $0x54] sm:$0xf] %v509
  %574 = vst [vmem:[%s3 + $0x58] sm:$0xf] %v510
  %575 = vst [vmem:[%s3 + $0x5c] sm:$0xf] %v511
  %576 = vst [vmem:[%s3 + $0x60] sm:$0xf] %v512
  %577 = vst [vmem:[%s3 + $0x64] sm:$0xf] %v513
  %578 = vst [vmem:[%s3 + $0x68] sm:$0xf] %v514
  %579 = vst [vmem:[%s3 + $0x6c] sm:$0xf] %v515
  %580 = vst [vmem:[%s3 + $0x70] sm:$0xf] %v516
  %581 = vst [vmem:[%s3 + $0x74] sm:$0xf] %v517
  %582 = vst [vmem:[%s3 + $0x78] sm:$0xf] %v518
  %583 = vst [vmem:[%s3 + $0x7c] sm:$0xf] %v519
  // Predicated region
  $region14: #{forward.81} parent=0 // pred_check
    _
  $region15: #{forward.81} parent=0 // pred_check_branch
    %585 = sbr.rel (0) target = $region17
  $region16: #{forward.81} parent=0 // pred_region
    _
  $region17: #{forward.81} parent=0 // pred_fallthru
    _
  // Predicated region
  $region18: #{forward.81} parent=0 // pred_check
    _
  $region19: #{forward.81} parent=0 // pred_check_branch
    %587 = sbr.rel (0) target = $region21
  $region20: #{forward.81} parent=0 // pred_region
    _
  $region21: #{forward.81} parent=0 // pred_fallthru
    _

// kernel: forward.83
$region0: #{forward.83}
  #allocation0 [shape = 'u32[]', space=smem, size = 0x4, offset = 0x4, fixed_abs, tag = 'smem constant byte address 0x4 - core index']
  #allocation1 [shape = 'u32[144,128]{1,0:T(1,128)}', space=vmem, size = 0x12000, scoped, tag = 'internal scratch']
  %s0 = inlined_call_operand.vmem [shape: bf16[56,32], index: 0, kind: input, shape index: {}]
  %s1 = inlined_call_operand.vmem [shape: bf16[32,128], index: 1, kind: input, shape index: {}]
  %s2 = inlined_call_operand.vmem [shape: f32[1,128], index: 2, kind: input, shape index: {}]
  %s3 = inlined_call_operand.vmem [shape: bf16[56,128], index: 3, kind: output, shape index: {}]
  %s4 = sld [smem:[#allocation0]]
  $region22: #{forward.83} parent=0
    _
  %s6 = ssub.s32 1, %s4
  %s7 = scalar_select 0, %s6, %s4
  // Predicated region
  $region2: #{forward.83} parent=0 // pred_check
    _
  $region3: #{forward.83} parent=0 // pred_check_branch
    %9 = sbr.rel (0) target = $region5
  $region4: #{forward.83} parent=0 // pred_region
    _
  $region5: #{forward.83} parent=0 // pred_fallthru
    _
  // Predicated region
  $region6: #{forward.83} parent=0 // pred_check
    _
  $region7: #{forward.83} parent=0 // pred_check_branch
    %11 = sbr.rel (0) target = $region9
  $region8: #{forward.83} parent=0 // pred_region
    _
  $region9: #{forward.83} parent=0 // pred_fallthru
    _
  // Predicated region
  $region10: #{forward.83} parent=0 // pred_check
    _
  $region11: #{forward.83} parent=0 // pred_check_branch
    %13 = sbr.rel (0) target = $region13
  $region12: #{forward.83} parent=0 // pred_region
    _
  $region13: #{forward.83} parent=0 // pred_fallthru
    _
  %v15 = vld [vmem:[%s0] sm:$0xf]
  %v16 = vld [vmem:[%s0 + $0x4] sm:$0xf]
  %v17 = vld [vmem:[%s0 + $0x8] sm:$0xf]
  %v18 = vld [vmem:[%s0 + $0xc] sm:$0xf]
  %v19 = vld [vmem:[%s0 + $0x10] sm:$0xf]
  %v20 = vld [vmem:[%s0 + $0x14] sm:$0xf]
  %v21 = vld [vmem:[%s0 + $0x18] sm:$0xf]
  %v22 = vld [vmem:[%s1] sm:$0xf]
  %v23 = vld [vmem:[%s1 + $0x4] sm:$0xf]
  %v24 = vld [vmem:[%s1 + $0x8] sm:$0xf]
  %v25 = vld [vmem:[%s1 + $0xc] sm:$0xf]
  %v26 = vld [vmem:[%s2] sm:$0x1]
  %v28 = vlaneseq
  %v29 = vshrl.u32 %v28, 7
  %v30 = vsub.s32 0, %v29
  %v31 = vrot.slane %v26, %v30
  %v40 = vunpack.c.l.b16 %v15
  %v41 = vunpack.c.l.b16 %v16
  %v42 = vunpack.c.l.b16 %v17
  %v43 = vunpack.c.l.b16 %v18
  %v44 = vunpack.c.l.b16 %v19
  %v45 = vunpack.c.l.b16 %v20
  %v46 = vunpack.c.l.b16 %v21
  %v47 = vpack.c.b16 %v41, %v40
  %v48 = vpack.c.b16 %v43, %v42
  %v49 = vpack.c.b16 %v45, %v44
  %v50 = vpack.c.b16 %v46, %v46
  %v55 = vunpack.c.l.b16 %v22
  %v56 = vunpack.c.l.b16 %v23
  %v57 = vunpack.c.l.b16 %v24
  %v58 = vunpack.c.l.b16 %v25
  %v59 = vpack.c.b16 %v56, %v55
  %v60 = vpack.c.b16 %v58, %v57
  %vm63 = vcmask 261120
  %v65 = vsel %vm63, %v47, 0
  %v68 = vsel %vm63, %v48, 0
  %v71 = vsel %vm63, %v49, 0
  %v74 = vsel %vm63, %v50, 0
  %76 = vmatprep.subr.bf16.mxu0 0
  %77 = vmatpush1.bf16.msra.mxu0 %v59
  %78 = vmatprep.subr.bf16.mxu0 0
  %79 = vmatpush1.bf16.msra.mxu0 %v60
  %80 = vmatprep.subr.bf16.mxu0 0
  %81 = vmatpush1.bf16.msra.mxu0 0
  %82 = vmatprep.subr.bf16.mxu0 0
  %83 = vmatpush1.bf16.msra.mxu0 0
  %84 = vmatprep.subr.bf16.mxu0 0
  %85 = vmatpush1.bf16.msra.mxu0 0
  %86 = vmatprep.subr.bf16.mxu0 0
  %87 = vmatpush1.bf16.msra.mxu0 0
  %88 = vmatprep.subr.bf16.mxu0 0
  %89 = vmatpush1.bf16.msra.mxu0 0
  %90 = vmatprep.subr.bf16.mxu0 0
  %91 = vmatpush1.bf16.msra.mxu0 0
  %92 = vmatprep.subr.bf16.mxu0 0
  %93 = vmatpush1.bf16.msra.mxu0 0
  %94 = vmatprep.subr.bf16.mxu0 0
  %95 = vmatpush1.bf16.msra.mxu0 0
  %96 = vmatprep.subr.bf16.mxu0 0
  %97 = vmatpush1.bf16.msra.mxu0 0
  %98 = vmatprep.subr.bf16.mxu0 0
  %99 = vmatpush1.bf16.msra.mxu0 0
  %100 = vmatprep.subr.bf16.mxu0 0
  %101 = vmatpush1.bf16.msra.mxu0 0
  %102 = vmatprep.subr.bf16.mxu0 0
  %103 = vmatpush1.bf16.msra.mxu0 0
  %104 = vmatprep.subr.bf16.mxu0 0
  %105 = vmatpush1.bf16.msra.mxu0 0
  %106 = vmatprep.subr.bf16.mxu0 0
  %107 = vmatpush1.bf16.msra.mxu0 0
  %108 = vmatprep.mubr.bf16.mxu0 0
  %109 = vmatmul.mubr.bf16.gmra.mrb[0].mxu0 %v65
  %v110 = vpop.f32.mrb[0].mxu0
  %v111 = vadd.f32 %v31, %v110
  %v112 = vpop.f32.mrb[0].mxu0
  %v113 = vpop.f32.mrb[0].mxu0
  %v114 = vadd.f32 %v31, %v113
  %v115 = vpop.f32.mrb[0].mxu0
  %116 = vmatprep.mubr.bf16.mxu0 0
  %117 = vmatmul.mubr.bf16.gmra.mrb[0].mxu0 %v68
  %v118 = vpop.f32.mrb[0].mxu0
  %v119 = vadd.f32 %v31, %v118
  %v120 = vpop.f32.mrb[0].mxu0
  %v121 = vpop.f32.mrb[0].mxu0
  %v122 = vadd.f32 %v31, %v121
  %v123 = vpop.f32.mrb[0].mxu0
  %124 = vmatprep.mubr.bf16.mxu0 0
  %125 = vmatmul.mubr.bf16.gmra.mrb[0].mxu0 %v71
  %v126 = vpop.f32.mrb[0].mxu0
  %v127 = vadd.f32 %v31, %v126
  %v128 = vpop.f32.mrb[0].mxu0
  %v129 = vpop.f32.mrb[0].mxu0
  %v130 = vadd.f32 %v31, %v129
  %v131 = vpop.f32.mrb[0].mxu0
  %132 = vmatprep.mubr.bf16.mxu0 0
  %133 = vmatmul.mubr.bf16.gmra.mrb[0].mxu0 %v74
  %v134 = vpop.f32.mrb[0].mxu0
  %v135 = vadd.f32 %v31, %v134
  %v136 = vpop.f32.mrb[0].mxu0
  %v137 = vpop.f32.mrb[0].mxu0
  %v138 = vpop.f32.mrb[0].mxu0
  %139 = vdwg.mxu0
  %v140 = vmax.f32 %v111, 0.0
  %v141 = vmax.f32 %v114, 0.0
  %v142 = vmax.f32 %v119, 0.0
  %v143 = vmax.f32 %v122, 0.0
  %v144 = vmax.f32 %v127, 0.0
  %v145 = vmax.f32 %v130, 0.0
  %v146 = vmax.f32 %v135, 0.0
  %v147 = vpack.c.bf16 %v141, %v140
  %v148 = vpack.c.bf16 %v143, %v142
  %v149 = vpack.c.bf16 %v145, %v144
  %v150 = vpack.c.bf16 %v146, %v146
  %v155 = vunpack.c.l.b16 %v147
  %v156 = vunpack.c.h.b16 %v147
  %v157 = vunpack.c.l.b16 %v148
  %v158 = vunpack.c.h.b16 %v148
  %v159 = vunpack.c.l.b16 %v149
  %v160 = vunpack.c.h.b16 %v149
  %v161 = vunpack.c.l.b16 %v150
  %v162 = vpack.c.b16 %v155, %v155
  %v163 = vpack.c.b16 %v156, %v156
  %v164 = vpack.c.b16 %v157, %v157
  %v165 = vpack.c.b16 %v158, %v158
  %v166 = vpack.c.b16 %v159, %v159
  %v167 = vpack.c.b16 %v160, %v160
  %v168 = vpack.c.b16 %v161, %v161
  %176 = vst [vmem:[%s3] sm:$0xf] %v162
  %177 = vst [vmem:[%s3 + $0x4] sm:$0xf] %v163
  %178 = vst [vmem:[%s3 + $0x8] sm:$0xf] %v164
  %179 = vst [vmem:[%s3 + $0xc] sm:$0xf] %v165
  %180 = vst [vmem:[%s3 + $0x10] sm:$0xf] %v166
  %181 = vst [vmem:[%s3 + $0x14] sm:$0xf] %v167
  %182 = vst [vmem:[%s3 + $0x18] sm:$0xf] %v168
  // Predicated region
  $region14: #{forward.83} parent=0 // pred_check
    _
  $region15: #{forward.83} parent=0 // pred_check_branch
    %184 = sbr.rel (0) target = $region17
  $region16: #{forward.83} parent=0 // pred_region
    _
  $region17: #{forward.83} parent=0 // pred_fallthru
    _
  // Predicated region
  $region18: #{forward.83} parent=0 // pred_check
    _
  $region19: #{forward.83} parent=0 // pred_check_branch
    %186 = sbr.rel (0) target = $region21
  $region20: #{forward.83} parent=0 // pred_region
    _
  $region21: #{forward.83} parent=0 // pred_fallthru
    _

// kernel: forward.82
$region0: #{forward.82}
  #allocation0 [shape = 'u32[]', space=smem, size = 0x4, offset = 0x4, fixed_abs, tag = 'smem constant byte address 0x4 - core index']
  #allocation1 [shape = 'u32[144,128]{1,0:T(1,128)}', space=vmem, size = 0x12000, scoped, tag = 'internal scratch']
  %s0 = inlined_call_operand.vmem [shape: bf16[9,49,24], index: 0, kind: input, shape index: {}]
  %s1 = inlined_call_operand.vmem [shape: bf16[49,24], index: 1, kind: output, shape index: {}]
  %s2 = sld [smem:[#allocation0]]
  $region14: #{forward.82} parent=0
    _
  %s4 = ssub.s32 1, %s2
  %s5 = scalar_select 0, %s4, %s2
  // Predicated region
  $region2: #{forward.82} parent=0 // pred_check
    _
  $region3: #{forward.82} parent=0 // pred_check_branch
    %7 = sbr.rel (0) target = $region5
  $region4: #{forward.82} parent=0 // pred_region
    _
  $region5: #{forward.82} parent=0 // pred_fallthru
    _
  %v9 = vld [vmem:[%s0] sm:$0xf]
  %v10 = vld [vmem:[%s0 + $0x4] sm:$0xf]
  %v11 = vld [vmem:[%s0 + $0x8] sm:$0xf]
  %v12 = vld [vmem:[%s0 + $0xc] sm:$0xf]
  %v13 = vld [vmem:[%s0 + $0x10] sm:$0xf]
  %v14 = vld [vmem:[%s0 + $0x14] sm:$0xf]
  %v15 = vld [vmem:[%s0 + $0x18] sm:$0x1]
  %v16 = vld [vmem:[%s0 + $0x1c] sm:$0xf]
  %v17 = vld [vmem:[%s0 + $0x20] sm:$0xf]
  %v18 = vld [vmem:[%s0 + $0x24] sm:$0xf]
  %v19 = vld [vmem:[%s0 + $0x28] sm:$0xf]
  %v20 = vld [vmem:[%s0 + $0x2c] sm:$0xf]
  %v21 = vld [vmem:[%s0 + $0x30] sm:$0xf]
  %v22 = vld [vmem:[%s0 + $0x34] sm:$0x1]
  %v23 = vld [vmem:[%s0 + $0x38] sm:$0xf]
  %v24 = vld [vmem:[%s0 + $0x3c] sm:$0xf]
  %v25 = vld [vmem:[%s0 + $0x40] sm:$0xf]
  %v26 = vld [vmem:[%s0 + $0x44] sm:$0xf]
  %v27 = vld [vmem:[%s0 + $0x48] sm:$0xf]
  %v28 = vld [vmem:[%s0 + $0x4c] sm:$0xf]
  %v29 = vld [vmem:[%s0 + $0x50] sm:$0x1]
  %v30 = vld [vmem:[%s0 + $0x54] sm:$0xf]
  %v31 = vld [vmem:[%s0 + $0x58] sm:$0xf]
  %v32 = vld [vmem:[%s0 + $0x5c] sm:$0xf]
  %v33 = vld [vmem:[%s0 + $0x60] sm:$0xf]
  %v34 = vld [vmem:[%s0 + $0x64] sm:$0xf]
  %v35 = vld [vmem:[%s0 + $0x68] sm:$0xf]
  %v36 = vld [vmem:[%s0 + $0x6c] sm:$0x1]
  %v37 = vld [vmem:[%s0 + $0x70] sm:$0xf]
  %v38 = vld [vmem:[%s0 + $0x74] sm:$0xf]
  %v39 = vld [vmem:[%s0 + $0x78] sm:$0xf]
  %v40 = vld [vmem:[%s0 + $0x7c] sm:$0xf]
  %v41 = vld [vmem:[%s0 + $0x80] sm:$0xf]
  %v42 = vld [vmem:[%s0 + $0x84] sm:$0xf]
  %v43 = vld [vmem:[%s0 + $0x88] sm:$0x1]
  %v44 = vld [vmem:[%s0 + $0x8c] sm:$0xf]
  %v45 = vld [vmem:[%s0 + $0x90] sm:$0xf]
  %v46 = vld [vmem:[%s0 + $0x94] sm:$0xf]
  %v47 = vld [vmem:[%s0 + $0x98] sm:$0xf]
  %v48 = vld [vmem:[%s0 + $0x9c] sm:$0xf]
  %v49 = vld [vmem:[%s0 + $0xa0] sm:$0xf]
  %v50 = vld [vmem:[%s0 + $0xa4] sm:$0x1]
  %v51 = vld [vmem:[%s0 + $0xa8] sm:$0xf]
  %v52 = vld [vmem:[%s0 + $0xac] sm:$0xf]
  %v53 = vld [vmem:[%s0 + $0xb0] sm:$0xf]
  %v54 = vld [vmem:[%s0 + $0xb4] sm:$0xf]
  %v55 = vld [vmem:[%s0 + $0xb8] sm:$0xf]
  %v56 = vld [vmem:[%s0 + $0xbc] sm:$0xf]
  %v57 = vld [vmem:[%s0 + $0xc0] sm:$0x1]
  %v58 = vld [vmem:[%s0 + $0xc4] sm:$0xf]
  %v59 = vld [vmem:[%s0 + $0xc8] sm:$0xf]
  %v60 = vld [vmem:[%s0 + $0xcc] sm:$0xf]
  %v61 = vld [vmem:[%s0 + $0xd0] sm:$0xf]
  %v62 = vld [vmem:[%s0 + $0xd4] sm:$0xf]
  %v63 = vld [vmem:[%s0 + $0xd8] sm:$0xf]
  %v64 = vld [vmem:[%s0 + $0xdc] sm:$0x1]
  %v65 = vld [vmem:[%s0 + $0xe0] sm:$0xf]
  %v66 = vld [vmem:[%s0 + $0xe4] sm:$0xf]
  %v67 = vld [vmem:[%s0 + $0xe8] sm:$0xf]
  %v68 = vld [vmem:[%s0 + $0xec] sm:$0xf]
  %v69 = vld [vmem:[%s0 + $0xf0] sm:$0xf]
  %v70 = vld [vmem:[%s0 + $0xf4] sm:$0xf]
  %v71 = vld [vmem:[%s0 + $0xf8] sm:$0x1]
  %vm72 = vcmask 191488
  %v75 = vsel %vm72, %v9, 4286644096
  %v78 = vsel %vm72, %v16, 4286644096
  %v80 = vmax.bf16 %v75, %v78
  %v82 = vsel %vm72, %v23, 4286644096
  %v84 = vmax.bf16 %v80, %v82
  %v86 = vsel %vm72, %v30, 4286644096
  %v88 = vmax.bf16 %v84, %v86
  %v90 = vsel %vm72, %v37, 4286644096
  %v92 = vmax.bf16 %v88, %v90
  %v94 = vsel %vm72, %v44, 4286644096
  %v96 = vmax.bf16 %v92, %v94
  %v98 = vsel %vm72, %v51, 4286644096
  %v100 = vmax.bf16 %v96, %v98
  %v102 = vsel %vm72, %v58, 4286644096
  %v104 = vmax.bf16 %v100, %v102
  %v106 = vsel %vm72, %v65, 4286644096
  %v108 = vmax.bf16 %v104, %v106
  %v110 = vsel %vm72, %v10, 4286644096
  %v113 = vsel %vm72, %v17, 4286644096
  %v115 = vmax.bf16 %v110, %v113
  %v117 = vsel %vm72, %v24, 4286644096
  %v119 = vmax.bf16 %v115, %v117
  %v121 = vsel %vm72, %v31, 4286644096
  %v123 = vmax.bf16 %v119, %v121
  %v125 = vsel %vm72, %v38, 4286644096
  %v127 = vmax.bf16 %v123, %v125
  %v129 = vsel %vm72, %v45, 4286644096
  %v131 = vmax.bf16 %v127, %v129
  %v133 = vsel %vm72, %v52, 4286644096
  %v135 = vmax.bf16 %v131, %v133
  %v137 = vsel %vm72, %v59, 4286644096
  %v139 = vmax.bf16 %v135, %v137
  %v141 = vsel %vm72, %v66, 4286644096
  %v143 = vmax.bf16 %v139, %v141
  %v145 = vsel %vm72, %v11, 4286644096
  %v148 = vsel %vm72, %v18, 4286644096
  %v150 = vmax.bf16 %v145, %v148
  %v152 = vsel %vm72, %v25, 4286644096
  %v154 = vmax.bf16 %v150, %v152
  %v156 = vsel %vm72, %v32, 4286644096
  %v158 = vmax.bf16 %v154, %v156
  %v160 = vsel %vm72, %v39, 4286644096
  %v162 = vmax.bf16 %v158, %v160
  %v164 = vsel %vm72, %v46, 4286644096
  %v166 = vmax.bf16 %v162, %v164
  %v168 = vsel %vm72, %v53, 4286644096
  %v170 = vmax.bf16 %v166, %v168
  %v172 = vsel %vm72, %v60, 4286644096
  %v174 = vmax.bf16 %v170, %v172
  %v176 = vsel %vm72, %v67, 4286644096
  %v178 = vmax.bf16 %v174, %v176
  %v180 = vsel %vm72, %v12, 4286644096
  %v183 = vsel %vm72, %v19, 4286644096
  %v185 = vmax.bf16 %v180, %v183
  %v187 = vsel %vm72, %v26, 4286644096
  %v189 = vmax.bf16 %v185, %v187
  %v191 = vsel %vm72, %v33, 4286644096
  %v193 = vmax.bf16 %v189, %v191
  %v195 = vsel %vm72, %v40, 4286644096
  %v197 = vmax.bf16 %v193, %v195
  %v199 = vsel %vm72, %v47, 4286644096
  %v201 = vmax.bf16 %v197, %v199
  %v203 = vsel %vm72, %v54, 4286644096
  %v205 = vmax.bf16 %v201, %v203
  %v207 = vsel %vm72, %v61, 4286644096
  %v209 = vmax.bf16 %v205, %v207
  %v211 = vsel %vm72, %v68, 4286644096
  %v213 = vmax.bf16 %v209, %v211
  %v215 = vsel %vm72, %v13, 4286644096
  %v218 = vsel %vm72, %v20, 4286644096
  %v220 = vmax.bf16 %v215, %v218
  %v222 = vsel %vm72, %v27, 4286644096
  %v224 = vmax.bf16 %v220, %v222
  %v226 = vsel %vm72, %v34, 4286644096
  %v228 = vmax.bf16 %v224, %v226
  %v230 = vsel %vm72, %v41, 4286644096
  %v232 = vmax.bf16 %v228, %v230
  %v234 = vsel %vm72, %v48, 4286644096
  %v236 = vmax.bf16 %v232, %v234
  %v238 = vsel %vm72, %v55, 4286644096
  %v240 = vmax.bf16 %v236, %v238
  %v242 = vsel %vm72, %v62, 4286644096
  %v244 = vmax.bf16 %v240, %v242
  %v246 = vsel %vm72, %v69, 4286644096
  %v248 = vmax.bf16 %v244, %v246
  %v250 = vsel %vm72, %v14, 4286644096
  %v253 = vsel %vm72, %v21, 4286644096
  %v255 = vmax.bf16 %v250, %v253
  %v257 = vsel %vm72, %v28, 4286644096
  %v259 = vmax.bf16 %v255, %v257
  %v261 = vsel %vm72, %v35, 4286644096
  %v263 = vmax.bf16 %v259, %v261
  %v265 = vsel %vm72, %v42, 4286644096
  %v267 = vmax.bf16 %v263, %v265
  %v269 = vsel %vm72, %v49, 4286644096
  %v271 = vmax.bf16 %v267, %v269
  %v273 = vsel %vm72, %v56, 4286644096
  %v275 = vmax.bf16 %v271, %v273
  %v277 = vsel %vm72, %v63, 4286644096
  %v279 = vmax.bf16 %v275, %v277
  %v281 = vsel %vm72, %v70, 4286644096
  %v283 = vmax.bf16 %v279, %v281
  %vm284 = vcmask 188416
  %vm285 = vsmask.f32 256
  %vm286 = vmand %vm284, %vm285
  %v287 = vsel %vm286, %v15, 4286644096
  %v288 = vsel %vm286, %v22, 4286644096
  %v289 = vmax.bf16 %v287, %v288
  %v290 = vsel %vm286, %v29, 4286644096
  %v291 = vmax.bf16 %v289, %v290
  %v292 = vsel %vm286, %v36, 4286644096
  %v293 = vmax.bf16 %v291, %v292
  %v294 = vsel %vm286, %v43, 4286644096
  %v295 = vmax.bf16 %v293, %v294
  %v296 = vsel %vm286, %v50, 4286644096
  %v297 = vmax.bf16 %v295, %v296
  %v298 = vsel %vm286, %v57, 4286644096
  %v299 = vmax.bf16 %v297, %v298
  %v300 = vsel %vm286, %v64, 4286644096
  %v301 = vmax.bf16 %v299, %v300
  %v302 = vsel %vm286, %v71, 4286644096
  %v303 = vmax.bf16 %v301, %v302
  %304 = vst.msk [vmem:[%s1] sm:$0xf] %vm72, %v108
  %305 = vst.msk [vmem:[%s1 + $0x4] sm:$0xf] %vm72, %v143
  %306 = vst.msk [vmem:[%s1 + $0x8] sm:$0xf] %vm72, %v178
  %307 = vst.msk [vmem:[%s1 + $0xc] sm:$0xf] %vm72, %v213
  %308 = vst.msk [vmem:[%s1 + $0x10] sm:$0xf] %vm72, %v248
  %309 = vst.msk [vmem:[%s1 + $0x14] sm:$0xf] %vm72, %v283
  %v310 = vld [vmem:[%s1 + $0x18] sm:$0x1]
  %v311 = vsel %vm286, %v303, %v310
  %312 = vst [vmem:[%s1 + $0x18] sm:$0x1] %v311
  // Predicated region
  $region6: #{forward.82} parent=0 // pred_check
    _
  $region7: #{forward.82} parent=0 // pred_check_branch
    %314 = sbr.rel (0) target = $region9
  $region8: #{forward.82} parent=0 // pred_region
    _
  $region9: #{forward.82} parent=0 // pred_fallthru
    _
  // Predicated region
  $region10: #{forward.82} parent=0 // pred_check
    _
  $region11: #{forward.82} parent=0 // pred_check_branch
    %316 = sbr.rel (0) target = $region13
  $region12: #{forward.82} parent=0 // pred_region
    _
  $region13: #{forward.82} parent=0 // pred_fallthru
    _

// kernel: forward.84
$region0: #{forward.84}
  #allocation0 [shape = 'u32[]', space=smem, size = 0x4, offset = 0x4, fixed_abs, tag = 'smem constant byte address 0x4 - core index']
  #allocation1 [shape = 'u32[144,128]{1,0:T(1,128)}', space=vmem, size = 0x12000, scoped, tag = 'internal scratch']
  %s0 = inlined_call_operand.vmem [shape: bf16[56,160], index: 0, kind: input, shape index: {}]
  %s1 = inlined_call_operand.vmem [shape: bf16[160,128], index: 1, kind: input, shape index: {}]
  %s2 = inlined_call_operand.vmem [shape: f32[1,128], index: 2, kind: input, shape index: {}]
  %s3 = inlined_call_operand.vmem [shape: bf16[56,128], index: 3, kind: output, shape index: {}]
  %s4 = sld [smem:[#allocation0]]
  $region22: #{forward.84} parent=0
    _
  %s6 = ssub.s32 1, %s4
  %s7 = scalar_select 0, %s6, %s4
  // Predicated region
  $region2: #{forward.84} parent=0 // pred_check
    _
  $region3: #{forward.84} parent=0 // pred_check_branch
    %9 = sbr.rel (0) target = $region5
  $region4: #{forward.84} parent=0 // pred_region
    _
  $region5: #{forward.84} parent=0 // pred_fallthru
    _
  // Predicated region
  $region6: #{forward.84} parent=0 // pred_check
    _
  $region7: #{forward.84} parent=0 // pred_check_branch
    %11 = sbr.rel (0) target = $region9
  $region8: #{forward.84} parent=0 // pred_region
    _
  $region9: #{forward.84} parent=0 // pred_fallthru
    _
  // Predicated region
  $region10: #{forward.84} parent=0 // pred_check
    _
  $region11: #{forward.84} parent=0 // pred_check_branch
    %13 = sbr.rel (0) target = $region13
  $region12: #{forward.84} parent=0 // pred_region
    _
  $region13: #{forward.84} parent=0 // pred_fallthru
    _
  %v15 = vld [vmem:[%s0] sm:$0xff]
  %v16 = vld [vmem:[%s0 + $0x8] sm:$0xff]
  %v17 = vld [vmem:[%s0 + $0x10] sm:$0xff]
  %v18 = vld [vmem:[%s0 + $0x18] sm:$0xff]
  %v19 = vld [vmem:[%s0 + $0x20] sm:$0xff]
  %v20 = vld [vmem:[%s0 + $0x28] sm:$0xff]
  %v21 = vld [vmem:[%s0 + $0x30] sm:$0xff]
  %v22 = vld [vmem:[%s1] sm:$0xf]
  %v23 = vld [vmem:[%s1 + $0x4] sm:$0xf]
  %v24 = vld [vmem:[%s1 + $0x8] sm:$0xf]
  %v25 = vld [vmem:[%s1 + $0xc] sm:$0xf]
  %v26 = vld [vmem:[%s1 + $0x10] sm:$0xf]
  %v27 = vld [vmem:[%s1 + $0x14] sm:$0xf]
  %v28 = vld [vmem:[%s1 + $0x18] sm:$0xf]
  %v29 = vld [vmem:[%s1 + $0x1c] sm:$0xf]
  %v30 = vld [vmem:[%s1 + $0x20] sm:$0xf]
  %v31 = vld [vmem:[%s1 + $0x24] sm:$0xf]
  %v32 = vld [vmem:[%s1 + $0x28] sm:$0xf]
  %v33 = vld [vmem:[%s1 + $0x2c] sm:$0xf]
  %v34 = vld [vmem:[%s1 + $0x30] sm:$0xf]
  %v35 = vld [vmem:[%s1 + $0x34] sm:$0xf]
  %v36 = vld [vmem:[%s1 + $0x38] sm:$0xf]
  %v37 = vld [vmem:[%s1 + $0x3c] sm:$0xf]
  %v38 = vld [vmem:[%s1 + $0x40] sm:$0xf]
  %v39 = vld [vmem:[%s1 + $0x44] sm:$0xf]
  %v40 = vld [vmem:[%s1 + $0x48] sm:$0xf]
  %v41 = vld [vmem:[%s1 + $0x4c] sm:$0xf]
  %v42 = vld [vmem:[%s2] sm:$0x1]
  %v44 = vlaneseq
  %v45 = vshrl.u32 %v44, 7
  %v46 = vsub.s32 0, %v45
  %v47 = vrot.slane %v42, %v46
  %v56 = vunpack.c.l.b16 %v15
  %v57 = vunpack.c.h.b16 %v15
  %v58 = vunpack.c.l.b16 %v16
  %v59 = vunpack.c.h.b16 %v16
  %v60 = vunpack.c.l.b16 %v17
  %v61 = vunpack.c.h.b16 %v17
  %v62 = vunpack.c.l.b16 %v18
  %v63 = vunpack.c.h.b16 %v18
  %v64 = vunpack.c.l.b16 %v19
  %v65 = vunpack.c.h.b16 %v19
  %v66 = vunpack.c.l.b16 %v20
  %v67 = vunpack.c.h.b16 %v20
  %v68 = vunpack.c.l.b16 %v21
  %v69 = vunpack.c.h.b16 %v21
  %v70 = vpack.c.b16 %v58, %v56
  %v71 = vpack.c.b16 %v59, %v57
  %v72 = vpack.c.b16 %v62, %v60
  %v73 = vpack.c.b16 %v63, %v61
  %v74 = vpack.c.b16 %v66, %v64
  %v75 = vpack.c.b16 %v67, %v65
  %v76 = vpack.c.b16 %v68, %v68
  %v77 = vpack.c.b16 %v69, %v69
  %v102 = vunpack.c.l.b16 %v22
  %v103 = vunpack.c.l.b16 %v23
  %v104 = vunpack.c.l.b16 %v24
  %v105 = vunpack.c.l.b16 %v25
  %v106 = vunpack.c.l.b16 %v26
  %v107 = vunpack.c.l.b16 %v27
  %v108 = vunpack.c.l.b16 %v28
  %v109 = vunpack.c.l.b16 %v29
  %v110 = vunpack.c.l.b16 %v30
  %v111 = vunpack.c.l.b16 %v31
  %v112 = vunpack.c.l.b16 %v32
  %v113 = vunpack.c.l.b16 %v33
  %v114 = vunpack.c.l.b16 %v34
  %v115 = vunpack.c.l.b16 %v35
  %v116 = vunpack.c.l.b16 %v36
  %v117 = vunpack.c.l.b16 %v37
  %v118 = vunpack.c.l.b16 %v38
  %v119 = vunpack.c.l.b16 %v39
  %v120 = vunpack.c.l.b16 %v40
  %v121 = vunpack.c.l.b16 %v41
  %v122 = vpack.c.b16 %v103, %v102
  %v123 = vpack.c.b16 %v105, %v104
  %v124 = vpack.c.b16 %v107, %v106
  %v125 = vpack.c.b16 %v109, %v108
  %v126 = vpack.c.b16 %v111, %v110
  %v127 = vpack.c.b16 %v113, %v112
  %v128 = vpack.c.b16 %v115, %v114
  %v129 = vpack.c.b16 %v117, %v116
  %v130 = vpack.c.b16 %v119, %v118
  %v131 = vpack.c.b16 %v121, %v120
  %vm142 = vcmask 261120
  %v144 = vsel %vm142, %v71, 0
  %v147 = vsel %vm142, %v73, 0
  %v150 = vsel %vm142, %v75, 0
  %v153 = vsel %vm142, %v77, 0
  %155 = vmatprep.subr.bf16.mxu0 0
  %156 = vmatpush1.bf16.msra.mxu0 %v122
  %157 = vmatprep.subr.bf16.mxu0 0
  %158 = vmatpush1.bf16.msra.mxu0 %v123
  %159 = vmatprep.subr.bf16.mxu0 0
  %160 = vmatpush1.bf16.msra.mxu0 %v124
  %161 = vmatprep.subr.bf16.mxu0 0
  %162 = vmatpush1.bf16.msra.mxu0 %v125
  %163 = vmatprep.subr.bf16.mxu0 0
  %164 = vmatpush1.bf16.msra.mxu0 %v126
  %165 = vmatprep.subr.bf16.mxu0 0
  %166 = vmatpush1.bf16.msra.mxu0 %v127
  %167 = vmatprep.subr.bf16.mxu0 0
  %168 = vmatpush1.bf16.msra.mxu0 %v128
  %169 = vmatprep.subr.bf16.mxu0 0
  %170 = vmatpush1.bf16.msra.mxu0 %v129
  %171 = vmatprep.subr.bf16.mxu0 0
  %172 = vmatpush1.bf16.msra.mxu0 %v130
  %173 = vmatprep.subr.bf16.mxu0 0
  %174 = vmatpush1.bf16.msra.mxu0 %v131
  %175 = vmatprep.subr.bf16.mxu0 0
  %176 = vmatpush1.bf16.msra.mxu0 0
  %177 = vmatprep.subr.bf16.mxu0 0
  %178 = vmatpush1.bf16.msra.mxu0 0
  %179 = vmatprep.subr.bf16.mxu0 0
  %180 = vmatpush1.bf16.msra.mxu0 0
  %181 = vmatprep.subr.bf16.mxu0 0
  %182 = vmatpush1.bf16.msra.mxu0 0
  %183 = vmatprep.subr.bf16.mxu0 0
  %184 = vmatpush1.bf16.msra.mxu0 0
  %185 = vmatprep.subr.bf16.mxu0 0
  %186 = vmatpush1.bf16.msra.mxu0 0
  %187 = vmatprep.mubr.bf16.mxu0 %v144
  %188 = vmatmul.mubr.bf16.gmra.mrb[0].mxu0 %v70
  %v189 = vpop.f32.mrb[0].mxu0
  %v190 = vadd.f32 %v47, %v189
  %v191 = vpop.f32.mrb[0].mxu0
  %v192 = vpop.f32.mrb[0].mxu0
  %v193 = vadd.f32 %v47, %v192
  %v194 = vpop.f32.mrb[0].mxu0
  %195 = vmatprep.mubr.bf16.mxu0 %v147
  %196 = vmatmul.mubr.bf16.gmra.mrb[0].mxu0 %v72
  %v197 = vpop.f32.mrb[0].mxu0
  %v198 = vadd.f32 %v47, %v197
  %v199 = vpop.f32.mrb[0].mxu0
  %v200 = vpop.f32.mrb[0].mxu0
  %v201 = vadd.f32 %v47, %v200
  %v202 = vpop.f32.mrb[0].mxu0
  %203 = vmatprep.mubr.bf16.mxu0 %v150
  %204 = vmatmul.mubr.bf16.gmra.mrb[0].mxu0 %v74
  %v205 = vpop.f32.mrb[0].mxu0
  %v206 = vadd.f32 %v47, %v205
  %v207 = vpop.f32.mrb[0].mxu0
  %v208 = vpop.f32.mrb[0].mxu0
  %v209 = vadd.f32 %v47, %v208
  %v210 = vpop.f32.mrb[0].mxu0
  %211 = vmatprep.mubr.bf16.mxu0 %v153
  %212 = vmatmul.mubr.bf16.gmra.mrb[0].mxu0 %v76
  %v213 = vpop.f32.mrb[0].mxu0
  %v214 = vadd.f32 %v47, %v213
  %v215 = vpop.f32.mrb[0].mxu0
  %v216 = vpop.f32.mrb[0].mxu0
  %v217 = vpop.f32.mrb[0].mxu0
  %218 = vdwg.mxu0
  %v219 = vmax.f32 %v190, 0.0
  %v220 = vmax.f32 %v193, 0.0
  %v221 = vmax.f32 %v198, 0.0
  %v222 = vmax.f32 %v201, 0.0
  %v223 = vmax.f32 %v206, 0.0
  %v224 = vmax.f32 %v209, 0.0
  %v225 = vmax.f32 %v214, 0.0
  %v226 = vpack.c.bf16 %v220, %v219
  %v227 = vpack.c.bf16 %v222, %v221
  %v228 = vpack.c.bf16 %v224, %v223
  %v229 = vpack.c.bf16 %v225, %v225
  %v234 = vunpack.c.l.b16 %v226
  %v235 = vunpack.c.h.b16 %v226
  %v236 = vunpack.c.l.b16 %v227
  %v237 = vunpack.c.h.b16 %v227
  %v238 = vunpack.c.l.b16 %v228
  %v239 = vunpack.c.h.b16 %v228
  %v240 = vunpack.c.l.b16 %v229
  %v241 = vpack.c.b16 %v234, %v234
  %v242 = vpack.c.b16 %v235, %v235
  %v243 = vpack.c.b16 %v236, %v236
  %v244 = vpack.c.b16 %v237, %v237
  %v245 = vpack.c.b16 %v238, %v238
  %v246 = vpack.c.b16 %v239, %v239
  %v247 = vpack.c.b16 %v240, %v240
  %255 = vst [vmem:[%s3] sm:$0xf] %v241
  %256 = vst [vmem:[%s3 + $0x4] sm:$0xf] %v242
  %257 = vst [vmem:[%s3 + $0x8] sm:$0xf] %v243
  %258 = vst [vmem:[%s3 + $0xc] sm:$0xf] %v244
  %259 = vst [vmem:[%s3 + $0x10] sm:$0xf] %v245
  %260 = vst [vmem:[%s3 + $0x14] sm:$0xf] %v246
  %261 = vst [vmem:[%s3 + $0x18] sm:$0xf] %v247
  // Predicated region
  $region14: #{forward.84} parent=0 // pred_check
    _
  $region15: #{forward.84} parent=0 // pred_check_branch
    %263 = sbr.rel (0) target = $region17
  $region16: #{forward.84} parent=0 // pred_region
    _
  $region17: #{forward.84} parent=0 // pred_fallthru
    _
  // Predicated region
  $region18: #{forward.84} parent=0 // pred_check
    _
  $region19: #{forward.84} parent=0 // pred_check_branch
    %265 = sbr.rel (0) target = $region21
  $region20: #{forward.84} parent=0 // pred_region
    _
  $region21: #{forward.84} parent=0 // pred_fallthru
    _

// kernel: forward.85
$region0: #{forward.85}
  #allocation0 [shape = 'u32[]', space=smem, size = 0x4, offset = 0x4, fixed_abs, tag = 'smem constant byte address 0x4 - core index']
  #allocation1 [shape = 'u32[144,128]{1,0:T(1,128)}', space=vmem, size = 0x12000, scoped, tag = 'internal scratch']
  %s0 = inlined_call_operand.vmem [shape: bf16[56,96], index: 0, kind: input, shape index: {}]
  %s1 = inlined_call_operand.vmem [shape: bf16[96,128], index: 1, kind: input, shape index: {}]
  %s2 = inlined_call_operand.vmem [shape: f32[1,128], index: 2, kind: input, shape index: {}]
  %s3 = inlined_call_operand.vmem [shape: bf16[56,128], index: 3, kind: output, shape index: {}]
  %s4 = sld [smem:[#allocation0]]
  $region22: #{forward.85} parent=0
    _
  %s6 = ssub.s32 1, %s4
  %s7 = scalar_select 0, %s6, %s4
  // Predicated region
  $region2: #{forward.85} parent=0 // pred_check
    _
  $region3: #{forward.85} parent=0 // pred_check_branch
    %9 = sbr.rel (0) target = $region5
  $region4: #{forward.85} parent=0 // pred_region
    _
  $region5: #{forward.85} parent=0 // pred_fallthru
    _
  // Predicated region
  $region6: #{forward.85} parent=0 // pred_check
    _
  $region7: #{forward.85} parent=0 // pred_check_branch
    %11 = sbr.rel (0) target = $region9
  $region8: #{forward.85} parent=0 // pred_region
    _
  $region9: #{forward.85} parent=0 // pred_fallthru
    _
  // Predicated region
  $region10: #{forward.85} parent=0 // pred_check
    _
  $region11: #{forward.85} parent=0 // pred_check_branch
    %13 = sbr.rel (0) target = $region13
  $region12: #{forward.85} parent=0 // pred_region
    _
  $region13: #{forward.85} parent=0 // pred_fallthru
    _
  %v15 = vld [vmem:[%s0] sm:$0xf]
  %v16 = vld [vmem:[%s0 + $0x4] sm:$0xf]
  %v17 = vld [vmem:[%s0 + $0x8] sm:$0xf]
  %v18 = vld [vmem:[%s0 + $0xc] sm:$0xf]
  %v19 = vld [vmem:[%s0 + $0x10] sm:$0xf]
  %v20 = vld [vmem:[%s0 + $0x14] sm:$0xf]
  %v21 = vld [vmem:[%s0 + $0x18] sm:$0xf]
  %v22 = vld [vmem:[%s1] sm:$0xf]
  %v23 = vld [vmem:[%s1 + $0x4] sm:$0xf]
  %v24 = vld [vmem:[%s1 + $0x8] sm:$0xf]
  %v25 = vld [vmem:[%s1 + $0xc] sm:$0xf]
  %v26 = vld [vmem:[%s1 + $0x10] sm:$0xf]
  %v27 = vld [vmem:[%s1 + $0x14] sm:$0xf]
  %v28 = vld [vmem:[%s1 + $0x18] sm:$0xf]
  %v29 = vld [vmem:[%s1 + $0x1c] sm:$0xf]
  %v30 = vld [vmem:[%s1 + $0x20] sm:$0xf]
  %v31 = vld [vmem:[%s1 + $0x24] sm:$0xf]
  %v32 = vld [vmem:[%s1 + $0x28] sm:$0xf]
  %v33 = vld [vmem:[%s1 + $0x2c] sm:$0xf]
  %v34 = vld [vmem:[%s2] sm:$0x1]
  %v36 = vlaneseq
  %v37 = vshrl.u32 %v36, 7
  %v38 = vsub.s32 0, %v37
  %v39 = vrot.slane %v34, %v38
  %v48 = vunpack.c.l.b16 %v15
  %v49 = vunpack.c.l.b16 %v16
  %v50 = vunpack.c.l.b16 %v17
  %v51 = vunpack.c.l.b16 %v18
  %v52 = vunpack.c.l.b16 %v19
  %v53 = vunpack.c.l.b16 %v20
  %v54 = vunpack.c.l.b16 %v21
  %v55 = vpack.c.b16 %v49, %v48
  %v56 = vpack.c.b16 %v51, %v50
  %v57 = vpack.c.b16 %v53, %v52
  %v58 = vpack.c.b16 %v54, %v54
  %v71 = vunpack.c.l.b16 %v22
  %v72 = vunpack.c.l.b16 %v23
  %v73 = vunpack.c.l.b16 %v24
  %v74 = vunpack.c.l.b16 %v25
  %v75 = vunpack.c.l.b16 %v26
  %v76 = vunpack.c.l.b16 %v27
  %v77 = vunpack.c.l.b16 %v28
  %v78 = vunpack.c.l.b16 %v29
  %v79 = vunpack.c.l.b16 %v30
  %v80 = vunpack.c.l.b16 %v31
  %v81 = vunpack.c.l.b16 %v32
  %v82 = vunpack.c.l.b16 %v33
  %v83 = vpack.c.b16 %v72, %v71
  %v84 = vpack.c.b16 %v74, %v73
  %v85 = vpack.c.b16 %v76, %v75
  %v86 = vpack.c.b16 %v78, %v77
  %v87 = vpack.c.b16 %v80, %v79
  %v88 = vpack.c.b16 %v82, %v81
  %vm95 = vcmask 785408
  %v97 = vsel %vm95, %v55, 0
  %v100 = vsel %vm95, %v56, 0
  %v103 = vsel %vm95, %v57, 0
  %v106 = vsel %vm95, %v58, 0
  %108 = vmatprep.subr.bf16.mxu0 0
  %109 = vmatpush1.bf16.msra.mxu0 %v83
  %110 = vmatprep.subr.bf16.mxu0 0
  %111 = vmatpush1.bf16.msra.mxu0 %v84
  %112 = vmatprep.subr.bf16.mxu0 0
  %113 = vmatpush1.bf16.msra.mxu0 %v85
  %114 = vmatprep.subr.bf16.mxu0 0
  %115 = vmatpush1.bf16.msra.mxu0 %v86
  %116 = vmatprep.subr.bf16.mxu0 0
  %117 = vmatpush1.bf16.msra.mxu0 %v87
  %118 = vmatprep.subr.bf16.mxu0 0
  %119 = vmatpush1.bf16.msra.mxu0 %v88
  %120 = vmatprep.subr.bf16.mxu0 0
  %121 = vmatpush1.bf16.msra.mxu0 0
  %122 = vmatprep.subr.bf16.mxu0 0
  %123 = vmatpush1.bf16.msra.mxu0 0
  %124 = vmatprep.subr.bf16.mxu0 0
  %125 = vmatpush1.bf16.msra.mxu0 0
  %126 = vmatprep.subr.bf16.mxu0 0
  %127 = vmatpush1.bf16.msra.mxu0 0
  %128 = vmatprep.subr.bf16.mxu0 0
  %129 = vmatpush1.bf16.msra.mxu0 0
  %130 = vmatprep.subr.bf16.mxu0 0
  %131 = vmatpush1.bf16.msra.mxu0 0
  %132 = vmatprep.subr.bf16.mxu0 0
  %133 = vmatpush1.bf16.msra.mxu0 0
  %134 = vmatprep.subr.bf16.mxu0 0
  %135 = vmatpush1.bf16.msra.mxu0 0
  %136 = vmatprep.subr.bf16.mxu0 0
  %137 = vmatpush1.bf16.msra.mxu0 0
  %138 = vmatprep.subr.bf16.mxu0 0
  %139 = vmatpush1.bf16.msra.mxu0 0
  %140 = vmatprep.mubr.bf16.mxu0 0
  %141 = vmatmul.mubr.bf16.gmra.mrb[0].mxu0 %v97
  %v142 = vpop.f32.mrb[0].mxu0
  %v143 = vadd.f32 %v39, %v142
  %v144 = vpop.f32.mrb[0].mxu0
  %v145 = vpop.f32.mrb[0].mxu0
  %v146 = vadd.f32 %v39, %v145
  %v147 = vpop.f32.mrb[0].mxu0
  %148 = vmatprep.mubr.bf16.mxu0 0
  %149 = vmatmul.mubr.bf16.gmra.mrb[0].mxu0 %v100
  %v150 = vpop.f32.mrb[0].mxu0
  %v151 = vadd.f32 %v39, %v150
  %v152 = vpop.f32.mrb[0].mxu0
  %v153 = vpop.f32.mrb[0].mxu0
  %v154 = vadd.f32 %v39, %v153
  %v155 = vpop.f32.mrb[0].mxu0
  %156 = vmatprep.mubr.bf16.mxu0 0
  %157 = vmatmul.mubr.bf16.gmra.mrb[0].mxu0 %v103
  %v158 = vpop.f32.mrb[0].mxu0
  %v159 = vadd.f32 %v39, %v158
  %v160 = vpop.f32.mrb[0].mxu0
  %v161 = vpop.f32.mrb[0].mxu0
  %v162 = vadd.f32 %v39, %v161
  %v163 = vpop.f32.mrb[0].mxu0
  %164 = vmatprep.mubr.bf16.mxu0 0
  %165 = vmatmul.mubr.bf16.gmra.mrb[0].mxu0 %v106
  %v166 = vpop.f32.mrb[0].mxu0
  %v167 = vadd.f32 %v39, %v166
  %v168 = vpop.f32.mrb[0].mxu0
  %v169 = vpop.f32.mrb[0].mxu0
  %v170 = vpop.f32.mrb[0].mxu0
  %171 = vdwg.mxu0
  %v172 = vmax.f32 %v143, 0.0
  %v173 = vmax.f32 %v146, 0.0
  %v174 = vmax.f32 %v151, 0.0
  %v175 = vmax.f32 %v154, 0.0
  %v176 = vmax.f32 %v159, 0.0
  %v177 = vmax.f32 %v162, 0.0
  %v178 = vmax.f32 %v167, 0.0
  %v179 = vpack.c.bf16 %v173, %v172
  %v180 = vpack.c.bf16 %v175, %v174
  %v181 = vpack.c.bf16 %v177, %v176
  %v182 = vpack.c.bf16 %v178, %v178
  %v187 = vunpack.c.l.b16 %v179
  %v188 = vunpack.c.h.b16 %v179
  %v189 = vunpack.c.l.b16 %v180
  %v190 = vunpack.c.h.b16 %v180
  %v191 = vunpack.c.l.b16 %v181
  %v192 = vunpack.c.h.b16 %v181
  %v193 = vunpack.c.l.b16 %v182
  %v194 = vpack.c.b16 %v187, %v187
  %v195 = vpack.c.b16 %v188, %v188
  %v196 = vpack.c.b16 %v189, %v189
  %v197 = vpack.c.b16 %v190, %v190
  %v198 = vpack.c.b16 %v191, %v191
  %v199 = vpack.c.b16 %v192, %v192
  %v200 = vpack.c.b16 %v193, %v193
  %208 = vst [vmem:[%s3] sm:$0xf] %v194
  %209 = vst [vmem:[%s3 + $0x4] sm:$0xf] %v195
  %210 = vst [vmem:[%s3 + $0x8] sm:$0xf] %v196
  %211 = vst [vmem:[%s3 + $0xc] sm:$0xf] %v197
  %212 = vst [vmem:[%s3 + $0x10] sm:$0xf] %v198
  %213 = vst [vmem:[%s3 + $0x14] sm:$0xf] %v199
  %214 = vst [vmem:[%s3 + $0x18] sm:$0xf] %v200
  // Predicated region
  $region14: #{forward.85} parent=0 // pred_check
    _
  $region15: #{forward.85} parent=0 // pred_check_branch
    %216 = sbr.rel (0) target = $region17
  $region16: #{forward.85} parent=0 // pred_region
    _
  $region17: #{forward.85} parent=0 // pred_fallthru
    _
  // Predicated region
  $region18: #{forward.85} parent=0 // pred_check
    _
  $region19: #{forward.85} parent=0 // pred_check_branch
    %218 = sbr.rel (0) target = $region21
  $region20: #{forward.85} parent=0 // pred_region
    _
  $region21: #{forward.85} parent=0 // pred_fallthru
    _

// kernel: forward.86
$region0: #{forward.86}
  #allocation0 [shape = 'u32[]', space=smem, size = 0x4, offset = 0x4, fixed_abs, tag = 'smem constant byte address 0x4 - core index']
  #allocation1 [shape = 'u32[144,128]{1,0:T(1,128)}', space=vmem, size = 0x12000, scoped, tag = 'internal scratch']
  %s0 = inlined_call_operand.vmem [shape: bf16[56,128], index: 0, kind: input, shape index: {}]
  %s1 = inlined_call_operand.vmem [shape: bf16[128,128], index: 1, kind: input, shape index: {}]
  %s2 = inlined_call_operand.vmem [shape: f32[1,128], index: 2, kind: input, shape index: {}]
  %s3 = inlined_call_operand.vmem [shape: bf16[56,128], index: 3, kind: output, shape index: {}]
  %s4 = sld [smem:[#allocation0]]
  $region22: #{forward.86} parent=0
    _
  %s6 = ssub.s32 1, %s4
  %s7 = scalar_select 0, %s6, %s4
  // Predicated region
  $region2: #{forward.86} parent=0 // pred_check
    _
  $region3: #{forward.86} parent=0 // pred_check_branch
    %9 = sbr.rel (0) target = $region5
  $region4: #{forward.86} parent=0 // pred_region
    _
  $region5: #{forward.86} parent=0 // pred_fallthru
    _
  // Predicated region
  $region6: #{forward.86} parent=0 // pred_check
    _
  $region7: #{forward.86} parent=0 // pred_check_branch
    %11 = sbr.rel (0) target = $region9
  $region8: #{forward.86} parent=0 // pred_region
    _
  $region9: #{forward.86} parent=0 // pred_fallthru
    _
  // Predicated region
  $region10: #{forward.86} parent=0 // pred_check
    _
  $region11: #{forward.86} parent=0 // pred_check_branch
    %13 = sbr.rel (0) target = $region13
  $region12: #{forward.86} parent=0 // pred_region
    _
  $region13: #{forward.86} parent=0 // pred_fallthru
    _
  %v15 = vld [vmem:[%s0] sm:$0xf]
  %v16 = vld [vmem:[%s0 + $0x4] sm:$0xf]
  %v17 = vld [vmem:[%s0 + $0x8] sm:$0xf]
  %v18 = vld [vmem:[%s0 + $0xc] sm:$0xf]
  %v19 = vld [vmem:[%s0 + $0x10] sm:$0xf]
  %v20 = vld [vmem:[%s0 + $0x14] sm:$0xf]
  %v21 = vld [vmem:[%s0 + $0x18] sm:$0xf]
  %v22 = vld [vmem:[%s1] sm:$0xf]
  %v23 = vld [vmem:[%s1 + $0x4] sm:$0xf]
  %v24 = vld [vmem:[%s1 + $0x8] sm:$0xf]
  %v25 = vld [vmem:[%s1 + $0xc] sm:$0xf]
  %v26 = vld [vmem:[%s1 + $0x10] sm:$0xf]
  %v27 = vld [vmem:[%s1 + $0x14] sm:$0xf]
  %v28 = vld [vmem:[%s1 + $0x18] sm:$0xf]
  %v29 = vld [vmem:[%s1 + $0x1c] sm:$0xf]
  %v30 = vld [vmem:[%s1 + $0x20] sm:$0xf]
  %v31 = vld [vmem:[%s1 + $0x24] sm:$0xf]
  %v32 = vld [vmem:[%s1 + $0x28] sm:$0xf]
  %v33 = vld [vmem:[%s1 + $0x2c] sm:$0xf]
  %v34 = vld [vmem:[%s1 + $0x30] sm:$0xf]
  %v35 = vld [vmem:[%s1 + $0x34] sm:$0xf]
  %v36 = vld [vmem:[%s1 + $0x38] sm:$0xf]
  %v37 = vld [vmem:[%s1 + $0x3c] sm:$0xf]
  %v38 = vld [vmem:[%s2] sm:$0x1]
  %v40 = vlaneseq
  %v41 = vshrl.u32 %v40, 7
  %v42 = vsub.s32 0, %v41
  %v43 = vrot.slane %v38, %v42
  %v52 = vunpack.c.l.b16 %v15
  %v53 = vunpack.c.l.b16 %v16
  %v54 = vunpack.c.l.b16 %v17
  %v55 = vunpack.c.l.b16 %v18
  %v56 = vunpack.c.l.b16 %v19
  %v57 = vunpack.c.l.b16 %v20
  %v58 = vunpack.c.l.b16 %v21
  %v59 = vpack.c.b16 %v53, %v52
  %v60 = vpack.c.b16 %v55, %v54
  %v61 = vpack.c.b16 %v57, %v56
  %v62 = vpack.c.b16 %v58, %v58
  %v83 = vunpack.c.l.b16 %v22
  %v84 = vunpack.c.l.b16 %v23
  %v85 = vunpack.c.l.b16 %v24
  %v86 = vunpack.c.l.b16 %v25
  %v87 = vunpack.c.l.b16 %v26
  %v88 = vunpack.c.l.b16 %v27
  %v89 = vunpack.c.l.b16 %v28
  %v90 = vunpack.c.l.b16 %v29
  %v91 = vunpack.c.l.b16 %v30
  %v92 = vunpack.c.l.b16 %v31
  %v93 = vunpack.c.l.b16 %v32
  %v94 = vunpack.c.l.b16 %v33
  %v95 = vunpack.c.l.b16 %v34
  %v96 = vunpack.c.l.b16 %v35
  %v97 = vunpack.c.l.b16 %v36
  %v98 = vunpack.c.l.b16 %v37
  %v99 = vpack.c.b16 %v84, %v83
  %v100 = vpack.c.b16 %v86, %v85
  %v101 = vpack.c.b16 %v88, %v87
  %v102 = vpack.c.b16 %v90, %v89
  %v103 = vpack.c.b16 %v92, %v91
  %v104 = vpack.c.b16 %v94, %v93
  %v105 = vpack.c.b16 %v96, %v95
  %v106 = vpack.c.b16 %v98, %v97
  %115 = vmatprep.subr.bf16.mxu0 0
  %116 = vmatpush1.bf16.msra.mxu0 %v99
  %117 = vmatprep.subr.bf16.mxu0 0
  %118 = vmatpush1.bf16.msra.mxu0 %v100
  %119 = vmatprep.subr.bf16.mxu0 0
  %120 = vmatpush1.bf16.msra.mxu0 %v101
  %121 = vmatprep.subr.bf16.mxu0 0
  %122 = vmatpush1.bf16.msra.mxu0 %v102
  %123 = vmatprep.subr.bf16.mxu0 0
  %124 = vmatpush1.bf16.msra.mxu0 %v103
  %125 = vmatprep.subr.bf16.mxu0 0
  %126 = vmatpush1.bf16.msra.mxu0 %v104
  %127 = vmatprep.subr.bf16.mxu0 0
  %128 = vmatpush1.bf16.msra.mxu0 %v105
  %129 = vmatprep.subr.bf16.mxu0 0
  %130 = vmatpush1.bf16.msra.mxu0 %v106
  %131 = vmatprep.subr.bf16.mxu0 0
  %132 = vmatpush1.bf16.msra.mxu0 0
  %133 = vmatprep.subr.bf16.mxu0 0
  %134 = vmatpush1.bf16.msra.mxu0 0
  %135 = vmatprep.subr.bf16.mxu0 0
  %136 = vmatpush1.bf16.msra.mxu0 0
  %137 = vmatprep.subr.bf16.mxu0 0
  %138 = vmatpush1.bf16.msra.mxu0 0
  %139 = vmatprep.subr.bf16.mxu0 0
  %140 = vmatpush1.bf16.msra.mxu0 0
  %141 = vmatprep.subr.bf16.mxu0 0
  %142 = vmatpush1.bf16.msra.mxu0 0
  %143 = vmatprep.subr.bf16.mxu0 0
  %144 = vmatpush1.bf16.msra.mxu0 0
  %145 = vmatprep.subr.bf16.mxu0 0
  %146 = vmatpush1.bf16.msra.mxu0 0
  %147 = vmatprep.mubr.bf16.mxu0 0
  %148 = vmatmul.mubr.bf16.gmra.mrb[0].mxu0 %v59
  %v149 = vpop.f32.mrb[0].mxu0
  %v150 = vadd.f32 %v43, %v149
  %v151 = vpop.f32.mrb[0].mxu0
  %v152 = vpop.f32.mrb[0].mxu0
  %v153 = vadd.f32 %v43, %v152
  %v154 = vpop.f32.mrb[0].mxu0
  %155 = vmatprep.mubr.bf16.mxu0 0
  %156 = vmatmul.mubr.bf16.gmra.mrb[0].mxu0 %v60
  %v157 = vpop.f32.mrb[0].mxu0
  %v158 = vadd.f32 %v43, %v157
  %v159 = vpop.f32.mrb[0].mxu0
  %v160 = vpop.f32.mrb[0].mxu0
  %v161 = vadd.f32 %v43, %v160
  %v162 = vpop.f32.mrb[0].mxu0
  %163 = vmatprep.mubr.bf16.mxu0 0
  %164 = vmatmul.mubr.bf16.gmra.mrb[0].mxu0 %v61
  %v165 = vpop.f32.mrb[0].mxu0
  %v166 = vadd.f32 %v43, %v165
  %v167 = vpop.f32.mrb[0].mxu0
  %v168 = vpop.f32.mrb[0].mxu0
  %v169 = vadd.f32 %v43, %v168
  %v170 = vpop.f32.mrb[0].mxu0
  %171 = vmatprep.mubr.bf16.mxu0 0
  %172 = vmatmul.mubr.bf16.gmra.mrb[0].mxu0 %v62
  %v173 = vpop.f32.mrb[0].mxu0
  %v174 = vadd.f32 %v43, %v173
  %v175 = vpop.f32.mrb[0].mxu0
  %v176 = vpop.f32.mrb[0].mxu0
  %v177 = vpop.f32.mrb[0].mxu0
  %178 = vdwg.mxu0
  %v179 = vmax.f32 %v150, 0.0
  %v180 = vmax.f32 %v153, 0.0
  %v181 = vmax.f32 %v158, 0.0
  %v182 = vmax.f32 %v161, 0.0
  %v183 = vmax.f32 %v166, 0.0
  %v184 = vmax.f32 %v169, 0.0
  %v185 = vmax.f32 %v174, 0.0
  %v186 = vpack.c.bf16 %v180, %v179
  %v187 = vpack.c.bf16 %v182, %v181
  %v188 = vpack.c.bf16 %v184, %v183
  %v189 = vpack.c.bf16 %v185, %v185
  %v194 = vunpack.c.l.b16 %v186
  %v195 = vunpack.c.h.b16 %v186
  %v196 = vunpack.c.l.b16 %v187
  %v197 = vunpack.c.h.b16 %v187
  %v198 = vunpack.c.l.b16 %v188
  %v199 = vunpack.c.h.b16 %v188
  %v200 = vunpack.c.l.b16 %v189
  %v201 = vpack.c.b16 %v194, %v194
  %v202 = vpack.c.b16 %v195, %v195
  %v203 = vpack.c.b16 %v196, %v196
  %v204 = vpack.c.b16 %v197, %v197
  %v205 = vpack.c.b16 %v198, %v198
  %v206 = vpack.c.b16 %v199, %v199
  %v207 = vpack.c.b16 %v200, %v200
  %215 = vst [vmem:[%s3] sm:$0xf] %v201
  %216 = vst [vmem:[%s3 + $0x4] sm:$0xf] %v202
  %217 = vst [vmem:[%s3 + $0x8] sm:$0xf] %v203
  %218 = vst [vmem:[%s3 + $0xc] sm:$0xf] %v204
  %219 = vst [vmem:[%s3 + $0x10] sm:$0xf] %v205
  %220 = vst [vmem:[%s3 + $0x14] sm:$0xf] %v206
  %221 = vst [vmem:[%s3 + $0x18] sm:$0xf] %v207
  // Predicated region
  $region14: #{forward.86} parent=0 // pred_check
    _
  $region15: #{forward.86} parent=0 // pred_check_branch
    %223 = sbr.rel (0) target = $region17
  $region16: #{forward.86} parent=0 // pred_region
    _
  $region17: #{forward.86} parent=0 // pred_fallthru
    _
  // Predicated region
  $region18: #{forward.86} parent=0 // pred_check
    _
  $region19: #{forward.86} parent=0 // pred_check_branch
    %225 = sbr.rel (0) target = $region21
  $region20: #{forward.86} parent=0 // pred_region
    _
  $region21: #{forward.86} parent=0 // pred_fallthru
    _

// kernel: forward.87
$region0: #{forward.87}
  #allocation0 [shape = 'u32[]', space=smem, size = 0x4, offset = 0x4, fixed_abs, tag = 'smem constant byte address 0x4 - core index']
  #allocation1 [shape = 'u32[144,128]{1,0:T(1,128)}', space=vmem, size = 0x12000, scoped, tag = 'internal scratch']
  %s0 = inlined_call_operand.vmem [shape: bf16[9,49,32], index: 0, kind: input, shape index: {}]
  %s1 = inlined_call_operand.vmem [shape: bf16[32,128], index: 1, kind: input, shape index: {}]
  %s2 = inlined_call_operand.vmem [shape: f32[1,128], index: 2, kind: input, shape index: {}]
  %s3 = inlined_call_operand.vmem [shape: bf16[49,128], index: 3, kind: output, shape index: {}]
  %s4 = sld [smem:[#allocation0]]
  $region22: #{forward.87} parent=0
    _
  %s6 = ssub.s32 1, %s4
  %s7 = scalar_select 0, %s6, %s4
  // Predicated region
  $region2: #{forward.87} parent=0 // pred_check
    _
  $region3: #{forward.87} parent=0 // pred_check_branch
    %9 = sbr.rel (0) target = $region5
  $region4: #{forward.87} parent=0 // pred_region
    _
  $region5: #{forward.87} parent=0 // pred_fallthru
    _
  // Predicated region
  $region6: #{forward.87} parent=0 // pred_check
    _
  $region7: #{forward.87} parent=0 // pred_check_branch
    %11 = sbr.rel (0) target = $region9
  $region8: #{forward.87} parent=0 // pred_region
    _
  $region9: #{forward.87} parent=0 // pred_fallthru
    _
  // Predicated region
  $region10: #{forward.87} parent=0 // pred_check
    _
  $region11: #{forward.87} parent=0 // pred_check_branch
    %13 = sbr.rel (0) target = $region13
  $region12: #{forward.87} parent=0 // pred_region
    _
  $region13: #{forward.87} parent=0 // pred_fallthru
    _
  %v15 = vld [vmem:[%s0] sm:$0xf]
  %v16 = vld [vmem:[%s0 + $0x4] sm:$0xf]
  %v17 = vld [vmem:[%s0 + $0x8] sm:$0xf]
  %v18 = vld [vmem:[%s0 + $0xc] sm:$0xf]
  %v19 = vld [vmem:[%s0 + $0x10] sm:$0xf]
  %v20 = vld [vmem:[%s0 + $0x14] sm:$0xf]
  %v21 = vld [vmem:[%s0 + $0x18] sm:$0x1]
  %v22 = vld [vmem:[%s0 + $0x1c] sm:$0xf]
  %v23 = vld [vmem:[%s0 + $0x20] sm:$0xf]
  %v24 = vld [vmem:[%s0 + $0x24] sm:$0xf]
  %v25 = vld [vmem:[%s0 + $0x28] sm:$0xf]
  %v26 = vld [vmem:[%s0 + $0x2c] sm:$0xf]
  %v27 = vld [vmem:[%s0 + $0x30] sm:$0xf]
  %v28 = vld [vmem:[%s0 + $0x34] sm:$0x1]
  %v29 = vld [vmem:[%s0 + $0x38] sm:$0xf]
  %v30 = vld [vmem:[%s0 + $0x3c] sm:$0xf]
  %v31 = vld [vmem:[%s0 + $0x40] sm:$0xf]
  %v32 = vld [vmem:[%s0 + $0x44] sm:$0xf]
  %v33 = vld [vmem:[%s0 + $0x48] sm:$0xf]
  %v34 = vld [vmem:[%s0 + $0x4c] sm:$0xf]
  %v35 = vld [vmem:[%s0 + $0x50] sm:$0x1]
  %v36 = vld [vmem:[%s0 + $0x54] sm:$0xf]
  %v37 = vld [vmem:[%s0 + $0x58] sm:$0xf]
  %v38 = vld [vmem:[%s0 + $0x5c] sm:$0xf]
  %v39 = vld [vmem:[%s0 + $0x60] sm:$0xf]
  %v40 = vld [vmem:[%s0 + $0x64] sm:$0xf]
  %v41 = vld [vmem:[%s0 + $0x68] sm:$0xf]
  %v42 = vld [vmem:[%s0 + $0x6c] sm:$0x1]
  %v43 = vld [vmem:[%s0 + $0x70] sm:$0xf]
  %v44 = vld [vmem:[%s0 + $0x74] sm:$0xf]
  %v45 = vld [vmem:[%s0 + $0x78] sm:$0xf]
  %v46 = vld [vmem:[%s0 + $0x7c] sm:$0xf]
  %v47 = vld [vmem:[%s0 + $0x80] sm:$0xf]
  %v48 = vld [vmem:[%s0 + $0x84] sm:$0xf]
  %v49 = vld [vmem:[%s0 + $0x88] sm:$0x1]
  %v50 = vld [vmem:[%s0 + $0x8c] sm:$0xf]
  %v51 = vld [vmem:[%s0 + $0x90] sm:$0xf]
  %v52 = vld [vmem:[%s0 + $0x94] sm:$0xf]
  %v53 = vld [vmem:[%s0 + $0x98] sm:$0xf]
  %v54 = vld [vmem:[%s0 + $0x9c] sm:$0xf]
  %v55 = vld [vmem:[%s0 + $0xa0] sm:$0xf]
  %v56 = vld [vmem:[%s0 + $0xa4] sm:$0x1]
  %v57 = vld [vmem:[%s0 + $0xa8] sm:$0xf]
  %v58 = vld [vmem:[%s0 + $0xac] sm:$0xf]
  %v59 = vld [vmem:[%s0 + $0xb0] sm:$0xf]
  %v60 = vld [vmem:[%s0 + $0xb4] sm:$0xf]
  %v61 = vld [vmem:[%s0 + $0xb8] sm:$0xf]
  %v62 = vld [vmem:[%s0 + $0xbc] sm:$0xf]
  %v63 = vld [vmem:[%s0 + $0xc0] sm:$0x1]
  %v64 = vld [vmem:[%s0 + $0xc4] sm:$0xf]
  %v65 = vld [vmem:[%s0 + $0xc8] sm:$0xf]
  %v66 = vld [vmem:[%s0 + $0xcc] sm:$0xf]
  %v67 = vld [vmem:[%s0 + $0xd0] sm:$0xf]
  %v68 = vld [vmem:[%s0 + $0xd4] sm:$0xf]
  %v69 = vld [vmem:[%s0 + $0xd8] sm:$0xf]
  %v70 = vld [vmem:[%s0 + $0xdc] sm:$0x1]
  %v71 = vld [vmem:[%s0 + $0xe0] sm:$0xf]
  %v72 = vld [vmem:[%s0 + $0xe4] sm:$0xf]
  %v73 = vld [vmem:[%s0 + $0xe8] sm:$0xf]
  %v74 = vld [vmem:[%s0 + $0xec] sm:$0xf]
  %v75 = vld [vmem:[%s0 + $0xf0] sm:$0xf]
  %v76 = vld [vmem:[%s0 + $0xf4] sm:$0xf]
  %v77 = vld [vmem:[%s0 + $0xf8] sm:$0x1]
  %v78 = vunpack.c.l.bf16 %v15
  %v79 = vunpack.c.l.bf16 %v16
  %v80 = vunpack.c.l.bf16 %v17
  %v81 = vunpack.c.l.bf16 %v18
  %v82 = vunpack.c.l.bf16 %v19
  %v83 = vunpack.c.l.bf16 %v20
  %v84 = vunpack.c.l.bf16 %v21
  %v85 = vunpack.c.l.bf16 %v22
  %v86 = vunpack.c.l.bf16 %v23
  %v87 = vunpack.c.l.bf16 %v24
  %v88 = vunpack.c.l.bf16 %v25
  %v89 = vunpack.c.l.bf16 %v26
  %v90 = vunpack.c.l.bf16 %v27
  %v91 = vunpack.c.l.bf16 %v28
  %v92 = vunpack.c.l.bf16 %v29
  %v93 = vunpack.c.l.bf16 %v30
  %v94 = vunpack.c.l.bf16 %v31
  %v95 = vunpack.c.l.bf16 %v32
  %v96 = vunpack.c.l.bf16 %v33
  %v97 = vunpack.c.l.bf16 %v34
  %v98 = vunpack.c.l.bf16 %v35
  %v99 = vunpack.c.l.bf16 %v36
  %v100 = vunpack.c.l.bf16 %v37
  %v101 = vunpack.c.l.bf16 %v38
  %v102 = vunpack.c.l.bf16 %v39
  %v103 = vunpack.c.l.bf16 %v40
  %v104 = vunpack.c.l.bf16 %v41
  %v105 = vunpack.c.l.bf16 %v42
  %v106 = vunpack.c.l.bf16 %v43
  %v107 = vunpack.c.l.bf16 %v44
  %v108 = vunpack.c.l.bf16 %v45
  %v109 = vunpack.c.l.bf16 %v46
  %v110 = vunpack.c.l.bf16 %v47
  %v111 = vunpack.c.l.bf16 %v48
  %v112 = vunpack.c.l.bf16 %v49
  %v113 = vunpack.c.l.bf16 %v50
  %v114 = vunpack.c.l.bf16 %v51
  %v115 = vunpack.c.l.bf16 %v52
  %v116 = vunpack.c.l.bf16 %v53
  %v117 = vunpack.c.l.bf16 %v54
  %v118 = vunpack.c.l.bf16 %v55
  %v119 = vunpack.c.l.bf16 %v56
  %v120 = vunpack.c.l.bf16 %v57
  %v121 = vunpack.c.l.bf16 %v58
  %v122 = vunpack.c.l.bf16 %v59
  %v123 = vunpack.c.l.bf16 %v60
  %v124 = vunpack.c.l.bf16 %v61
  %v125 = vunpack.c.l.bf16 %v62
  %v126 = vunpack.c.l.bf16 %v63
  %v127 = vunpack.c.l.bf16 %v64
  %v128 = vunpack.c.l.bf16 %v65
  %v129 = vunpack.c.l.bf16 %v66
  %v130 = vunpack.c.l.bf16 %v67
  %v131 = vunpack.c.l.bf16 %v68
  %v132 = vunpack.c.l.bf16 %v69
  %v133 = vunpack.c.l.bf16 %v70
  %v134 = vunpack.c.l.bf16 %v71
  %v135 = vunpack.c.l.bf16 %v72
  %v136 = vunpack.c.l.bf16 %v73
  %v137 = vunpack.c.l.bf16 %v74
  %v138 = vunpack.c.l.bf16 %v75
  %v139 = vunpack.c.l.bf16 %v76
  %v140 = vunpack.c.l.bf16 %v77
  %vm141 = vcmask 261120
  %v142 = vsel %vm141, %v78, 0.0
  %v143 = vsel %vm141, %v85, 0.0
  %v144 = vadd.f32 %v142, %v143
  %v145 = vsel %vm141, %v92, 0.0
  %v146 = vadd.f32 %v144, %v145
  %v147 = vsel %vm141, %v99, 0.0
  %v148 = vadd.f32 %v146, %v147
  %v149 = vsel %vm141, %v106, 0.0
  %v150 = vadd.f32 %v148, %v149
  %v151 = vsel %vm141, %v113, 0.0
  %v152 = vadd.f32 %v150, %v151
  %v153 = vsel %vm141, %v120, 0.0
  %v154 = vadd.f32 %v152, %v153
  %v155 = vsel %vm141, %v127, 0.0
  %v156 = vadd.f32 %v154, %v155
  %v157 = vsel %vm141, %v134, 0.0
  %v158 = vadd.f32 %v156, %v157
  %v159 = vsel %vm141, %v79, 0.0
  %v160 = vsel %vm141, %v86, 0.0
  %v161 = vadd.f32 %v159, %v160
  %v162 = vsel %vm141, %v93, 0.0
  %v163 = vadd.f32 %v161, %v162
  %v164 = vsel %vm141, %v100, 0.0
  %v165 = vadd.f32 %v163, %v164
  %v166 = vsel %vm141, %v107, 0.0
  %v167 = vadd.f32 %v165, %v166
  %v168 = vsel %vm141, %v114, 0.0
  %v169 = vadd.f32 %v167, %v168
  %v170 = vsel %vm141, %v121, 0.0
  %v171 = vadd.f32 %v169, %v170
  %v172 = vsel %vm141, %v128, 0.0
  %v173 = vadd.f32 %v171, %v172
  %v174 = vsel %vm141, %v135, 0.0
  %v175 = vadd.f32 %v173, %v174
  %v176 = vsel %vm141, %v80, 0.0
  %v177 = vsel %vm141, %v87, 0.0
  %v178 = vadd.f32 %v176, %v177
  %v179 = vsel %vm141, %v94, 0.0
  %v180 = vadd.f32 %v178, %v179
  %v181 = vsel %vm141, %v101, 0.0
  %v182 = vadd.f32 %v180, %v181
  %v183 = vsel %vm141, %v108, 0.0
  %v184 = vadd.f32 %v182, %v183
  %v185 = vsel %vm141, %v115, 0.0
  %v186 = vadd.f32 %v184, %v185
  %v187 = vsel %vm141, %v122, 0.0
  %v188 = vadd.f32 %v186, %v187
  %v189 = vsel %vm141, %v129, 0.0
  %v190 = vadd.f32 %v188, %v189
  %v191 = vsel %vm141, %v136, 0.0
  %v192 = vadd.f32 %v190, %v191
  %v193 = vsel %vm141, %v81, 0.0
  %v194 = vsel %vm141, %v88, 0.0
  %v195 = vadd.f32 %v193, %v194
  %v196 = vsel %vm141, %v95, 0.0
  %v197 = vadd.f32 %v195, %v196
  %v198 = vsel %vm141, %v102, 0.0
  %v199 = vadd.f32 %v197, %v198
  %v200 = vsel %vm141, %v109, 0.0
  %v201 = vadd.f32 %v199, %v200
  %v202 = vsel %vm141, %v116, 0.0
  %v203 = vadd.f32 %v201, %v202
  %v204 = vsel %vm141, %v123, 0.0
  %v205 = vadd.f32 %v203, %v204
  %v206 = vsel %vm141, %v130, 0.0
  %v207 = vadd.f32 %v205, %v206
  %v208 = vsel %vm141, %v137, 0.0
  %v209 = vadd.f32 %v207, %v208
  %v210 = vsel %vm141, %v82, 0.0
  %v211 = vsel %vm141, %v89, 0.0
  %v212 = vadd.f32 %v210, %v211
  %v213 = vsel %vm141, %v96, 0.0
  %v214 = vadd.f32 %v212, %v213
  %v215 = vsel %vm141, %v103, 0.0
  %v216 = vadd.f32 %v214, %v215
  %v217 = vsel %vm141, %v110, 0.0
  %v218 = vadd.f32 %v216, %v217
  %v219 = vsel %vm141, %v117, 0.0
  %v220 = vadd.f32 %v218, %v219
  %v221 = vsel %vm141, %v124, 0.0
  %v222 = vadd.f32 %v220, %v221
  %v223 = vsel %vm141, %v131, 0.0
  %v224 = vadd.f32 %v222, %v223
  %v225 = vsel %vm141, %v138, 0.0
  %v226 = vadd.f32 %v224, %v225
  %v227 = vsel %vm141, %v83, 0.0
  %v228 = vsel %vm141, %v90, 0.0
  %v229 = vadd.f32 %v227, %v228
  %v230 = vsel %vm141, %v97, 0.0
  %v231 = vadd.f32 %v229, %v230
  %v232 = vsel %vm141, %v104, 0.0
  %v233 = vadd.f32 %v231, %v232
  %v234 = vsel %vm141, %v111, 0.0
  %v235 = vadd.f32 %v233, %v234
  %v236 = vsel %vm141, %v118, 0.0
  %v237 = vadd.f32 %v235, %v236
  %v238 = vsel %vm141, %v125, 0.0
  %v239 = vadd.f32 %v237, %v238
  %v240 = vsel %vm141, %v132, 0.0
  %v241 = vadd.f32 %v239, %v240
  %v242 = vsel %vm141, %v139, 0.0
  %v243 = vadd.f32 %v241, %v242
  %vm244 = vcmask 253952
  %v245 = vsel %vm244, %v84, 0.0
  %v246 = vsel %vm244, %v91, 0.0
  %v247 = vadd.f32 %v245, %v246
  %v248 = vsel %vm244, %v98, 0.0
  %v249 = vadd.f32 %v247, %v248
  %v250 = vsel %vm244, %v105, 0.0
  %v251 = vadd.f32 %v249, %v250
  %v252 = vsel %vm244, %v112, 0.0
  %v253 = vadd.f32 %v251, %v252
  %v254 = vsel %vm244, %v119, 0.0
  %v255 = vadd.f32 %v253, %v254
  %v256 = vsel %vm244, %v126, 0.0
  %v257 = vadd.f32 %v255, %v256
  %v258 = vsel %vm244, %v133, 0.0
  %v259 = vadd.f32 %v257, %v258
  %v260 = vsel %vm244, %v140, 0.0
  %v261 = vadd.f32 %v259, %v260
  %v262 = vmul.f32 %v158, 0.11111111
  %v263 = vmul.f32 %v175, 0.11111111
  %v264 = vmul.f32 %v192, 0.11111111
  %v265 = vmul.f32 %v209, 0.11111111
  %v266 = vmul.f32 %v226, 0.11111111
  %v267 = vmul.f32 %v243, 0.11111111
  %v268 = vmul.f32 %v261, 0.11111111
  %v269 = vpack.c.bf16 %v263, %v262
  %v270 = vpack.c.bf16 %v265, %v264
  %v271 = vpack.c.bf16 %v267, %v266
  %v272 = vpack.c.bf16 %v268, %v268
  %v273 = vld [vmem:[%s1] sm:$0xf]
  %v274 = vld [vmem:[%s1 + $0x4] sm:$0xf]
  %v275 = vld [vmem:[%s1 + $0x8] sm:$0xf]
  %v276 = vld [vmem:[%s1 + $0xc] sm:$0xf]
  %v277 = vld [vmem:[%s2] sm:$0x1]
  %v279 = vlaneseq
  %v280 = vshrl.u32 %v279, 7
  %v281 = vsub.s32 0, %v280
  %v282 = vrot.slane %v277, %v281
  %v288 = vunpack.c.l.b16 %v273
  %v289 = vunpack.c.l.b16 %v274
  %v290 = vunpack.c.l.b16 %v275
  %v291 = vunpack.c.l.b16 %v276
  %v292 = vpack.c.b16 %v289, %v288
  %v293 = vpack.c.b16 %v291, %v290
  %v297 = vsel %vm141, %v269, 0
  %v300 = vsel %vm141, %v270, 0
  %v303 = vsel %vm141, %v271, 0
  %v306 = vsel %vm141, %v272, 0
  %308 = vmatprep.subr.bf16.mxu0 0
  %309 = vmatpush1.bf16.msra.mxu0 %v292
  %310 = vmatprep.subr.bf16.mxu0 0
  %311 = vmatpush1.bf16.msra.mxu0 %v293
  %312 = vmatprep.subr.bf16.mxu0 0
  %313 = vmatpush1.bf16.msra.mxu0 0
  %314 = vmatprep.subr.bf16.mxu0 0
  %315 = vmatpush1.bf16.msra.mxu0 0
  %316 = vmatprep.subr.bf16.mxu0 0
  %317 = vmatpush1.bf16.msra.mxu0 0
  %318 = vmatprep.subr.bf16.mxu0 0
  %319 = vmatpush1.bf16.msra.mxu0 0
  %320 = vmatprep.subr.bf16.mxu0 0
  %321 = vmatpush1.bf16.msra.mxu0 0
  %322 = vmatprep.subr.bf16.mxu0 0
  %323 = vmatpush1.bf16.msra.mxu0 0
  %324 = vmatprep.subr.bf16.mxu0 0
  %325 = vmatpush1.bf16.msra.mxu0 0
  %326 = vmatprep.subr.bf16.mxu0 0
  %327 = vmatpush1.bf16.msra.mxu0 0
  %328 = vmatprep.subr.bf16.mxu0 0
  %329 = vmatpush1.bf16.msra.mxu0 0
  %330 = vmatprep.subr.bf16.mxu0 0
  %331 = vmatpush1.bf16.msra.mxu0 0
  %332 = vmatprep.subr.bf16.mxu0 0
  %333 = vmatpush1.bf16.msra.mxu0 0
  %334 = vmatprep.subr.bf16.mxu0 0
  %335 = vmatpush1.bf16.msra.mxu0 0
  %336 = vmatprep.subr.bf16.mxu0 0
  %337 = vmatpush1.bf16.msra.mxu0 0
  %338 = vmatprep.subr.bf16.mxu0 0
  %339 = vmatpush1.bf16.msra.mxu0 0
  %340 = vmatprep.mubr.bf16.mxu0 0
  %341 = vmatmul.mubr.bf16.gmra.mrb[0].mxu0 %v297
  %v342 = vpop.f32.mrb[0].mxu0
  %v343 = vadd.f32 %v282, %v342
  %v344 = vpop.f32.mrb[0].mxu0
  %v345 = vpop.f32.mrb[0].mxu0
  %v346 = vadd.f32 %v282, %v345
  %v347 = vpop.f32.mrb[0].mxu0
  %348 = vmatprep.mubr.bf16.mxu0 0
  %349 = vmatmul.mubr.bf16.gmra.mrb[0].mxu0 %v300
  %v350 = vpop.f32.mrb[0].mxu0
  %v351 = vadd.f32 %v282, %v350
  %v352 = vpop.f32.mrb[0].mxu0
  %v353 = vpop.f32.mrb[0].mxu0
  %v354 = vadd.f32 %v282, %v353
  %v355 = vpop.f32.mrb[0].mxu0
  %356 = vmatprep.mubr.bf16.mxu0 0
  %357 = vmatmul.mubr.bf16.gmra.mrb[0].mxu0 %v303
  %v358 = vpop.f32.mrb[0].mxu0
  %v359 = vadd.f32 %v282, %v358
  %v360 = vpop.f32.mrb[0].mxu0
  %v361 = vpop.f32.mrb[0].mxu0
  %v362 = vadd.f32 %v282, %v361
  %v363 = vpop.f32.mrb[0].mxu0
  %364 = vmatprep.mubr.bf16.mxu0 0
  %365 = vmatmul.mubr.bf16.gmra.mrb[0].mxu0 %v306
  %v366 = vpop.f32.mrb[0].mxu0
  %v367 = vadd.f32 %v282, %v366
  %v368 = vpop.f32.mrb[0].mxu0
  %v369 = vpop.f32.mrb[0].mxu0
  %v370 = vpop.f32.mrb[0].mxu0
  %371 = vdwg.mxu0
  %v372 = vmax.f32 %v343, 0.0
  %v373 = vmax.f32 %v346, 0.0
  %v374 = vmax.f32 %v351, 0.0
  %v375 = vmax.f32 %v354, 0.0
  %v376 = vmax.f32 %v359, 0.0
  %v377 = vmax.f32 %v362, 0.0
  %v378 = vmax.f32 %v367, 0.0
  %v379 = vpack.c.bf16 %v373, %v372
  %v380 = vpack.c.bf16 %v375, %v374
  %v381 = vpack.c.bf16 %v377, %v376
  %v382 = vpack.c.bf16 %v378, %v378
  %v387 = vunpack.c.l.b16 %v379
  %v388 = vunpack.c.h.b16 %v379
  %v389 = vunpack.c.l.b16 %v380
  %v390 = vunpack.c.h.b16 %v380
  %v391 = vunpack.c.l.b16 %v381
  %v392 = vunpack.c.h.b16 %v381
  %v393 = vunpack.c.l.b16 %v382
  %v394 = vpack.c.b16 %v387, %v387
  %v395 = vpack.c.b16 %v388, %v388
  %v396 = vpack.c.b16 %v389, %v389
  %v397 = vpack.c.b16 %v390, %v390
  %v398 = vpack.c.b16 %v391, %v391
  %v399 = vpack.c.b16 %v392, %v392
  %v400 = vpack.c.b16 %v393, %v393
  %408 = vst [vmem:[%s3] sm:$0xf] %v394
  %409 = vst [vmem:[%s3 + $0x4] sm:$0xf] %v395
  %410 = vst [vmem:[%s3 + $0x8] sm:$0xf] %v396
  %411 = vst [vmem:[%s3 + $0xc] sm:$0xf] %v397
  %412 = vst [vmem:[%s3 + $0x10] sm:$0xf] %v398
  %413 = vst [vmem:[%s3 + $0x14] sm:$0xf] %v399
  %vm414 = vcmask 1040384
  %vm415 = vsmask.f32 256
  %vm416 = vmand %vm414, %vm415
  %v417 = vld [vmem:[%s3 + $0x18] sm:$0x1]
  %v418 = vsel %vm416, %v400, %v417
  %419 = vst [vmem:[%s3 + $0x18] sm:$0x1] %v418
  // Predicated region
  $region14: #{forward.87} parent=0 // pred_check
    _
  $region15: #{forward.87} parent=0 // pred_check_branch
    %421 = sbr.rel (0) target = $region17
  $region16: #{forward.87} parent=0 // pred_region
    _
  $region17: #{forward.87} parent=0 // pred_fallthru
    _
  // Predicated region
  $region18: #{forward.87} parent=0 // pred_check
    _
  $region19: #{forward.87} parent=0 // pred_check_branch
    %423 = sbr.rel (0) target = $region21
  $region20: #{forward.87} parent=0 // pred_region
    _
  $region21: #{forward.87} parent=0 // pred_fallthru
    _

// kernel: forward.93
$region0: #{forward.93}
  #allocation0 [shape = 'u32[]', space=smem, size = 0x4, offset = 0x4, fixed_abs, tag = 'smem constant byte address 0x4 - core index']
  #allocation1 [shape = 'u32[144,128]{1,0:T(1,128)}', space=vmem, size = 0x12000, scoped, tag = 'internal scratch']
  %s0 = inlined_call_operand.vmem [shape: bf16[56,64], index: 0, kind: input, shape index: {}]
  %s1 = inlined_call_operand.vmem [shape: bf16[64,128], index: 1, kind: input, shape index: {}]
  %s2 = inlined_call_operand.vmem [shape: f32[1,128], index: 2, kind: input, shape index: {}]
  %s3 = inlined_call_operand.vmem [shape: bf16[56,128], index: 3, kind: output, shape index: {}]
  %s4 = sld [smem:[#allocation0]]
  $region22: #{forward.93} parent=0
    _
  %s6 = ssub.s32 1, %s4
  %s7 = scalar_select 0, %s6, %s4
  // Predicated region
  $region2: #{forward.93} parent=0 // pred_check
    _
  $region3: #{forward.93} parent=0 // pred_check_branch
    %9 = sbr.rel (0) target = $region5
  $region4: #{forward.93} parent=0 // pred_region
    _
  $region5: #{forward.93} parent=0 // pred_fallthru
    _
  // Predicated region
  $region6: #{forward.93} parent=0 // pred_check
    _
  $region7: #{forward.93} parent=0 // pred_check_branch
    %11 = sbr.rel (0) target = $region9
  $region8: #{forward.93} parent=0 // pred_region
    _
  $region9: #{forward.93} parent=0 // pred_fallthru
    _
  // Predicated region
  $region10: #{forward.93} parent=0 // pred_check
    _
  $region11: #{forward.93} parent=0 // pred_check_branch
    %13 = sbr.rel (0) target = $region13
  $region12: #{forward.93} parent=0 // pred_region
    _
  $region13: #{forward.93} parent=0 // pred_fallthru
    _
  %v15 = vld [vmem:[%s0] sm:$0xf]
  %v16 = vld [vmem:[%s0 + $0x4] sm:$0xf]
  %v17 = vld [vmem:[%s0 + $0x8] sm:$0xf]
  %v18 = vld [vmem:[%s0 + $0xc] sm:$0xf]
  %v19 = vld [vmem:[%s0 + $0x10] sm:$0xf]
  %v20 = vld [vmem:[%s0 + $0x14] sm:$0xf]
  %v21 = vld [vmem:[%s0 + $0x18] sm:$0xf]
  %v22 = vld [vmem:[%s1] sm:$0xf]
  %v23 = vld [vmem:[%s1 + $0x4] sm:$0xf]
  %v24 = vld [vmem:[%s1 + $0x8] sm:$0xf]
  %v25 = vld [vmem:[%s1 + $0xc] sm:$0xf]
  %v26 = vld [vmem:[%s1 + $0x10] sm:$0xf]
  %v27 = vld [vmem:[%s1 + $0x14] sm:$0xf]
  %v28 = vld [vmem:[%s1 + $0x18] sm:$0xf]
  %v29 = vld [vmem:[%s1 + $0x1c] sm:$0xf]
  %v30 = vld [vmem:[%s2] sm:$0x1]
  %v32 = vlaneseq
  %v33 = vshrl.u32 %v32, 7
  %v34 = vsub.s32 0, %v33
  %v35 = vrot.slane %v30, %v34
  %v44 = vunpack.c.l.b16 %v15
  %v45 = vunpack.c.l.b16 %v16
  %v46 = vunpack.c.l.b16 %v17
  %v47 = vunpack.c.l.b16 %v18
  %v48 = vunpack.c.l.b16 %v19
  %v49 = vunpack.c.l.b16 %v20
  %v50 = vunpack.c.l.b16 %v21
  %v51 = vpack.c.b16 %v45, %v44
  %v52 = vpack.c.b16 %v47, %v46
  %v53 = vpack.c.b16 %v49, %v48
  %v54 = vpack.c.b16 %v50, %v50
  %v63 = vunpack.c.l.b16 %v22
  %v64 = vunpack.c.l.b16 %v23
  %v65 = vunpack.c.l.b16 %v24
  %v66 = vunpack.c.l.b16 %v25
  %v67 = vunpack.c.l.b16 %v26
  %v68 = vunpack.c.l.b16 %v27
  %v69 = vunpack.c.l.b16 %v28
  %v70 = vunpack.c.l.b16 %v29
  %v71 = vpack.c.b16 %v64, %v63
  %v72 = vpack.c.b16 %v66, %v65
  %v73 = vpack.c.b16 %v68, %v67
  %v74 = vpack.c.b16 %v70, %v69
  %vm79 = vcmask 523264
  %v81 = vsel %vm79, %v51, 0
  %v84 = vsel %vm79, %v52, 0
  %v87 = vsel %vm79, %v53, 0
  %v90 = vsel %vm79, %v54, 0
  %92 = vmatprep.subr.bf16.mxu0 0
  %93 = vmatpush1.bf16.msra.mxu0 %v71
  %94 = vmatprep.subr.bf16.mxu0 0
  %95 = vmatpush1.bf16.msra.mxu0 %v72
  %96 = vmatprep.subr.bf16.mxu0 0
  %97 = vmatpush1.bf16.msra.mxu0 %v73
  %98 = vmatprep.subr.bf16.mxu0 0
  %99 = vmatpush1.bf16.msra.mxu0 %v74
  %100 = vmatprep.subr.bf16.mxu0 0
  %101 = vmatpush1.bf16.msra.mxu0 0
  %102 = vmatprep.subr.bf16.mxu0 0
  %103 = vmatpush1.bf16.msra.mxu0 0
  %104 = vmatprep.subr.bf16.mxu0 0
  %105 = vmatpush1.bf16.msra.mxu0 0
  %106 = vmatprep.subr.bf16.mxu0 0
  %107 = vmatpush1.bf16.msra.mxu0 0
  %108 = vmatprep.subr.bf16.mxu0 0
  %109 = vmatpush1.bf16.msra.mxu0 0
  %110 = vmatprep.subr.bf16.mxu0 0
  %111 = vmatpush1.bf16.msra.mxu0 0
  %112 = vmatprep.subr.bf16.mxu0 0
  %113 = vmatpush1.bf16.msra.mxu0 0
  %114 = vmatprep.subr.bf16.mxu0 0
  %115 = vmatpush1.bf16.msra.mxu0 0
  %116 = vmatprep.subr.bf16.mxu0 0
  %117 = vmatpush1.bf16.msra.mxu0 0
  %118 = vmatprep.subr.bf16.mxu0 0
  %119 = vmatpush1.bf16.msra.mxu0 0
  %120 = vmatprep.subr.bf16.mxu0 0
  %121 = vmatpush1.bf16.msra.mxu0 0
  %122 = vmatprep.subr.bf16.mxu0 0
  %123 = vmatpush1.bf16.msra.mxu0 0
  %124 = vmatprep.mubr.bf16.mxu0 0
  %125 = vmatmul.mubr.bf16.gmra.mrb[0].mxu0 %v81
  %v126 = vpop.f32.mrb[0].mxu0
  %v127 = vadd.f32 %v35, %v126
  %v128 = vpop.f32.mrb[0].mxu0
  %v129 = vpop.f32.mrb[0].mxu0
  %v130 = vadd.f32 %v35, %v129
  %v131 = vpop.f32.mrb[0].mxu0
  %132 = vmatprep.mubr.bf16.mxu0 0
  %133 = vmatmul.mubr.bf16.gmra.mrb[0].mxu0 %v84
  %v134 = vpop.f32.mrb[0].mxu0
  %v135 = vadd.f32 %v35, %v134
  %v136 = vpop.f32.mrb[0].mxu0
  %v137 = vpop.f32.mrb[0].mxu0
  %v138 = vadd.f32 %v35, %v137
  %v139 = vpop.f32.mrb[0].mxu0
  %140 = vmatprep.mubr.bf16.mxu0 0
  %141 = vmatmul.mubr.bf16.gmra.mrb[0].mxu0 %v87
  %v142 = vpop.f32.mrb[0].mxu0
  %v143 = vadd.f32 %v35, %v142
  %v144 = vpop.f32.mrb[0].mxu0
  %v145 = vpop.f32.mrb[0].mxu0
  %v146 = vadd.f32 %v35, %v145
  %v147 = vpop.f32.mrb[0].mxu0
  %148 = vmatprep.mubr.bf16.mxu0 0
  %149 = vmatmul.mubr.bf16.gmra.mrb[0].mxu0 %v90
  %v150 = vpop.f32.mrb[0].mxu0
  %v151 = vadd.f32 %v35, %v150
  %v152 = vpop.f32.mrb[0].mxu0
  %v153 = vpop.f32.mrb[0].mxu0
  %v154 = vpop.f32.mrb[0].mxu0
  %155 = vdwg.mxu0
  %v156 = vmax.f32 %v127, 0.0
  %v157 = vmax.f32 %v130, 0.0
  %v158 = vmax.f32 %v135, 0.0
  %v159 = vmax.f32 %v138, 0.0
  %v160 = vmax.f32 %v143, 0.0
  %v161 = vmax.f32 %v146, 0.0
  %v162 = vmax.f32 %v151, 0.0
  %v163 = vpack.c.bf16 %v157, %v156
  %v164 = vpack.c.bf16 %v159, %v158
  %v165 = vpack.c.bf16 %v161, %v160
  %v166 = vpack.c.bf16 %v162, %v162
  %v171 = vunpack.c.l.b16 %v163
  %v172 = vunpack.c.h.b16 %v163
  %v173 = vunpack.c.l.b16 %v164
  %v174 = vunpack.c.h.b16 %v164
  %v175 = vunpack.c.l.b16 %v165
  %v176 = vunpack.c.h.b16 %v165
  %v177 = vunpack.c.l.b16 %v166
  %v178 = vpack.c.b16 %v171, %v171
  %v179 = vpack.c.b16 %v172, %v172
  %v180 = vpack.c.b16 %v173, %v173
  %v181 = vpack.c.b16 %v174, %v174
  %v182 = vpack.c.b16 %v175, %v175
  %v183 = vpack.c.b16 %v176, %v176
  %v184 = vpack.c.b16 %v177, %v177
  %192 = vst [vmem:[%s3] sm:$0xf] %v178
  %193 = vst [vmem:[%s3 + $0x4] sm:$0xf] %v179
  %194 = vst [vmem:[%s3 + $0x8] sm:$0xf] %v180
  %195 = vst [vmem:[%s3 + $0xc] sm:$0xf] %v181
  %196 = vst [vmem:[%s3 + $0x10] sm:$0xf] %v182
  %197 = vst [vmem:[%s3 + $0x14] sm:$0xf] %v183
  %198 = vst [vmem:[%s3 + $0x18] sm:$0xf] %v184
  // Predicated region
  $region14: #{forward.93} parent=0 // pred_check
    _
  $region15: #{forward.93} parent=0 // pred_check_branch
    %200 = sbr.rel (0) target = $region17
  $region16: #{forward.93} parent=0 // pred_region
    _
  $region17: #{forward.93} parent=0 // pred_fallthru
    _
  // Predicated region
  $region18: #{forward.93} parent=0 // pred_check
    _
  $region19: #{forward.93} parent=0 // pred_check_branch
    %202 = sbr.rel (0) target = $region21
  $region20: #{forward.93} parent=0 // pred_region
    _
  $region21: #{forward.93} parent=0 // pred_fallthru
    _

// kernel: forward.97
$region0: #{forward.97}
  #allocation0 [shape = 'u32[]', space=smem, size = 0x4, offset = 0x4, fixed_abs, tag = 'smem constant byte address 0x4 - core index']
  #allocation1 [shape = 'u32[144,128]{1,0:T(1,128)}', space=vmem, size = 0x12000, scoped, tag = 'internal scratch']
  %s0 = inlined_call_operand.vmem [shape: bf16[9,49,64], index: 0, kind: input, shape index: {}]
  %s1 = inlined_call_operand.vmem [shape: bf16[64,128], index: 1, kind: input, shape index: {}]
  %s2 = inlined_call_operand.vmem [shape: f32[1,128], index: 2, kind: input, shape index: {}]
  %s3 = inlined_call_operand.vmem [shape: bf16[49,128], index: 3, kind: output, shape index: {}]
  %s4 = sld [smem:[#allocation0]]
  $region22: #{forward.97} parent=0
    _
  %s6 = ssub.s32 1, %s4
  %s7 = scalar_select 0, %s6, %s4
  // Predicated region
  $region2: #{forward.97} parent=0 // pred_check
    _
  $region3: #{forward.97} parent=0 // pred_check_branch
    %9 = sbr.rel (0) target = $region5
  $region4: #{forward.97} parent=0 // pred_region
    _
  $region5: #{forward.97} parent=0 // pred_fallthru
    _
  // Predicated region
  $region6: #{forward.97} parent=0 // pred_check
    _
  $region7: #{forward.97} parent=0 // pred_check_branch
    %11 = sbr.rel (0) target = $region9
  $region8: #{forward.97} parent=0 // pred_region
    _
  $region9: #{forward.97} parent=0 // pred_fallthru
    _
  // Predicated region
  $region10: #{forward.97} parent=0 // pred_check
    _
  $region11: #{forward.97} parent=0 // pred_check_branch
    %13 = sbr.rel (0) target = $region13
  $region12: #{forward.97} parent=0 // pred_region
    _
  $region13: #{forward.97} parent=0 // pred_fallthru
    _
  %v15 = vld [vmem:[%s0] sm:$0xf]
  %v16 = vld [vmem:[%s0 + $0x4] sm:$0xf]
  %v17 = vld [vmem:[%s0 + $0x8] sm:$0xf]
  %v18 = vld [vmem:[%s0 + $0xc] sm:$0xf]
  %v19 = vld [vmem:[%s0 + $0x10] sm:$0xf]
  %v20 = vld [vmem:[%s0 + $0x14] sm:$0xf]
  %v21 = vld [vmem:[%s0 + $0x18] sm:$0x1]
  %v22 = vld [vmem:[%s0 + $0x1c] sm:$0xf]
  %v23 = vld [vmem:[%s0 + $0x20] sm:$0xf]
  %v24 = vld [vmem:[%s0 + $0x24] sm:$0xf]
  %v25 = vld [vmem:[%s0 + $0x28] sm:$0xf]
  %v26 = vld [vmem:[%s0 + $0x2c] sm:$0xf]
  %v27 = vld [vmem:[%s0 + $0x30] sm:$0xf]
  %v28 = vld [vmem:[%s0 + $0x34] sm:$0x1]
  %v29 = vld [vmem:[%s0 + $0x38] sm:$0xf]
  %v30 = vld [vmem:[%s0 + $0x3c] sm:$0xf]
  %v31 = vld [vmem:[%s0 + $0x40] sm:$0xf]
  %v32 = vld [vmem:[%s0 + $0x44] sm:$0xf]
  %v33 = vld [vmem:[%s0 + $0x48] sm:$0xf]
  %v34 = vld [vmem:[%s0 + $0x4c] sm:$0xf]
  %v35 = vld [vmem:[%s0 + $0x50] sm:$0x1]
  %v36 = vld [vmem:[%s0 + $0x54] sm:$0xf]
  %v37 = vld [vmem:[%s0 + $0x58] sm:$0xf]
  %v38 = vld [vmem:[%s0 + $0x5c] sm:$0xf]
  %v39 = vld [vmem:[%s0 + $0x60] sm:$0xf]
  %v40 = vld [vmem:[%s0 + $0x64] sm:$0xf]
  %v41 = vld [vmem:[%s0 + $0x68] sm:$0xf]
  %v42 = vld [vmem:[%s0 + $0x6c] sm:$0x1]
  %v43 = vld [vmem:[%s0 + $0x70] sm:$0xf]
  %v44 = vld [vmem:[%s0 + $0x74] sm:$0xf]
  %v45 = vld [vmem:[%s0 + $0x78] sm:$0xf]
  %v46 = vld [vmem:[%s0 + $0x7c] sm:$0xf]
  %v47 = vld [vmem:[%s0 + $0x80] sm:$0xf]
  %v48 = vld [vmem:[%s0 + $0x84] sm:$0xf]
  %v49 = vld [vmem:[%s0 + $0x88] sm:$0x1]
  %v50 = vld [vmem:[%s0 + $0x8c] sm:$0xf]
  %v51 = vld [vmem:[%s0 + $0x90] sm:$0xf]
  %v52 = vld [vmem:[%s0 + $0x94] sm:$0xf]
  %v53 = vld [vmem:[%s0 + $0x98] sm:$0xf]
  %v54 = vld [vmem:[%s0 + $0x9c] sm:$0xf]
  %v55 = vld [vmem:[%s0 + $0xa0] sm:$0xf]
  %v56 = vld [vmem:[%s0 + $0xa4] sm:$0x1]
  %v57 = vld [vmem:[%s0 + $0xa8] sm:$0xf]
  %v58 = vld [vmem:[%s0 + $0xac] sm:$0xf]
  %v59 = vld [vmem:[%s0 + $0xb0] sm:$0xf]
  %v60 = vld [vmem:[%s0 + $0xb4] sm:$0xf]
  %v61 = vld [vmem:[%s0 + $0xb8] sm:$0xf]
  %v62 = vld [vmem:[%s0 + $0xbc] sm:$0xf]
  %v63 = vld [vmem:[%s0 + $0xc0] sm:$0x1]
  %v64 = vld [vmem:[%s0 + $0xc4] sm:$0xf]
  %v65 = vld [vmem:[%s0 + $0xc8] sm:$0xf]
  %v66 = vld [vmem:[%s0 + $0xcc] sm:$0xf]
  %v67 = vld [vmem:[%s0 + $0xd0] sm:$0xf]
  %v68 = vld [vmem:[%s0 + $0xd4] sm:$0xf]
  %v69 = vld [vmem:[%s0 + $0xd8] sm:$0xf]
  %v70 = vld [vmem:[%s0 + $0xdc] sm:$0x1]
  %v71 = vld [vmem:[%s0 + $0xe0] sm:$0xf]
  %v72 = vld [vmem:[%s0 + $0xe4] sm:$0xf]
  %v73 = vld [vmem:[%s0 + $0xe8] sm:$0xf]
  %v74 = vld [vmem:[%s0 + $0xec] sm:$0xf]
  %v75 = vld [vmem:[%s0 + $0xf0] sm:$0xf]
  %v76 = vld [vmem:[%s0 + $0xf4] sm:$0xf]
  %v77 = vld [vmem:[%s0 + $0xf8] sm:$0x1]
  %v78 = vunpack.c.l.bf16 %v15
  %v79 = vunpack.c.l.bf16 %v16
  %v80 = vunpack.c.l.bf16 %v17
  %v81 = vunpack.c.l.bf16 %v18
  %v82 = vunpack.c.l.bf16 %v19
  %v83 = vunpack.c.l.bf16 %v20
  %v84 = vunpack.c.l.bf16 %v21
  %v85 = vunpack.c.l.bf16 %v22
  %v86 = vunpack.c.l.bf16 %v23
  %v87 = vunpack.c.l.bf16 %v24
  %v88 = vunpack.c.l.bf16 %v25
  %v89 = vunpack.c.l.bf16 %v26
  %v90 = vunpack.c.l.bf16 %v27
  %v91 = vunpack.c.l.bf16 %v28
  %v92 = vunpack.c.l.bf16 %v29
  %v93 = vunpack.c.l.bf16 %v30
  %v94 = vunpack.c.l.bf16 %v31
  %v95 = vunpack.c.l.bf16 %v32
  %v96 = vunpack.c.l.bf16 %v33
  %v97 = vunpack.c.l.bf16 %v34
  %v98 = vunpack.c.l.bf16 %v35
  %v99 = vunpack.c.l.bf16 %v36
  %v100 = vunpack.c.l.bf16 %v37
  %v101 = vunpack.c.l.bf16 %v38
  %v102 = vunpack.c.l.bf16 %v39
  %v103 = vunpack.c.l.bf16 %v40
  %v104 = vunpack.c.l.bf16 %v41
  %v105 = vunpack.c.l.bf16 %v42
  %v106 = vunpack.c.l.bf16 %v43
  %v107 = vunpack.c.l.bf16 %v44
  %v108 = vunpack.c.l.bf16 %v45
  %v109 = vunpack.c.l.bf16 %v46
  %v110 = vunpack.c.l.bf16 %v47
  %v111 = vunpack.c.l.bf16 %v48
  %v112 = vunpack.c.l.bf16 %v49
  %v113 = vunpack.c.l.bf16 %v50
  %v114 = vunpack.c.l.bf16 %v51
  %v115 = vunpack.c.l.bf16 %v52
  %v116 = vunpack.c.l.bf16 %v53
  %v117 = vunpack.c.l.bf16 %v54
  %v118 = vunpack.c.l.bf16 %v55
  %v119 = vunpack.c.l.bf16 %v56
  %v120 = vunpack.c.l.bf16 %v57
  %v121 = vunpack.c.l.bf16 %v58
  %v122 = vunpack.c.l.bf16 %v59
  %v123 = vunpack.c.l.bf16 %v60
  %v124 = vunpack.c.l.bf16 %v61
  %v125 = vunpack.c.l.bf16 %v62
  %v126 = vunpack.c.l.bf16 %v63
  %v127 = vunpack.c.l.bf16 %v64
  %v128 = vunpack.c.l.bf16 %v65
  %v129 = vunpack.c.l.bf16 %v66
  %v130 = vunpack.c.l.bf16 %v67
  %v131 = vunpack.c.l.bf16 %v68
  %v132 = vunpack.c.l.bf16 %v69
  %v133 = vunpack.c.l.bf16 %v70
  %v134 = vunpack.c.l.bf16 %v71
  %v135 = vunpack.c.l.bf16 %v72
  %v136 = vunpack.c.l.bf16 %v73
  %v137 = vunpack.c.l.bf16 %v74
  %v138 = vunpack.c.l.bf16 %v75
  %v139 = vunpack.c.l.bf16 %v76
  %v140 = vunpack.c.l.bf16 %v77
  %vm141 = vcmask 523264
  %v142 = vsel %vm141, %v78, 0.0
  %v143 = vsel %vm141, %v85, 0.0
  %v144 = vadd.f32 %v142, %v143
  %v145 = vsel %vm141, %v92, 0.0
  %v146 = vadd.f32 %v144, %v145
  %v147 = vsel %vm141, %v99, 0.0
  %v148 = vadd.f32 %v146, %v147
  %v149 = vsel %vm141, %v106, 0.0
  %v150 = vadd.f32 %v148, %v149
  %v151 = vsel %vm141, %v113, 0.0
  %v152 = vadd.f32 %v150, %v151
  %v153 = vsel %vm141, %v120, 0.0
  %v154 = vadd.f32 %v152, %v153
  %v155 = vsel %vm141, %v127, 0.0
  %v156 = vadd.f32 %v154, %v155
  %v157 = vsel %vm141, %v134, 0.0
  %v158 = vadd.f32 %v156, %v157
  %v159 = vsel %vm141, %v79, 0.0
  %v160 = vsel %vm141, %v86, 0.0
  %v161 = vadd.f32 %v159, %v160
  %v162 = vsel %vm141, %v93, 0.0
  %v163 = vadd.f32 %v161, %v162
  %v164 = vsel %vm141, %v100, 0.0
  %v165 = vadd.f32 %v163, %v164
  %v166 = vsel %vm141, %v107, 0.0
  %v167 = vadd.f32 %v165, %v166
  %v168 = vsel %vm141, %v114, 0.0
  %v169 = vadd.f32 %v167, %v168
  %v170 = vsel %vm141, %v121, 0.0
  %v171 = vadd.f32 %v169, %v170
  %v172 = vsel %vm141, %v128, 0.0
  %v173 = vadd.f32 %v171, %v172
  %v174 = vsel %vm141, %v135, 0.0
  %v175 = vadd.f32 %v173, %v174
  %v176 = vsel %vm141, %v80, 0.0
  %v177 = vsel %vm141, %v87, 0.0
  %v178 = vadd.f32 %v176, %v177
  %v179 = vsel %vm141, %v94, 0.0
  %v180 = vadd.f32 %v178, %v179
  %v181 = vsel %vm141, %v101, 0.0
  %v182 = vadd.f32 %v180, %v181
  %v183 = vsel %vm141, %v108, 0.0
  %v184 = vadd.f32 %v182, %v183
  %v185 = vsel %vm141, %v115, 0.0
  %v186 = vadd.f32 %v184, %v185
  %v187 = vsel %vm141, %v122, 0.0
  %v188 = vadd.f32 %v186, %v187
  %v189 = vsel %vm141, %v129, 0.0
  %v190 = vadd.f32 %v188, %v189
  %v191 = vsel %vm141, %v136, 0.0
  %v192 = vadd.f32 %v190, %v191
  %v193 = vsel %vm141, %v81, 0.0
  %v194 = vsel %vm141, %v88, 0.0
  %v195 = vadd.f32 %v193, %v194
  %v196 = vsel %vm141, %v95, 0.0
  %v197 = vadd.f32 %v195, %v196
  %v198 = vsel %vm141, %v102, 0.0
  %v199 = vadd.f32 %v197, %v198
  %v200 = vsel %vm141, %v109, 0.0
  %v201 = vadd.f32 %v199, %v200
  %v202 = vsel %vm141, %v116, 0.0
  %v203 = vadd.f32 %v201, %v202
  %v204 = vsel %vm141, %v123, 0.0
  %v205 = vadd.f32 %v203, %v204
  %v206 = vsel %vm141, %v130, 0.0
  %v207 = vadd.f32 %v205, %v206
  %v208 = vsel %vm141, %v137, 0.0
  %v209 = vadd.f32 %v207, %v208
  %v210 = vsel %vm141, %v82, 0.0
  %v211 = vsel %vm141, %v89, 0.0
  %v212 = vadd.f32 %v210, %v211
  %v213 = vsel %vm141, %v96, 0.0
  %v214 = vadd.f32 %v212, %v213
  %v215 = vsel %vm141, %v103, 0.0
  %v216 = vadd.f32 %v214, %v215
  %v217 = vsel %vm141, %v110, 0.0
  %v218 = vadd.f32 %v216, %v217
  %v219 = vsel %vm141, %v117, 0.0
  %v220 = vadd.f32 %v218, %v219
  %v221 = vsel %vm141, %v124, 0.0
  %v222 = vadd.f32 %v220, %v221
  %v223 = vsel %vm141, %v131, 0.0
  %v224 = vadd.f32 %v222, %v223
  %v225 = vsel %vm141, %v138, 0.0
  %v226 = vadd.f32 %v224, %v225
  %v227 = vsel %vm141, %v83, 0.0
  %v228 = vsel %vm141, %v90, 0.0
  %v229 = vadd.f32 %v227, %v228
  %v230 = vsel %vm141, %v97, 0.0
  %v231 = vadd.f32 %v229, %v230
  %v232 = vsel %vm141, %v104, 0.0
  %v233 = vadd.f32 %v231, %v232
  %v234 = vsel %vm141, %v111, 0.0
  %v235 = vadd.f32 %v233, %v234
  %v236 = vsel %vm141, %v118, 0.0
  %v237 = vadd.f32 %v235, %v236
  %v238 = vsel %vm141, %v125, 0.0
  %v239 = vadd.f32 %v237, %v238
  %v240 = vsel %vm141, %v132, 0.0
  %v241 = vadd.f32 %v239, %v240
  %v242 = vsel %vm141, %v139, 0.0
  %v243 = vadd.f32 %v241, %v242
  %vm244 = vcmask 516096
  %v245 = vsel %vm244, %v84, 0.0
  %v246 = vsel %vm244, %v91, 0.0
  %v247 = vadd.f32 %v245, %v246
  %v248 = vsel %vm244, %v98, 0.0
  %v249 = vadd.f32 %v247, %v248
  %v250 = vsel %vm244, %v105, 0.0
  %v251 = vadd.f32 %v249, %v250
  %v252 = vsel %vm244, %v112, 0.0
  %v253 = vadd.f32 %v251, %v252
  %v254 = vsel %vm244, %v119, 0.0
  %v255 = vadd.f32 %v253, %v254
  %v256 = vsel %vm244, %v126, 0.0
  %v257 = vadd.f32 %v255, %v256
  %v258 = vsel %vm244, %v133, 0.0
  %v259 = vadd.f32 %v257, %v258
  %v260 = vsel %vm244, %v140, 0.0
  %v261 = vadd.f32 %v259, %v260
  %v262 = vmul.f32 %v158, 0.11111111
  %v263 = vmul.f32 %v175, 0.11111111
  %v264 = vmul.f32 %v192, 0.11111111
  %v265 = vmul.f32 %v209, 0.11111111
  %v266 = vmul.f32 %v226, 0.11111111
  %v267 = vmul.f32 %v243, 0.11111111
  %v268 = vmul.f32 %v261, 0.11111111
  %v269 = vpack.c.bf16 %v263, %v262
  %v270 = vpack.c.bf16 %v265, %v264
  %v271 = vpack.c.bf16 %v267, %v266
  %v272 = vpack.c.bf16 %v268, %v268
  %v273 = vld [vmem:[%s1] sm:$0xf]
  %v274 = vld [vmem:[%s1 + $0x4] sm:$0xf]
  %v275 = vld [vmem:[%s1 + $0x8] sm:$0xf]
  %v276 = vld [vmem:[%s1 + $0xc] sm:$0xf]
  %v277 = vld [vmem:[%s1 + $0x10] sm:$0xf]
  %v278 = vld [vmem:[%s1 + $0x14] sm:$0xf]
  %v279 = vld [vmem:[%s1 + $0x18] sm:$0xf]
  %v280 = vld [vmem:[%s1 + $0x1c] sm:$0xf]
  %v281 = vld [vmem:[%s2] sm:$0x1]
  %v283 = vlaneseq
  %v284 = vshrl.u32 %v283, 7
  %v285 = vsub.s32 0, %v284
  %v286 = vrot.slane %v281, %v285
  %v296 = vunpack.c.l.b16 %v273
  %v297 = vunpack.c.l.b16 %v274
  %v298 = vunpack.c.l.b16 %v275
  %v299 = vunpack.c.l.b16 %v276
  %v300 = vunpack.c.l.b16 %v277
  %v301 = vunpack.c.l.b16 %v278
  %v302 = vunpack.c.l.b16 %v279
  %v303 = vunpack.c.l.b16 %v280
  %v304 = vpack.c.b16 %v297, %v296
  %v305 = vpack.c.b16 %v299, %v298
  %v306 = vpack.c.b16 %v301, %v300
  %v307 = vpack.c.b16 %v303, %v302
  %v313 = vsel %vm141, %v269, 0
  %v316 = vsel %vm141, %v270, 0
  %v319 = vsel %vm141, %v271, 0
  %v322 = vsel %vm141, %v272, 0
  %324 = vmatprep.subr.bf16.mxu0 0
  %325 = vmatpush1.bf16.msra.mxu0 %v304
  %326 = vmatprep.subr.bf16.mxu0 0
  %327 = vmatpush1.bf16.msra.mxu0 %v305
  %328 = vmatprep.subr.bf16.mxu0 0
  %329 = vmatpush1.bf16.msra.mxu0 %v306
  %330 = vmatprep.subr.bf16.mxu0 0
  %331 = vmatpush1.bf16.msra.mxu0 %v307
  %332 = vmatprep.subr.bf16.mxu0 0
  %333 = vmatpush1.bf16.msra.mxu0 0
  %334 = vmatprep.subr.bf16.mxu0 0
  %335 = vmatpush1.bf16.msra.mxu0 0
  %336 = vmatprep.subr.bf16.mxu0 0
  %337 = vmatpush1.bf16.msra.mxu0 0
  %338 = vmatprep.subr.bf16.mxu0 0
  %339 = vmatpush1.bf16.msra.mxu0 0
  %340 = vmatprep.subr.bf16.mxu0 0
  %341 = vmatpush1.bf16.msra.mxu0 0
  %342 = vmatprep.subr.bf16.mxu0 0
  %343 = vmatpush1.bf16.msra.mxu0 0
  %344 = vmatprep.subr.bf16.mxu0 0
  %345 = vmatpush1.bf16.msra.mxu0 0
  %346 = vmatprep.subr.bf16.mxu0 0
  %347 = vmatpush1.bf16.msra.mxu0 0
  %348 = vmatprep.subr.bf16.mxu0 0
  %349 = vmatpush1.bf16.msra.mxu0 0
  %350 = vmatprep.subr.bf16.mxu0 0
  %351 = vmatpush1.bf16.msra.mxu0 0
  %352 = vmatprep.subr.bf16.mxu0 0
  %353 = vmatpush1.bf16.msra.mxu0 0
  %354 = vmatprep.subr.bf16.mxu0 0
  %355 = vmatpush1.bf16.msra.mxu0 0
  %356 = vmatprep.mubr.bf16.mxu0 0
  %357 = vmatmul.mubr.bf16.gmra.mrb[0].mxu0 %v313
  %v358 = vpop.f32.mrb[0].mxu0
  %v359 = vadd.f32 %v286, %v358
  %v360 = vpop.f32.mrb[0].mxu0
  %v361 = vpop.f32.mrb[0].mxu0
  %v362 = vadd.f32 %v286, %v361
  %v363 = vpop.f32.mrb[0].mxu0
  %364 = vmatprep.mubr.bf16.mxu0 0
  %365 = vmatmul.mubr.bf16.gmra.mrb[0].mxu0 %v316
  %v366 = vpop.f32.mrb[0].mxu0
  %v367 = vadd.f32 %v286, %v366
  %v368 = vpop.f32.mrb[0].mxu0
  %v369 = vpop.f32.mrb[0].mxu0
  %v370 = vadd.f32 %v286, %v369
  %v371 = vpop.f32.mrb[0].mxu0
  %372 = vmatprep.mubr.bf16.mxu0 0
  %373 = vmatmul.mubr.bf16.gmra.mrb[0].mxu0 %v319
  %v374 = vpop.f32.mrb[0].mxu0
  %v375 = vadd.f32 %v286, %v374
  %v376 = vpop.f32.mrb[0].mxu0
  %v377 = vpop.f32.mrb[0].mxu0
  %v378 = vadd.f32 %v286, %v377
  %v379 = vpop.f32.mrb[0].mxu0
  %380 = vmatprep.mubr.bf16.mxu0 0
  %381 = vmatmul.mubr.bf16.gmra.mrb[0].mxu0 %v322
  %v382 = vpop.f32.mrb[0].mxu0
  %v383 = vadd.f32 %v286, %v382
  %v384 = vpop.f32.mrb[0].mxu0
  %v385 = vpop.f32.mrb[0].mxu0
  %v386 = vpop.f32.mrb[0].mxu0
  %387 = vdwg.mxu0
  %v388 = vmax.f32 %v359, 0.0
  %v389 = vmax.f32 %v362, 0.0
  %v390 = vmax.f32 %v367, 0.0
  %v391 = vmax.f32 %v370, 0.0
  %v392 = vmax.f32 %v375, 0.0
  %v393 = vmax.f32 %v378, 0.0
  %v394 = vmax.f32 %v383, 0.0
  %v395 = vpack.c.bf16 %v389, %v388
  %v396 = vpack.c.bf16 %v391, %v390
  %v397 = vpack.c.bf16 %v393, %v392
  %v398 = vpack.c.bf16 %v394, %v394
  %v403 = vunpack.c.l.b16 %v395
  %v404 = vunpack.c.h.b16 %v395
  %v405 = vunpack.c.l.b16 %v396
  %v406 = vunpack.c.h.b16 %v396
  %v407 = vunpack.c.l.b16 %v397
  %v408 = vunpack.c.h.b16 %v397
  %v409 = vunpack.c.l.b16 %v398
  %v410 = vpack.c.b16 %v403, %v403
  %v411 = vpack.c.b16 %v404, %v404
  %v412 = vpack.c.b16 %v405, %v405
  %v413 = vpack.c.b16 %v406, %v406
  %v414 = vpack.c.b16 %v407, %v407
  %v415 = vpack.c.b16 %v408, %v408
  %v416 = vpack.c.b16 %v409, %v409
  %424 = vst [vmem:[%s3] sm:$0xf] %v410
  %425 = vst [vmem:[%s3 + $0x4] sm:$0xf] %v411
  %426 = vst [vmem:[%s3 + $0x8] sm:$0xf] %v412
  %427 = vst [vmem:[%s3 + $0xc] sm:$0xf] %v413
  %428 = vst [vmem:[%s3 + $0x10] sm:$0xf] %v414
  %429 = vst [vmem:[%s3 + $0x14] sm:$0xf] %v415
  %vm430 = vcmask 1040384
  %vm431 = vsmask.f32 256
  %vm432 = vmand %vm430, %vm431
  %v433 = vld [vmem:[%s3 + $0x18] sm:$0x1]
  %v434 = vsel %vm432, %v416, %v433
  %435 = vst [vmem:[%s3 + $0x18] sm:$0x1] %v434
  // Predicated region
  $region14: #{forward.97} parent=0 // pred_check
    _
  $region15: #{forward.97} parent=0 // pred_check_branch
    %437 = sbr.rel (0) target = $region17
  $region16: #{forward.97} parent=0 // pred_region
    _
  $region17: #{forward.97} parent=0 // pred_fallthru
    _
  // Predicated region
  $region18: #{forward.97} parent=0 // pred_check
    _
  $region19: #{forward.97} parent=0 // pred_check_branch
    %439 = sbr.rel (0) target = $region21
  $region20: #{forward.97} parent=0 // pred_region
    _
  $region21: #{forward.97} parent=0 // pred_fallthru
    _

// kernel: forward.101
$region0: #{forward.101}
  #allocation0 [shape = 'u32[]', space=smem, size = 0x4, offset = 0x4, fixed_abs, tag = 'smem constant byte address 0x4 - core index']
  #allocation1 [shape = 'u32[144,128]{1,0:T(1,128)}', space=vmem, size = 0x12000, scoped, tag = 'internal scratch']
  %s0 = inlined_call_operand.vmem [shape: bf16[16,128], index: 0, kind: input, shape index: {}]
  %s1 = inlined_call_operand.vmem [shape: bf16[128,128], index: 1, kind: input, shape index: {}]
  %s2 = inlined_call_operand.vmem [shape: f32[1,128], index: 2, kind: input, shape index: {}]
  %s3 = inlined_call_operand.vmem [shape: bf16[16,128], index: 3, kind: output, shape index: {}]
  %s4 = sld [smem:[#allocation0]]
  $region22: #{forward.101} parent=0
    _
  %s6 = ssub.s32 1, %s4
  %s7 = scalar_select 0, %s6, %s4
  // Predicated region
  $region2: #{forward.101} parent=0 // pred_check
    _
  $region3: #{forward.101} parent=0 // pred_check_branch
    %9 = sbr.rel (0) target = $region5
  $region4: #{forward.101} parent=0 // pred_region
    _
  $region5: #{forward.101} parent=0 // pred_fallthru
    _
  // Predicated region
  $region6: #{forward.101} parent=0 // pred_check
    _
  $region7: #{forward.101} parent=0 // pred_check_branch
    %11 = sbr.rel (0) target = $region9
  $region8: #{forward.101} parent=0 // pred_region
    _
  $region9: #{forward.101} parent=0 // pred_fallthru
    _
  // Predicated region
  $region10: #{forward.101} parent=0 // pred_check
    _
  $region11: #{forward.101} parent=0 // pred_check_branch
    %13 = sbr.rel (0) target = $region13
  $region12: #{forward.101} parent=0 // pred_region
    _
  $region13: #{forward.101} parent=0 // pred_fallthru
    _
  %v15 = vld [vmem:[%s0] sm:$0xf]
  %v16 = vld [vmem:[%s0 + $0x4] sm:$0xf]
  %v17 = vld [vmem:[%s1] sm:$0xf]
  %v18 = vld [vmem:[%s1 + $0x4] sm:$0xf]
  %v19 = vld [vmem:[%s1 + $0x8] sm:$0xf]
  %v20 = vld [vmem:[%s1 + $0xc] sm:$0xf]
  %v21 = vld [vmem:[%s1 + $0x10] sm:$0xf]
  %v22 = vld [vmem:[%s1 + $0x14] sm:$0xf]
  %v23 = vld [vmem:[%s1 + $0x18] sm:$0xf]
  %v24 = vld [vmem:[%s1 + $0x1c] sm:$0xf]
  %v25 = vld [vmem:[%s1 + $0x20] sm:$0xf]
  %v26 = vld [vmem:[%s1 + $0x24] sm:$0xf]
  %v27 = vld [vmem:[%s1 + $0x28] sm:$0xf]
  %v28 = vld [vmem:[%s1 + $0x2c] sm:$0xf]
  %v29 = vld [vmem:[%s1 + $0x30] sm:$0xf]
  %v30 = vld [vmem:[%s1 + $0x34] sm:$0xf]
  %v31 = vld [vmem:[%s1 + $0x38] sm:$0xf]
  %v32 = vld [vmem:[%s1 + $0x3c] sm:$0xf]
  %v33 = vld [vmem:[%s2] sm:$0x1]
  %v35 = vlaneseq
  %v36 = vshrl.u32 %v35, 7
  %v37 = vsub.s32 0, %v36
  %v38 = vrot.slane %v33, %v37
  %v42 = vunpack.c.l.b16 %v15
  %v43 = vunpack.c.l.b16 %v16
  %v44 = vpack.c.b16 %v43, %v42
  %v62 = vunpack.c.l.b16 %v17
  %v63 = vunpack.c.l.b16 %v18
  %v64 = vunpack.c.l.b16 %v19
  %v65 = vunpack.c.l.b16 %v20
  %v66 = vunpack.c.l.b16 %v21
  %v67 = vunpack.c.l.b16 %v22
  %v68 = vunpack.c.l.b16 %v23
  %v69 = vunpack.c.l.b16 %v24
  %v70 = vunpack.c.l.b16 %v25
  %v71 = vunpack.c.l.b16 %v26
  %v72 = vunpack.c.l.b16 %v27
  %v73 = vunpack.c.l.b16 %v28
  %v74 = vunpack.c.l.b16 %v29
  %v75 = vunpack.c.l.b16 %v30
  %v76 = vunpack.c.l.b16 %v31
  %v77 = vunpack.c.l.b16 %v32
  %v78 = vpack.c.b16 %v63, %v62
  %v79 = vpack.c.b16 %v65, %v64
  %v80 = vpack.c.b16 %v67, %v66
  %v81 = vpack.c.b16 %v69, %v68
  %v82 = vpack.c.b16 %v71, %v70
  %v83 = vpack.c.b16 %v73, %v72
  %v84 = vpack.c.b16 %v75, %v74
  %v85 = vpack.c.b16 %v77, %v76
  %94 = vmatprep.subr.bf16.mxu0 0
  %95 = vmatpush1.bf16.msra.mxu0 %v78
  %96 = vmatprep.subr.bf16.mxu0 0
  %97 = vmatpush1.bf16.msra.mxu0 %v79
  %98 = vmatprep.subr.bf16.mxu0 0
  %99 = vmatpush1.bf16.msra.mxu0 %v80
  %100 = vmatprep.subr.bf16.mxu0 0
  %101 = vmatpush1.bf16.msra.mxu0 %v81
  %102 = vmatprep.subr.bf16.mxu0 0
  %103 = vmatpush1.bf16.msra.mxu0 %v82
  %104 = vmatprep.subr.bf16.mxu0 0
  %105 = vmatpush1.bf16.msra.mxu0 %v83
  %106 = vmatprep.subr.bf16.mxu0 0
  %107 = vmatpush1.bf16.msra.mxu0 %v84
  %108 = vmatprep.subr.bf16.mxu0 0
  %109 = vmatpush1.bf16.msra.mxu0 %v85
  %110 = vmatprep.subr.bf16.mxu0 0
  %111 = vmatpush1.bf16.msra.mxu0 0
  %112 = vmatprep.subr.bf16.mxu0 0
  %113 = vmatpush1.bf16.msra.mxu0 0
  %114 = vmatprep.subr.bf16.mxu0 0
  %115 = vmatpush1.bf16.msra.mxu0 0
  %116 = vmatprep.subr.bf16.mxu0 0
  %117 = vmatpush1.bf16.msra.mxu0 0
  %118 = vmatprep.subr.bf16.mxu0 0
  %119 = vmatpush1.bf16.msra.mxu0 0
  %120 = vmatprep.subr.bf16.mxu0 0
  %121 = vmatpush1.bf16.msra.mxu0 0
  %122 = vmatprep.subr.bf16.mxu0 0
  %123 = vmatpush1.bf16.msra.mxu0 0
  %124 = vmatprep.subr.bf16.mxu0 0
  %125 = vmatpush1.bf16.msra.mxu0 0
  %126 = vmatprep.mubr.bf16.mxu0 0
  %127 = vmatmul.mubr.bf16.gmra.mrb[0].mxu0 %v44
  %v128 = vpop.f32.mrb[0].mxu0
  %v129 = vadd.f32 %v38, %v128
  %v130 = vpop.f32.mrb[0].mxu0
  %v131 = vpop.f32.mrb[0].mxu0
  %v132 = vadd.f32 %v38, %v131
  %v133 = vpop.f32.mrb[0].mxu0
  %134 = vdwg.mxu0
  %v135 = vmax.f32 %v129, 0.0
  %v136 = vmax.f32 %v132, 0.0
  %v137 = vpack.c.bf16 %v136, %v135
  %v139 = vunpack.c.l.b16 %v137
  %v140 = vunpack.c.h.b16 %v137
  %v141 = vpack.c.b16 %v139, %v139
  %v142 = vpack.c.b16 %v140, %v140
  %145 = vst [vmem:[%s3] sm:$0xf] %v141
  %146 = vst [vmem:[%s3 + $0x4] sm:$0xf] %v142
  // Predicated region
  $region14: #{forward.101} parent=0 // pred_check
    _
  $region15: #{forward.101} parent=0 // pred_check_branch
    %148 = sbr.rel (0) target = $region17
  $region16: #{forward.101} parent=0 // pred_region
    _
  $region17: #{forward.101} parent=0 // pred_fallthru
    _
  // Predicated region
  $region18: #{forward.101} parent=0 // pred_check
    _
  $region19: #{forward.101} parent=0 // pred_check_branch
    %150 = sbr.rel (0) target = $region21
  $region20: #{forward.101} parent=0 // pred_region
    _
  $region21: #{forward.101} parent=0 // pred_fallthru
    _

// kernel: forward.102
$region0: #{forward.102}
  #allocation0 [shape = 'u32[]', space=smem, size = 0x4, offset = 0x4, fixed_abs, tag = 'smem constant byte address 0x4 - core index']
  #allocation1 [shape = 'u32[144,128]{1,0:T(1,128)}', space=vmem, size = 0x12000, scoped, tag = 'internal scratch']
  %s0 = inlined_call_operand.vmem [shape: bf16[9,9,36], index: 0, kind: input, shape index: {}]
  %s1 = inlined_call_operand.vmem [shape: bf16[9,36], index: 1, kind: output, shape index: {}]
  %s2 = sld [smem:[#allocation0]]
  $region14: #{forward.102} parent=0
    _
  %s4 = ssub.s32 1, %s2
  %s5 = scalar_select 0, %s4, %s2
  // Predicated region
  $region2: #{forward.102} parent=0 // pred_check
    _
  $region3: #{forward.102} parent=0 // pred_check_branch
    %7 = sbr.rel (0) target = $region5
  $region4: #{forward.102} parent=0 // pred_region
    _
  $region5: #{forward.102} parent=0 // pred_fallthru
    _
  %v9 = vld [vmem:[%s0] sm:$0xf]
  %v10 = vld [vmem:[%s0 + $0x4] sm:$0x1]
  %v11 = vld [vmem:[%s0 + $0x8] sm:$0xf]
  %v12 = vld [vmem:[%s0 + $0xc] sm:$0x1]
  %v13 = vld [vmem:[%s0 + $0x10] sm:$0xf]
  %v14 = vld [vmem:[%s0 + $0x14] sm:$0x1]
  %v15 = vld [vmem:[%s0 + $0x18] sm:$0xf]
  %v16 = vld [vmem:[%s0 + $0x1c] sm:$0x1]
  %v17 = vld [vmem:[%s0 + $0x20] sm:$0xf]
  %v18 = vld [vmem:[%s0 + $0x24] sm:$0x1]
  %v19 = vld [vmem:[%s0 + $0x28] sm:$0xf]
  %v20 = vld [vmem:[%s0 + $0x2c] sm:$0x1]
  %v21 = vld [vmem:[%s0 + $0x30] sm:$0xf]
  %v22 = vld [vmem:[%s0 + $0x34] sm:$0x1]
  %v23 = vld [vmem:[%s0 + $0x38] sm:$0xf]
  %v24 = vld [vmem:[%s0 + $0x3c] sm:$0x1]
  %v25 = vld [vmem:[%s0 + $0x40] sm:$0xf]
  %v26 = vld [vmem:[%s0 + $0x44] sm:$0x1]
  %vm27 = vcmask 289792
  %v30 = vsel %vm27, %v9, 4286644096
  %v33 = vsel %vm27, %v11, 4286644096
  %v36 = vsel %vm27, %v13, 4286644096
  %v38 = vmax.bf16 %v30, %v36
  %v40 = vsel %vm27, %v15, 4286644096
  %v42 = vmax.bf16 %v33, %v40
  %v44 = vsel %vm27, %v17, 4286644096
  %v46 = vmax.bf16 %v38, %v44
  %v48 = vsel %vm27, %v19, 4286644096
  %v50 = vmax.bf16 %v42, %v48
  %v52 = vsel %vm27, %v21, 4286644096
  %v54 = vmax.bf16 %v46, %v52
  %v56 = vsel %vm27, %v23, 4286644096
  %v58 = vmax.bf16 %v50, %v56
  %v60 = vsel %vm27, %v25, 4286644096
  %v62 = vmax.bf16 %v54, %v60
  %v63 = vmax.bf16 %v62, %v58
  %vm64 = vcmask 286720
  %vm65 = vsmask.f32 256
  %vm66 = vmand %vm64, %vm65
  %v67 = vsel %vm66, %v10, 4286644096
  %v68 = vsel %vm66, %v12, 4286644096
  %v69 = vsel %vm66, %v14, 4286644096
  %v70 = vmax.bf16 %v67, %v69
  %v71 = vsel %vm66, %v16, 4286644096
  %v72 = vmax.bf16 %v68, %v71
  %v73 = vsel %vm66, %v18, 4286644096
  %v74 = vmax.bf16 %v70, %v73
  %v75 = vsel %vm66, %v20, 4286644096
  %v76 = vmax.bf16 %v72, %v75
  %v77 = vsel %vm66, %v22, 4286644096
  %v78 = vmax.bf16 %v74, %v77
  %v79 = vsel %vm66, %v24, 4286644096
  %v80 = vmax.bf16 %v76, %v79
  %v81 = vsel %vm66, %v26, 4286644096
  %v82 = vmax.bf16 %v78, %v81
  %v83 = vmax.bf16 %v82, %v80
  %84 = vst.msk [vmem:[%s1] sm:$0xf] %vm27, %v63
  %v85 = vld [vmem:[%s1 + $0x4] sm:$0x1]
  %v86 = vsel %vm66, %v83, %v85
  %87 = vst [vmem:[%s1 + $0x4] sm:$0x1] %v86
  // Predicated region
  $region6: #{forward.102} parent=0 // pred_check
    _
  $region7: #{forward.102} parent=0 // pred_check_branch
    %89 = sbr.rel (0) target = $region9
  $region8: #{forward.102} parent=0 // pred_region
    _
  $region9: #{forward.102} parent=0 // pred_fallthru
    _
  // Predicated region
  $region10: #{forward.102} parent=0 // pred_check
    _
  $region11: #{forward.102} parent=0 // pred_check_branch
    %91 = sbr.rel (0) target = $region13
  $region12: #{forward.102} parent=0 // pred_region
    _
  $region13: #{forward.102} parent=0 // pred_fallthru
    _

// kernel: forward.103
$region0: #{forward.103}
  #allocation0 [shape = 'u32[]', space=smem, size = 0x4, offset = 0x4, fixed_abs, tag = 'smem constant byte address 0x4 - core index']
  #allocation1 [shape = 'u32[144,128]{1,0:T(1,128)}', space=vmem, size = 0x12000, scoped, tag = 'internal scratch']
  %s0 = inlined_call_operand.vmem [shape: bf16[16,96], index: 0, kind: input, shape index: {}]
  %s1 = inlined_call_operand.vmem [shape: bf16[96,128], index: 1, kind: input, shape index: {}]
  %s2 = inlined_call_operand.vmem [shape: f32[1,128], index: 2, kind: input, shape index: {}]
  %s3 = inlined_call_operand.vmem [shape: bf16[16,128], index: 3, kind: output, shape index: {}]
  %s4 = sld [smem:[#allocation0]]
  $region22: #{forward.103} parent=0
    _
  %s6 = ssub.s32 1, %s4
  %s7 = scalar_select 0, %s6, %s4
  // Predicated region
  $region2: #{forward.103} parent=0 // pred_check
    _
  $region3: #{forward.103} parent=0 // pred_check_branch
    %9 = sbr.rel (0) target = $region5
  $region4: #{forward.103} parent=0 // pred_region
    _
  $region5: #{forward.103} parent=0 // pred_fallthru
    _
  // Predicated region
  $region6: #{forward.103} parent=0 // pred_check
    _
  $region7: #{forward.103} parent=0 // pred_check_branch
    %11 = sbr.rel (0) target = $region9
  $region8: #{forward.103} parent=0 // pred_region
    _
  $region9: #{forward.103} parent=0 // pred_fallthru
    _
  // Predicated region
  $region10: #{forward.103} parent=0 // pred_check
    _
  $region11: #{forward.103} parent=0 // pred_check_branch
    %13 = sbr.rel (0) target = $region13
  $region12: #{forward.103} parent=0 // pred_region
    _
  $region13: #{forward.103} parent=0 // pred_fallthru
    _
  %v15 = vld [vmem:[%s0] sm:$0xf]
  %v16 = vld [vmem:[%s0 + $0x4] sm:$0xf]
  %v17 = vld [vmem:[%s1] sm:$0xf]
  %v18 = vld [vmem:[%s1 + $0x4] sm:$0xf]
  %v19 = vld [vmem:[%s1 + $0x8] sm:$0xf]
  %v20 = vld [vmem:[%s1 + $0xc] sm:$0xf]
  %v21 = vld [vmem:[%s1 + $0x10] sm:$0xf]
  %v22 = vld [vmem:[%s1 + $0x14] sm:$0xf]
  %v23 = vld [vmem:[%s1 + $0x18] sm:$0xf]
  %v24 = vld [vmem:[%s1 + $0x1c] sm:$0xf]
  %v25 = vld [vmem:[%s1 + $0x20] sm:$0xf]
  %v26 = vld [vmem:[%s1 + $0x24] sm:$0xf]
  %v27 = vld [vmem:[%s1 + $0x28] sm:$0xf]
  %v28 = vld [vmem:[%s1 + $0x2c] sm:$0xf]
  %v29 = vld [vmem:[%s2] sm:$0x1]
  %v31 = vlaneseq
  %v32 = vshrl.u32 %v31, 7
  %v33 = vsub.s32 0, %v32
  %v34 = vrot.slane %v29, %v33
  %v38 = vunpack.c.l.b16 %v15
  %v39 = vunpack.c.l.b16 %v16
  %v40 = vpack.c.b16 %v39, %v38
  %v53 = vunpack.c.l.b16 %v17
  %v54 = vunpack.c.l.b16 %v18
  %v55 = vunpack.c.l.b16 %v19
  %v56 = vunpack.c.l.b16 %v20
  %v57 = vunpack.c.l.b16 %v21
  %v58 = vunpack.c.l.b16 %v22
  %v59 = vunpack.c.l.b16 %v23
  %v60 = vunpack.c.l.b16 %v24
  %v61 = vunpack.c.l.b16 %v25
  %v62 = vunpack.c.l.b16 %v26
  %v63 = vunpack.c.l.b16 %v27
  %v64 = vunpack.c.l.b16 %v28
  %v65 = vpack.c.b16 %v54, %v53
  %v66 = vpack.c.b16 %v56, %v55
  %v67 = vpack.c.b16 %v58, %v57
  %v68 = vpack.c.b16 %v60, %v59
  %v69 = vpack.c.b16 %v62, %v61
  %v70 = vpack.c.b16 %v64, %v63
  %vm77 = vcmask 785408
  %v79 = vsel %vm77, %v40, 0
  %81 = vmatprep.subr.bf16.mxu0 0
  %82 = vmatpush1.bf16.msra.mxu0 %v65
  %83 = vmatprep.subr.bf16.mxu0 0
  %84 = vmatpush1.bf16.msra.mxu0 %v66
  %85 = vmatprep.subr.bf16.mxu0 0
  %86 = vmatpush1.bf16.msra.mxu0 %v67
  %87 = vmatprep.subr.bf16.mxu0 0
  %88 = vmatpush1.bf16.msra.mxu0 %v68
  %89 = vmatprep.subr.bf16.mxu0 0
  %90 = vmatpush1.bf16.msra.mxu0 %v69
  %91 = vmatprep.subr.bf16.mxu0 0
  %92 = vmatpush1.bf16.msra.mxu0 %v70
  %93 = vmatprep.subr.bf16.mxu0 0
  %94 = vmatpush1.bf16.msra.mxu0 0
  %95 = vmatprep.subr.bf16.mxu0 0
  %96 = vmatpush1.bf16.msra.mxu0 0
  %97 = vmatprep.subr.bf16.mxu0 0
  %98 = vmatpush1.bf16.msra.mxu0 0
  %99 = vmatprep.subr.bf16.mxu0 0
  %100 = vmatpush1.bf16.msra.mxu0 0
  %101 = vmatprep.subr.bf16.mxu0 0
  %102 = vmatpush1.bf16.msra.mxu0 0
  %103 = vmatprep.subr.bf16.mxu0 0
  %104 = vmatpush1.bf16.msra.mxu0 0
  %105 = vmatprep.subr.bf16.mxu0 0
  %106 = vmatpush1.bf16.msra.mxu0 0
  %107 = vmatprep.subr.bf16.mxu0 0
  %108 = vmatpush1.bf16.msra.mxu0 0
  %109 = vmatprep.subr.bf16.mxu0 0
  %110 = vmatpush1.bf16.msra.mxu0 0
  %111 = vmatprep.subr.bf16.mxu0 0
  %112 = vmatpush1.bf16.msra.mxu0 0
  %113 = vmatprep.mubr.bf16.mxu0 0
  %114 = vmatmul.mubr.bf16.gmra.mrb[0].mxu0 %v79
  %v115 = vpop.f32.mrb[0].mxu0
  %v116 = vadd.f32 %v34, %v115
  %v117 = vpop.f32.mrb[0].mxu0
  %v118 = vpop.f32.mrb[0].mxu0
  %v119 = vadd.f32 %v34, %v118
  %v120 = vpop.f32.mrb[0].mxu0
  %121 = vdwg.mxu0
  %v122 = vmax.f32 %v116, 0.0
  %v123 = vmax.f32 %v119, 0.0
  %v124 = vpack.c.bf16 %v123, %v122
  %v126 = vunpack.c.l.b16 %v124
  %v127 = vunpack.c.h.b16 %v124
  %v128 = vpack.c.b16 %v126, %v126
  %v129 = vpack.c.b16 %v127, %v127
  %132 = vst [vmem:[%s3] sm:$0xf] %v128
  %133 = vst [vmem:[%s3 + $0x4] sm:$0xf] %v129
  // Predicated region
  $region14: #{forward.103} parent=0 // pred_check
    _
  $region15: #{forward.103} parent=0 // pred_check_branch
    %135 = sbr.rel (0) target = $region17
  $region16: #{forward.103} parent=0 // pred_region
    _
  $region17: #{forward.103} parent=0 // pred_fallthru
    _
  // Predicated region
  $region18: #{forward.103} parent=0 // pred_check
    _
  $region19: #{forward.103} parent=0 // pred_check_branch
    %137 = sbr.rel (0) target = $region21
  $region20: #{forward.103} parent=0 // pred_region
    _
  $region21: #{forward.103} parent=0 // pred_fallthru
    _

// kernel: forward.98
$region0: #{forward.98}
  #allocation0 [shape = 'u32[]', space=smem, size = 0x4, offset = 0x4, fixed_abs, tag = 'smem constant byte address 0x4 - core index']
  #allocation1 [shape = 'u32[144,128]{1,0:T(1,128)}', space=vmem, size = 0x12000, scoped, tag = 'internal scratch']
  %s0 = inlined_call_operand.vmem [shape: bf16[16,352], index: 0, kind: input, shape index: {}]
  %s1 = inlined_call_operand.vmem [shape: bf16[352,128], index: 1, kind: input, shape index: {}]
  %s2 = inlined_call_operand.vmem [shape: f32[1,128], index: 2, kind: input, shape index: {}]
  %s3 = inlined_call_operand.vmem [shape: bf16[16,128], index: 3, kind: output, shape index: {}]
  %s4 = sld [smem:[#allocation0]]
  $region22: #{forward.98} parent=0
    _
  %s6 = ssub.s32 1, %s4
  %s7 = scalar_select 0, %s6, %s4
  // Predicated region
  $region2: #{forward.98} parent=0 // pred_check
    _
  $region3: #{forward.98} parent=0 // pred_check_branch
    %9 = sbr.rel (0) target = $region5
  $region4: #{forward.98} parent=0 // pred_region
    _
  $region5: #{forward.98} parent=0 // pred_fallthru
    _
  // Predicated region
  $region6: #{forward.98} parent=0 // pred_check
    _
  $region7: #{forward.98} parent=0 // pred_check_branch
    %11 = sbr.rel (0) target = $region9
  $region8: #{forward.98} parent=0 // pred_region
    _
  $region9: #{forward.98} parent=0 // pred_fallthru
    _
  // Predicated region
  $region10: #{forward.98} parent=0 // pred_check
    _
  $region11: #{forward.98} parent=0 // pred_check_branch
    %13 = sbr.rel (0) target = $region13
  $region12: #{forward.98} parent=0 // pred_region
    _
  $region13: #{forward.98} parent=0 // pred_fallthru
    _
  %v15 = vld [vmem:[%s0] sm:$0xff]
  %v16 = vld [vmem:[%s0 + $0x8] sm:$0xf]
  %v17 = vld [vmem:[%s0 + $0xc] sm:$0xff]
  %v18 = vld [vmem:[%s0 + $0x14] sm:$0xf]
  %v19 = vld [vmem:[%s1] sm:$0xf]
  %v20 = vld [vmem:[%s1 + $0x4] sm:$0xf]
  %v21 = vld [vmem:[%s1 + $0x8] sm:$0xf]
  %v22 = vld [vmem:[%s1 + $0xc] sm:$0xf]
  %v23 = vld [vmem:[%s1 + $0x10] sm:$0xf]
  %v24 = vld [vmem:[%s1 + $0x14] sm:$0xf]
  %v25 = vld [vmem:[%s1 + $0x18] sm:$0xf]
  %v26 = vld [vmem:[%s1 + $0x1c] sm:$0xf]
  %v27 = vld [vmem:[%s1 + $0x20] sm:$0xf]
  %v28 = vld [vmem:[%s1 + $0x24] sm:$0xf]
  %v29 = vld [vmem:[%s1 + $0x28] sm:$0xf]
  %v30 = vld [vmem:[%s1 + $0x2c] sm:$0xf]
  %v31 = vld [vmem:[%s1 + $0x30] sm:$0xf]
  %v32 = vld [vmem:[%s1 + $0x34] sm:$0xf]
  %v33 = vld [vmem:[%s1 + $0x38] sm:$0xf]
  %v34 = vld [vmem:[%s1 + $0x3c] sm:$0xf]
  %v35 = vld [vmem:[%s1 + $0x40] sm:$0xf]
  %v36 = vld [vmem:[%s1 + $0x44] sm:$0xf]
  %v37 = vld [vmem:[%s1 + $0x48] sm:$0xf]
  %v38 = vld [vmem:[%s1 + $0x4c] sm:$0xf]
  %v39 = vld [vmem:[%s1 + $0x50] sm:$0xf]
  %v40 = vld [vmem:[%s1 + $0x54] sm:$0xf]
  %v41 = vld [vmem:[%s1 + $0x58] sm:$0xf]
  %v42 = vld [vmem:[%s1 + $0x5c] sm:$0xf]
  %v43 = vld [vmem:[%s1 + $0x60] sm:$0xf]
  %v44 = vld [vmem:[%s1 + $0x64] sm:$0xf]
  %v45 = vld [vmem:[%s1 + $0x68] sm:$0xf]
  %v46 = vld [vmem:[%s1 + $0x6c] sm:$0xf]
  %v47 = vld [vmem:[%s1 + $0x70] sm:$0xf]
  %v48 = vld [vmem:[%s1 + $0x74] sm:$0xf]
  %v49 = vld [vmem:[%s1 + $0x78] sm:$0xf]
  %v50 = vld [vmem:[%s1 + $0x7c] sm:$0xf]
  %v51 = vld [vmem:[%s1 + $0x80] sm:$0xf]
  %v52 = vld [vmem:[%s1 + $0x84] sm:$0xf]
  %v53 = vld [vmem:[%s1 + $0x88] sm:$0xf]
  %v54 = vld [vmem:[%s1 + $0x8c] sm:$0xf]
  %v55 = vld [vmem:[%s1 + $0x90] sm:$0xf]
  %v56 = vld [vmem:[%s1 + $0x94] sm:$0xf]
  %v57 = vld [vmem:[%s1 + $0x98] sm:$0xf]
  %v58 = vld [vmem:[%s1 + $0x9c] sm:$0xf]
  %v59 = vld [vmem:[%s1 + $0xa0] sm:$0xf]
  %v60 = vld [vmem:[%s1 + $0xa4] sm:$0xf]
  %v61 = vld [vmem:[%s1 + $0xa8] sm:$0xf]
  %v62 = vld [vmem:[%s1 + $0xac] sm:$0xf]
  %v63 = vld [vmem:[%s2] sm:$0x1]
  %v65 = vlaneseq
  %v66 = vshrl.u32 %v65, 7
  %v67 = vsub.s32 0, %v66
  %v68 = vrot.slane %v63, %v67
  %v74 = vunpack.c.l.b16 %v15
  %v75 = vunpack.c.h.b16 %v15
  %v76 = vunpack.c.l.b16 %v16
  %v77 = vunpack.c.l.b16 %v17
  %v78 = vunpack.c.h.b16 %v17
  %v79 = vunpack.c.l.b16 %v18
  %v80 = vpack.c.b16 %v77, %v74
  %v81 = vpack.c.b16 %v78, %v75
  %v82 = vpack.c.b16 %v79, %v76
  %v129 = vunpack.c.l.b16 %v19
  %v130 = vunpack.c.l.b16 %v20
  %v131 = vunpack.c.l.b16 %v21
  %v132 = vunpack.c.l.b16 %v22
  %v133 = vunpack.c.l.b16 %v23
  %v134 = vunpack.c.l.b16 %v24
  %v135 = vunpack.c.l.b16 %v25
  %v136 = vunpack.c.l.b16 %v26
  %v137 = vunpack.c.l.b16 %v27
  %v138 = vunpack.c.l.b16 %v28
  %v139 = vunpack.c.l.b16 %v29
  %v140 = vunpack.c.l.b16 %v30
  %v141 = vunpack.c.l.b16 %v31
  %v142 = vunpack.c.l.b16 %v32
  %v143 = vunpack.c.l.b16 %v33
  %v144 = vunpack.c.l.b16 %v34
  %v145 = vunpack.c.l.b16 %v35
  %v146 = vunpack.c.l.b16 %v36
  %v147 = vunpack.c.l.b16 %v37
  %v148 = vunpack.c.l.b16 %v38
  %v149 = vunpack.c.l.b16 %v39
  %v150 = vunpack.c.l.b16 %v40
  %v151 = vunpack.c.l.b16 %v41
  %v152 = vunpack.c.l.b16 %v42
  %v153 = vunpack.c.l.b16 %v43
  %v154 = vunpack.c.l.b16 %v44
  %v155 = vunpack.c.l.b16 %v45
  %v156 = vunpack.c.l.b16 %v46
  %v157 = vunpack.c.l.b16 %v47
  %v158 = vunpack.c.l.b16 %v48
  %v159 = vunpack.c.l.b16 %v49
  %v160 = vunpack.c.l.b16 %v50
  %v161 = vunpack.c.l.b16 %v51
  %v162 = vunpack.c.l.b16 %v52
  %v163 = vunpack.c.l.b16 %v53
  %v164 = vunpack.c.l.b16 %v54
  %v165 = vunpack.c.l.b16 %v55
  %v166 = vunpack.c.l.b16 %v56
  %v167 = vunpack.c.l.b16 %v57
  %v168 = vunpack.c.l.b16 %v58
  %v169 = vunpack.c.l.b16 %v59
  %v170 = vunpack.c.l.b16 %v60
  %v171 = vunpack.c.l.b16 %v61
  %v172 = vunpack.c.l.b16 %v62
  %v173 = vpack.c.b16 %v130, %v129
  %v174 = vpack.c.b16 %v132, %v131
  %v175 = vpack.c.b16 %v134, %v133
  %v176 = vpack.c.b16 %v136, %v135
  %v177 = vpack.c.b16 %v138, %v137
  %v178 = vpack.c.b16 %v140, %v139
  %v179 = vpack.c.b16 %v142, %v141
  %v180 = vpack.c.b16 %v144, %v143
  %v181 = vpack.c.b16 %v146, %v145
  %v182 = vpack.c.b16 %v148, %v147
  %v183 = vpack.c.b16 %v150, %v149
  %v184 = vpack.c.b16 %v152, %v151
  %v185 = vpack.c.b16 %v154, %v153
  %v186 = vpack.c.b16 %v156, %v155
  %v187 = vpack.c.b16 %v158, %v157
  %v188 = vpack.c.b16 %v160, %v159
  %v189 = vpack.c.b16 %v162, %v161
  %v190 = vpack.c.b16 %v164, %v163
  %v191 = vpack.c.b16 %v166, %v165
  %v192 = vpack.c.b16 %v168, %v167
  %v193 = vpack.c.b16 %v170, %v169
  %v194 = vpack.c.b16 %v172, %v171
  %vm217 = vcmask 785408
  %v219 = vsel %vm217, %v82, 0
  %221 = vmatprep.subr.bf16.mxu0 0
  %222 = vmatpush1.bf16.msra.mxu0 %v173
  %223 = vmatprep.subr.bf16.mxu0 0
  %224 = vmatpush1.bf16.msra.mxu0 %v174
  %225 = vmatprep.subr.bf16.mxu0 0
  %226 = vmatpush1.bf16.msra.mxu0 %v175
  %227 = vmatprep.subr.bf16.mxu0 0
  %228 = vmatpush1.bf16.msra.mxu0 %v176
  %229 = vmatprep.subr.bf16.mxu0 0
  %230 = vmatpush1.bf16.msra.mxu0 %v177
  %231 = vmatprep.subr.bf16.mxu0 0
  %232 = vmatpush1.bf16.msra.mxu0 %v178
  %233 = vmatprep.subr.bf16.mxu0 0
  %234 = vmatpush1.bf16.msra.mxu0 %v179
  %235 = vmatprep.subr.bf16.mxu0 0
  %236 = vmatpush1.bf16.msra.mxu0 %v180
  %237 = vmatprep.subr.bf16.mxu0 0
  %238 = vmatpush1.bf16.msra.mxu0 %v181
  %239 = vmatprep.subr.bf16.mxu0 0
  %240 = vmatpush1.bf16.msra.mxu0 %v182
  %241 = vmatprep.subr.bf16.mxu0 0
  %242 = vmatpush1.bf16.msra.mxu0 %v183
  %243 = vmatprep.subr.bf16.mxu0 0
  %244 = vmatpush1.bf16.msra.mxu0 %v184
  %245 = vmatprep.subr.bf16.mxu0 0
  %246 = vmatpush1.bf16.msra.mxu0 %v185
  %247 = vmatprep.subr.bf16.mxu0 0
  %248 = vmatpush1.bf16.msra.mxu0 %v186
  %249 = vmatprep.subr.bf16.mxu0 0
  %250 = vmatpush1.bf16.msra.mxu0 %v187
  %251 = vmatprep.subr.bf16.mxu0 0
  %252 = vmatpush1.bf16.msra.mxu0 %v188
  %253 = vmatprep.mubr.bf16.mxu0 %v81
  %254 = vmatmul.mubr.bf16.gmra.mrb[0].mxu0 %v80
  %v255 = vpop.f32.mrb[0].mxu0
  %v256 = vadd.f32 %v68, %v255
  %v257 = vpop.f32.mrb[0].mxu0
  %v258 = vpop.f32.mrb[0].mxu0
  %v259 = vadd.f32 %v68, %v258
  %v260 = vpop.f32.mrb[0].mxu0
  %261 = vdwg.mxu0
  %262 = vmatprep.subr.bf16.mxu0 0
  %263 = vmatpush1.bf16.msra.mxu0 %v189
  %264 = vmatprep.subr.bf16.mxu0 0
  %265 = vmatpush1.bf16.msra.mxu0 %v190
  %266 = vmatprep.subr.bf16.mxu0 0
  %267 = vmatpush1.bf16.msra.mxu0 %v191
  %268 = vmatprep.subr.bf16.mxu0 0
  %269 = vmatpush1.bf16.msra.mxu0 %v192
  %270 = vmatprep.subr.bf16.mxu0 0
  %271 = vmatpush1.bf16.msra.mxu0 %v193
  %272 = vmatprep.subr.bf16.mxu0 0
  %273 = vmatpush1.bf16.msra.mxu0 %v194
  %274 = vmatprep.subr.bf16.mxu0 0
  %275 = vmatpush1.bf16.msra.mxu0 0
  %276 = vmatprep.subr.bf16.mxu0 0
  %277 = vmatpush1.bf16.msra.mxu0 0
  %278 = vmatprep.subr.bf16.mxu0 0
  %279 = vmatpush1.bf16.msra.mxu0 0
  %280 = vmatprep.subr.bf16.mxu0 0
  %281 = vmatpush1.bf16.msra.mxu0 0
  %282 = vmatprep.subr.bf16.mxu0 0
  %283 = vmatpush1.bf16.msra.mxu0 0
  %284 = vmatprep.subr.bf16.mxu0 0
  %285 = vmatpush1.bf16.msra.mxu0 0
  %286 = vmatprep.subr.bf16.mxu0 0
  %287 = vmatpush1.bf16.msra.mxu0 0
  %288 = vmatprep.subr.bf16.mxu0 0
  %289 = vmatpush1.bf16.msra.mxu0 0
  %290 = vmatprep.subr.bf16.mxu0 0
  %291 = vmatpush1.bf16.msra.mxu0 0
  %292 = vmatprep.subr.bf16.mxu0 0
  %293 = vmatpush1.bf16.msra.mxu0 0
  %294 = vmatprep.mubr.bf16.mxu0 0
  %295 = vmatmul.mubr.bf16.gmra.mrb[0].mxu0 %v219
  %v296 = vpop.f32.mrb[0].mxu0
  %v297 = vadd.f32 %v256, %v296
  %v298 = vpop.f32.mrb[0].mxu0
  %v299 = vpop.f32.mrb[0].mxu0
  %v300 = vadd.f32 %v259, %v299
  %v301 = vpop.f32.mrb[0].mxu0
  %302 = vdwg.mxu0
  %v303 = vmax.f32 %v297, 0.0
  %v304 = vmax.f32 %v300, 0.0
  %v305 = vpack.c.bf16 %v304, %v303
  %v307 = vunpack.c.l.b16 %v305
  %v308 = vunpack.c.h.b16 %v305
  %v309 = vpack.c.b16 %v307, %v307
  %v310 = vpack.c.b16 %v308, %v308
  %313 = vst [vmem:[%s3] sm:$0xf] %v309
  %314 = vst [vmem:[%s3 + $0x4] sm:$0xf] %v310
  // Predicated region
  $region14: #{forward.98} parent=0 // pred_check
    _
  $region15: #{forward.98} parent=0 // pred_check_branch
    %316 = sbr.rel (0) target = $region17
  $region16: #{forward.98} parent=0 // pred_region
    _
  $region17: #{forward.98} parent=0 // pred_fallthru
    _
  // Predicated region
  $region18: #{forward.98} parent=0 // pred_check
    _
  $region19: #{forward.98} parent=0 // pred_check_branch
    %318 = sbr.rel (0) target = $region21
  $region20: #{forward.98} parent=0 // pred_region
    _
  $region21: #{forward.98} parent=0 // pred_fallthru
    _

// kernel: forward.110
$region0: #{forward.110}
  #allocation0 [shape = 'u32[]', space=smem, size = 0x4, offset = 0x4, fixed_abs, tag = 'smem constant byte address 0x4 - core index']
  #allocation1 [shape = 'u32[144,128]{1,0:T(1,128)}', space=vmem, size = 0x12000, scoped, tag = 'internal scratch']
  %s0 = inlined_call_operand.vmem [shape: bf16[9,9,96], index: 0, kind: input, shape index: {}]
  %s1 = inlined_call_operand.vmem [shape: bf16[96,128], index: 1, kind: input, shape index: {}]
  %s2 = inlined_call_operand.vmem [shape: f32[1,128], index: 2, kind: input, shape index: {}]
  %s3 = inlined_call_operand.vmem [shape: bf16[9,128], index: 3, kind: output, shape index: {}]
  %s4 = sld [smem:[#allocation0]]
  $region22: #{forward.110} parent=0
    _
  %s6 = ssub.s32 1, %s4
  %s7 = scalar_select 0, %s6, %s4
  // Predicated region
  $region2: #{forward.110} parent=0 // pred_check
    _
  $region3: #{forward.110} parent=0 // pred_check_branch
    %9 = sbr.rel (0) target = $region5
  $region4: #{forward.110} parent=0 // pred_region
    _
  $region5: #{forward.110} parent=0 // pred_fallthru
    _
  // Predicated region
  $region6: #{forward.110} parent=0 // pred_check
    _
  $region7: #{forward.110} parent=0 // pred_check_branch
    %11 = sbr.rel (0) target = $region9
  $region8: #{forward.110} parent=0 // pred_region
    _
  $region9: #{forward.110} parent=0 // pred_fallthru
    _
  // Predicated region
  $region10: #{forward.110} parent=0 // pred_check
    _
  $region11: #{forward.110} parent=0 // pred_check_branch
    %13 = sbr.rel (0) target = $region13
  $region12: #{forward.110} parent=0 // pred_region
    _
  $region13: #{forward.110} parent=0 // pred_fallthru
    _
  %v15 = vld [vmem:[%s0] sm:$0xf]
  %v16 = vld [vmem:[%s0 + $0x4] sm:$0x1]
  %v17 = vld [vmem:[%s0 + $0x8] sm:$0xf]
  %v18 = vld [vmem:[%s0 + $0xc] sm:$0x1]
  %v19 = vld [vmem:[%s0 + $0x10] sm:$0xf]
  %v20 = vld [vmem:[%s0 + $0x14] sm:$0x1]
  %v21 = vld [vmem:[%s0 + $0x18] sm:$0xf]
  %v22 = vld [vmem:[%s0 + $0x1c] sm:$0x1]
  %v23 = vld [vmem:[%s0 + $0x20] sm:$0xf]
  %v24 = vld [vmem:[%s0 + $0x24] sm:$0x1]
  %v25 = vld [vmem:[%s0 + $0x28] sm:$0xf]
  %v26 = vld [vmem:[%s0 + $0x2c] sm:$0x1]
  %v27 = vld [vmem:[%s0 + $0x30] sm:$0xf]
  %v28 = vld [vmem:[%s0 + $0x34] sm:$0x1]
  %v29 = vld [vmem:[%s0 + $0x38] sm:$0xf]
  %v30 = vld [vmem:[%s0 + $0x3c] sm:$0x1]
  %v31 = vld [vmem:[%s0 + $0x40] sm:$0xf]
  %v32 = vld [vmem:[%s0 + $0x44] sm:$0x1]
  %v33 = vunpack.c.l.bf16 %v15
  %v34 = vunpack.c.l.bf16 %v16
  %v35 = vunpack.c.l.bf16 %v17
  %v36 = vunpack.c.l.bf16 %v18
  %v37 = vunpack.c.l.bf16 %v19
  %v38 = vunpack.c.l.bf16 %v20
  %v39 = vunpack.c.l.bf16 %v21
  %v40 = vunpack.c.l.bf16 %v22
  %v41 = vunpack.c.l.bf16 %v23
  %v42 = vunpack.c.l.bf16 %v24
  %v43 = vunpack.c.l.bf16 %v25
  %v44 = vunpack.c.l.bf16 %v26
  %v45 = vunpack.c.l.bf16 %v27
  %v46 = vunpack.c.l.bf16 %v28
  %v47 = vunpack.c.l.bf16 %v29
  %v48 = vunpack.c.l.bf16 %v30
  %v49 = vunpack.c.l.bf16 %v31
  %v50 = vunpack.c.l.bf16 %v32
  %vm51 = vcmask 785408
  %v52 = vsel %vm51, %v33, 0.0
  %v53 = vsel %vm51, %v35, 0.0
  %v54 = vadd.f32 %v52, %v53
  %v55 = vsel %vm51, %v37, 0.0
  %v56 = vadd.f32 %v54, %v55
  %v57 = vsel %vm51, %v39, 0.0
  %v58 = vadd.f32 %v56, %v57
  %v59 = vsel %vm51, %v41, 0.0
  %v60 = vadd.f32 %v58, %v59
  %v61 = vsel %vm51, %v43, 0.0
  %v62 = vadd.f32 %v60, %v61
  %v63 = vsel %vm51, %v45, 0.0
  %v64 = vadd.f32 %v62, %v63
  %v65 = vsel %vm51, %v47, 0.0
  %v66 = vadd.f32 %v64, %v65
  %v67 = vsel %vm51, %v49, 0.0
  %v68 = vadd.f32 %v66, %v67
  %vm69 = vcmask 778240
  %v70 = vsel %vm69, %v34, 0.0
  %v71 = vsel %vm69, %v36, 0.0
  %v72 = vadd.f32 %v70, %v71
  %v73 = vsel %vm69, %v38, 0.0
  %v74 = vadd.f32 %v72, %v73
  %v75 = vsel %vm69, %v40, 0.0
  %v76 = vadd.f32 %v74, %v75
  %v77 = vsel %vm69, %v42, 0.0
  %v78 = vadd.f32 %v76, %v77
  %v79 = vsel %vm69, %v44, 0.0
  %v80 = vadd.f32 %v78, %v79
  %v81 = vsel %vm69, %v46, 0.0
  %v82 = vadd.f32 %v80, %v81
  %v83 = vsel %vm69, %v48, 0.0
  %v84 = vadd.f32 %v82, %v83
  %v85 = vsel %vm69, %v50, 0.0
  %v86 = vadd.f32 %v84, %v85
  %v87 = vmul.f32 %v68, 0.11111111
  %v88 = vmul.f32 %v86, 0.11111111
  %v89 = vpack.c.bf16 %v88, %v87
  %v90 = vld [vmem:[%s1] sm:$0xf]
  %v91 = vld [vmem:[%s1 + $0x4] sm:$0xf]
  %v92 = vld [vmem:[%s1 + $0x8] sm:$0xf]
  %v93 = vld [vmem:[%s1 + $0xc] sm:$0xf]
  %v94 = vld [vmem:[%s1 + $0x10] sm:$0xf]
  %v95 = vld [vmem:[%s1 + $0x14] sm:$0xf]
  %v96 = vld [vmem:[%s1 + $0x18] sm:$0xf]
  %v97 = vld [vmem:[%s1 + $0x1c] sm:$0xf]
  %v98 = vld [vmem:[%s1 + $0x20] sm:$0xf]
  %v99 = vld [vmem:[%s1 + $0x24] sm:$0xf]
  %v100 = vld [vmem:[%s1 + $0x28] sm:$0xf]
  %v101 = vld [vmem:[%s1 + $0x2c] sm:$0xf]
  %v102 = vld [vmem:[%s2] sm:$0x1]
  %v104 = vlaneseq
  %v105 = vshrl.u32 %v104, 7
  %v106 = vsub.s32 0, %v105
  %v107 = vrot.slane %v102, %v106
  %v121 = vunpack.c.l.b16 %v90
  %v122 = vunpack.c.l.b16 %v91
  %v123 = vunpack.c.l.b16 %v92
  %v124 = vunpack.c.l.b16 %v93
  %v125 = vunpack.c.l.b16 %v94
  %v126 = vunpack.c.l.b16 %v95
  %v127 = vunpack.c.l.b16 %v96
  %v128 = vunpack.c.l.b16 %v97
  %v129 = vunpack.c.l.b16 %v98
  %v130 = vunpack.c.l.b16 %v99
  %v131 = vunpack.c.l.b16 %v100
  %v132 = vunpack.c.l.b16 %v101
  %v133 = vpack.c.b16 %v122, %v121
  %v134 = vpack.c.b16 %v124, %v123
  %v135 = vpack.c.b16 %v126, %v125
  %v136 = vpack.c.b16 %v128, %v127
  %v137 = vpack.c.b16 %v130, %v129
  %v138 = vpack.c.b16 %v132, %v131
  %v146 = vsel %vm51, %v89, 0
  %148 = vmatprep.subr.bf16.mxu0 0
  %149 = vmatpush1.bf16.msra.mxu0 %v133
  %150 = vmatprep.subr.bf16.mxu0 0
  %151 = vmatpush1.bf16.msra.mxu0 %v134
  %152 = vmatprep.subr.bf16.mxu0 0
  %153 = vmatpush1.bf16.msra.mxu0 %v135
  %154 = vmatprep.subr.bf16.mxu0 0
  %155 = vmatpush1.bf16.msra.mxu0 %v136
  %156 = vmatprep.subr.bf16.mxu0 0
  %157 = vmatpush1.bf16.msra.mxu0 %v137
  %158 = vmatprep.subr.bf16.mxu0 0
  %159 = vmatpush1.bf16.msra.mxu0 %v138
  %160 = vmatprep.subr.bf16.mxu0 0
  %161 = vmatpush1.bf16.msra.mxu0 0
  %162 = vmatprep.subr.bf16.mxu0 0
  %163 = vmatpush1.bf16.msra.mxu0 0
  %164 = vmatprep.subr.bf16.mxu0 0
  %165 = vmatpush1.bf16.msra.mxu0 0
  %166 = vmatprep.subr.bf16.mxu0 0
  %167 = vmatpush1.bf16.msra.mxu0 0
  %168 = vmatprep.subr.bf16.mxu0 0
  %169 = vmatpush1.bf16.msra.mxu0 0
  %170 = vmatprep.subr.bf16.mxu0 0
  %171 = vmatpush1.bf16.msra.mxu0 0
  %172 = vmatprep.subr.bf16.mxu0 0
  %173 = vmatpush1.bf16.msra.mxu0 0
  %174 = vmatprep.subr.bf16.mxu0 0
  %175 = vmatpush1.bf16.msra.mxu0 0
  %176 = vmatprep.subr.bf16.mxu0 0
  %177 = vmatpush1.bf16.msra.mxu0 0
  %178 = vmatprep.subr.bf16.mxu0 0
  %179 = vmatpush1.bf16.msra.mxu0 0
  %180 = vmatprep.mubr.bf16.mxu0 0
  %181 = vmatmul.mubr.bf16.gmra.mrb[0].mxu0 %v146
  %v182 = vpop.f32.mrb[0].mxu0
  %v183 = vadd.f32 %v107, %v182
  %v184 = vpop.f32.mrb[0].mxu0
  %v185 = vpop.f32.mrb[0].mxu0
  %v186 = vadd.f32 %v107, %v185
  %v187 = vpop.f32.mrb[0].mxu0
  %188 = vdwg.mxu0
  %v189 = vmax.f32 %v183, 0.0
  %v190 = vmax.f32 %v186, 0.0
  %v191 = vpack.c.bf16 %v190, %v189
  %v193 = vunpack.c.l.b16 %v191
  %v194 = vunpack.c.h.b16 %v191
  %v195 = vpack.c.b16 %v193, %v193
  %v196 = vpack.c.b16 %v194, %v194
  %199 = vst [vmem:[%s3] sm:$0xf] %v195
  %vm200 = vcmask 1040384
  %vm201 = vsmask.f32 256
  %vm202 = vmand %vm200, %vm201
  %v203 = vld [vmem:[%s3 + $0x4] sm:$0x1]
  %v204 = vsel %vm202, %v196, %v203
  %205 = vst [vmem:[%s3 + $0x4] sm:$0x1] %v204
  // Predicated region
  $region14: #{forward.110} parent=0 // pred_check
    _
  $region15: #{forward.110} parent=0 // pred_check_branch
    %207 = sbr.rel (0) target = $region17
  $region16: #{forward.110} parent=0 // pred_region
    _
  $region17: #{forward.110} parent=0 // pred_fallthru
    _
  // Predicated region
  $region18: #{forward.110} parent=0 // pred_check
    _
  $region19: #{forward.110} parent=0 // pred_check_branch
    %209 = sbr.rel (0) target = $region21
  $region20: #{forward.110} parent=0 // pred_region
    _
  $region21: #{forward.110} parent=0 // pred_fallthru
    _

// kernel: forward.112
$region0: #{forward.112}
  #allocation0 [shape = 'u32[]', space=smem, size = 0x4, offset = 0x4, fixed_abs, tag = 'smem constant byte address 0x4 - core index']
  #allocation1 [shape = 'u32[144,128]{1,0:T(1,128)}', space=vmem, size = 0x12000, scoped, tag = 'internal scratch']
  %s0 = inlined_call_operand.vmem [shape: bf16[16,160], index: 0, kind: input, shape index: {}]
  %s1 = inlined_call_operand.vmem [shape: bf16[160,128], index: 1, kind: input, shape index: {}]
  %s2 = inlined_call_operand.vmem [shape: f32[1,128], index: 2, kind: input, shape index: {}]
  %s3 = inlined_call_operand.vmem [shape: bf16[16,128], index: 3, kind: output, shape index: {}]
  %s4 = sld [smem:[#allocation0]]
  $region22: #{forward.112} parent=0
    _
  %s6 = ssub.s32 1, %s4
  %s7 = scalar_select 0, %s6, %s4
  // Predicated region
  $region2: #{forward.112} parent=0 // pred_check
    _
  $region3: #{forward.112} parent=0 // pred_check_branch
    %9 = sbr.rel (0) target = $region5
  $region4: #{forward.112} parent=0 // pred_region
    _
  $region5: #{forward.112} parent=0 // pred_fallthru
    _
  // Predicated region
  $region6: #{forward.112} parent=0 // pred_check
    _
  $region7: #{forward.112} parent=0 // pred_check_branch
    %11 = sbr.rel (0) target = $region9
  $region8: #{forward.112} parent=0 // pred_region
    _
  $region9: #{forward.112} parent=0 // pred_fallthru
    _
  // Predicated region
  $region10: #{forward.112} parent=0 // pred_check
    _
  $region11: #{forward.112} parent=0 // pred_check_branch
    %13 = sbr.rel (0) target = $region13
  $region12: #{forward.112} parent=0 // pred_region
    _
  $region13: #{forward.112} parent=0 // pred_fallthru
    _
  %v15 = vld [vmem:[%s0] sm:$0xff]
  %v16 = vld [vmem:[%s0 + $0x8] sm:$0xff]
  %v17 = vld [vmem:[%s1] sm:$0xf]
  %v18 = vld [vmem:[%s1 + $0x4] sm:$0xf]
  %v19 = vld [vmem:[%s1 + $0x8] sm:$0xf]
  %v20 = vld [vmem:[%s1 + $0xc] sm:$0xf]
  %v21 = vld [vmem:[%s1 + $0x10] sm:$0xf]
  %v22 = vld [vmem:[%s1 + $0x14] sm:$0xf]
  %v23 = vld [vmem:[%s1 + $0x18] sm:$0xf]
  %v24 = vld [vmem:[%s1 + $0x1c] sm:$0xf]
  %v25 = vld [vmem:[%s1 + $0x20] sm:$0xf]
  %v26 = vld [vmem:[%s1 + $0x24] sm:$0xf]
  %v27 = vld [vmem:[%s1 + $0x28] sm:$0xf]
  %v28 = vld [vmem:[%s1 + $0x2c] sm:$0xf]
  %v29 = vld [vmem:[%s1 + $0x30] sm:$0xf]
  %v30 = vld [vmem:[%s1 + $0x34] sm:$0xf]
  %v31 = vld [vmem:[%s1 + $0x38] sm:$0xf]
  %v32 = vld [vmem:[%s1 + $0x3c] sm:$0xf]
  %v33 = vld [vmem:[%s1 + $0x40] sm:$0xf]
  %v34 = vld [vmem:[%s1 + $0x44] sm:$0xf]
  %v35 = vld [vmem:[%s1 + $0x48] sm:$0xf]
  %v36 = vld [vmem:[%s1 + $0x4c] sm:$0xf]
  %v37 = vld [vmem:[%s2] sm:$0x1]
  %v39 = vlaneseq
  %v40 = vshrl.u32 %v39, 7
  %v41 = vsub.s32 0, %v40
  %v42 = vrot.slane %v37, %v41
  %v46 = vunpack.c.l.b16 %v15
  %v47 = vunpack.c.h.b16 %v15
  %v48 = vunpack.c.l.b16 %v16
  %v49 = vunpack.c.h.b16 %v16
  %v50 = vpack.c.b16 %v48, %v46
  %v51 = vpack.c.b16 %v49, %v47
  %v73 = vunpack.c.l.b16 %v17
  %v74 = vunpack.c.l.b16 %v18
  %v75 = vunpack.c.l.b16 %v19
  %v76 = vunpack.c.l.b16 %v20
  %v77 = vunpack.c.l.b16 %v21
  %v78 = vunpack.c.l.b16 %v22
  %v79 = vunpack.c.l.b16 %v23
  %v80 = vunpack.c.l.b16 %v24
  %v81 = vunpack.c.l.b16 %v25
  %v82 = vunpack.c.l.b16 %v26
  %v83 = vunpack.c.l.b16 %v27
  %v84 = vunpack.c.l.b16 %v28
  %v85 = vunpack.c.l.b16 %v29
  %v86 = vunpack.c.l.b16 %v30
  %v87 = vunpack.c.l.b16 %v31
  %v88 = vunpack.c.l.b16 %v32
  %v89 = vunpack.c.l.b16 %v33
  %v90 = vunpack.c.l.b16 %v34
  %v91 = vunpack.c.l.b16 %v35
  %v92 = vunpack.c.l.b16 %v36
  %v93 = vpack.c.b16 %v74, %v73
  %v94 = vpack.c.b16 %v76, %v75
  %v95 = vpack.c.b16 %v78, %v77
  %v96 = vpack.c.b16 %v80, %v79
  %v97 = vpack.c.b16 %v82, %v81
  %v98 = vpack.c.b16 %v84, %v83
  %v99 = vpack.c.b16 %v86, %v85
  %v100 = vpack.c.b16 %v88, %v87
  %v101 = vpack.c.b16 %v90, %v89
  %v102 = vpack.c.b16 %v92, %v91
  %vm113 = vcmask 261120
  %v115 = vsel %vm113, %v51, 0
  %117 = vmatprep.subr.bf16.mxu0 0
  %118 = vmatpush1.bf16.msra.mxu0 %v93
  %119 = vmatprep.subr.bf16.mxu0 0
  %120 = vmatpush1.bf16.msra.mxu0 %v94
  %121 = vmatprep.subr.bf16.mxu0 0
  %122 = vmatpush1.bf16.msra.mxu0 %v95
  %123 = vmatprep.subr.bf16.mxu0 0
  %124 = vmatpush1.bf16.msra.mxu0 %v96
  %125 = vmatprep.subr.bf16.mxu0 0
  %126 = vmatpush1.bf16.msra.mxu0 %v97
  %127 = vmatprep.subr.bf16.mxu0 0
  %128 = vmatpush1.bf16.msra.mxu0 %v98
  %129 = vmatprep.subr.bf16.mxu0 0
  %130 = vmatpush1.bf16.msra.mxu0 %v99
  %131 = vmatprep.subr.bf16.mxu0 0
  %132 = vmatpush1.bf16.msra.mxu0 %v100
  %133 = vmatprep.subr.bf16.mxu0 0
  %134 = vmatpush1.bf16.msra.mxu0 %v101
  %135 = vmatprep.subr.bf16.mxu0 0
  %136 = vmatpush1.bf16.msra.mxu0 %v102
  %137 = vmatprep.subr.bf16.mxu0 0
  %138 = vmatpush1.bf16.msra.mxu0 0
  %139 = vmatprep.subr.bf16.mxu0 0
  %140 = vmatpush1.bf16.msra.mxu0 0
  %141 = vmatprep.subr.bf16.mxu0 0
  %142 = vmatpush1.bf16.msra.mxu0 0
  %143 = vmatprep.subr.bf16.mxu0 0
  %144 = vmatpush1.bf16.msra.mxu0 0
  %145 = vmatprep.subr.bf16.mxu0 0
  %146 = vmatpush1.bf16.msra.mxu0 0
  %147 = vmatprep.subr.bf16.mxu0 0
  %148 = vmatpush1.bf16.msra.mxu0 0
  %149 = vmatprep.mubr.bf16.mxu0 %v115
  %150 = vmatmul.mubr.bf16.gmra.mrb[0].mxu0 %v50
  %v151 = vpop.f32.mrb[0].mxu0
  %v152 = vadd.f32 %v42, %v151
  %v153 = vpop.f32.mrb[0].mxu0
  %v154 = vpop.f32.mrb[0].mxu0
  %v155 = vadd.f32 %v42, %v154
  %v156 = vpop.f32.mrb[0].mxu0
  %157 = vdwg.mxu0
  %v158 = vmax.f32 %v152, 0.0
  %v159 = vmax.f32 %v155, 0.0
  %v160 = vpack.c.bf16 %v159, %v158
  %v162 = vunpack.c.l.b16 %v160
  %v163 = vunpack.c.h.b16 %v160
  %v164 = vpack.c.b16 %v162, %v162
  %v165 = vpack.c.b16 %v163, %v163
  %168 = vst [vmem:[%s3] sm:$0xf] %v164
  %169 = vst [vmem:[%s3 + $0x4] sm:$0xf] %v165
  // Predicated region
  $region14: #{forward.112} parent=0 // pred_check
    _
  $region15: #{forward.112} parent=0 // pred_check_branch
    %171 = sbr.rel (0) target = $region17
  $region16: #{forward.112} parent=0 // pred_region
    _
  $region17: #{forward.112} parent=0 // pred_fallthru
    _
  // Predicated region
  $region18: #{forward.112} parent=0 // pred_check
    _
  $region19: #{forward.112} parent=0 // pred_check_branch
    %173 = sbr.rel (0) target = $region21
  $region20: #{forward.112} parent=0 // pred_region
    _
  $region21: #{forward.112} parent=0 // pred_fallthru
    _

// kernel: forward.128
$region0: #{forward.128}
  #allocation0 [shape = 'u32[]', space=smem, size = 0x4, offset = 0x4, fixed_abs, tag = 'smem constant byte address 0x4 - core index']
  #allocation1 [shape = 'u32[144,128]{1,0:T(1,128)}', space=vmem, size = 0x12000, scoped, tag = 'internal scratch']
  %s0 = inlined_call_operand.vmem [shape: bf16[16,192], index: 0, kind: input, shape index: {}]
  %s1 = inlined_call_operand.vmem [shape: bf16[192,128], index: 1, kind: input, shape index: {}]
  %s2 = inlined_call_operand.vmem [shape: f32[1,128], index: 2, kind: input, shape index: {}]
  %s3 = inlined_call_operand.vmem [shape: bf16[16,128], index: 3, kind: output, shape index: {}]
  %s4 = sld [smem:[#allocation0]]
  $region22: #{forward.128} parent=0
    _
  %s6 = ssub.s32 1, %s4
  %s7 = scalar_select 0, %s6, %s4
  // Predicated region
  $region2: #{forward.128} parent=0 // pred_check
    _
  $region3: #{forward.128} parent=0 // pred_check_branch
    %9 = sbr.rel (0) target = $region5
  $region4: #{forward.128} parent=0 // pred_region
    _
  $region5: #{forward.128} parent=0 // pred_fallthru
    _
  // Predicated region
  $region6: #{forward.128} parent=0 // pred_check
    _
  $region7: #{forward.128} parent=0 // pred_check_branch
    %11 = sbr.rel (0) target = $region9
  $region8: #{forward.128} parent=0 // pred_region
    _
  $region9: #{forward.128} parent=0 // pred_fallthru
    _
  // Predicated region
  $region10: #{forward.128} parent=0 // pred_check
    _
  $region11: #{forward.128} parent=0 // pred_check_branch
    %13 = sbr.rel (0) target = $region13
  $region12: #{forward.128} parent=0 // pred_region
    _
  $region13: #{forward.128} parent=0 // pred_fallthru
    _
  %v15 = vld [vmem:[%s0] sm:$0xff]
  %v16 = vld [vmem:[%s0 + $0x8] sm:$0xff]
  %v17 = vld [vmem:[%s1] sm:$0xf]
  %v18 = vld [vmem:[%s1 + $0x4] sm:$0xf]
  %v19 = vld [vmem:[%s1 + $0x8] sm:$0xf]
  %v20 = vld [vmem:[%s1 + $0xc] sm:$0xf]
  %v21 = vld [vmem:[%s1 + $0x10] sm:$0xf]
  %v22 = vld [vmem:[%s1 + $0x14] sm:$0xf]
  %v23 = vld [vmem:[%s1 + $0x18] sm:$0xf]
  %v24 = vld [vmem:[%s1 + $0x1c] sm:$0xf]
  %v25 = vld [vmem:[%s1 + $0x20] sm:$0xf]
  %v26 = vld [vmem:[%s1 + $0x24] sm:$0xf]
  %v27 = vld [vmem:[%s1 + $0x28] sm:$0xf]
  %v28 = vld [vmem:[%s1 + $0x2c] sm:$0xf]
  %v29 = vld [vmem:[%s1 + $0x30] sm:$0xf]
  %v30 = vld [vmem:[%s1 + $0x34] sm:$0xf]
  %v31 = vld [vmem:[%s1 + $0x38] sm:$0xf]
  %v32 = vld [vmem:[%s1 + $0x3c] sm:$0xf]
  %v33 = vld [vmem:[%s1 + $0x40] sm:$0xf]
  %v34 = vld [vmem:[%s1 + $0x44] sm:$0xf]
  %v35 = vld [vmem:[%s1 + $0x48] sm:$0xf]
  %v36 = vld [vmem:[%s1 + $0x4c] sm:$0xf]
  %v37 = vld [vmem:[%s1 + $0x50] sm:$0xf]
  %v38 = vld [vmem:[%s1 + $0x54] sm:$0xf]
  %v39 = vld [vmem:[%s1 + $0x58] sm:$0xf]
  %v40 = vld [vmem:[%s1 + $0x5c] sm:$0xf]
  %v41 = vld [vmem:[%s2] sm:$0x1]
  %v43 = vlaneseq
  %v44 = vshrl.u32 %v43, 7
  %v45 = vsub.s32 0, %v44
  %v46 = vrot.slane %v41, %v45
  %v50 = vunpack.c.l.b16 %v15
  %v51 = vunpack.c.h.b16 %v15
  %v52 = vunpack.c.l.b16 %v16
  %v53 = vunpack.c.h.b16 %v16
  %v54 = vpack.c.b16 %v52, %v50
  %v55 = vpack.c.b16 %v53, %v51
  %v81 = vunpack.c.l.b16 %v17
  %v82 = vunpack.c.l.b16 %v18
  %v83 = vunpack.c.l.b16 %v19
  %v84 = vunpack.c.l.b16 %v20
  %v85 = vunpack.c.l.b16 %v21
  %v86 = vunpack.c.l.b16 %v22
  %v87 = vunpack.c.l.b16 %v23
  %v88 = vunpack.c.l.b16 %v24
  %v89 = vunpack.c.l.b16 %v25
  %v90 = vunpack.c.l.b16 %v26
  %v91 = vunpack.c.l.b16 %v27
  %v92 = vunpack.c.l.b16 %v28
  %v93 = vunpack.c.l.b16 %v29
  %v94 = vunpack.c.l.b16 %v30
  %v95 = vunpack.c.l.b16 %v31
  %v96 = vunpack.c.l.b16 %v32
  %v97 = vunpack.c.l.b16 %v33
  %v98 = vunpack.c.l.b16 %v34
  %v99 = vunpack.c.l.b16 %v35
  %v100 = vunpack.c.l.b16 %v36
  %v101 = vunpack.c.l.b16 %v37
  %v102 = vunpack.c.l.b16 %v38
  %v103 = vunpack.c.l.b16 %v39
  %v104 = vunpack.c.l.b16 %v40
  %v105 = vpack.c.b16 %v82, %v81
  %v106 = vpack.c.b16 %v84, %v83
  %v107 = vpack.c.b16 %v86, %v85
  %v108 = vpack.c.b16 %v88, %v87
  %v109 = vpack.c.b16 %v90, %v89
  %v110 = vpack.c.b16 %v92, %v91
  %v111 = vpack.c.b16 %v94, %v93
  %v112 = vpack.c.b16 %v96, %v95
  %v113 = vpack.c.b16 %v98, %v97
  %v114 = vpack.c.b16 %v100, %v99
  %v115 = vpack.c.b16 %v102, %v101
  %v116 = vpack.c.b16 %v104, %v103
  %vm129 = vcmask 523264
  %v131 = vsel %vm129, %v55, 0
  %133 = vmatprep.subr.bf16.mxu0 0
  %134 = vmatpush1.bf16.msra.mxu0 %v105
  %135 = vmatprep.subr.bf16.mxu0 0
  %136 = vmatpush1.bf16.msra.mxu0 %v106
  %137 = vmatprep.subr.bf16.mxu0 0
  %138 = vmatpush1.bf16.msra.mxu0 %v107
  %139 = vmatprep.subr.bf16.mxu0 0
  %140 = vmatpush1.bf16.msra.mxu0 %v108
  %141 = vmatprep.subr.bf16.mxu0 0
  %142 = vmatpush1.bf16.msra.mxu0 %v109
  %143 = vmatprep.subr.bf16.mxu0 0
  %144 = vmatpush1.bf16.msra.mxu0 %v110
  %145 = vmatprep.subr.bf16.mxu0 0
  %146 = vmatpush1.bf16.msra.mxu0 %v111
  %147 = vmatprep.subr.bf16.mxu0 0
  %148 = vmatpush1.bf16.msra.mxu0 %v112
  %149 = vmatprep.subr.bf16.mxu0 0
  %150 = vmatpush1.bf16.msra.mxu0 %v113
  %151 = vmatprep.subr.bf16.mxu0 0
  %152 = vmatpush1.bf16.msra.mxu0 %v114
  %153 = vmatprep.subr.bf16.mxu0 0
  %154 = vmatpush1.bf16.msra.mxu0 %v115
  %155 = vmatprep.subr.bf16.mxu0 0
  %156 = vmatpush1.bf16.msra.mxu0 %v116
  %157 = vmatprep.subr.bf16.mxu0 0
  %158 = vmatpush1.bf16.msra.mxu0 0
  %159 = vmatprep.subr.bf16.mxu0 0
  %160 = vmatpush1.bf16.msra.mxu0 0
  %161 = vmatprep.subr.bf16.mxu0 0
  %162 = vmatpush1.bf16.msra.mxu0 0
  %163 = vmatprep.subr.bf16.mxu0 0
  %164 = vmatpush1.bf16.msra.mxu0 0
  %165 = vmatprep.mubr.bf16.mxu0 %v131
  %166 = vmatmul.mubr.bf16.gmra.mrb[0].mxu0 %v54
  %v167 = vpop.f32.mrb[0].mxu0
  %v168 = vadd.f32 %v46, %v167
  %v169 = vpop.f32.mrb[0].mxu0
  %v170 = vpop.f32.mrb[0].mxu0
  %v171 = vadd.f32 %v46, %v170
  %v172 = vpop.f32.mrb[0].mxu0
  %173 = vdwg.mxu0
  %v174 = vmax.f32 %v168, 0.0
  %v175 = vmax.f32 %v171, 0.0
  %v176 = vpack.c.bf16 %v175, %v174
  %v178 = vunpack.c.l.b16 %v176
  %v179 = vunpack.c.h.b16 %v176
  %v180 = vpack.c.b16 %v178, %v178
  %v181 = vpack.c.b16 %v179, %v179
  %184 = vst [vmem:[%s3] sm:$0xf] %v180
  %185 = vst [vmem:[%s3 + $0x4] sm:$0xf] %v181
  // Predicated region
  $region14: #{forward.128} parent=0 // pred_check
    _
  $region15: #{forward.128} parent=0 // pred_check_branch
    %187 = sbr.rel (0) target = $region17
  $region16: #{forward.128} parent=0 // pred_region
    _
  $region17: #{forward.128} parent=0 // pred_fallthru
    _
  // Predicated region
  $region18: #{forward.128} parent=0 // pred_check
    _
  $region19: #{forward.128} parent=0 // pred_check_branch
    %189 = sbr.rel (0) target = $region21
  $region20: #{forward.128} parent=0 // pred_region
    _
  $region21: #{forward.128} parent=0 // pred_fallthru
    _

// kernel: forward.136
$region0: #{forward.136}
  #allocation0 [shape = 'u32[]', space=smem, size = 0x4, offset = 0x4, fixed_abs, tag = 'smem constant byte address 0x4 - core index']
  #allocation1 [shape = 'u32[144,128]{1,0:T(1,128)}', space=vmem, size = 0x12000, scoped, tag = 'internal scratch']
  %s0 = inlined_call_operand.vmem [shape: bf16[8,224], index: 0, kind: input, shape index: {}]
  %s1 = inlined_call_operand.vmem [shape: bf16[224,128], index: 1, kind: input, shape index: {}]
  %s2 = inlined_call_operand.vmem [shape: f32[1,128], index: 2, kind: input, shape index: {}]
  %s3 = inlined_call_operand.vmem [shape: bf16[8,128], index: 3, kind: output, shape index: {}]
  %s4 = sld [smem:[#allocation0]]
  $region22: #{forward.136} parent=0
    _
  %s6 = ssub.s32 1, %s4
  %s7 = scalar_select 0, %s6, %s4
  // Predicated region
  $region2: #{forward.136} parent=0 // pred_check
    _
  $region3: #{forward.136} parent=0 // pred_check_branch
    %9 = sbr.rel (0) target = $region5
  $region4: #{forward.136} parent=0 // pred_region
    _
  $region5: #{forward.136} parent=0 // pred_fallthru
    _
  // Predicated region
  $region6: #{forward.136} parent=0 // pred_check
    _
  $region7: #{forward.136} parent=0 // pred_check_branch
    %11 = sbr.rel (0) target = $region9
  $region8: #{forward.136} parent=0 // pred_region
    _
  $region9: #{forward.136} parent=0 // pred_fallthru
    _
  // Predicated region
  $region10: #{forward.136} parent=0 // pred_check
    _
  $region11: #{forward.136} parent=0 // pred_check_branch
    %13 = sbr.rel (0) target = $region13
  $region12: #{forward.136} parent=0 // pred_region
    _
  $region13: #{forward.136} parent=0 // pred_fallthru
    _
  %v15 = vld [vmem:[%s0] sm:$0xff]
  %v16 = vld [vmem:[%s1] sm:$0xf]
  %v17 = vld [vmem:[%s1 + $0x4] sm:$0xf]
  %v18 = vld [vmem:[%s1 + $0x8] sm:$0xf]
  %v19 = vld [vmem:[%s1 + $0xc] sm:$0xf]
  %v20 = vld [vmem:[%s1 + $0x10] sm:$0xf]
  %v21 = vld [vmem:[%s1 + $0x14] sm:$0xf]
  %v22 = vld [vmem:[%s1 + $0x18] sm:$0xf]
  %v23 = vld [vmem:[%s1 + $0x1c] sm:$0xf]
  %v24 = vld [vmem:[%s1 + $0x20] sm:$0xf]
  %v25 = vld [vmem:[%s1 + $0x24] sm:$0xf]
  %v26 = vld [vmem:[%s1 + $0x28] sm:$0xf]
  %v27 = vld [vmem:[%s1 + $0x2c] sm:$0xf]
  %v28 = vld [vmem:[%s1 + $0x30] sm:$0xf]
  %v29 = vld [vmem:[%s1 + $0x34] sm:$0xf]
  %v30 = vld [vmem:[%s1 + $0x38] sm:$0xf]
  %v31 = vld [vmem:[%s1 + $0x3c] sm:$0xf]
  %v32 = vld [vmem:[%s1 + $0x40] sm:$0xf]
  %v33 = vld [vmem:[%s1 + $0x44] sm:$0xf]
  %v34 = vld [vmem:[%s1 + $0x48] sm:$0xf]
  %v35 = vld [vmem:[%s1 + $0x4c] sm:$0xf]
  %v36 = vld [vmem:[%s1 + $0x50] sm:$0xf]
  %v37 = vld [vmem:[%s1 + $0x54] sm:$0xf]
  %v38 = vld [vmem:[%s1 + $0x58] sm:$0xf]
  %v39 = vld [vmem:[%s1 + $0x5c] sm:$0xf]
  %v40 = vld [vmem:[%s1 + $0x60] sm:$0xf]
  %v41 = vld [vmem:[%s1 + $0x64] sm:$0xf]
  %v42 = vld [vmem:[%s1 + $0x68] sm:$0xf]
  %v43 = vld [vmem:[%s1 + $0x6c] sm:$0xf]
  %v44 = vld [vmem:[%s2] sm:$0x1]
  %v46 = vlaneseq
  %v47 = vshrl.u32 %v46, 7
  %v48 = vsub.s32 0, %v47
  %v49 = vrot.slane %v44, %v48
  %v52 = vunpack.c.l.b16 %v15
  %v53 = vunpack.c.h.b16 %v15
  %v54 = vpack.c.b16 %v52, %v52
  %v55 = vpack.c.b16 %v53, %v53
  %v85 = vunpack.c.l.b16 %v16
  %v86 = vunpack.c.l.b16 %v17
  %v87 = vunpack.c.l.b16 %v18
  %v88 = vunpack.c.l.b16 %v19
  %v89 = vunpack.c.l.b16 %v20
  %v90 = vunpack.c.l.b16 %v21
  %v91 = vunpack.c.l.b16 %v22
  %v92 = vunpack.c.l.b16 %v23
  %v93 = vunpack.c.l.b16 %v24
  %v94 = vunpack.c.l.b16 %v25
  %v95 = vunpack.c.l.b16 %v26
  %v96 = vunpack.c.l.b16 %v27
  %v97 = vunpack.c.l.b16 %v28
  %v98 = vunpack.c.l.b16 %v29
  %v99 = vunpack.c.l.b16 %v30
  %v100 = vunpack.c.l.b16 %v31
  %v101 = vunpack.c.l.b16 %v32
  %v102 = vunpack.c.l.b16 %v33
  %v103 = vunpack.c.l.b16 %v34
  %v104 = vunpack.c.l.b16 %v35
  %v105 = vunpack.c.l.b16 %v36
  %v106 = vunpack.c.l.b16 %v37
  %v107 = vunpack.c.l.b16 %v38
  %v108 = vunpack.c.l.b16 %v39
  %v109 = vunpack.c.l.b16 %v40
  %v110 = vunpack.c.l.b16 %v41
  %v111 = vunpack.c.l.b16 %v42
  %v112 = vunpack.c.l.b16 %v43
  %v113 = vpack.c.b16 %v86, %v85
  %v114 = vpack.c.b16 %v88, %v87
  %v115 = vpack.c.b16 %v90, %v89
  %v116 = vpack.c.b16 %v92, %v91
  %v117 = vpack.c.b16 %v94, %v93
  %v118 = vpack.c.b16 %v96, %v95
  %v119 = vpack.c.b16 %v98, %v97
  %v120 = vpack.c.b16 %v100, %v99
  %v121 = vpack.c.b16 %v102, %v101
  %v122 = vpack.c.b16 %v104, %v103
  %v123 = vpack.c.b16 %v106, %v105
  %v124 = vpack.c.b16 %v108, %v107
  %v125 = vpack.c.b16 %v110, %v109
  %v126 = vpack.c.b16 %v112, %v111
  %vm141 = vcmask 785408
  %v143 = vsel %vm141, %v55, 0
  %145 = vmatprep.subr.bf16.mxu0 0
  %146 = vmatpush1.bf16.msra.mxu0 %v113
  %147 = vmatprep.subr.bf16.mxu0 0
  %148 = vmatpush1.bf16.msra.mxu0 %v114
  %149 = vmatprep.subr.bf16.mxu0 0
  %150 = vmatpush1.bf16.msra.mxu0 %v115
  %151 = vmatprep.subr.bf16.mxu0 0
  %152 = vmatpush1.bf16.msra.mxu0 %v116
  %153 = vmatprep.subr.bf16.mxu0 0
  %154 = vmatpush1.bf16.msra.mxu0 %v117
  %155 = vmatprep.subr.bf16.mxu0 0
  %156 = vmatpush1.bf16.msra.mxu0 %v118
  %157 = vmatprep.subr.bf16.mxu0 0
  %158 = vmatpush1.bf16.msra.mxu0 %v119
  %159 = vmatprep.subr.bf16.mxu0 0
  %160 = vmatpush1.bf16.msra.mxu0 %v120
  %161 = vmatprep.subr.bf16.mxu0 0
  %162 = vmatpush1.bf16.msra.mxu0 %v121
  %163 = vmatprep.subr.bf16.mxu0 0
  %164 = vmatpush1.bf16.msra.mxu0 %v122
  %165 = vmatprep.subr.bf16.mxu0 0
  %166 = vmatpush1.bf16.msra.mxu0 %v123
  %167 = vmatprep.subr.bf16.mxu0 0
  %168 = vmatpush1.bf16.msra.mxu0 %v124
  %169 = vmatprep.subr.bf16.mxu0 0
  %170 = vmatpush1.bf16.msra.mxu0 %v125
  %171 = vmatprep.subr.bf16.mxu0 0
  %172 = vmatpush1.bf16.msra.mxu0 %v126
  %173 = vmatprep.subr.bf16.mxu0 0
  %174 = vmatpush1.bf16.msra.mxu0 0
  %175 = vmatprep.subr.bf16.mxu0 0
  %176 = vmatpush1.bf16.msra.mxu0 0
  %177 = vmatprep.mubr.bf16.mxu0 %v143
  %178 = vmatmul.mubr.bf16.gmra.mrb[0].mxu0 %v54
  %v179 = vpop.f32.mrb[0].mxu0
  %v180 = vadd.f32 %v49, %v179
  %v181 = vpop.f32.mrb[0].mxu0
  %v182 = vpop.f32.mrb[0].mxu0
  %v183 = vpop.f32.mrb[0].mxu0
  %184 = vdwg.mxu0
  %v185 = vmax.f32 %v180, 0.0
  %v186 = vpack.c.bf16 %v185, %v185
  %187 = vst [vmem:[%s3] sm:$0xf] %v186
  // Predicated region
  $region14: #{forward.136} parent=0 // pred_check
    _
  $region15: #{forward.136} parent=0 // pred_check_branch
    %189 = sbr.rel (0) target = $region17
  $region16: #{forward.136} parent=0 // pred_region
    _
  $region17: #{forward.136} parent=0 // pred_fallthru
    _
  // Predicated region
  $region18: #{forward.136} parent=0 // pred_check
    _
  $region19: #{forward.136} parent=0 // pred_check_branch
    %191 = sbr.rel (0) target = $region21
  $region20: #{forward.136} parent=0 // pred_region
    _
  $region21: #{forward.136} parent=0 // pred_fallthru
    _

// kernel: forward.140
$region0: #{forward.140}
  #allocation0 [shape = 'u32[]', space=smem, size = 0x4, offset = 0x4, fixed_abs, tag = 'smem constant byte address 0x4 - core index']
  #allocation1 [shape = 'u32[144,128]{1,0:T(1,128)}', space=vmem, size = 0x12000, scoped, tag = 'internal scratch']
  %s0 = inlined_call_operand.vmem [shape: bf16[9,1,96], index: 0, kind: input, shape index: {}]
  %s1 = inlined_call_operand.vmem [shape: bf16[1,96], index: 1, kind: output, shape index: {}]
  %s2 = sld [smem:[#allocation0]]
  $region14: #{forward.140} parent=0
    _
  %s4 = ssub.s32 1, %s2
  %s5 = scalar_select 0, %s4, %s2
  // Predicated region
  $region2: #{forward.140} parent=0 // pred_check
    _
  $region3: #{forward.140} parent=0 // pred_check_branch
    %7 = sbr.rel (0) target = $region5
  $region4: #{forward.140} parent=0 // pred_region
    _
  $region5: #{forward.140} parent=0 // pred_fallthru
    _
  %v9 = vld [vmem:[%s0] sm:$0x1]
  %v10 = vld [vmem:[%s0 + $0x1] sm:$0x1]
  %v11 = vld [vmem:[%s0 + $0x2] sm:$0x1]
  %v12 = vld [vmem:[%s0 + $0x3] sm:$0x1]
  %v13 = vld [vmem:[%s0 + $0x4] sm:$0x1]
  %v14 = vld [vmem:[%s0 + $0x5] sm:$0x1]
  %v15 = vld [vmem:[%s0 + $0x6] sm:$0x1]
  %v16 = vld [vmem:[%s0 + $0x7] sm:$0x1]
  %v17 = vld [vmem:[%s0 + $0x8] sm:$0x1]
  %vm18 = vcmask 778240
  %vm19 = vsmask.f32 256
  %vm20 = vmand %vm18, %vm19
  %v21 = vsel %vm20, %v9, 4286644096
  %v22 = vsel %vm20, %v10, 4286644096
  %v23 = vsel %vm20, %v11, 4286644096
  %v24 = vsel %vm20, %v12, 4286644096
  %v25 = vsel %vm20, %v13, 4286644096
  %v26 = vmax.bf16 %v21, %v25
  %v27 = vsel %vm20, %v14, 4286644096
  %v28 = vmax.bf16 %v22, %v27
  %v29 = vsel %vm20, %v15, 4286644096
  %v30 = vmax.bf16 %v23, %v29
  %v31 = vsel %vm20, %v16, 4286644096
  %v32 = vmax.bf16 %v24, %v31
  %v33 = vsel %vm20, %v17, 4286644096
  %v34 = vmax.bf16 %v26, %v33
  %v35 = vmax.bf16 %v34, %v28
  %v36 = vmax.bf16 %v30, %v32
  %v37 = vmax.bf16 %v35, %v36
  %v38 = vld [vmem:[%s1] sm:$0x1]
  %v39 = vsel %vm20, %v37, %v38
  %40 = vst [vmem:[%s1] sm:$0x1] %v39
  // Predicated region
  $region6: #{forward.140} parent=0 // pred_check
    _
  $region7: #{forward.140} parent=0 // pred_check_branch
    %42 = sbr.rel (0) target = $region9
  $region8: #{forward.140} parent=0 // pred_region
    _
  $region9: #{forward.140} parent=0 // pred_fallthru
    _
  // Predicated region
  $region10: #{forward.140} parent=0 // pred_check
    _
  $region11: #{forward.140} parent=0 // pred_check_branch
    %44 = sbr.rel (0) target = $region13
  $region12: #{forward.140} parent=0 // pred_region
    _
  $region13: #{forward.140} parent=0 // pred_fallthru
    _

// kernel: forward.147
$region0: #{forward.147}
  #allocation0 [shape = 'u32[]', space=smem, size = 0x4, offset = 0x4, fixed_abs, tag = 'smem constant byte address 0x4 - core index']
  #allocation1 [shape = 'u32[144,128]{1,0:T(1,128)}', space=vmem, size = 0x12000, scoped, tag = 'internal scratch']
  %s0 = inlined_call_operand.vmem [shape: bf16[9,1,160], index: 0, kind: input, shape index: {}]
  %s1 = inlined_call_operand.vmem [shape: bf16[160,128], index: 1, kind: input, shape index: {}]
  %s2 = inlined_call_operand.vmem [shape: f32[1,128], index: 2, kind: input, shape index: {}]
  %s3 = inlined_call_operand.vmem [shape: bf16[1,128], index: 3, kind: output, shape index: {}]
  %s4 = sld [smem:[#allocation0]]
  $region22: #{forward.147} parent=0
    _
  %s6 = ssub.s32 1, %s4
  %s7 = scalar_select 0, %s6, %s4
  // Predicated region
  $region2: #{forward.147} parent=0 // pred_check
    _
  $region3: #{forward.147} parent=0 // pred_check_branch
    %9 = sbr.rel (0) target = $region5
  $region4: #{forward.147} parent=0 // pred_region
    _
  $region5: #{forward.147} parent=0 // pred_fallthru
    _
  // Predicated region
  $region6: #{forward.147} parent=0 // pred_check
    _
  $region7: #{forward.147} parent=0 // pred_check_branch
    %11 = sbr.rel (0) target = $region9
  $region8: #{forward.147} parent=0 // pred_region
    _
  $region9: #{forward.147} parent=0 // pred_fallthru
    _
  // Predicated region
  $region10: #{forward.147} parent=0 // pred_check
    _
  $region11: #{forward.147} parent=0 // pred_check_branch
    %13 = sbr.rel (0) target = $region13
  $region12: #{forward.147} parent=0 // pred_region
    _
  $region13: #{forward.147} parent=0 // pred_fallthru
    _
  %v15 = vld [vmem:[%s0] sm:$0x3]
  %v16 = vld [vmem:[%s0 + $0x2] sm:$0x3]
  %v17 = vld [vmem:[%s0 + $0x4] sm:$0x3]
  %v18 = vld [vmem:[%s0 + $0x6] sm:$0x3]
  %v19 = vld [vmem:[%s0 + $0x8] sm:$0x3]
  %v20 = vld [vmem:[%s0 + $0xa] sm:$0x3]
  %v21 = vld [vmem:[%s0 + $0xc] sm:$0x3]
  %v22 = vld [vmem:[%s0 + $0xe] sm:$0x3]
  %v23 = vld [vmem:[%s0 + $0x10] sm:$0x3]
  %v24 = vunpack.c.l.bf16 %v15
  %v25 = vunpack.c.l.bf16 %v16
  %v26 = vunpack.c.l.bf16 %v17
  %v27 = vunpack.c.l.bf16 %v18
  %v28 = vunpack.c.l.bf16 %v19
  %v29 = vunpack.c.l.bf16 %v20
  %v30 = vunpack.c.l.bf16 %v21
  %v31 = vunpack.c.l.bf16 %v22
  %v32 = vunpack.c.l.bf16 %v23
  %v42 = vlaneseq
  %v43 = vshrl.u32 %v42, 7
  %v44 = vsub.s32 0, %v43
  %v45 = vrot.slane %v24, %v44
  %v46 = vlaneseq
  %v47 = vshrl.u32 %v46, 7
  %v48 = vsub.s32 2, %v47
  %v49 = vrot.slane %v24, %v48
  %v50 = vlaneseq
  %v51 = vshrl.u32 %v50, 7
  %v52 = vsub.s32 0, %v51
  %v53 = vrot.slane %v25, %v52
  %v54 = vlaneseq
  %v55 = vshrl.u32 %v54, 7
  %v56 = vsub.s32 2, %v55
  %v57 = vrot.slane %v25, %v56
  %v58 = vlaneseq
  %v59 = vshrl.u32 %v58, 7
  %v60 = vsub.s32 0, %v59
  %v61 = vrot.slane %v26, %v60
  %v62 = vlaneseq
  %v63 = vshrl.u32 %v62, 7
  %v64 = vsub.s32 2, %v63
  %v65 = vrot.slane %v26, %v64
  %v66 = vlaneseq
  %v67 = vshrl.u32 %v66, 7
  %v68 = vsub.s32 0, %v67
  %v69 = vrot.slane %v27, %v68
  %v70 = vlaneseq
  %v71 = vshrl.u32 %v70, 7
  %v72 = vsub.s32 2, %v71
  %v73 = vrot.slane %v27, %v72
  %v74 = vlaneseq
  %v75 = vshrl.u32 %v74, 7
  %v76 = vsub.s32 0, %v75
  %v77 = vrot.slane %v28, %v76
  %v78 = vlaneseq
  %v79 = vshrl.u32 %v78, 7
  %v80 = vsub.s32 2, %v79
  %v81 = vrot.slane %v28, %v80
  %v82 = vlaneseq
  %v83 = vshrl.u32 %v82, 7
  %v84 = vsub.s32 0, %v83
  %v85 = vrot.slane %v29, %v84
  %v86 = vlaneseq
  %v87 = vshrl.u32 %v86, 7
  %v88 = vsub.s32 2, %v87
  %v89 = vrot.slane %v29, %v88
  %v90 = vlaneseq
  %v91 = vshrl.u32 %v90, 7
  %v92 = vsub.s32 0, %v91
  %v93 = vrot.slane %v30, %v92
  %v94 = vlaneseq
  %v95 = vshrl.u32 %v94, 7
  %v96 = vsub.s32 2, %v95
  %v97 = vrot.slane %v30, %v96
  %v98 = vlaneseq
  %v99 = vshrl.u32 %v98, 7
  %v100 = vsub.s32 0, %v99
  %v101 = vrot.slane %v31, %v100
  %v102 = vlaneseq
  %v103 = vshrl.u32 %v102, 7
  %v104 = vsub.s32 2, %v103
  %v105 = vrot.slane %v31, %v104
  %v106 = vlaneseq
  %v107 = vshrl.u32 %v106, 7
  %v108 = vsub.s32 0, %v107
  %v109 = vrot.slane %v32, %v108
  %v110 = vlaneseq
  %v111 = vshrl.u32 %v110, 7
  %v112 = vsub.s32 2, %v111
  %v113 = vrot.slane %v32, %v112
  %vm132 = vcmask 1040384
  %v133 = vsel %vm132, %v45, 0.0
  %v134 = vsel %vm132, %v53, 0.0
  %v135 = vadd.f32 %v133, %v134
  %v136 = vsel %vm132, %v61, 0.0
  %v137 = vadd.f32 %v135, %v136
  %v138 = vsel %vm132, %v69, 0.0
  %v139 = vadd.f32 %v137, %v138
  %v140 = vsel %vm132, %v77, 0.0
  %v141 = vadd.f32 %v139, %v140
  %v142 = vsel %vm132, %v85, 0.0
  %v143 = vadd.f32 %v141, %v142
  %v144 = vsel %vm132, %v93, 0.0
  %v145 = vadd.f32 %v143, %v144
  %v146 = vsel %vm132, %v101, 0.0
  %v147 = vadd.f32 %v145, %v146
  %v148 = vsel %vm132, %v109, 0.0
  %v149 = vadd.f32 %v147, %v148
  %vm150 = vcmask 253952
  %v151 = vsel %vm150, %v49, 0.0
  %v152 = vsel %vm150, %v57, 0.0
  %v153 = vadd.f32 %v151, %v152
  %v154 = vsel %vm150, %v65, 0.0
  %v155 = vadd.f32 %v153, %v154
  %v156 = vsel %vm150, %v73, 0.0
  %v157 = vadd.f32 %v155, %v156
  %v158 = vsel %vm150, %v81, 0.0
  %v159 = vadd.f32 %v157, %v158
  %v160 = vsel %vm150, %v89, 0.0
  %v161 = vadd.f32 %v159, %v160
  %v162 = vsel %vm150, %v97, 0.0
  %v163 = vadd.f32 %v161, %v162
  %v164 = vsel %vm150, %v105, 0.0
  %v165 = vadd.f32 %v163, %v164
  %v166 = vsel %vm150, %v113, 0.0
  %v167 = vadd.f32 %v165, %v166
  %v168 = vmul.f32 %v149, 0.11111111
  %v169 = vmul.f32 %v167, 0.11111111
  %v170 = vpack.c.bf16 %v168, %v168
  %v171 = vpack.c.bf16 %v169, %v169
  %v172 = vld [vmem:[%s1] sm:$0xf]
  %v173 = vld [vmem:[%s1 + $0x4] sm:$0xf]
  %v174 = vld [vmem:[%s1 + $0x8] sm:$0xf]
  %v175 = vld [vmem:[%s1 + $0xc] sm:$0xf]
  %v176 = vld [vmem:[%s1 + $0x10] sm:$0xf]
  %v177 = vld [vmem:[%s1 + $0x14] sm:$0xf]
  %v178 = vld [vmem:[%s1 + $0x18] sm:$0xf]
  %v179 = vld [vmem:[%s1 + $0x1c] sm:$0xf]
  %v180 = vld [vmem:[%s1 + $0x20] sm:$0xf]
  %v181 = vld [vmem:[%s1 + $0x24] sm:$0xf]
  %v182 = vld [vmem:[%s1 + $0x28] sm:$0xf]
  %v183 = vld [vmem:[%s1 + $0x2c] sm:$0xf]
  %v184 = vld [vmem:[%s1 + $0x30] sm:$0xf]
  %v185 = vld [vmem:[%s1 + $0x34] sm:$0xf]
  %v186 = vld [vmem:[%s1 + $0x38] sm:$0xf]
  %v187 = vld [vmem:[%s1 + $0x3c] sm:$0xf]
  %v188 = vld [vmem:[%s1 + $0x40] sm:$0xf]
  %v189 = vld [vmem:[%s1 + $0x44] sm:$0xf]
  %v190 = vld [vmem:[%s1 + $0x48] sm:$0xf]
  %v191 = vld [vmem:[%s1 + $0x4c] sm:$0xf]
  %v192 = vld [vmem:[%s2] sm:$0x1]
  %v213 = vunpack.c.l.b16 %v172
  %v214 = vunpack.c.l.b16 %v173
  %v215 = vunpack.c.l.b16 %v174
  %v216 = vunpack.c.l.b16 %v175
  %v217 = vunpack.c.l.b16 %v176
  %v218 = vunpack.c.l.b16 %v177
  %v219 = vunpack.c.l.b16 %v178
  %v220 = vunpack.c.l.b16 %v179
  %v221 = vunpack.c.l.b16 %v180
  %v222 = vunpack.c.l.b16 %v181
  %v223 = vunpack.c.l.b16 %v182
  %v224 = vunpack.c.l.b16 %v183
  %v225 = vunpack.c.l.b16 %v184
  %v226 = vunpack.c.l.b16 %v185
  %v227 = vunpack.c.l.b16 %v186
  %v228 = vunpack.c.l.b16 %v187
  %v229 = vunpack.c.l.b16 %v188
  %v230 = vunpack.c.l.b16 %v189
  %v231 = vunpack.c.l.b16 %v190
  %v232 = vunpack.c.l.b16 %v191
  %v233 = vpack.c.b16 %v214, %v213
  %v234 = vpack.c.b16 %v216, %v215
  %v235 = vpack.c.b16 %v218, %v217
  %v236 = vpack.c.b16 %v220, %v219
  %v237 = vpack.c.b16 %v222, %v221
  %v238 = vpack.c.b16 %v224, %v223
  %v239 = vpack.c.b16 %v226, %v225
  %v240 = vpack.c.b16 %v228, %v227
  %v241 = vpack.c.b16 %v230, %v229
  %v242 = vpack.c.b16 %v232, %v231
  %vm253 = vcmask 261120
  %v255 = vsel %vm253, %v171, 0
  %257 = vmatprep.subr.bf16.mxu0 0
  %258 = vmatpush1.bf16.msra.mxu0 %v233
  %259 = vmatprep.subr.bf16.mxu0 0
  %260 = vmatpush1.bf16.msra.mxu0 %v234
  %261 = vmatprep.subr.bf16.mxu0 0
  %262 = vmatpush1.bf16.msra.mxu0 %v235
  %263 = vmatprep.subr.bf16.mxu0 0
  %264 = vmatpush1.bf16.msra.mxu0 %v236
  %265 = vmatprep.subr.bf16.mxu0 0
  %266 = vmatpush1.bf16.msra.mxu0 %v237
  %267 = vmatprep.subr.bf16.mxu0 0
  %268 = vmatpush1.bf16.msra.mxu0 %v238
  %269 = vmatprep.subr.bf16.mxu0 0
  %270 = vmatpush1.bf16.msra.mxu0 %v239
  %271 = vmatprep.subr.bf16.mxu0 0
  %272 = vmatpush1.bf16.msra.mxu0 %v240
  %273 = vmatprep.subr.bf16.mxu0 0
  %274 = vmatpush1.bf16.msra.mxu0 %v241
  %275 = vmatprep.subr.bf16.mxu0 0
  %276 = vmatpush1.bf16.msra.mxu0 %v242
  %277 = vmatprep.subr.bf16.mxu0 0
  %278 = vmatpush1.bf16.msra.mxu0 0
  %279 = vmatprep.subr.bf16.mxu0 0
  %280 = vmatpush1.bf16.msra.mxu0 0
  %281 = vmatprep.subr.bf16.mxu0 0
  %282 = vmatpush1.bf16.msra.mxu0 0
  %283 = vmatprep.subr.bf16.mxu0 0
  %284 = vmatpush1.bf16.msra.mxu0 0
  %285 = vmatprep.subr.bf16.mxu0 0
  %286 = vmatpush1.bf16.msra.mxu0 0
  %287 = vmatprep.subr.bf16.mxu0 0
  %288 = vmatpush1.bf16.msra.mxu0 0
  %289 = vmatprep.mubr.bf16.mxu0 %v255
  %290 = vmatmul.mubr.bf16.gmra.mrb[0].mxu0 %v170
  %v291 = vpop.f32.mrb[0].mxu0
  %v292 = vadd.f32 %v192, %v291
  %v293 = vpop.f32.mrb[0].mxu0
  %v294 = vpop.f32.mrb[0].mxu0
  %v295 = vpop.f32.mrb[0].mxu0
  %296 = vdwg.mxu0
  %v297 = vmax.f32 %v292, 0.0
  %v298 = vpack.c.bf16 %v297, %v297
  %vm299 = vcmask 1040384
  %vm300 = vsmask.f32 256
  %vm301 = vmand %vm299, %vm300
  %v302 = vld [vmem:[%s3] sm:$0x1]
  %v303 = vsel %vm301, %v298, %v302
  %304 = vst [vmem:[%s3] sm:$0x1] %v303
  // Predicated region
  $region14: #{forward.147} parent=0 // pred_check
    _
  $region15: #{forward.147} parent=0 // pred_check_branch
    %306 = sbr.rel (0) target = $region17
  $region16: #{forward.147} parent=0 // pred_region
    _
  $region17: #{forward.147} parent=0 // pred_fallthru
    _
  // Predicated region
  $region18: #{forward.147} parent=0 // pred_check
    _
  $region19: #{forward.147} parent=0 // pred_check_branch
    %308 = sbr.rel (0) target = $region21
  $region20: #{forward.147} parent=0 // pred_region
    _
  $region21: #{forward.147} parent=0 // pred_fallthru
    _

// kernel: forward.141
$region0: #{forward.141}
  #allocation0 [shape = 'u32[]', space=smem, size = 0x4, offset = 0x4, fixed_abs, tag = 'smem constant byte address 0x4 - core index']
  #allocation1 [shape = 'u32[144,128]{1,0:T(1,128)}', space=vmem, size = 0x12000, scoped, tag = 'internal scratch']
  %s0 = inlined_call_operand.vmem [shape: bf16[8,160], index: 0, kind: input, shape index: {}]
  %s1 = inlined_call_operand.vmem [shape: bf16[160,256], index: 1, kind: input, shape index: {}]
  %s2 = inlined_call_operand.vmem [shape: f32[1,256], index: 2, kind: input, shape index: {}]
  %s3 = inlined_call_operand.vmem [shape: bf16[8,256], index: 3, kind: output, shape index: {}]
  %s4 = sld [smem:[#allocation0]]
  $region22: #{forward.141} parent=0
    _
  %s6 = ssub.s32 1, %s4
  %s7 = scalar_select 0, %s6, %s4
  // Predicated region
  $region2: #{forward.141} parent=0 // pred_check
    _
  $region3: #{forward.141} parent=0 // pred_check_branch
    %9 = sbr.rel (0) target = $region5
  $region4: #{forward.141} parent=0 // pred_region
    _
  $region5: #{forward.141} parent=0 // pred_fallthru
    _
  // Predicated region
  $region6: #{forward.141} parent=0 // pred_check
    _
  $region7: #{forward.141} parent=0 // pred_check_branch
    %11 = sbr.rel (0) target = $region9
  $region8: #{forward.141} parent=0 // pred_region
    _
  $region9: #{forward.141} parent=0 // pred_fallthru
    _
  // Predicated region
  $region10: #{forward.141} parent=0 // pred_check
    _
  $region11: #{forward.141} parent=0 // pred_check_branch
    %13 = sbr.rel (0) target = $region13
  $region12: #{forward.141} parent=0 // pred_region
    _
  $region13: #{forward.141} parent=0 // pred_fallthru
    _
  %v15 = vld [vmem:[%s0] sm:$0xff]
  %v16 = vld [vmem:[%s1] sm:$0xff]
  %v17 = vld [vmem:[%s1 + $0x8] sm:$0xff]
  %v18 = vld [vmem:[%s1 + $0x10] sm:$0xff]
  %v19 = vld [vmem:[%s1 + $0x18] sm:$0xff]
  %v20 = vld [vmem:[%s1 + $0x20] sm:$0xff]
  %v21 = vld [vmem:[%s1 + $0x28] sm:$0xff]
  %v22 = vld [vmem:[%s1 + $0x30] sm:$0xff]
  %v23 = vld [vmem:[%s1 + $0x38] sm:$0xff]
  %v24 = vld [vmem:[%s1 + $0x40] sm:$0xff]
  %v25 = vld [vmem:[%s1 + $0x48] sm:$0xff]
  %v26 = vld [vmem:[%s1 + $0x50] sm:$0xff]
  %v27 = vld [vmem:[%s1 + $0x58] sm:$0xff]
  %v28 = vld [vmem:[%s1 + $0x60] sm:$0xff]
  %v29 = vld [vmem:[%s1 + $0x68] sm:$0xff]
  %v30 = vld [vmem:[%s1 + $0x70] sm:$0xff]
  %v31 = vld [vmem:[%s1 + $0x78] sm:$0xff]
  %v32 = vld [vmem:[%s1 + $0x80] sm:$0xff]
  %v33 = vld [vmem:[%s1 + $0x88] sm:$0xff]
  %v34 = vld [vmem:[%s1 + $0x90] sm:$0xff]
  %v35 = vld [vmem:[%s1 + $0x98] sm:$0xff]
  %v36 = vld [vmem:[%s2] sm:$0x3]
  %v38 = vlaneseq
  %v39 = vshrl.u32 %v38, 7
  %v40 = vsub.s32 0, %v39
  %v41 = vrot.slane %v36, %v40
  %v42 = vlaneseq
  %v43 = vshrl.u32 %v42, 7
  %v44 = vsub.s32 1, %v43
  %v45 = vrot.slane %v36, %v44
  %v49 = vunpack.c.l.b16 %v15
  %v50 = vunpack.c.h.b16 %v15
  %v51 = vpack.c.b16 %v49, %v49
  %v52 = vpack.c.b16 %v50, %v50
  %v74 = vunpack.c.l.b16 %v16
  %v75 = vunpack.c.h.b16 %v16
  %v76 = vunpack.c.l.b16 %v17
  %v77 = vunpack.c.h.b16 %v17
  %v78 = vunpack.c.l.b16 %v18
  %v79 = vunpack.c.h.b16 %v18
  %v80 = vunpack.c.l.b16 %v19
  %v81 = vunpack.c.h.b16 %v19
  %v82 = vunpack.c.l.b16 %v20
  %v83 = vunpack.c.h.b16 %v20
  %v84 = vunpack.c.l.b16 %v21
  %v85 = vunpack.c.h.b16 %v21
  %v86 = vunpack.c.l.b16 %v22
  %v87 = vunpack.c.h.b16 %v22
  %v88 = vunpack.c.l.b16 %v23
  %v89 = vunpack.c.h.b16 %v23
  %v90 = vunpack.c.l.b16 %v24
  %v91 = vunpack.c.h.b16 %v24
  %v92 = vunpack.c.l.b16 %v25
  %v93 = vunpack.c.h.b16 %v25
  %v94 = vunpack.c.l.b16 %v26
  %v95 = vunpack.c.h.b16 %v26
  %v96 = vunpack.c.l.b16 %v27
  %v97 = vunpack.c.h.b16 %v27
  %v98 = vunpack.c.l.b16 %v28
  %v99 = vunpack.c.h.b16 %v28
  %v100 = vunpack.c.l.b16 %v29
  %v101 = vunpack.c.h.b16 %v29
  %v102 = vunpack.c.l.b16 %v30
  %v103 = vunpack.c.h.b16 %v30
  %v104 = vunpack.c.l.b16 %v31
  %v105 = vunpack.c.h.b16 %v31
  %v106 = vunpack.c.l.b16 %v32
  %v107 = vunpack.c.h.b16 %v32
  %v108 = vunpack.c.l.b16 %v33
  %v109 = vunpack.c.h.b16 %v33
  %v110 = vunpack.c.l.b16 %v34
  %v111 = vunpack.c.h.b16 %v34
  %v112 = vunpack.c.l.b16 %v35
  %v113 = vunpack.c.h.b16 %v35
  %v114 = vpack.c.b16 %v76, %v74
  %v115 = vpack.c.b16 %v77, %v75
  %v116 = vpack.c.b16 %v80, %v78
  %v117 = vpack.c.b16 %v81, %v79
  %v118 = vpack.c.b16 %v84, %v82
  %v119 = vpack.c.b16 %v85, %v83
  %v120 = vpack.c.b16 %v88, %v86
  %v121 = vpack.c.b16 %v89, %v87
  %v122 = vpack.c.b16 %v92, %v90
  %v123 = vpack.c.b16 %v93, %v91
  %v124 = vpack.c.b16 %v96, %v94
  %v125 = vpack.c.b16 %v97, %v95
  %v126 = vpack.c.b16 %v100, %v98
  %v127 = vpack.c.b16 %v101, %v99
  %v128 = vpack.c.b16 %v104, %v102
  %v129 = vpack.c.b16 %v105, %v103
  %v130 = vpack.c.b16 %v108, %v106
  %v131 = vpack.c.b16 %v109, %v107
  %v132 = vpack.c.b16 %v112, %v110
  %v133 = vpack.c.b16 %v113, %v111
  %vm154 = vcmask 261120
  %v156 = vsel %vm154, %v52, 0
  %158 = vmatprep.subr.bf16.mxu0 %v115
  %159 = vmatpush1.bf16.msra.mxu0 %v114
  %160 = vmatprep.subr.bf16.mxu0 %v117
  %161 = vmatpush1.bf16.msra.mxu0 %v116
  %162 = vmatprep.subr.bf16.mxu0 %v119
  %163 = vmatpush1.bf16.msra.mxu0 %v118
  %164 = vmatprep.subr.bf16.mxu0 %v121
  %165 = vmatpush1.bf16.msra.mxu0 %v120
  %166 = vmatprep.subr.bf16.mxu0 %v123
  %167 = vmatpush1.bf16.msra.mxu0 %v122
  %168 = vmatprep.subr.bf16.mxu0 %v125
  %169 = vmatpush1.bf16.msra.mxu0 %v124
  %170 = vmatprep.subr.bf16.mxu0 %v127
  %171 = vmatpush1.bf16.msra.mxu0 %v126
  %172 = vmatprep.subr.bf16.mxu0 %v129
  %173 = vmatpush1.bf16.msra.mxu0 %v128
  %174 = vmatprep.subr.bf16.mxu0 %v131
  %175 = vmatpush1.bf16.msra.mxu0 %v130
  %176 = vmatprep.subr.bf16.mxu0 %v133
  %177 = vmatpush1.bf16.msra.mxu0 %v132
  %178 = vmatprep.subr.bf16.mxu0 0
  %179 = vmatpush1.bf16.msra.mxu0 0
  %180 = vmatprep.subr.bf16.mxu0 0
  %181 = vmatpush1.bf16.msra.mxu0 0
  %182 = vmatprep.subr.bf16.mxu0 0
  %183 = vmatpush1.bf16.msra.mxu0 0
  %184 = vmatprep.subr.bf16.mxu0 0
  %185 = vmatpush1.bf16.msra.mxu0 0
  %186 = vmatprep.subr.bf16.mxu0 0
  %187 = vmatpush1.bf16.msra.mxu0 0
  %188 = vmatprep.subr.bf16.mxu0 0
  %189 = vmatpush1.bf16.msra.mxu0 0
  %190 = vmatprep.mubr.bf16.mxu0 %v156
  %191 = vmatmul.mubr.bf16.gmra.mrb[0].mxu0 %v51
  %v192 = vpop.f32.mrb[0].mxu0
  %v193 = vadd.f32 %v41, %v192
  %v194 = vpop.f32.mrb[0].mxu0
  %v195 = vadd.f32 %v45, %v194
  %v196 = vpop.f32.mrb[0].mxu0
  %v197 = vpop.f32.mrb[0].mxu0
  %198 = vdwg.mxu0
  %v199 = vmax.f32 %v193, 0.0
  %v200 = vmax.f32 %v195, 0.0
  %v201 = vpack.c.bf16 %v199, %v199
  %v202 = vpack.c.bf16 %v200, %v200
  %v205 = vunpack.c.l.b16 %v201
  %v206 = vunpack.c.l.b16 %v202
  %v207 = vpack.c.b16 %v206, %v205
  %209 = vst [vmem:[%s3] sm:$0xff] %v207
  // Predicated region
  $region14: #{forward.141} parent=0 // pred_check
    _
  $region15: #{forward.141} parent=0 // pred_check_branch
    %211 = sbr.rel (0) target = $region17
  $region16: #{forward.141} parent=0 // pred_region
    _
  $region17: #{forward.141} parent=0 // pred_fallthru
    _
  // Predicated region
  $region18: #{forward.141} parent=0 // pred_check
    _
  $region19: #{forward.141} parent=0 // pred_check_branch
    %213 = sbr.rel (0) target = $region21
  $region20: #{forward.141} parent=0 // pred_region
    _
  $region21: #{forward.141} parent=0 // pred_fallthru
    _

// kernel: forward.146
$region0: #{forward.146}
  #allocation0 [shape = 'u32[]', space=smem, size = 0x4, offset = 0x4, fixed_abs, tag = 'smem constant byte address 0x4 - core index']
  #allocation1 [shape = 'u32[144,128]{1,0:T(1,128)}', space=vmem, size = 0x12000, scoped, tag = 'internal scratch']
  %s0 = inlined_call_operand.vmem [shape: bf16[8,160], index: 0, kind: input, shape index: {}]
  %s1 = inlined_call_operand.vmem [shape: bf16[160,128], index: 1, kind: input, shape index: {}]
  %s2 = inlined_call_operand.vmem [shape: f32[1,128], index: 2, kind: input, shape index: {}]
  %s3 = inlined_call_operand.vmem [shape: bf16[8,128], index: 3, kind: output, shape index: {}]
  %s4 = sld [smem:[#allocation0]]
  $region22: #{forward.146} parent=0
    _
  %s6 = ssub.s32 1, %s4
  %s7 = scalar_select 0, %s6, %s4
  // Predicated region
  $region2: #{forward.146} parent=0 // pred_check
    _
  $region3: #{forward.146} parent=0 // pred_check_branch
    %9 = sbr.rel (0) target = $region5
  $region4: #{forward.146} parent=0 // pred_region
    _
  $region5: #{forward.146} parent=0 // pred_fallthru
    _
  // Predicated region
  $region6: #{forward.146} parent=0 // pred_check
    _
  $region7: #{forward.146} parent=0 // pred_check_branch
    %11 = sbr.rel (0) target = $region9
  $region8: #{forward.146} parent=0 // pred_region
    _
  $region9: #{forward.146} parent=0 // pred_fallthru
    _
  // Predicated region
  $region10: #{forward.146} parent=0 // pred_check
    _
  $region11: #{forward.146} parent=0 // pred_check_branch
    %13 = sbr.rel (0) target = $region13
  $region12: #{forward.146} parent=0 // pred_region
    _
  $region13: #{forward.146} parent=0 // pred_fallthru
    _
  %v15 = vld [vmem:[%s0] sm:$0xff]
  %v16 = vld [vmem:[%s1] sm:$0xf]
  %v17 = vld [vmem:[%s1 + $0x4] sm:$0xf]
  %v18 = vld [vmem:[%s1 + $0x8] sm:$0xf]
  %v19 = vld [vmem:[%s1 + $0xc] sm:$0xf]
  %v20 = vld [vmem:[%s1 + $0x10] sm:$0xf]
  %v21 = vld [vmem:[%s1 + $0x14] sm:$0xf]
  %v22 = vld [vmem:[%s1 + $0x18] sm:$0xf]
  %v23 = vld [vmem:[%s1 + $0x1c] sm:$0xf]
  %v24 = vld [vmem:[%s1 + $0x20] sm:$0xf]
  %v25 = vld [vmem:[%s1 + $0x24] sm:$0xf]
  %v26 = vld [vmem:[%s1 + $0x28] sm:$0xf]
  %v27 = vld [vmem:[%s1 + $0x2c] sm:$0xf]
  %v28 = vld [vmem:[%s1 + $0x30] sm:$0xf]
  %v29 = vld [vmem:[%s1 + $0x34] sm:$0xf]
  %v30 = vld [vmem:[%s1 + $0x38] sm:$0xf]
  %v31 = vld [vmem:[%s1 + $0x3c] sm:$0xf]
  %v32 = vld [vmem:[%s1 + $0x40] sm:$0xf]
  %v33 = vld [vmem:[%s1 + $0x44] sm:$0xf]
  %v34 = vld [vmem:[%s1 + $0x48] sm:$0xf]
  %v35 = vld [vmem:[%s1 + $0x4c] sm:$0xf]
  %v36 = vld [vmem:[%s2] sm:$0x1]
  %v38 = vlaneseq
  %v39 = vshrl.u32 %v38, 7
  %v40 = vsub.s32 0, %v39
  %v41 = vrot.slane %v36, %v40
  %v44 = vunpack.c.l.b16 %v15
  %v45 = vunpack.c.h.b16 %v15
  %v46 = vpack.c.b16 %v44, %v44
  %v47 = vpack.c.b16 %v45, %v45
  %v69 = vunpack.c.l.b16 %v16
  %v70 = vunpack.c.l.b16 %v17
  %v71 = vunpack.c.l.b16 %v18
  %v72 = vunpack.c.l.b16 %v19
  %v73 = vunpack.c.l.b16 %v20
  %v74 = vunpack.c.l.b16 %v21
  %v75 = vunpack.c.l.b16 %v22
  %v76 = vunpack.c.l.b16 %v23
  %v77 = vunpack.c.l.b16 %v24
  %v78 = vunpack.c.l.b16 %v25
  %v79 = vunpack.c.l.b16 %v26
  %v80 = vunpack.c.l.b16 %v27
  %v81 = vunpack.c.l.b16 %v28
  %v82 = vunpack.c.l.b16 %v29
  %v83 = vunpack.c.l.b16 %v30
  %v84 = vunpack.c.l.b16 %v31
  %v85 = vunpack.c.l.b16 %v32
  %v86 = vunpack.c.l.b16 %v33
  %v87 = vunpack.c.l.b16 %v34
  %v88 = vunpack.c.l.b16 %v35
  %v89 = vpack.c.b16 %v70, %v69
  %v90 = vpack.c.b16 %v72, %v71
  %v91 = vpack.c.b16 %v74, %v73
  %v92 = vpack.c.b16 %v76, %v75
  %v93 = vpack.c.b16 %v78, %v77
  %v94 = vpack.c.b16 %v80, %v79
  %v95 = vpack.c.b16 %v82, %v81
  %v96 = vpack.c.b16 %v84, %v83
  %v97 = vpack.c.b16 %v86, %v85
  %v98 = vpack.c.b16 %v88, %v87
  %vm109 = vcmask 261120
  %v111 = vsel %vm109, %v47, 0
  %113 = vmatprep.subr.bf16.mxu0 0
  %114 = vmatpush1.bf16.msra.mxu0 %v89
  %115 = vmatprep.subr.bf16.mxu0 0
  %116 = vmatpush1.bf16.msra.mxu0 %v90
  %117 = vmatprep.subr.bf16.mxu0 0
  %118 = vmatpush1.bf16.msra.mxu0 %v91
  %119 = vmatprep.subr.bf16.mxu0 0
  %120 = vmatpush1.bf16.msra.mxu0 %v92
  %121 = vmatprep.subr.bf16.mxu0 0
  %122 = vmatpush1.bf16.msra.mxu0 %v93
  %123 = vmatprep.subr.bf16.mxu0 0
  %124 = vmatpush1.bf16.msra.mxu0 %v94
  %125 = vmatprep.subr.bf16.mxu0 0
  %126 = vmatpush1.bf16.msra.mxu0 %v95
  %127 = vmatprep.subr.bf16.mxu0 0
  %128 = vmatpush1.bf16.msra.mxu0 %v96
  %129 = vmatprep.subr.bf16.mxu0 0
  %130 = vmatpush1.bf16.msra.mxu0 %v97
  %131 = vmatprep.subr.bf16.mxu0 0
  %132 = vmatpush1.bf16.msra.mxu0 %v98
  %133 = vmatprep.subr.bf16.mxu0 0
  %134 = vmatpush1.bf16.msra.mxu0 0
  %135 = vmatprep.subr.bf16.mxu0 0
  %136 = vmatpush1.bf16.msra.mxu0 0
  %137 = vmatprep.subr.bf16.mxu0 0
  %138 = vmatpush1.bf16.msra.mxu0 0
  %139 = vmatprep.subr.bf16.mxu0 0
  %140 = vmatpush1.bf16.msra.mxu0 0
  %141 = vmatprep.subr.bf16.mxu0 0
  %142 = vmatpush1.bf16.msra.mxu0 0
  %143 = vmatprep.subr.bf16.mxu0 0
  %144 = vmatpush1.bf16.msra.mxu0 0
  %145 = vmatprep.mubr.bf16.mxu0 %v111
  %146 = vmatmul.mubr.bf16.gmra.mrb[0].mxu0 %v46
  %v147 = vpop.f32.mrb[0].mxu0
  %v148 = vadd.f32 %v41, %v147
  %v149 = vpop.f32.mrb[0].mxu0
  %v150 = vpop.f32.mrb[0].mxu0
  %v151 = vpop.f32.mrb[0].mxu0
  %152 = vdwg.mxu0
  %v153 = vmax.f32 %v148, 0.0
  %v154 = vpack.c.bf16 %v153, %v153
  %155 = vst [vmem:[%s3] sm:$0xf] %v154
  // Predicated region
  $region14: #{forward.146} parent=0 // pred_check
    _
  $region15: #{forward.146} parent=0 // pred_check_branch
    %157 = sbr.rel (0) target = $region17
  $region16: #{forward.146} parent=0 // pred_region
    _
  $region17: #{forward.146} parent=0 // pred_fallthru
    _
  // Predicated region
  $region18: #{forward.146} parent=0 // pred_check
    _
  $region19: #{forward.146} parent=0 // pred_check_branch
    %159 = sbr.rel (0) target = $region21
  $region20: #{forward.146} parent=0 // pred_region
    _
  $region21: #{forward.146} parent=0 // pred_fallthru
    _

// kernel: forward.144
$region0: #{forward.144}
  #allocation0 [shape = 'u32[]', space=smem, size = 0x4, offset = 0x4, fixed_abs, tag = 'smem constant byte address 0x4 - core index']
  #allocation1 [shape = 'u32[144,128]{1,0:T(1,128)}', space=vmem, size = 0x12000, scoped, tag = 'internal scratch']
  %s0 = inlined_call_operand.vmem [shape: bf16[8,512], index: 0, kind: input, shape index: {}]
  %s1 = inlined_call_operand.vmem [shape: bf16[512,128], index: 1, kind: input, shape index: {}]
  %s2 = inlined_call_operand.vmem [shape: f32[1,128], index: 2, kind: input, shape index: {}]
  %s3 = inlined_call_operand.vmem [shape: bf16[8,128], index: 3, kind: output, shape index: {}]
  %s4 = sld [smem:[#allocation0]]
  $region22: #{forward.144} parent=0
    _
  %s6 = ssub.s32 1, %s4
  %s7 = scalar_select 0, %s6, %s4
  // Predicated region
  $region2: #{forward.144} parent=0 // pred_check
    _
  $region3: #{forward.144} parent=0 // pred_check_branch
    %9 = sbr.rel (0) target = $region5
  $region4: #{forward.144} parent=0 // pred_region
    _
  $region5: #{forward.144} parent=0 // pred_fallthru
    _
  // Predicated region
  $region6: #{forward.144} parent=0 // pred_check
    _
  $region7: #{forward.144} parent=0 // pred_check_branch
    %11 = sbr.rel (0) target = $region9
  $region8: #{forward.144} parent=0 // pred_region
    _
  $region9: #{forward.144} parent=0 // pred_fallthru
    _
  // Predicated region
  $region10: #{forward.144} parent=0 // pred_check
    _
  $region11: #{forward.144} parent=0 // pred_check_branch
    %13 = sbr.rel (0) target = $region13
  $region12: #{forward.144} parent=0 // pred_region
    _
  $region13: #{forward.144} parent=0 // pred_fallthru
    _
  %v15 = vld [vmem:[%s0] sm:$0xff]
  %v16 = vld [vmem:[%s0 + $0x8] sm:$0xff]
  %v17 = vld [vmem:[%s1] sm:$0xf]
  %v18 = vld [vmem:[%s1 + $0x4] sm:$0xf]
  %v19 = vld [vmem:[%s1 + $0x8] sm:$0xf]
  %v20 = vld [vmem:[%s1 + $0xc] sm:$0xf]
  %v21 = vld [vmem:[%s1 + $0x10] sm:$0xf]
  %v22 = vld [vmem:[%s1 + $0x14] sm:$0xf]
  %v23 = vld [vmem:[%s1 + $0x18] sm:$0xf]
  %v24 = vld [vmem:[%s1 + $0x1c] sm:$0xf]
  %v25 = vld [vmem:[%s1 + $0x20] sm:$0xf]
  %v26 = vld [vmem:[%s1 + $0x24] sm:$0xf]
  %v27 = vld [vmem:[%s1 + $0x28] sm:$0xf]
  %v28 = vld [vmem:[%s1 + $0x2c] sm:$0xf]
  %v29 = vld [vmem:[%s1 + $0x30] sm:$0xf]
  %v30 = vld [vmem:[%s1 + $0x34] sm:$0xf]
  %v31 = vld [vmem:[%s1 + $0x38] sm:$0xf]
  %v32 = vld [vmem:[%s1 + $0x3c] sm:$0xf]
  %v33 = vld [vmem:[%s1 + $0x40] sm:$0xf]
  %v34 = vld [vmem:[%s1 + $0x44] sm:$0xf]
  %v35 = vld [vmem:[%s1 + $0x48] sm:$0xf]
  %v36 = vld [vmem:[%s1 + $0x4c] sm:$0xf]
  %v37 = vld [vmem:[%s1 + $0x50] sm:$0xf]
  %v38 = vld [vmem:[%s1 + $0x54] sm:$0xf]
  %v39 = vld [vmem:[%s1 + $0x58] sm:$0xf]
  %v40 = vld [vmem:[%s1 + $0x5c] sm:$0xf]
  %v41 = vld [vmem:[%s1 + $0x60] sm:$0xf]
  %v42 = vld [vmem:[%s1 + $0x64] sm:$0xf]
  %v43 = vld [vmem:[%s1 + $0x68] sm:$0xf]
  %v44 = vld [vmem:[%s1 + $0x6c] sm:$0xf]
  %v45 = vld [vmem:[%s1 + $0x70] sm:$0xf]
  %v46 = vld [vmem:[%s1 + $0x74] sm:$0xf]
  %v47 = vld [vmem:[%s1 + $0x78] sm:$0xf]
  %v48 = vld [vmem:[%s1 + $0x7c] sm:$0xf]
  %v49 = vld [vmem:[%s1 + $0x80] sm:$0xf]
  %v50 = vld [vmem:[%s1 + $0x84] sm:$0xf]
  %v51 = vld [vmem:[%s1 + $0x88] sm:$0xf]
  %v52 = vld [vmem:[%s1 + $0x8c] sm:$0xf]
  %v53 = vld [vmem:[%s1 + $0x90] sm:$0xf]
  %v54 = vld [vmem:[%s1 + $0x94] sm:$0xf]
  %v55 = vld [vmem:[%s1 + $0x98] sm:$0xf]
  %v56 = vld [vmem:[%s1 + $0x9c] sm:$0xf]
  %v57 = vld [vmem:[%s1 + $0xa0] sm:$0xf]
  %v58 = vld [vmem:[%s1 + $0xa4] sm:$0xf]
  %v59 = vld [vmem:[%s1 + $0xa8] sm:$0xf]
  %v60 = vld [vmem:[%s1 + $0xac] sm:$0xf]
  %v61 = vld [vmem:[%s1 + $0xb0] sm:$0xf]
  %v62 = vld [vmem:[%s1 + $0xb4] sm:$0xf]
  %v63 = vld [vmem:[%s1 + $0xb8] sm:$0xf]
  %v64 = vld [vmem:[%s1 + $0xbc] sm:$0xf]
  %v65 = vld [vmem:[%s1 + $0xc0] sm:$0xf]
  %v66 = vld [vmem:[%s1 + $0xc4] sm:$0xf]
  %v67 = vld [vmem:[%s1 + $0xc8] sm:$0xf]
  %v68 = vld [vmem:[%s1 + $0xcc] sm:$0xf]
  %v69 = vld [vmem:[%s1 + $0xd0] sm:$0xf]
  %v70 = vld [vmem:[%s1 + $0xd4] sm:$0xf]
  %v71 = vld [vmem:[%s1 + $0xd8] sm:$0xf]
  %v72 = vld [vmem:[%s1 + $0xdc] sm:$0xf]
  %v73 = vld [vmem:[%s1 + $0xe0] sm:$0xf]
  %v74 = vld [vmem:[%s1 + $0xe4] sm:$0xf]
  %v75 = vld [vmem:[%s1 + $0xe8] sm:$0xf]
  %v76 = vld [vmem:[%s1 + $0xec] sm:$0xf]
  %v77 = vld [vmem:[%s1 + $0xf0] sm:$0xf]
  %v78 = vld [vmem:[%s1 + $0xf4] sm:$0xf]
  %v79 = vld [vmem:[%s1 + $0xf8] sm:$0xf]
  %v80 = vld [vmem:[%s1 + $0xfc] sm:$0xf]
  %v81 = vld [vmem:[%s2] sm:$0x1]
  %v83 = vlaneseq
  %v84 = vshrl.u32 %v83, 7
  %v85 = vsub.s32 0, %v84
  %v86 = vrot.slane %v81, %v85
  %v90 = vunpack.c.l.b16 %v15
  %v91 = vunpack.c.h.b16 %v15
  %v92 = vunpack.c.l.b16 %v16
  %v93 = vunpack.c.h.b16 %v16
  %v94 = vpack.c.b16 %v90, %v90
  %v95 = vpack.c.b16 %v91, %v91
  %v96 = vpack.c.b16 %v92, %v92
  %v97 = vpack.c.b16 %v93, %v93
  %v166 = vunpack.c.l.b16 %v17
  %v167 = vunpack.c.l.b16 %v18
  %v168 = vunpack.c.l.b16 %v19
  %v169 = vunpack.c.l.b16 %v20
  %v170 = vunpack.c.l.b16 %v21
  %v171 = vunpack.c.l.b16 %v22
  %v172 = vunpack.c.l.b16 %v23
  %v173 = vunpack.c.l.b16 %v24
  %v174 = vunpack.c.l.b16 %v25
  %v175 = vunpack.c.l.b16 %v26
  %v176 = vunpack.c.l.b16 %v27
  %v177 = vunpack.c.l.b16 %v28
  %v178 = vunpack.c.l.b16 %v29
  %v179 = vunpack.c.l.b16 %v30
  %v180 = vunpack.c.l.b16 %v31
  %v181 = vunpack.c.l.b16 %v32
  %v182 = vunpack.c.l.b16 %v33
  %v183 = vunpack.c.l.b16 %v34
  %v184 = vunpack.c.l.b16 %v35
  %v185 = vunpack.c.l.b16 %v36
  %v186 = vunpack.c.l.b16 %v37
  %v187 = vunpack.c.l.b16 %v38
  %v188 = vunpack.c.l.b16 %v39
  %v189 = vunpack.c.l.b16 %v40
  %v190 = vunpack.c.l.b16 %v41
  %v191 = vunpack.c.l.b16 %v42
  %v192 = vunpack.c.l.b16 %v43
  %v193 = vunpack.c.l.b16 %v44
  %v194 = vunpack.c.l.b16 %v45
  %v195 = vunpack.c.l.b16 %v46
  %v196 = vunpack.c.l.b16 %v47
  %v197 = vunpack.c.l.b16 %v48
  %v198 = vunpack.c.l.b16 %v49
  %v199 = vunpack.c.l.b16 %v50
  %v200 = vunpack.c.l.b16 %v51
  %v201 = vunpack.c.l.b16 %v52
  %v202 = vunpack.c.l.b16 %v53
  %v203 = vunpack.c.l.b16 %v54
  %v204 = vunpack.c.l.b16 %v55
  %v205 = vunpack.c.l.b16 %v56
  %v206 = vunpack.c.l.b16 %v57
  %v207 = vunpack.c.l.b16 %v58
  %v208 = vunpack.c.l.b16 %v59
  %v209 = vunpack.c.l.b16 %v60
  %v210 = vunpack.c.l.b16 %v61
  %v211 = vunpack.c.l.b16 %v62
  %v212 = vunpack.c.l.b16 %v63
  %v213 = vunpack.c.l.b16 %v64
  %v214 = vunpack.c.l.b16 %v65
  %v215 = vunpack.c.l.b16 %v66
  %v216 = vunpack.c.l.b16 %v67
  %v217 = vunpack.c.l.b16 %v68
  %v218 = vunpack.c.l.b16 %v69
  %v219 = vunpack.c.l.b16 %v70
  %v220 = vunpack.c.l.b16 %v71
  %v221 = vunpack.c.l.b16 %v72
  %v222 = vunpack.c.l.b16 %v73
  %v223 = vunpack.c.l.b16 %v74
  %v224 = vunpack.c.l.b16 %v75
  %v225 = vunpack.c.l.b16 %v76
  %v226 = vunpack.c.l.b16 %v77
  %v227 = vunpack.c.l.b16 %v78
  %v228 = vunpack.c.l.b16 %v79
  %v229 = vunpack.c.l.b16 %v80
  %v230 = vpack.c.b16 %v167, %v166
  %v231 = vpack.c.b16 %v169, %v168
  %v232 = vpack.c.b16 %v171, %v170
  %v233 = vpack.c.b16 %v173, %v172
  %v234 = vpack.c.b16 %v175, %v174
  %v235 = vpack.c.b16 %v177, %v176
  %v236 = vpack.c.b16 %v179, %v178
  %v237 = vpack.c.b16 %v181, %v180
  %v238 = vpack.c.b16 %v183, %v182
  %v239 = vpack.c.b16 %v185, %v184
  %v240 = vpack.c.b16 %v187, %v186
  %v241 = vpack.c.b16 %v189, %v188
  %v242 = vpack.c.b16 %v191, %v190
  %v243 = vpack.c.b16 %v193, %v192
  %v244 = vpack.c.b16 %v195, %v194
  %v245 = vpack.c.b16 %v197, %v196
  %v246 = vpack.c.b16 %v199, %v198
  %v247 = vpack.c.b16 %v201, %v200
  %v248 = vpack.c.b16 %v203, %v202
  %v249 = vpack.c.b16 %v205, %v204
  %v250 = vpack.c.b16 %v207, %v206
  %v251 = vpack.c.b16 %v209, %v208
  %v252 = vpack.c.b16 %v211, %v210
  %v253 = vpack.c.b16 %v213, %v212
  %v254 = vpack.c.b16 %v215, %v214
  %v255 = vpack.c.b16 %v217, %v216
  %v256 = vpack.c.b16 %v219, %v218
  %v257 = vpack.c.b16 %v221, %v220
  %v258 = vpack.c.b16 %v223, %v222
  %v259 = vpack.c.b16 %v225, %v224
  %v260 = vpack.c.b16 %v227, %v226
  %v261 = vpack.c.b16 %v229, %v228
  %294 = vmatprep.subr.bf16.mxu0 0
  %295 = vmatpush1.bf16.msra.mxu0 %v230
  %296 = vmatprep.subr.bf16.mxu0 0
  %297 = vmatpush1.bf16.msra.mxu0 %v231
  %298 = vmatprep.subr.bf16.mxu0 0
  %299 = vmatpush1.bf16.msra.mxu0 %v232
  %300 = vmatprep.subr.bf16.mxu0 0
  %301 = vmatpush1.bf16.msra.mxu0 %v233
  %302 = vmatprep.subr.bf16.mxu0 0
  %303 = vmatpush1.bf16.msra.mxu0 %v234
  %304 = vmatprep.subr.bf16.mxu0 0
  %305 = vmatpush1.bf16.msra.mxu0 %v235
  %306 = vmatprep.subr.bf16.mxu0 0
  %307 = vmatpush1.bf16.msra.mxu0 %v236
  %308 = vmatprep.subr.bf16.mxu0 0
  %309 = vmatpush1.bf16.msra.mxu0 %v237
  %310 = vmatprep.subr.bf16.mxu0 0
  %311 = vmatpush1.bf16.msra.mxu0 %v238
  %312 = vmatprep.subr.bf16.mxu0 0
  %313 = vmatpush1.bf16.msra.mxu0 %v239
  %314 = vmatprep.subr.bf16.mxu0 0
  %315 = vmatpush1.bf16.msra.mxu0 %v240
  %316 = vmatprep.subr.bf16.mxu0 0
  %317 = vmatpush1.bf16.msra.mxu0 %v241
  %318 = vmatprep.subr.bf16.mxu0 0
  %319 = vmatpush1.bf16.msra.mxu0 %v242
  %320 = vmatprep.subr.bf16.mxu0 0
  %321 = vmatpush1.bf16.msra.mxu0 %v243
  %322 = vmatprep.subr.bf16.mxu0 0
  %323 = vmatpush1.bf16.msra.mxu0 %v244
  %324 = vmatprep.subr.bf16.mxu0 0
  %325 = vmatpush1.bf16.msra.mxu0 %v245
  %326 = vmatprep.mubr.bf16.mxu0 %v95
  %327 = vmatmul.mubr.bf16.gmra.mrb[0].mxu0 %v94
  %v328 = vpop.f32.mrb[0].mxu0
  %v329 = vadd.f32 %v86, %v328
  %v330 = vpop.f32.mrb[0].mxu0
  %v331 = vpop.f32.mrb[0].mxu0
  %v332 = vpop.f32.mrb[0].mxu0
  %333 = vdwg.mxu0
  %334 = vmatprep.subr.bf16.mxu0 0
  %335 = vmatpush1.bf16.msra.mxu0 %v246
  %336 = vmatprep.subr.bf16.mxu0 0
  %337 = vmatpush1.bf16.msra.mxu0 %v247
  %338 = vmatprep.subr.bf16.mxu0 0
  %339 = vmatpush1.bf16.msra.mxu0 %v248
  %340 = vmatprep.subr.bf16.mxu0 0
  %341 = vmatpush1.bf16.msra.mxu0 %v249
  %342 = vmatprep.subr.bf16.mxu0 0
  %343 = vmatpush1.bf16.msra.mxu0 %v250
  %344 = vmatprep.subr.bf16.mxu0 0
  %345 = vmatpush1.bf16.msra.mxu0 %v251
  %346 = vmatprep.subr.bf16.mxu0 0
  %347 = vmatpush1.bf16.msra.mxu0 %v252
  %348 = vmatprep.subr.bf16.mxu0 0
  %349 = vmatpush1.bf16.msra.mxu0 %v253
  %350 = vmatprep.subr.bf16.mxu0 0
  %351 = vmatpush1.bf16.msra.mxu0 %v254
  %352 = vmatprep.subr.bf16.mxu0 0
  %353 = vmatpush1.bf16.msra.mxu0 %v255
  %354 = vmatprep.subr.bf16.mxu0 0
  %355 = vmatpush1.bf16.msra.mxu0 %v256
  %356 = vmatprep.subr.bf16.mxu0 0
  %357 = vmatpush1.bf16.msra.mxu0 %v257
  %358 = vmatprep.subr.bf16.mxu0 0
  %359 = vmatpush1.bf16.msra.mxu0 %v258
  %360 = vmatprep.subr.bf16.mxu0 0
  %361 = vmatpush1.bf16.msra.mxu0 %v259
  %362 = vmatprep.subr.bf16.mxu0 0
  %363 = vmatpush1.bf16.msra.mxu0 %v260
  %364 = vmatprep.subr.bf16.mxu0 0
  %365 = vmatpush1.bf16.msra.mxu0 %v261
  %366 = vmatprep.mubr.bf16.mxu0 %v97
  %367 = vmatmul.mubr.bf16.gmra.mrb[0].mxu0 %v96
  %v368 = vpop.f32.mrb[0].mxu0
  %v369 = vadd.f32 %v329, %v368
  %v370 = vpop.f32.mrb[0].mxu0
  %v371 = vpop.f32.mrb[0].mxu0
  %v372 = vpop.f32.mrb[0].mxu0
  %373 = vdwg.mxu0
  %v374 = vmax.f32 %v369, 0.0
  %v375 = vpack.c.bf16 %v374, %v374
  %376 = vst [vmem:[%s3] sm:$0xf] %v375
  // Predicated region
  $region14: #{forward.144} parent=0 // pred_check
    _
  $region15: #{forward.144} parent=0 // pred_check_branch
    %378 = sbr.rel (0) target = $region17
  $region16: #{forward.144} parent=0 // pred_region
    _
  $region17: #{forward.144} parent=0 // pred_fallthru
    _
  // Predicated region
  $region18: #{forward.144} parent=0 // pred_check
    _
  $region19: #{forward.144} parent=0 // pred_check_branch
    %380 = sbr.rel (0) target = $region21
  $region20: #{forward.144} parent=0 // pred_region
    _
  $region21: #{forward.144} parent=0 // pred_fallthru
    _

// kernel: forward.148
$region0: #{forward.148}
  #allocation0 [shape = 'u32[]', space=smem, size = 0x4, offset = 0x4, fixed_abs, tag = 'smem constant byte address 0x4 - core index']
  #allocation1 [shape = 'u32[144,128]{1,0:T(1,128)}', space=vmem, size = 0x12000, scoped, tag = 'internal scratch']
  %s0 = inlined_call_operand.vmem [shape: bf16[8,256], index: 0, kind: input, shape index: {}]
  %s1 = inlined_call_operand.vmem [shape: bf16[256,256], index: 1, kind: input, shape index: {}]
  %s2 = inlined_call_operand.vmem [shape: f32[1,256], index: 2, kind: input, shape index: {}]
  %s3 = inlined_call_operand.vmem [shape: bf16[8,256], index: 3, kind: output, shape index: {}]
  %s4 = sld [smem:[#allocation0]]
  $region22: #{forward.148} parent=0
    _
  %s6 = ssub.s32 1, %s4
  %s7 = scalar_select 0, %s6, %s4
  // Predicated region
  $region2: #{forward.148} parent=0 // pred_check
    _
  $region3: #{forward.148} parent=0 // pred_check_branch
    %9 = sbr.rel (0) target = $region5
  $region4: #{forward.148} parent=0 // pred_region
    _
  $region5: #{forward.148} parent=0 // pred_fallthru
    _
  // Predicated region
  $region6: #{forward.148} parent=0 // pred_check
    _
  $region7: #{forward.148} parent=0 // pred_check_branch
    %11 = sbr.rel (0) target = $region9
  $region8: #{forward.148} parent=0 // pred_region
    _
  $region9: #{forward.148} parent=0 // pred_fallthru
    _
  // Predicated region
  $region10: #{forward.148} parent=0 // pred_check
    _
  $region11: #{forward.148} parent=0 // pred_check_branch
    %13 = sbr.rel (0) target = $region13
  $region12: #{forward.148} parent=0 // pred_region
    _
  $region13: #{forward.148} parent=0 // pred_fallthru
    _
  %v14 = vld [vmem:[%s0] sm:$0xff]
  %v15 = vld [vmem:[%s1] sm:$0xff]
  %v16 = vld [vmem:[%s1 + $0x8] sm:$0xff]
  %v17 = vld [vmem:[%s1 + $0x10] sm:$0xff]
  %v18 = vld [vmem:[%s1 + $0x18] sm:$0xff]
  %v19 = vld [vmem:[%s1 + $0x20] sm:$0xff]
  %v20 = vld [vmem:[%s1 + $0x28] sm:$0xff]
  %v21 = vld [vmem:[%s1 + $0x30] sm:$0xff]
  %v22 = vld [vmem:[%s1 + $0x38] sm:$0xff]
  %v23 = vld [vmem:[%s1 + $0x40] sm:$0xff]
  %v24 = vld [vmem:[%s1 + $0x48] sm:$0xff]
  %v25 = vld [vmem:[%s1 + $0x50] sm:$0xff]
  %v26 = vld [vmem:[%s1 + $0x58] sm:$0xff]
  %v27 = vld [vmem:[%s1 + $0x60] sm:$0xff]
  %v28 = vld [vmem:[%s1 + $0x68] sm:$0xff]
  %v29 = vld [vmem:[%s1 + $0x70] sm:$0xff]
  %v30 = vld [vmem:[%s1 + $0x78] sm:$0xff]
  %v31 = vld [vmem:[%s1 + $0x80] sm:$0xff]
  %v32 = vld [vmem:[%s1 + $0x88] sm:$0xff]
  %v33 = vld [vmem:[%s1 + $0x90] sm:$0xff]
  %v34 = vld [vmem:[%s1 + $0x98] sm:$0xff]
  %v35 = vld [vmem:[%s1 + $0xa0] sm:$0xff]
  %v36 = vld [vmem:[%s1 + $0xa8] sm:$0xff]
  %v37 = vld [vmem:[%s1 + $0xb0] sm:$0xff]
  %v38 = vld [vmem:[%s1 + $0xb8] sm:$0xff]
  %v39 = vld [vmem:[%s1 + $0xc0] sm:$0xff]
  %v40 = vld [vmem:[%s1 + $0xc8] sm:$0xff]
  %v41 = vld [vmem:[%s1 + $0xd0] sm:$0xff]
  %v42 = vld [vmem:[%s1 + $0xd8] sm:$0xff]
  %v43 = vld [vmem:[%s1 + $0xe0] sm:$0xff]
  %v44 = vld [vmem:[%s1 + $0xe8] sm:$0xff]
  %v45 = vld [vmem:[%s1 + $0xf0] sm:$0xff]
  %v46 = vld [vmem:[%s1 + $0xf8] sm:$0xff]
  %v47 = vld [vmem:[%s2] sm:$0x3]
  %v49 = vlaneseq
  %v50 = vshrl.u32 %v49, 7
  %v51 = vsub.s32 0, %v50
  %v52 = vrot.slane %v47, %v51
  %v53 = vlaneseq
  %v54 = vshrl.u32 %v53, 7
  %v55 = vsub.s32 1, %v54
  %v56 = vrot.slane %v47, %v55
  %v60 = vunpack.c.l.b16 %v14
  %v61 = vunpack.c.h.b16 %v14
  %v62 = vpack.c.b16 %v60, %v60
  %v63 = vpack.c.b16 %v61, %v61
  %v98 = vunpack.c.l.b16 %v15
  %v99 = vunpack.c.h.b16 %v15
  %v100 = vunpack.c.l.b16 %v16
  %v101 = vunpack.c.h.b16 %v16
  %v102 = vunpack.c.l.b16 %v17
  %v103 = vunpack.c.h.b16 %v17
  %v104 = vunpack.c.l.b16 %v18
  %v105 = vunpack.c.h.b16 %v18
  %v106 = vunpack.c.l.b16 %v19
  %v107 = vunpack.c.h.b16 %v19
  %v108 = vunpack.c.l.b16 %v20
  %v109 = vunpack.c.h.b16 %v20
  %v110 = vunpack.c.l.b16 %v21
  %v111 = vunpack.c.h.b16 %v21
  %v112 = vunpack.c.l.b16 %v22
  %v113 = vunpack.c.h.b16 %v22
  %v114 = vunpack.c.l.b16 %v23
  %v115 = vunpack.c.h.b16 %v23
  %v116 = vunpack.c.l.b16 %v24
  %v117 = vunpack.c.h.b16 %v24
  %v118 = vunpack.c.l.b16 %v25
  %v119 = vunpack.c.h.b16 %v25
  %v120 = vunpack.c.l.b16 %v26
  %v121 = vunpack.c.h.b16 %v26
  %v122 = vunpack.c.l.b16 %v27
  %v123 = vunpack.c.h.b16 %v27
  %v124 = vunpack.c.l.b16 %v28
  %v125 = vunpack.c.h.b16 %v28
  %v126 = vunpack.c.l.b16 %v29
  %v127 = vunpack.c.h.b16 %v29
  %v128 = vunpack.c.l.b16 %v30
  %v129 = vunpack.c.h.b16 %v30
  %v130 = vunpack.c.l.b16 %v31
  %v131 = vunpack.c.h.b16 %v31
  %v132 = vunpack.c.l.b16 %v32
  %v133 = vunpack.c.h.b16 %v32
  %v134 = vunpack.c.l.b16 %v33
  %v135 = vunpack.c.h.b16 %v33
  %v136 = vunpack.c.l.b16 %v34
  %v137 = vunpack.c.h.b16 %v34
  %v138 = vunpack.c.l.b16 %v35
  %v139 = vunpack.c.h.b16 %v35
  %v140 = vunpack.c.l.b16 %v36
  %v141 = vunpack.c.h.b16 %v36
  %v142 = vunpack.c.l.b16 %v37
  %v143 = vunpack.c.h.b16 %v37
  %v144 = vunpack.c.l.b16 %v38
  %v145 = vunpack.c.h.b16 %v38
  %v146 = vunpack.c.l.b16 %v39
  %v147 = vunpack.c.h.b16 %v39
  %v148 = vunpack.c.l.b16 %v40
  %v149 = vunpack.c.h.b16 %v40
  %v150 = vunpack.c.l.b16 %v41
  %v151 = vunpack.c.h.b16 %v41
  %v152 = vunpack.c.l.b16 %v42
  %v153 = vunpack.c.h.b16 %v42
  %v154 = vunpack.c.l.b16 %v43
  %v155 = vunpack.c.h.b16 %v43
  %v156 = vunpack.c.l.b16 %v44
  %v157 = vunpack.c.h.b16 %v44
  %v158 = vunpack.c.l.b16 %v45
  %v159 = vunpack.c.h.b16 %v45
  %v160 = vunpack.c.l.b16 %v46
  %v161 = vunpack.c.h.b16 %v46
  %v162 = vpack.c.b16 %v100, %v98
  %v163 = vpack.c.b16 %v101, %v99
  %v164 = vpack.c.b16 %v104, %v102
  %v165 = vpack.c.b16 %v105, %v103
  %v166 = vpack.c.b16 %v108, %v106
  %v167 = vpack.c.b16 %v109, %v107
  %v168 = vpack.c.b16 %v112, %v110
  %v169 = vpack.c.b16 %v113, %v111
  %v170 = vpack.c.b16 %v116, %v114
  %v171 = vpack.c.b16 %v117, %v115
  %v172 = vpack.c.b16 %v120, %v118
  %v173 = vpack.c.b16 %v121, %v119
  %v174 = vpack.c.b16 %v124, %v122
  %v175 = vpack.c.b16 %v125, %v123
  %v176 = vpack.c.b16 %v128, %v126
  %v177 = vpack.c.b16 %v129, %v127
  %v178 = vpack.c.b16 %v132, %v130
  %v179 = vpack.c.b16 %v133, %v131
  %v180 = vpack.c.b16 %v136, %v134
  %v181 = vpack.c.b16 %v137, %v135
  %v182 = vpack.c.b16 %v140, %v138
  %v183 = vpack.c.b16 %v141, %v139
  %v184 = vpack.c.b16 %v144, %v142
  %v185 = vpack.c.b16 %v145, %v143
  %v186 = vpack.c.b16 %v148, %v146
  %v187 = vpack.c.b16 %v149, %v147
  %v188 = vpack.c.b16 %v152, %v150
  %v189 = vpack.c.b16 %v153, %v151
  %v190 = vpack.c.b16 %v156, %v154
  %v191 = vpack.c.b16 %v157, %v155
  %v192 = vpack.c.b16 %v160, %v158
  %v193 = vpack.c.b16 %v161, %v159
  %226 = vmatprep.subr.bf16.mxu0 %v163
  %227 = vmatpush1.bf16.msra.mxu0 %v162
  %228 = vmatprep.subr.bf16.mxu0 %v165
  %229 = vmatpush1.bf16.msra.mxu0 %v164
  %230 = vmatprep.subr.bf16.mxu0 %v167
  %231 = vmatpush1.bf16.msra.mxu0 %v166
  %232 = vmatprep.subr.bf16.mxu0 %v169
  %233 = vmatpush1.bf16.msra.mxu0 %v168
  %234 = vmatprep.subr.bf16.mxu0 %v171
  %235 = vmatpush1.bf16.msra.mxu0 %v170
  %236 = vmatprep.subr.bf16.mxu0 %v173
  %237 = vmatpush1.bf16.msra.mxu0 %v172
  %238 = vmatprep.subr.bf16.mxu0 %v175
  %239 = vmatpush1.bf16.msra.mxu0 %v174
  %240 = vmatprep.subr.bf16.mxu0 %v177
  %241 = vmatpush1.bf16.msra.mxu0 %v176
  %242 = vmatprep.subr.bf16.mxu0 %v179
  %243 = vmatpush1.bf16.msra.mxu0 %v178
  %244 = vmatprep.subr.bf16.mxu0 %v181
  %245 = vmatpush1.bf16.msra.mxu0 %v180
  %246 = vmatprep.subr.bf16.mxu0 %v183
  %247 = vmatpush1.bf16.msra.mxu0 %v182
  %248 = vmatprep.subr.bf16.mxu0 %v185
  %249 = vmatpush1.bf16.msra.mxu0 %v184
  %250 = vmatprep.subr.bf16.mxu0 %v187
  %251 = vmatpush1.bf16.msra.mxu0 %v186
  %252 = vmatprep.subr.bf16.mxu0 %v189
  %253 = vmatpush1.bf16.msra.mxu0 %v188
  %254 = vmatprep.subr.bf16.mxu0 %v191
  %255 = vmatpush1.bf16.msra.mxu0 %v190
  %256 = vmatprep.subr.bf16.mxu0 %v193
  %257 = vmatpush1.bf16.msra.mxu0 %v192
  %258 = vmatprep.mubr.bf16.mxu0 %v63
  %259 = vmatmul.mubr.bf16.gmra.mrb[0].mxu0 %v62
  %v260 = vpop.f32.mrb[0].mxu0
  %v261 = vadd.f32 %v52, %v260
  %v262 = vpop.f32.mrb[0].mxu0
  %v263 = vadd.f32 %v56, %v262
  %v264 = vpop.f32.mrb[0].mxu0
  %v265 = vpop.f32.mrb[0].mxu0
  %266 = vdwg.mxu0
  %v267 = vmax.f32 %v261, 0.0
  %v268 = vmax.f32 %v263, 0.0
  %v269 = vpack.c.bf16 %v267, %v267
  %v270 = vpack.c.bf16 %v268, %v268
  %v273 = vunpack.c.l.b16 %v269
  %v274 = vunpack.c.l.b16 %v270
  %v275 = vpack.c.b16 %v274, %v273
  %277 = vst [vmem:[%s3] sm:$0xff] %v275
  // Predicated region
  $region14: #{forward.148} parent=0 // pred_check
    _
  $region15: #{forward.148} parent=0 // pred_check_branch
    %279 = sbr.rel (0) target = $region17
  $region16: #{forward.148} parent=0 // pred_region
    _
  $region17: #{forward.148} parent=0 // pred_fallthru
    _
  // Predicated region
  $region18: #{forward.148} parent=0 // pred_check
    _
  $region19: #{forward.148} parent=0 // pred_check_branch
    %281 = sbr.rel (0) target = $region21
  $region20: #{forward.148} parent=0 // pred_region
    _
  $region21: #{forward.148} parent=0 // pred_fallthru
    _

// kernel: forward.154
$region0: #{forward.154}
  #allocation0 [shape = 'u32[]', space=smem, size = 0x4, offset = 0x4, fixed_abs, tag = 'smem constant byte address 0x4 - core index']
  #allocation1 [shape = 'u32[144,128]{1,0:T(1,128)}', space=vmem, size = 0x12000, scoped, tag = 'internal scratch']
  %s0 = inlined_call_operand.vmem [shape: bf16[9,1,256], index: 0, kind: input, shape index: {}]
  %s1 = inlined_call_operand.vmem [shape: bf16[256,128], index: 1, kind: input, shape index: {}]
  %s2 = inlined_call_operand.vmem [shape: f32[1,128], index: 2, kind: input, shape index: {}]
  %s3 = inlined_call_operand.vmem [shape: bf16[1,128], index: 3, kind: output, shape index: {}]
  %s4 = sld [smem:[#allocation0]]
  $region22: #{forward.154} parent=0
    _
  %s6 = ssub.s32 1, %s4
  %s7 = scalar_select 0, %s6, %s4
  // Predicated region
  $region2: #{forward.154} parent=0 // pred_check
    _
  $region3: #{forward.154} parent=0 // pred_check_branch
    %9 = sbr.rel (0) target = $region5
  $region4: #{forward.154} parent=0 // pred_region
    _
  $region5: #{forward.154} parent=0 // pred_fallthru
    _
  // Predicated region
  $region6: #{forward.154} parent=0 // pred_check
    _
  $region7: #{forward.154} parent=0 // pred_check_branch
    %11 = sbr.rel (0) target = $region9
  $region8: #{forward.154} parent=0 // pred_region
    _
  $region9: #{forward.154} parent=0 // pred_fallthru
    _
  // Predicated region
  $region10: #{forward.154} parent=0 // pred_check
    _
  $region11: #{forward.154} parent=0 // pred_check_branch
    %13 = sbr.rel (0) target = $region13
  $region12: #{forward.154} parent=0 // pred_region
    _
  $region13: #{forward.154} parent=0 // pred_fallthru
    _
  %v15 = vld [vmem:[%s0] sm:$0x3]
  %v16 = vld [vmem:[%s0 + $0x2] sm:$0x3]
  %v17 = vld [vmem:[%s0 + $0x4] sm:$0x3]
  %v18 = vld [vmem:[%s0 + $0x6] sm:$0x3]
  %v19 = vld [vmem:[%s0 + $0x8] sm:$0x3]
  %v20 = vld [vmem:[%s0 + $0xa] sm:$0x3]
  %v21 = vld [vmem:[%s0 + $0xc] sm:$0x3]
  %v22 = vld [vmem:[%s0 + $0xe] sm:$0x3]
  %v23 = vld [vmem:[%s0 + $0x10] sm:$0x3]
  %v24 = vunpack.c.l.bf16 %v15
  %v25 = vunpack.c.l.bf16 %v16
  %v26 = vunpack.c.l.bf16 %v17
  %v27 = vunpack.c.l.bf16 %v18
  %v28 = vunpack.c.l.bf16 %v19
  %v29 = vunpack.c.l.bf16 %v20
  %v30 = vunpack.c.l.bf16 %v21
  %v31 = vunpack.c.l.bf16 %v22
  %v32 = vunpack.c.l.bf16 %v23
  %v42 = vlaneseq
  %v43 = vshrl.u32 %v42, 7
  %v44 = vsub.s32 0, %v43
  %v45 = vrot.slane %v24, %v44
  %v46 = vlaneseq
  %v47 = vshrl.u32 %v46, 7
  %v48 = vsub.s32 2, %v47
  %v49 = vrot.slane %v24, %v48
  %v50 = vlaneseq
  %v51 = vshrl.u32 %v50, 7
  %v52 = vsub.s32 0, %v51
  %v53 = vrot.slane %v25, %v52
  %v54 = vlaneseq
  %v55 = vshrl.u32 %v54, 7
  %v56 = vsub.s32 2, %v55
  %v57 = vrot.slane %v25, %v56
  %v58 = vlaneseq
  %v59 = vshrl.u32 %v58, 7
  %v60 = vsub.s32 0, %v59
  %v61 = vrot.slane %v26, %v60
  %v62 = vlaneseq
  %v63 = vshrl.u32 %v62, 7
  %v64 = vsub.s32 2, %v63
  %v65 = vrot.slane %v26, %v64
  %v66 = vlaneseq
  %v67 = vshrl.u32 %v66, 7
  %v68 = vsub.s32 0, %v67
  %v69 = vrot.slane %v27, %v68
  %v70 = vlaneseq
  %v71 = vshrl.u32 %v70, 7
  %v72 = vsub.s32 2, %v71
  %v73 = vrot.slane %v27, %v72
  %v74 = vlaneseq
  %v75 = vshrl.u32 %v74, 7
  %v76 = vsub.s32 0, %v75
  %v77 = vrot.slane %v28, %v76
  %v78 = vlaneseq
  %v79 = vshrl.u32 %v78, 7
  %v80 = vsub.s32 2, %v79
  %v81 = vrot.slane %v28, %v80
  %v82 = vlaneseq
  %v83 = vshrl.u32 %v82, 7
  %v84 = vsub.s32 0, %v83
  %v85 = vrot.slane %v29, %v84
  %v86 = vlaneseq
  %v87 = vshrl.u32 %v86, 7
  %v88 = vsub.s32 2, %v87
  %v89 = vrot.slane %v29, %v88
  %v90 = vlaneseq
  %v91 = vshrl.u32 %v90, 7
  %v92 = vsub.s32 0, %v91
  %v93 = vrot.slane %v30, %v92
  %v94 = vlaneseq
  %v95 = vshrl.u32 %v94, 7
  %v96 = vsub.s32 2, %v95
  %v97 = vrot.slane %v30, %v96
  %v98 = vlaneseq
  %v99 = vshrl.u32 %v98, 7
  %v100 = vsub.s32 0, %v99
  %v101 = vrot.slane %v31, %v100
  %v102 = vlaneseq
  %v103 = vshrl.u32 %v102, 7
  %v104 = vsub.s32 2, %v103
  %v105 = vrot.slane %v31, %v104
  %v106 = vlaneseq
  %v107 = vshrl.u32 %v106, 7
  %v108 = vsub.s32 0, %v107
  %v109 = vrot.slane %v32, %v108
  %v110 = vlaneseq
  %v111 = vshrl.u32 %v110, 7
  %v112 = vsub.s32 2, %v111
  %v113 = vrot.slane %v32, %v112
  %vm132 = vcmask 1040384
  %v133 = vsel %vm132, %v45, 0.0
  %v134 = vsel %vm132, %v53, 0.0
  %v135 = vadd.f32 %v133, %v134
  %v136 = vsel %vm132, %v61, 0.0
  %v137 = vadd.f32 %v135, %v136
  %v138 = vsel %vm132, %v69, 0.0
  %v139 = vadd.f32 %v137, %v138
  %v140 = vsel %vm132, %v77, 0.0
  %v141 = vadd.f32 %v139, %v140
  %v142 = vsel %vm132, %v85, 0.0
  %v143 = vadd.f32 %v141, %v142
  %v144 = vsel %vm132, %v93, 0.0
  %v145 = vadd.f32 %v143, %v144
  %v146 = vsel %vm132, %v101, 0.0
  %v147 = vadd.f32 %v145, %v146
  %v148 = vsel %vm132, %v109, 0.0
  %v149 = vadd.f32 %v147, %v148
  %v150 = vsel %vm132, %v49, 0.0
  %v151 = vsel %vm132, %v57, 0.0
  %v152 = vadd.f32 %v150, %v151
  %v153 = vsel %vm132, %v65, 0.0
  %v154 = vadd.f32 %v152, %v153
  %v155 = vsel %vm132, %v73, 0.0
  %v156 = vadd.f32 %v154, %v155
  %v157 = vsel %vm132, %v81, 0.0
  %v158 = vadd.f32 %v156, %v157
  %v159 = vsel %vm132, %v89, 0.0
  %v160 = vadd.f32 %v158, %v159
  %v161 = vsel %vm132, %v97, 0.0
  %v162 = vadd.f32 %v160, %v161
  %v163 = vsel %vm132, %v105, 0.0
  %v164 = vadd.f32 %v162, %v163
  %v165 = vsel %vm132, %v113, 0.0
  %v166 = vadd.f32 %v164, %v165
  %v167 = vmul.f32 %v149, 0.11111111
  %v168 = vmul.f32 %v166, 0.11111111
  %v169 = vpack.c.bf16 %v167, %v167
  %v170 = vpack.c.bf16 %v168, %v168
  %v171 = vld [vmem:[%s1] sm:$0xf]
  %v172 = vld [vmem:[%s1 + $0x4] sm:$0xf]
  %v173 = vld [vmem:[%s1 + $0x8] sm:$0xf]
  %v174 = vld [vmem:[%s1 + $0xc] sm:$0xf]
  %v175 = vld [vmem:[%s1 + $0x10] sm:$0xf]
  %v176 = vld [vmem:[%s1 + $0x14] sm:$0xf]
  %v177 = vld [vmem:[%s1 + $0x18] sm:$0xf]
  %v178 = vld [vmem:[%s1 + $0x1c] sm:$0xf]
  %v179 = vld [vmem:[%s1 + $0x20] sm:$0xf]
  %v180 = vld [vmem:[%s1 + $0x24] sm:$0xf]
  %v181 = vld [vmem:[%s1 + $0x28] sm:$0xf]
  %v182 = vld [vmem:[%s1 + $0x2c] sm:$0xf]
  %v183 = vld [vmem:[%s1 + $0x30] sm:$0xf]
  %v184 = vld [vmem:[%s1 + $0x34] sm:$0xf]
  %v185 = vld [vmem:[%s1 + $0x38] sm:$0xf]
  %v186 = vld [vmem:[%s1 + $0x3c] sm:$0xf]
  %v187 = vld [vmem:[%s1 + $0x40] sm:$0xf]
  %v188 = vld [vmem:[%s1 + $0x44] sm:$0xf]
  %v189 = vld [vmem:[%s1 + $0x48] sm:$0xf]
  %v190 = vld [vmem:[%s1 + $0x4c] sm:$0xf]
  %v191 = vld [vmem:[%s1 + $0x50] sm:$0xf]
  %v192 = vld [vmem:[%s1 + $0x54] sm:$0xf]
  %v193 = vld [vmem:[%s1 + $0x58] sm:$0xf]
  %v194 = vld [vmem:[%s1 + $0x5c] sm:$0xf]
  %v195 = vld [vmem:[%s1 + $0x60] sm:$0xf]
  %v196 = vld [vmem:[%s1 + $0x64] sm:$0xf]
  %v197 = vld [vmem:[%s1 + $0x68] sm:$0xf]
  %v198 = vld [vmem:[%s1 + $0x6c] sm:$0xf]
  %v199 = vld [vmem:[%s1 + $0x70] sm:$0xf]
  %v200 = vld [vmem:[%s1 + $0x74] sm:$0xf]
  %v201 = vld [vmem:[%s1 + $0x78] sm:$0xf]
  %v202 = vld [vmem:[%s1 + $0x7c] sm:$0xf]
  %v203 = vld [vmem:[%s2] sm:$0x1]
  %v236 = vunpack.c.l.b16 %v171
  %v237 = vunpack.c.l.b16 %v172
  %v238 = vunpack.c.l.b16 %v173
  %v239 = vunpack.c.l.b16 %v174
  %v240 = vunpack.c.l.b16 %v175
  %v241 = vunpack.c.l.b16 %v176
  %v242 = vunpack.c.l.b16 %v177
  %v243 = vunpack.c.l.b16 %v178
  %v244 = vunpack.c.l.b16 %v179
  %v245 = vunpack.c.l.b16 %v180
  %v246 = vunpack.c.l.b16 %v181
  %v247 = vunpack.c.l.b16 %v182
  %v248 = vunpack.c.l.b16 %v183
  %v249 = vunpack.c.l.b16 %v184
  %v250 = vunpack.c.l.b16 %v185
  %v251 = vunpack.c.l.b16 %v186
  %v252 = vunpack.c.l.b16 %v187
  %v253 = vunpack.c.l.b16 %v188
  %v254 = vunpack.c.l.b16 %v189
  %v255 = vunpack.c.l.b16 %v190
  %v256 = vunpack.c.l.b16 %v191
  %v257 = vunpack.c.l.b16 %v192
  %v258 = vunpack.c.l.b16 %v193
  %v259 = vunpack.c.l.b16 %v194
  %v260 = vunpack.c.l.b16 %v195
  %v261 = vunpack.c.l.b16 %v196
  %v262 = vunpack.c.l.b16 %v197
  %v263 = vunpack.c.l.b16 %v198
  %v264 = vunpack.c.l.b16 %v199
  %v265 = vunpack.c.l.b16 %v200
  %v266 = vunpack.c.l.b16 %v201
  %v267 = vunpack.c.l.b16 %v202
  %v268 = vpack.c.b16 %v237, %v236
  %v269 = vpack.c.b16 %v239, %v238
  %v270 = vpack.c.b16 %v241, %v240
  %v271 = vpack.c.b16 %v243, %v242
  %v272 = vpack.c.b16 %v245, %v244
  %v273 = vpack.c.b16 %v247, %v246
  %v274 = vpack.c.b16 %v249, %v248
  %v275 = vpack.c.b16 %v251, %v250
  %v276 = vpack.c.b16 %v253, %v252
  %v277 = vpack.c.b16 %v255, %v254
  %v278 = vpack.c.b16 %v257, %v256
  %v279 = vpack.c.b16 %v259, %v258
  %v280 = vpack.c.b16 %v261, %v260
  %v281 = vpack.c.b16 %v263, %v262
  %v282 = vpack.c.b16 %v265, %v264
  %v283 = vpack.c.b16 %v267, %v266
  %300 = vmatprep.subr.bf16.mxu0 0
  %301 = vmatpush1.bf16.msra.mxu0 %v268
  %302 = vmatprep.subr.bf16.mxu0 0
  %303 = vmatpush1.bf16.msra.mxu0 %v269
  %304 = vmatprep.subr.bf16.mxu0 0
  %305 = vmatpush1.bf16.msra.mxu0 %v270
  %306 = vmatprep.subr.bf16.mxu0 0
  %307 = vmatpush1.bf16.msra.mxu0 %v271
  %308 = vmatprep.subr.bf16.mxu0 0
  %309 = vmatpush1.bf16.msra.mxu0 %v272
  %310 = vmatprep.subr.bf16.mxu0 0
  %311 = vmatpush1.bf16.msra.mxu0 %v273
  %312 = vmatprep.subr.bf16.mxu0 0
  %313 = vmatpush1.bf16.msra.mxu0 %v274
  %314 = vmatprep.subr.bf16.mxu0 0
  %315 = vmatpush1.bf16.msra.mxu0 %v275
  %316 = vmatprep.subr.bf16.mxu0 0
  %317 = vmatpush1.bf16.msra.mxu0 %v276
  %318 = vmatprep.subr.bf16.mxu0 0
  %319 = vmatpush1.bf16.msra.mxu0 %v277
  %320 = vmatprep.subr.bf16.mxu0 0
  %321 = vmatpush1.bf16.msra.mxu0 %v278
  %322 = vmatprep.subr.bf16.mxu0 0
  %323 = vmatpush1.bf16.msra.mxu0 %v279
  %324 = vmatprep.subr.bf16.mxu0 0
  %325 = vmatpush1.bf16.msra.mxu0 %v280
  %326 = vmatprep.subr.bf16.mxu0 0
  %327 = vmatpush1.bf16.msra.mxu0 %v281
  %328 = vmatprep.subr.bf16.mxu0 0
  %329 = vmatpush1.bf16.msra.mxu0 %v282
  %330 = vmatprep.subr.bf16.mxu0 0
  %331 = vmatpush1.bf16.msra.mxu0 %v283
  %332 = vmatprep.mubr.bf16.mxu0 %v170
  %333 = vmatmul.mubr.bf16.gmra.mrb[0].mxu0 %v169
  %v334 = vpop.f32.mrb[0].mxu0
  %v335 = vadd.f32 %v203, %v334
  %v336 = vpop.f32.mrb[0].mxu0
  %v337 = vpop.f32.mrb[0].mxu0
  %v338 = vpop.f32.mrb[0].mxu0
  %339 = vdwg.mxu0
  %v340 = vmax.f32 %v335, 0.0
  %v341 = vpack.c.bf16 %v340, %v340
  %vm342 = vcmask 1040384
  %vm343 = vsmask.f32 256
  %vm344 = vmand %vm342, %vm343
  %v345 = vld [vmem:[%s3] sm:$0x1]
  %v346 = vsel %vm344, %v341, %v345
  %347 = vst [vmem:[%s3] sm:$0x1] %v346
  // Predicated region
  $region14: #{forward.154} parent=0 // pred_check
    _
  $region15: #{forward.154} parent=0 // pred_check_branch
    %349 = sbr.rel (0) target = $region17
  $region16: #{forward.154} parent=0 // pred_region
    _
  $region17: #{forward.154} parent=0 // pred_fallthru
    _
  // Predicated region
  $region18: #{forward.154} parent=0 // pred_check
    _
  $region19: #{forward.154} parent=0 // pred_check_branch
    %351 = sbr.rel (0) target = $region21
  $region20: #{forward.154} parent=0 // pred_region
    _
  $region21: #{forward.154} parent=0 // pred_fallthru
    _

// kernel: forward.155
$region0: #{forward.155}
  #allocation0 [shape = 'u32[]', space=smem, size = 0x4, offset = 0x4, fixed_abs, tag = 'smem constant byte address 0x4 - core index']
  #allocation1 [shape = 'u32[144,128]{1,0:T(1,128)}', space=vmem, size = 0x12000, scoped, tag = 'internal scratch']
  %s0 = inlined_call_operand.vmem [shape: bf16[8,256], index: 0, kind: input, shape index: {}]
  %s1 = inlined_call_operand.vmem [shape: bf16[256,128], index: 1, kind: input, shape index: {}]
  %s2 = inlined_call_operand.vmem [shape: f32[1,128], index: 2, kind: input, shape index: {}]
  %s3 = inlined_call_operand.vmem [shape: f32[8,128], index: 3, kind: output, shape index: {}]
  %s4 = sld [smem:[#allocation0]]
  $region22: #{forward.155} parent=0
    _
  %s6 = ssub.s32 1, %s4
  %s7 = scalar_select 0, %s6, %s4
  // Predicated region
  $region2: #{forward.155} parent=0 // pred_check
    _
  $region3: #{forward.155} parent=0 // pred_check_branch
    %9 = sbr.rel (0) target = $region5
  $region4: #{forward.155} parent=0 // pred_region
    _
  $region5: #{forward.155} parent=0 // pred_fallthru
    _
  // Predicated region
  $region6: #{forward.155} parent=0 // pred_check
    _
  $region7: #{forward.155} parent=0 // pred_check_branch
    %11 = sbr.rel (0) target = $region9
  $region8: #{forward.155} parent=0 // pred_region
    _
  $region9: #{forward.155} parent=0 // pred_fallthru
    _
  // Predicated region
  $region10: #{forward.155} parent=0 // pred_check
    _
  $region11: #{forward.155} parent=0 // pred_check_branch
    %13 = sbr.rel (0) target = $region13
  $region12: #{forward.155} parent=0 // pred_region
    _
  $region13: #{forward.155} parent=0 // pred_fallthru
    _
  %v15 = vld [vmem:[%s0] sm:$0xff]
  %v16 = vld [vmem:[%s1] sm:$0xf]
  %v17 = vld [vmem:[%s1 + $0x4] sm:$0xf]
  %v18 = vld [vmem:[%s1 + $0x8] sm:$0xf]
  %v19 = vld [vmem:[%s1 + $0xc] sm:$0xf]
  %v20 = vld [vmem:[%s1 + $0x10] sm:$0xf]
  %v21 = vld [vmem:[%s1 + $0x14] sm:$0xf]
  %v22 = vld [vmem:[%s1 + $0x18] sm:$0xf]
  %v23 = vld [vmem:[%s1 + $0x1c] sm:$0xf]
  %v24 = vld [vmem:[%s1 + $0x20] sm:$0xf]
  %v25 = vld [vmem:[%s1 + $0x24] sm:$0xf]
  %v26 = vld [vmem:[%s1 + $0x28] sm:$0xf]
  %v27 = vld [vmem:[%s1 + $0x2c] sm:$0xf]
  %v28 = vld [vmem:[%s1 + $0x30] sm:$0xf]
  %v29 = vld [vmem:[%s1 + $0x34] sm:$0xf]
  %v30 = vld [vmem:[%s1 + $0x38] sm:$0xf]
  %v31 = vld [vmem:[%s1 + $0x3c] sm:$0xf]
  %v32 = vld [vmem:[%s1 + $0x40] sm:$0xf]
  %v33 = vld [vmem:[%s1 + $0x44] sm:$0xf]
  %v34 = vld [vmem:[%s1 + $0x48] sm:$0xf]
  %v35 = vld [vmem:[%s1 + $0x4c] sm:$0xf]
  %v36 = vld [vmem:[%s1 + $0x50] sm:$0xf]
  %v37 = vld [vmem:[%s1 + $0x54] sm:$0xf]
  %v38 = vld [vmem:[%s1 + $0x58] sm:$0xf]
  %v39 = vld [vmem:[%s1 + $0x5c] sm:$0xf]
  %v40 = vld [vmem:[%s1 + $0x60] sm:$0xf]
  %v41 = vld [vmem:[%s1 + $0x64] sm:$0xf]
  %v42 = vld [vmem:[%s1 + $0x68] sm:$0xf]
  %v43 = vld [vmem:[%s1 + $0x6c] sm:$0xf]
  %v44 = vld [vmem:[%s1 + $0x70] sm:$0xf]
  %v45 = vld [vmem:[%s1 + $0x74] sm:$0xf]
  %v46 = vld [vmem:[%s1 + $0x78] sm:$0xf]
  %v47 = vld [vmem:[%s1 + $0x7c] sm:$0xf]
  %v48 = vld [vmem:[%s2] sm:$0x1]
  %v50 = vlaneseq
  %v51 = vshrl.u32 %v50, 7
  %v52 = vsub.s32 0, %v51
  %v53 = vrot.slane %v48, %v52
  %v56 = vunpack.c.l.b16 %v15
  %v57 = vunpack.c.h.b16 %v15
  %v58 = vpack.c.b16 %v56, %v56
  %v59 = vpack.c.b16 %v57, %v57
  %v94 = vunpack.c.l.b16 %v16
  %v95 = vunpack.c.l.b16 %v17
  %v96 = vunpack.c.l.b16 %v18
  %v97 = vunpack.c.l.b16 %v19
  %v98 = vunpack.c.l.b16 %v20
  %v99 = vunpack.c.l.b16 %v21
  %v100 = vunpack.c.l.b16 %v22
  %v101 = vunpack.c.l.b16 %v23
  %v102 = vunpack.c.l.b16 %v24
  %v103 = vunpack.c.l.b16 %v25
  %v104 = vunpack.c.l.b16 %v26
  %v105 = vunpack.c.l.b16 %v27
  %v106 = vunpack.c.l.b16 %v28
  %v107 = vunpack.c.l.b16 %v29
  %v108 = vunpack.c.l.b16 %v30
  %v109 = vunpack.c.l.b16 %v31
  %v110 = vunpack.c.l.b16 %v32
  %v111 = vunpack.c.l.b16 %v33
  %v112 = vunpack.c.l.b16 %v34
  %v113 = vunpack.c.l.b16 %v35
  %v114 = vunpack.c.l.b16 %v36
  %v115 = vunpack.c.l.b16 %v37
  %v116 = vunpack.c.l.b16 %v38
  %v117 = vunpack.c.l.b16 %v39
  %v118 = vunpack.c.l.b16 %v40
  %v119 = vunpack.c.l.b16 %v41
  %v120 = vunpack.c.l.b16 %v42
  %v121 = vunpack.c.l.b16 %v43
  %v122 = vunpack.c.l.b16 %v44
  %v123 = vunpack.c.l.b16 %v45
  %v124 = vunpack.c.l.b16 %v46
  %v125 = vunpack.c.l.b16 %v47
  %v126 = vpack.c.b16 %v95, %v94
  %v127 = vpack.c.b16 %v97, %v96
  %v128 = vpack.c.b16 %v99, %v98
  %v129 = vpack.c.b16 %v101, %v100
  %v130 = vpack.c.b16 %v103, %v102
  %v131 = vpack.c.b16 %v105, %v104
  %v132 = vpack.c.b16 %v107, %v106
  %v133 = vpack.c.b16 %v109, %v108
  %v134 = vpack.c.b16 %v111, %v110
  %v135 = vpack.c.b16 %v113, %v112
  %v136 = vpack.c.b16 %v115, %v114
  %v137 = vpack.c.b16 %v117, %v116
  %v138 = vpack.c.b16 %v119, %v118
  %v139 = vpack.c.b16 %v121, %v120
  %v140 = vpack.c.b16 %v123, %v122
  %v141 = vpack.c.b16 %v125, %v124
  %158 = vmatprep.subr.bf16.mxu0 0
  %159 = vmatpush1.bf16.msra.mxu0 %v126
  %160 = vmatprep.subr.bf16.mxu0 0
  %161 = vmatpush1.bf16.msra.mxu0 %v127
  %162 = vmatprep.subr.bf16.mxu0 0
  %163 = vmatpush1.bf16.msra.mxu0 %v128
  %164 = vmatprep.subr.bf16.mxu0 0
  %165 = vmatpush1.bf16.msra.mxu0 %v129
  %166 = vmatprep.subr.bf16.mxu0 0
  %167 = vmatpush1.bf16.msra.mxu0 %v130
  %168 = vmatprep.subr.bf16.mxu0 0
  %169 = vmatpush1.bf16.msra.mxu0 %v131
  %170 = vmatprep.subr.bf16.mxu0 0
  %171 = vmatpush1.bf16.msra.mxu0 %v132
  %172 = vmatprep.subr.bf16.mxu0 0
  %173 = vmatpush1.bf16.msra.mxu0 %v133
  %174 = vmatprep.subr.bf16.mxu0 0
  %175 = vmatpush1.bf16.msra.mxu0 %v134
  %176 = vmatprep.subr.bf16.mxu0 0
  %177 = vmatpush1.bf16.msra.mxu0 %v135
  %178 = vmatprep.subr.bf16.mxu0 0
  %179 = vmatpush1.bf16.msra.mxu0 %v136
  %180 = vmatprep.subr.bf16.mxu0 0
  %181 = vmatpush1.bf16.msra.mxu0 %v137
  %182 = vmatprep.subr.bf16.mxu0 0
  %183 = vmatpush1.bf16.msra.mxu0 %v138
  %184 = vmatprep.subr.bf16.mxu0 0
  %185 = vmatpush1.bf16.msra.mxu0 %v139
  %186 = vmatprep.subr.bf16.mxu0 0
  %187 = vmatpush1.bf16.msra.mxu0 %v140
  %188 = vmatprep.subr.bf16.mxu0 0
  %189 = vmatpush1.bf16.msra.mxu0 %v141
  %190 = vmatprep.mubr.bf16.mxu0 %v59
  %191 = vmatmul.mubr.bf16.gmra.mrb[0].mxu0 %v58
  %v192 = vpop.f32.mrb[0].mxu0
  %v193 = vadd.f32 %v53, %v192
  %v194 = vpop.f32.mrb[0].mxu0
  %v195 = vpop.f32.mrb[0].mxu0
  %v196 = vpop.f32.mrb[0].mxu0
  %197 = vdwg.mxu0
  %198 = vst [vmem:[%s3] sm:$0xff] %v193
  // Predicated region
  $region14: #{forward.155} parent=0 // pred_check
    _
  $region15: #{forward.155} parent=0 // pred_check_branch
    %200 = sbr.rel (0) target = $region17
  $region16: #{forward.155} parent=0 // pred_region
    _
  $region17: #{forward.155} parent=0 // pred_fallthru
    _
  // Predicated region
  $region18: #{forward.155} parent=0 // pred_check
    _
  $region19: #{forward.155} parent=0 // pred_check_branch
    %202 = sbr.rel (0) target = $region21
  $region20: #{forward.155} parent=0 // pred_region
    _
  $region21: #{forward.155} parent=0 // pred_fallthru
    _

</llo_original>
